<compile_context>
chip_gen: v7x
topology: tpu7x:2x2x1
jax: 0.10.0
libtpu: 0.0.40
codegen_flags: <defaults>
</compile_context>

<pallas_src>
import jax
import jax.numpy as jnp
from jax.experimental import pallas as pl
from jax.experimental.pallas import tpu as pltpu


_GELU_C = 0.7978845608028654  # sqrt(2/pi)


def _gelu(x):
    """tanh-approximated GELU (same formula inside Pallas and in the XLA ref)."""
    return 0.5 * x * (1.0 + jnp.tanh(_GELU_C * (x + 0.044715 * (x * x * x))))


# ----------------------------------------------------------------------------
# Pallas kernel: fused (im2col-matmul) 3x3 conv + bias [+ residual] [+ GELU]
# ----------------------------------------------------------------------------

def _make_conv_mm_kernel(gelu_out: bool, has_residual: bool):
    def kernel(p_ref, w_ref, b_ref, *rest):
        if has_residual:
            r_ref, o_ref = rest
        else:
            (o_ref,) = rest
        # (tile, 9*Cin) @ (9*Cin, Cout) on the MXU, f32 accumulation.
        acc = jnp.dot(p_ref[...], w_ref[...], preferred_element_type=jnp.float32)
        acc = acc + b_ref[...]
        if has_residual:
            acc = acc + r_ref[...]
        if gelu_out:
            acc = _gelu(acc)
        o_ref[...] = acc.astype(o_ref.dtype)
    return kernel


def conv3x3_as_matmul(patches, w_col, b, *, residual=None, gelu_out=False,
                      tile=512):
    """out = maybe_gelu(patches @ w_col + b [+ residual]).

    patches: (N, 9*Cin) im2col rows, w_col: (9*Cin, Cout), b: (Cout,),
    residual: optional (N, Cout).  Returns (N, Cout) f32.
    """
    N, K = patches.shape
    Cout = w_col.shape[1]
    n_blocks = pl.cdiv(N, tile)
    Np = n_blocks * tile
    pad = Np - N

    # bf16 MXU operands, f32 accumulation / elementwise (perf review).
    p_in = patches.astype(jnp.bfloat16)
    w_in = w_col.astype(jnp.bfloat16)
    if pad:
        p_in = jnp.pad(p_in, ((0, pad), (0, 0)))

    in_arrays = [p_in, w_in, b.reshape(1, Cout).astype(jnp.float32)]
    in_specs = [
        pl.BlockSpec((tile, K), lambda i: (i, 0)),
        pl.BlockSpec((K, Cout), lambda i: (0, 0)),   # weights resident over grid
        pl.BlockSpec((1, Cout), lambda i: (0, 0)),
    ]
    if residual is not None:
        r_in = residual.astype(jnp.float32)
        if pad:
            r_in = jnp.pad(r_in, ((0, pad), (0, 0)))
        in_arrays.append(r_in)
        in_specs.append(pl.BlockSpec((tile, Cout), lambda i: (i, 0)))

    out = pl.pallas_call(
        _make_conv_mm_kernel(gelu_out, residual is not None),
        out_shape=jax.ShapeDtypeStruct((Np, Cout), jnp.float32),
        grid=(n_blocks,),
        in_specs=in_specs,
        out_specs=pl.BlockSpec((tile, Cout), lambda i: (i, 0)),
        compiler_params=pltpu.CompilerParams(
            dimension_semantics=("parallel",)),
    )(*in_arrays)
    return out[:N] if pad else out


# ----------------------------------------------------------------------------
# MiddleBlock forward (NHWC-native between the two boundary transposes)
# ----------------------------------------------------------------------------

def _im2col_3x3(a):
    """(B, H, W, C) NHWC -> (B*H*W, 9*C) 'SAME' 3x3 patches (tap-major)."""
    # TODO(synk): patch extraction stays in XLA (fused with the pad / GELU
    # prologue); a halo-overlap BlockSpec would avoid the 9x expansion at scale.
    B, H, W, C = a.shape
    ap = jnp.pad(a, ((0, 0), (1, 1), (1, 1), (0, 0)))
    taps = [ap[:, ky:ky + H, kx:kx + W, :] for ky in range(3) for kx in range(3)]
    return jnp.stack(taps, axis=3).reshape(B * H * W, 9 * C)


def _residual_block_nhwc(x, p, *, tile):
    """ResidualBlock (norm=Identity, shortcut=Identity):
       return conv2(gelu(conv1(gelu(x)))) + x."""
    B, H, W, C = x.shape
    N = B * H * W
    # g1 = gelu(conv1(gelu(x)))   -- output GELU fused into the Pallas kernel.
    g1 = conv3x3_as_matmul(_im2col_3x3(_gelu(x)), p["w1_col"], p["b1"],
                           gelu_out=True, tile=tile)
    # out = conv2(g1) + x         -- residual add fused into the Pallas kernel.
    out = conv3x3_as_matmul(_im2col_3x3(g1.reshape(B, H, W, C)),
                            p["w2_col"], p["b2"],
                            residual=x.reshape(N, C), tile=tile)
    return out.reshape(B, H, W, C)


def middle_block(x, params, *, tile=512):
    """MiddleBlock forward: res1 -> attn(Identity) -> res2.
    x: (B, C, H, W) f32 -> (B, C, H, W) f32."""
    x = jnp.transpose(x, (0, 2, 3, 1))                 # NCHW -> NHWC (once)
    x = _residual_block_nhwc(x, params["res1"], tile=tile)
    # TODO(synk): AttentionBlock path (has_attn=True) not implemented; the
    # MiddleBlock default has_attn=False makes it nn.Identity.
    x = _residual_block_nhwc(x, params["res2"], tile=tile)
    return jnp.transpose(x, (0, 3, 1, 2))              # NHWC -> NCHW (once)


# ----------------------------------------------------------------------------
# Pure-JAX reference (f32) for a tolerance check against the bf16-MXU kernels
# ----------------------------------------------------------------------------

def _conv3x3_ref(a, w_col, b):
    C = a.shape[-1]
    w = w_col.reshape(3, 3, C, -1)
    y = jax.lax.conv_general_dilated(
        a, w, window_strides=(1, 1), padding="SAME",
        dimension_numbers=("NHWC", "HWIO", "NHWC"))
    return y + b


def middle_block_ref(x, params):
    x = jnp.transpose(x, (0, 2, 3, 1))
    for name in ("res1", "res2"):
        p = params[name]
        h = _conv3x3_ref(_gelu(x), p["w1_col"], p["b1"])
        h = _conv3x3_ref(_gelu(h), p["w2_col"], p["b2"])
        x = h + x
    return jnp.transpose(x, (0, 3, 1, 2))


# ----------------------------------------------------------------------------
# Deterministic parameter init (Conv2d 3x3 weights stored in (ky,kx,ci,co)
# order and pre-flattened to the (9*C, C) im2col-matmul layout)
# ----------------------------------------------------------------------------

def init_params(key, n_channels):
    C = n_channels
    bound = (9 * C) ** -0.5          # PyTorch Conv2d default bound (fan_in = 9*C)
    ks = jax.random.split(key, 9)
    u = jax.random.uniform

    def conv(kw, kb):
        w = u(kw, (3, 3, C, C), jnp.float32, -bound, bound)
        return w.reshape(9 * C, C), u(kb, (C,), jnp.float32, -bound, bound)

    w1, b1 = conv(ks[0], ks[1])
    w2, b2 = conv(ks[2], ks[3])
    w3, b3 = conv(ks[4], ks[5])
    w4, b4 = conv(ks[6], ks[7])
    params = {
        "res1": {"w1_col": w1, "b1": b1, "w2_col": w2, "b2": b2},
        "res2": {"w1_col": w3, "b1": b3, "w2_col": w4, "b2": b4},
    }
    return params, ks[8]


if __name__ == "__main__":
    # Small middle-block shapes: N = B*H*W = 1024 -> 2 parallel 512-row tiles;
    # C = 128 keeps the matmul output lane-dense.
    B, C, H, W = 4, 128, 16, 16

    params, xkey = init_params(jax.random.PRNGKey(0), C)
    x = jax.random.normal(xkey, (B, C, H, W), jnp.float32)

    y = jax.block_until_ready(jax.jit(middle_block)(x, params))
    y_ref = jax.block_until_ready(jax.jit(middle_block_ref)(x, params))

    assert y.shape == (B, C, H, W), y.shape
    assert bool(jnp.all(jnp.isfinite(y)))
    # bf16 MXU operands + f32 accumulation vs the all-f32 XLA reference.
    assert bool(jnp.allclose(y, y_ref, rtol=5e-2, atol=5e-2)), float(
        jnp.max(jnp.abs(y - y_ref)))
    print("KERNEL_OK")
</pallas_src>

<mosaic_0001>
module attributes {stable_mosaic.version = 11 : i64} {
  func.func @kernel(%arg0: i32, %arg1: memref<512x1152xbf16, #tpu.memory_space<vmem>>, %arg2: memref<1152x128xbf16, #tpu.memory_space<vmem>>, %arg3: memref<1x128xf32, #tpu.memory_space<vmem>>, %arg4: memref<512x128xf32, #tpu.memory_space<vmem>>) attributes {dimension_semantics = [#tpu.dimension_semantics<parallel>], iteration_bounds = array<i64: 2>, scalar_prefetch = 0 : i64, scratch_operands = 0 : i64, tpu.core_type = #tpu.core_type<tc>, window_params = [{transform_indices = @transform_0, window_bounds = array<i64: 512, 1152>}, {pipeline_mode = #tpu.pipeline_mode<synchronous>, transform_indices = @transform_1, window_bounds = array<i64: 1152, 128>}, {pipeline_mode = #tpu.pipeline_mode<synchronous>, transform_indices = @transform_2, window_bounds = array<i64: 1, 128>}, {transform_indices = @transform_3, window_bounds = array<i64: 512, 128>}]} {
    %c0 = arith.constant 0 : index
    %c0_0 = arith.constant 0 : index
    %0 = vector.load %arg1[%c0, %c0_0] : memref<512x1152xbf16, #tpu.memory_space<vmem>>, vector<512x1152xbf16>
    %c0_1 = arith.constant 0 : index
    %c0_2 = arith.constant 0 : index
    %1 = vector.load %arg2[%c0_1, %c0_2] : memref<1152x128xbf16, #tpu.memory_space<vmem>>, vector<1152x128xbf16>
    %cst = arith.constant dense<0.000000e+00> : vector<512x128xf32>
    %2 = tpu.matmul %0, %1, %cst {dimension_numbers = #tpu.dot_dimension_numbers<[1], [0], [0], [1], [0, 0, 1, 1], [], []>} : vector<512x1152xbf16>, vector<1152x128xbf16>, vector<512x128xf32> -> vector<512x128xf32>
    %c0_3 = arith.constant 0 : index
    %c0_4 = arith.constant 0 : index
    %3 = vector.load %arg3[%c0_3, %c0_4] : memref<1x128xf32, #tpu.memory_space<vmem>>, vector<1x128xf32>
    %4 = vector.broadcast %3 : vector<1x128xf32> to vector<512x128xf32>
    %5 = arith.addf %2, %4 : vector<512x128xf32>
    %cst_5 = arith.constant 5.000000e-01 : f32
    %6 = vector.broadcast %cst_5 : f32 to vector<512x128xf32>
    %7 = arith.mulf %6, %5 : vector<512x128xf32>
    %8 = arith.mulf %5, %5 : vector<512x128xf32>
    %9 = arith.mulf %8, %5 : vector<512x128xf32>
    %cst_6 = arith.constant 4.471500e-02 : f32
    %10 = vector.broadcast %cst_6 : f32 to vector<512x128xf32>
    %11 = arith.mulf %10, %9 : vector<512x128xf32>
    %12 = arith.addf %5, %11 : vector<512x128xf32>
    %cst_7 = arith.constant 0.797884583 : f32
    %13 = vector.broadcast %cst_7 : f32 to vector<512x128xf32>
    %14 = arith.mulf %13, %12 : vector<512x128xf32>
    %15 = math.tanh %14 : vector<512x128xf32>
    %cst_8 = arith.constant 1.000000e+00 : f32
    %16 = vector.broadcast %cst_8 : f32 to vector<512x128xf32>
    %17 = arith.addf %16, %15 : vector<512x128xf32>
    %18 = arith.mulf %7, %17 : vector<512x128xf32>
    %c0_9 = arith.constant 0 : index
    %c0_10 = arith.constant 0 : index
    %19 = vector.load %arg4[%c0_9, %c0_10] : memref<512x128xf32, #tpu.memory_space<vmem>>, vector<512x128xf32>
    tpu.vector_store %arg4[%c0_9, %c0_10], %18 {strides = array<i32>} : memref<512x128xf32, #tpu.memory_space<vmem>>, vector<512x128xf32>,
    return
  }
  func.func @transform_0(%arg0: i32) -> (i32, i32) {
    %c0_i32 = arith.constant 0 : i32
    %c0_i32_0 = arith.constant 0 : i32
    return %arg0, %c0_i32 : i32, i32
  }
  func.func @transform_1(%arg0: i32) -> (i32, i32) {
    %c0_i32 = arith.constant 0 : i32
    %c0_i32_0 = arith.constant 0 : i32
    %c0_i32_1 = arith.constant 0 : i32
    return %c0_i32, %c0_i32_0 : i32, i32
  }
  func.func @transform_2(%arg0: i32) -> (i32, i32) {
    %c0_i32 = arith.constant 0 : i32
    %c0_i32_0 = arith.constant 0 : i32
    %c0_i32_1 = arith.constant 0 : i32
    return %c0_i32, %c0_i32_0 : i32, i32
  }
  func.func @transform_3(%arg0: i32) -> (i32, i32) {
    %c0_i32 = arith.constant 0 : i32
    %c0_i32_0 = arith.constant 0 : i32
    return %arg0, %c0_i32 : i32, i32
  }
}

module attributes {stable_mosaic.version = 11 : i64} {
  func.func @kernel(%arg0: i32, %arg1: memref<512x1152xbf16, #tpu.memory_space<vmem>>, %arg2: memref<1152x128xbf16, #tpu.memory_space<vmem>>, %arg3: memref<1x128xf32, #tpu.memory_space<vmem>>, %arg4: memref<512x128xf32, #tpu.memory_space<vmem>>, %arg5: memref<512x128xf32, #tpu.memory_space<vmem>>) attributes {dimension_semantics = [#tpu.dimension_semantics<parallel>], iteration_bounds = array<i64: 2>, scalar_prefetch = 0 : i64, scratch_operands = 0 : i64, tpu.core_type = #tpu.core_type<tc>, window_params = [{transform_indices = @transform_0, window_bounds = array<i64: 512, 1152>}, {pipeline_mode = #tpu.pipeline_mode<synchronous>, transform_indices = @transform_1, window_bounds = array<i64: 1152, 128>}, {pipeline_mode = #tpu.pipeline_mode<synchronous>, transform_indices = @transform_2, window_bounds = array<i64: 1, 128>}, {transform_indices = @transform_3, window_bounds = array<i64: 512, 128>}, {transform_indices = @transform_4, window_bounds = array<i64: 512, 128>}]} {
    %c0 = arith.constant 0 : index
    %c0_0 = arith.constant 0 : index
    %0 = vector.load %arg1[%c0, %c0_0] : memref<512x1152xbf16, #tpu.memory_space<vmem>>, vector<512x1152xbf16>
    %c0_1 = arith.constant 0 : index
    %c0_2 = arith.constant 0 : index
    %1 = vector.load %arg2[%c0_1, %c0_2] : memref<1152x128xbf16, #tpu.memory_space<vmem>>, vector<1152x128xbf16>
    %cst = arith.constant dense<0.000000e+00> : vector<512x128xf32>
    %2 = tpu.matmul %0, %1, %cst {dimension_numbers = #tpu.dot_dimension_numbers<[1], [0], [0], [1], [0, 0, 1, 1], [], []>} : vector<512x1152xbf16>, vector<1152x128xbf16>, vector<512x128xf32> -> vector<512x128xf32>
    %c0_3 = arith.constant 0 : index
    %c0_4 = arith.constant 0 : index
    %3 = vector.load %arg3[%c0_3, %c0_4] : memref<1x128xf32, #tpu.memory_space<vmem>>, vector<1x128xf32>
    %4 = vector.broadcast %3 : vector<1x128xf32> to vector<512x128xf32>
    %5 = arith.addf %2, %4 : vector<512x128xf32>
    %c0_5 = arith.constant 0 : index
    %c0_6 = arith.constant 0 : index
    %6 = vector.load %arg4[%c0_5, %c0_6] : memref<512x128xf32, #tpu.memory_space<vmem>>, vector<512x128xf32>
    %7 = arith.addf %5, %6 : vector<512x128xf32>
    %c0_7 = arith.constant 0 : index
    %c0_8 = arith.constant 0 : index
    %8 = vector.load %arg5[%c0_7, %c0_8] : memref<512x128xf32, #tpu.memory_space<vmem>>, vector<512x128xf32>
    tpu.vector_store %arg5[%c0_7, %c0_8], %7 {strides = array<i32>} : memref<512x128xf32, #tpu.memory_space<vmem>>, vector<512x128xf32>,
    return
  }
  func.func @transform_0(%arg0: i32) -> (i32, i32) {
    %c0_i32 = arith.constant 0 : i32
    %c0_i32_0 = arith.constant 0 : i32
    return %arg0, %c0_i32 : i32, i32
  }
  func.func @transform_1(%arg0: i32) -> (i32, i32) {
    %c0_i32 = arith.constant 0 : i32
    %c0_i32_0 = arith.constant 0 : i32
    %c0_i32_1 = arith.constant 0 : i32
    return %c0_i32, %c0_i32_0 : i32, i32
  }
  func.func @transform_2(%arg0: i32) -> (i32, i32) {
    %c0_i32 = arith.constant 0 : i32
    %c0_i32_0 = arith.constant 0 : i32
    %c0_i32_1 = arith.constant 0 : i32
    return %c0_i32, %c0_i32_0 : i32, i32
  }
  func.func @transform_3(%arg0: i32) -> (i32, i32) {
    %c0_i32 = arith.constant 0 : i32
    %c0_i32_0 = arith.constant 0 : i32
    return %arg0, %c0_i32 : i32, i32
  }
  func.func @transform_4(%arg0: i32) -> (i32, i32) {
    %c0_i32 = arith.constant 0 : i32
    %c0_i32_0 = arith.constant 0 : i32
    return %arg0, %c0_i32 : i32, i32
  }
}

module attributes {stable_mosaic.version = 11 : i64} {
  func.func @kernel(%arg0: i32, %arg1: memref<512x1152xbf16, #tpu.memory_space<vmem>>, %arg2: memref<1152x128xbf16, #tpu.memory_space<vmem>>, %arg3: memref<1x128xf32, #tpu.memory_space<vmem>>, %arg4: memref<512x128xf32, #tpu.memory_space<vmem>>, %arg5: memref<512x128xf32, #tpu.memory_space<vmem>>) attributes {dimension_semantics = [#tpu.dimension_semantics<parallel>], iteration_bounds = array<i64: 2>, scalar_prefetch = 0 : i64, scratch_operands = 0 : i64, tpu.core_type = #tpu.core_type<tc>, window_params = [{transform_indices = @transform_0, window_bounds = array<i64: 512, 1152>}, {pipeline_mode = #tpu.pipeline_mode<synchronous>, transform_indices = @transform_1, window_bounds = array<i64: 1152, 128>}, {pipeline_mode = #tpu.pipeline_mode<synchronous>, transform_indices = @transform_2, window_bounds = array<i64: 1, 128>}, {transform_indices = @transform_3, window_bounds = array<i64: 512, 128>}, {transform_indices = @transform_4, window_bounds = array<i64: 512, 128>}]} {
    %c0 = arith.constant 0 : index
    %c0_0 = arith.constant 0 : index
    %0 = vector.load %arg1[%c0, %c0_0] : memref<512x1152xbf16, #tpu.memory_space<vmem>>, vector<512x1152xbf16>
    %c0_1 = arith.constant 0 : index
    %c0_2 = arith.constant 0 : index
    %1 = vector.load %arg2[%c0_1, %c0_2] : memref<1152x128xbf16, #tpu.memory_space<vmem>>, vector<1152x128xbf16>
    %cst = arith.constant dense<0.000000e+00> : vector<512x128xf32>
    %2 = tpu.matmul %0, %1, %cst {dimension_numbers = #tpu.dot_dimension_numbers<[1], [0], [0], [1], [0, 0, 1, 1], [], []>} : vector<512x1152xbf16>, vector<1152x128xbf16>, vector<512x128xf32> -> vector<512x128xf32>
    %c0_3 = arith.constant 0 : index
    %c0_4 = arith.constant 0 : index
    %3 = vector.load %arg3[%c0_3, %c0_4] : memref<1x128xf32, #tpu.memory_space<vmem>>, vector<1x128xf32>
    %4 = vector.broadcast %3 : vector<1x128xf32> to vector<512x128xf32>
    %5 = arith.addf %2, %4 : vector<512x128xf32>
    %c0_5 = arith.constant 0 : index
    %c0_6 = arith.constant 0 : index
    %6 = vector.load %arg4[%c0_5, %c0_6] : memref<512x128xf32, #tpu.memory_space<vmem>>, vector<512x128xf32>
    %7 = arith.addf %5, %6 : vector<512x128xf32>
    %c0_7 = arith.constant 0 : index
    %c0_8 = arith.constant 0 : index
    %8 = vector.load %arg5[%c0_7, %c0_8] : memref<512x128xf32, #tpu.memory_space<vmem>>, vector<512x128xf32>
    tpu.vector_store %arg5[%c0_7, %c0_8], %7 {strides = array<i32>} : memref<512x128xf32, #tpu.memory_space<vmem>>, vector<512x128xf32>,
    return
  }
  func.func @transform_0(%arg0: i32) -> (i32, i32) {
    %c0_i32 = arith.constant 0 : i32
    %c0_i32_0 = arith.constant 0 : i32
    return %arg0, %c0_i32 : i32, i32
  }
  func.func @transform_1(%arg0: i32) -> (i32, i32) {
    %c0_i32 = arith.constant 0 : i32
    %c0_i32_0 = arith.constant 0 : i32
    %c0_i32_1 = arith.constant 0 : i32
    return %c0_i32, %c0_i32_0 : i32, i32
  }
  func.func @transform_2(%arg0: i32) -> (i32, i32) {
    %c0_i32 = arith.constant 0 : i32
    %c0_i32_0 = arith.constant 0 : i32
    %c0_i32_1 = arith.constant 0 : i32
    return %c0_i32, %c0_i32_0 : i32, i32
  }
  func.func @transform_3(%arg0: i32) -> (i32, i32) {
    %c0_i32 = arith.constant 0 : i32
    %c0_i32_0 = arith.constant 0 : i32
    return %arg0, %c0_i32 : i32, i32
  }
  func.func @transform_4(%arg0: i32) -> (i32, i32) {
    %c0_i32 = arith.constant 0 : i32
    %c0_i32_0 = arith.constant 0 : i32
    return %arg0, %c0_i32 : i32, i32
  }
}

</mosaic_0001>

<llo_original>
// kernel: middle_block.4
$region0: #{middle_block.4}
  #allocation0 [shape = 'u32[]', space=smem, size = 0x4, offset = 0x4, fixed_abs, tag = 'smem constant byte address 0x4 - core index']
  #allocation1 [shape = 'u32[144,128]{1,0:T(1,128)}', space=vmem, size = 0x12000, scoped, tag = 'internal scratch']
  %s0 = inlined_call_operand.vmem [shape: bf16[1024,1152], index: 0, kind: input, shape index: {}]
  %s1 = inlined_call_operand.vmem [shape: bf16[1152,128], index: 1, kind: input, shape index: {}]
  %s2 = inlined_call_operand.vmem [shape: f32[1,128], index: 2, kind: input, shape index: {}]
  %s3 = inlined_call_operand.vmem [shape: f32[1024,128], index: 3, kind: output, shape index: {}]
  %s4 = sld [smem:[#allocation0]]
  $region45: #{middle_block.4} parent=0
    _
  %s6 = ssub.s32 1, %s4
  %s7 = scalar_select 0, %s6, %s4
  loop: start=0, step=1, limit=4
  $region2: #{middle_block.4} parent=0 // loop_pre_header
    _
  $region3: #{middle_block.4} parent=0 // loop_header
    %s9 = sphi 0, %s13
    %p10 = scmp.ge.s32.totalorder %s9, 4
    %s19 = sphi 0, %s21
    %s22 = sphi 0, %s19
    %s23 = sphi 0, %s22
    %s39 = sphi 0, %s23
    %s43 = sphi 0, %s43
    %s45 = sphi 0, %s43
    %s46 = sphi 0, %s45
    %s60 = sphi 0, %s46
    %s64 = sphi 0, %s64
    %s66 = sphi 0, %s64
    %s67 = sphi 0, %s66
    %s81 = sphi 0, %s67
    %s87 = sphi 0, %s89
    %s90 = sphi 0, %s87
    %s91 = sphi 0, %s90
    %s107 = sphi 0, %s91
  $region4: #{middle_block.4} parent=0 // loop_header_branch
    %12 = sbr.rel (%p10) target = $region8
  $region5: #{middle_block.4} parent=0 // loop_body
    %s14 = ssub.s32 %s9, 1
    %s15 = ssub.s32 %s9, 2
    %s16 = sadd.s32 %s9, 1
    %s17 = ssub.s32 %s9, %s16
    %p18 = scmp.eq.s32.totalorder %s17, 0
    %s20 = sadd.s32 %s19, 1
    %s21 = scalar_select %p18, %s19, %s20
    %p24 = pneg %p18
    %p25 = scmp.eq.s32.totalorder %s9, 1
    %p26 = por %p24, %p25
    %p27 = scmp.ne.s32.totalorder %s19, %s22
    %p28 = scmp.eq.s32.totalorder %s9, 0
    %p29 = por %p27, %p28
    %p30 = scmp.ne.s32.totalorder %s19, %s22
    %p31 = scmp.eq.s32.totalorder %s14, 1
    %p32 = por %p30, %p31
    %p33 = scmp.ne.s32.totalorder %s22, %s23
    %p34 = scmp.eq.s32.totalorder %s14, 0
    %p35 = por %p33, %p34
    %p36 = scmp.ne.s32.totalorder %s22, %s23
    %p37 = scmp.eq.s32.totalorder %s15, 1
    %p38 = por %p36, %p37
    %p40 = scmp.ne.s32.totalorder %s23, %s39
    %p41 = scmp.eq.s32.totalorder %s15, 0
    %p42 = por %p40, %p41
    %s44 = sadd.s32 %s43, 1
    %p47 = scmp.eq.s32.totalorder %s9, 1
    %p48 = scmp.ne.s32.totalorder %s43, %s45
    %p49 = scmp.eq.s32.totalorder %s9, 0
    %p50 = por %p48, %p49
    %p51 = scmp.ne.s32.totalorder %s43, %s45
    %p52 = scmp.eq.s32.totalorder %s14, 1
    %p53 = por %p51, %p52
    %p54 = scmp.ne.s32.totalorder %s45, %s46
    %p55 = scmp.eq.s32.totalorder %s14, 0
    %p56 = por %p54, %p55
    %p57 = scmp.ne.s32.totalorder %s45, %s46
    %p58 = scmp.eq.s32.totalorder %s15, 1
    %p59 = por %p57, %p58
    %p61 = scmp.ne.s32.totalorder %s46, %s60
    %p62 = scmp.eq.s32.totalorder %s15, 0
    %p63 = por %p61, %p62
    %s65 = sadd.s32 %s64, 1
    %p68 = scmp.eq.s32.totalorder %s9, 1
    %p69 = scmp.ne.s32.totalorder %s64, %s66
    %p70 = scmp.eq.s32.totalorder %s9, 0
    %p71 = por %p69, %p70
    %p72 = scmp.ne.s32.totalorder %s64, %s66
    %p73 = scmp.eq.s32.totalorder %s14, 1
    %p74 = por %p72, %p73
    %p75 = scmp.ne.s32.totalorder %s66, %s67
    %p76 = scmp.eq.s32.totalorder %s14, 0
    %p77 = por %p75, %p76
    %p78 = scmp.ne.s32.totalorder %s66, %s67
    %p79 = scmp.eq.s32.totalorder %s15, 1
    %p80 = por %p78, %p79
    %p82 = scmp.ne.s32.totalorder %s67, %s81
    %p83 = scmp.eq.s32.totalorder %s15, 0
    %p84 = por %p82, %p83
    %s85 = ssub.s32 %s9, %s16
    %p86 = scmp.eq.s32.totalorder %s85, 0
    %s88 = sadd.s32 %s87, 1
    %s89 = scalar_select %p86, %s87, %s88
    %p92 = pneg %p86
    %p93 = scmp.eq.s32.totalorder %s9, 1
    %p94 = por %p92, %p93
    %p95 = scmp.ne.s32.totalorder %s87, %s90
    %p96 = scmp.eq.s32.totalorder %s9, 0
    %p97 = por %p95, %p96
    %p98 = scmp.ne.s32.totalorder %s87, %s90
    %p99 = scmp.eq.s32.totalorder %s14, 1
    %p100 = por %p98, %p99
    %p101 = scmp.ne.s32.totalorder %s90, %s91
    %p102 = scmp.eq.s32.totalorder %s14, 0
    %p103 = por %p101, %p102
    %p104 = scmp.ne.s32.totalorder %s90, %s91
    %p105 = scmp.eq.s32.totalorder %s15, 1
    %p106 = por %p104, %p105
    %p108 = scmp.ne.s32.totalorder %s91, %s107
    %p109 = scmp.eq.s32.totalorder %s15, 0
    %p110 = por %p108, %p109
    %p111 = scmp.le.s32.totalorder 1, %s9
    %p112 = scmp.lt.s32.totalorder %s9, 3
    %p113 = pnand %p111, %p112
    %p114 = pneg %p113
    // Predicated region
    $region9: #{middle_block.4} parent=5 // pred_check
      _
    $region10: #{middle_block.4} parent=5 // pred_check_branch
      %116 = sbr.rel (%p113) target = $region12
    $region11: #{middle_block.4} parent=5 // pred_region
      %s117 = ssub.s32 %s9, 1
      // Predicated region
      $region13: #{middle_block.4} parent=11 // pred_check
        %p118 = pneg %p56
      $region14: #{middle_block.4} parent=11 // pred_check_branch
        %120 = sbr.rel (%p118) target = $region16
      $region15: #{middle_block.4} parent=11 // pred_region
        _
      $region16: #{middle_block.4} parent=11 // pred_fallthru
        _
      // Predicated region
      $region17: #{middle_block.4} parent=11 // pred_check
        %p121 = pneg %p77
      $region18: #{middle_block.4} parent=11 // pred_check_branch
        %123 = sbr.rel (%p121) target = $region20
      $region19: #{middle_block.4} parent=11 // pred_region
        _
      $region20: #{middle_block.4} parent=11 // pred_fallthru
        _
    $region12: #{middle_block.4} parent=5 // pred_fallthru
      _
    %p124 = scmp.lt.s32.totalorder %s9, 2
    // Predicated region
    $region21: #{middle_block.4} parent=5 // pred_check
      %p125 = pneg %p124
    $region22: #{middle_block.4} parent=5 // pred_check_branch
      %127 = sbr.rel (%p125) target = $region24
    $region23: #{middle_block.4} parent=5 // pred_region
      // Predicated region
      $region25: #{middle_block.4} parent=23 // pred_check
        %p128 = pneg %p29
      $region26: #{middle_block.4} parent=23 // pred_check_branch
        %130 = sbr.rel (%p128) target = $region28
      $region27: #{middle_block.4} parent=23 // pred_region
        %s131 = smul.u32 64, %s9
        %p132 = scmp.lt.s32.totalorder %s131, 127
        %s133 = scalar_select %p132, %s131, 127
        %s134 = smul.addr %s133, 9
        %s135 = smul.addr %s134, 4
        %s136 = scalar_lea.vmem %s0, %s135
        %s137 = smul.u32 64, %s9
      $region28: #{middle_block.4} parent=23 // pred_fallthru
        _
    $region24: #{middle_block.4} parent=5 // pred_fallthru
      _
    %p138 = scmp.le.s32.totalorder 1, %s9
    %p139 = scmp.lt.s32.totalorder %s9, 3
    %p140 = pnand %p138, %p139
    %p141 = pneg %p140
    // Predicated region
    $region29: #{middle_block.4} parent=5 // pred_check
      _
    $region30: #{middle_block.4} parent=5 // pred_check_branch
      %143 = sbr.rel (%p140) target = $region32
    $region31: #{middle_block.4} parent=5 // pred_region
      %s144 = ssub.s32 %s9, 1
      %s145 = smul.u32 64, %s14
      %p146 = scmp.lt.s32.totalorder %s145, 127
      %s147 = scalar_select %p146, %s145, 127
      %s148 = smul.addr %s147, 9
      %s149 = smul.addr %s148, 4
      %s150 = scalar_lea.vmem %s0, %s149
      %p151 = pneg %p35
      %p152 = pneg %p32
      %p153 = pneg %p56
      %p154 = pneg %p53
      %p155 = pneg %p77
      %p156 = pneg %p74
      %p157 = pneg %p103
      %p158 = pneg %p100
      %s159 = smul.u32 64, %s14
      %p160 = scmp.lt.s32.totalorder %s159, 127
      %s161 = scalar_select %p160, %s159, 127
      %s162 = smul.addr %s161, 8
      %s163 = scalar_lea.vmem %s3, %s162
      %s164 = smul.u32 64, %s14
      %p165 = scmp.lt.s32.totalorder %s164, 127
      %s166 = scalar_select %p165, %s164, 127
      %s167 = smul.addr %s166, 9
      %s168 = smul.addr %s167, 4
      %s169 = scalar_lea.vmem %s0, %s168
      %s170 = smul.u32 64, %s14
      %s171 = smul.u32 64, %s14
      %p172 = scmp.lt.s32.totalorder %s171, 127
      %s173 = scalar_select %p172, %s171, 127
      %s174 = smul.addr %s173, 8
      %s175 = scalar_lea.vmem %s3, %s174
      %s176 = smul.u32 64, %s14
      %v178 = vld [vmem:[%s169] sm:$0xff]
      %v179 = vld [vmem:[%s169 + $0x8] sm:$0xff]
      %v180 = vld [vmem:[%s169 + $0x10] sm:$0xff]
      %v181 = vld [vmem:[%s169 + $0x18] sm:$0xff]
      %v182 = vld [vmem:[%s169 + $0x20] sm:$0xf]
      %v183 = vld [vmem:[%s169 + $0x24] sm:$0xff]
      %v184 = vld [vmem:[%s169 + $0x2c] sm:$0xff]
      %v185 = vld [vmem:[%s169 + $0x34] sm:$0xff]
      %v186 = vld [vmem:[%s169 + $0x3c] sm:$0xff]
      %v187 = vld [vmem:[%s169 + $0x44] sm:$0xf]
      %v188 = vld [vmem:[%s169 + $0x48] sm:$0xff]
      %v189 = vld [vmem:[%s169 + $0x50] sm:$0xff]
      %v190 = vld [vmem:[%s169 + $0x58] sm:$0xff]
      %v191 = vld [vmem:[%s169 + $0x60] sm:$0xff]
      %v192 = vld [vmem:[%s169 + $0x68] sm:$0xf]
      %v193 = vld [vmem:[%s169 + $0x6c] sm:$0xff]
      %v194 = vld [vmem:[%s169 + $0x74] sm:$0xff]
      %v195 = vld [vmem:[%s169 + $0x7c] sm:$0xff]
      %v196 = vld [vmem:[%s169 + $0x84] sm:$0xff]
      %v197 = vld [vmem:[%s169 + $0x8c] sm:$0xf]
      %v198 = vld [vmem:[%s169 + $0x90] sm:$0xff]
      %v199 = vld [vmem:[%s169 + $0x98] sm:$0xff]
      %v200 = vld [vmem:[%s169 + $0xa0] sm:$0xff]
      %v201 = vld [vmem:[%s169 + $0xa8] sm:$0xff]
      %v202 = vld [vmem:[%s169 + $0xb0] sm:$0xf]
      %v203 = vld [vmem:[%s169 + $0xb4] sm:$0xff]
      %v204 = vld [vmem:[%s169 + $0xbc] sm:$0xff]
      %v205 = vld [vmem:[%s169 + $0xc4] sm:$0xff]
      %v206 = vld [vmem:[%s169 + $0xcc] sm:$0xff]
      %v207 = vld [vmem:[%s169 + $0xd4] sm:$0xf]
      %v208 = vld [vmem:[%s169 + $0xd8] sm:$0xff]
      %v209 = vld [vmem:[%s169 + $0xe0] sm:$0xff]
      %v210 = vld [vmem:[%s169 + $0xe8] sm:$0xff]
      %v211 = vld [vmem:[%s169 + $0xf0] sm:$0xff]
      %v212 = vld [vmem:[%s169 + $0xf8] sm:$0xf]
      %v213 = vld [vmem:[%s169 + $0xfc] sm:$0xff]
      %v214 = vld [vmem:[%s169 + $0x104] sm:$0xff]
      %v215 = vld [vmem:[%s169 + $0x10c] sm:$0xff]
      %v216 = vld [vmem:[%s169 + $0x114] sm:$0xff]
      %v217 = vld [vmem:[%s169 + $0x11c] sm:$0xf]
      %v218 = vld [vmem:[%s169 + $0x120] sm:$0xff]
      %v219 = vld [vmem:[%s169 + $0x128] sm:$0xff]
      %v220 = vld [vmem:[%s169 + $0x130] sm:$0xff]
      %v221 = vld [vmem:[%s169 + $0x138] sm:$0xff]
      %v222 = vld [vmem:[%s169 + $0x140] sm:$0xf]
      %v223 = vld [vmem:[%s169 + $0x144] sm:$0xff]
      %v224 = vld [vmem:[%s169 + $0x14c] sm:$0xff]
      %v225 = vld [vmem:[%s169 + $0x154] sm:$0xff]
      %v226 = vld [vmem:[%s169 + $0x15c] sm:$0xff]
      %v227 = vld [vmem:[%s169 + $0x164] sm:$0xf]
      %v228 = vld [vmem:[%s169 + $0x168] sm:$0xff]
      %v229 = vld [vmem:[%s169 + $0x170] sm:$0xff]
      %v230 = vld [vmem:[%s169 + $0x178] sm:$0xff]
      %v231 = vld [vmem:[%s169 + $0x180] sm:$0xff]
      %v232 = vld [vmem:[%s169 + $0x188] sm:$0xf]
      %v233 = vld [vmem:[%s169 + $0x18c] sm:$0xff]
      %v234 = vld [vmem:[%s169 + $0x194] sm:$0xff]
      %v235 = vld [vmem:[%s169 + $0x19c] sm:$0xff]
      %v236 = vld [vmem:[%s169 + $0x1a4] sm:$0xff]
      %v237 = vld [vmem:[%s169 + $0x1ac] sm:$0xf]
      %v238 = vld [vmem:[%s169 + $0x1b0] sm:$0xff]
      %v239 = vld [vmem:[%s169 + $0x1b8] sm:$0xff]
      %v240 = vld [vmem:[%s169 + $0x1c0] sm:$0xff]
      %v241 = vld [vmem:[%s169 + $0x1c8] sm:$0xff]
      %v242 = vld [vmem:[%s169 + $0x1d0] sm:$0xf]
      %v243 = vld [vmem:[%s169 + $0x1d4] sm:$0xff]
      %v244 = vld [vmem:[%s169 + $0x1dc] sm:$0xff]
      %v245 = vld [vmem:[%s169 + $0x1e4] sm:$0xff]
      %v246 = vld [vmem:[%s169 + $0x1ec] sm:$0xff]
      %v247 = vld [vmem:[%s169 + $0x1f4] sm:$0xf]
      %v248 = vld [vmem:[%s169 + $0x1f8] sm:$0xff]
      %v249 = vld [vmem:[%s169 + $0x200] sm:$0xff]
      %v250 = vld [vmem:[%s169 + $0x208] sm:$0xff]
      %v251 = vld [vmem:[%s169 + $0x210] sm:$0xff]
      %v252 = vld [vmem:[%s169 + $0x218] sm:$0xf]
      %v253 = vld [vmem:[%s169 + $0x21c] sm:$0xff]
      %v254 = vld [vmem:[%s169 + $0x224] sm:$0xff]
      %v255 = vld [vmem:[%s169 + $0x22c] sm:$0xff]
      %v256 = vld [vmem:[%s169 + $0x234] sm:$0xff]
      %v257 = vld [vmem:[%s169 + $0x23c] sm:$0xf]
      %v258 = vld [vmem:[%s169 + $0x240] sm:$0xff]
      %v259 = vld [vmem:[%s169 + $0x248] sm:$0xff]
      %v260 = vld [vmem:[%s169 + $0x250] sm:$0xff]
      %v261 = vld [vmem:[%s169 + $0x258] sm:$0xff]
      %v262 = vld [vmem:[%s169 + $0x260] sm:$0xf]
      %v263 = vld [vmem:[%s169 + $0x264] sm:$0xff]
      %v264 = vld [vmem:[%s169 + $0x26c] sm:$0xff]
      %v265 = vld [vmem:[%s169 + $0x274] sm:$0xff]
      %v266 = vld [vmem:[%s169 + $0x27c] sm:$0xff]
      %v267 = vld [vmem:[%s169 + $0x284] sm:$0xf]
      %v268 = vld [vmem:[%s169 + $0x288] sm:$0xff]
      %v269 = vld [vmem:[%s169 + $0x290] sm:$0xff]
      %v270 = vld [vmem:[%s169 + $0x298] sm:$0xff]
      %v271 = vld [vmem:[%s169 + $0x2a0] sm:$0xff]
      %v272 = vld [vmem:[%s169 + $0x2a8] sm:$0xf]
      %v273 = vld [vmem:[%s169 + $0x2ac] sm:$0xff]
      %v274 = vld [vmem:[%s169 + $0x2b4] sm:$0xff]
      %v275 = vld [vmem:[%s169 + $0x2bc] sm:$0xff]
      %v276 = vld [vmem:[%s169 + $0x2c4] sm:$0xff]
      %v277 = vld [vmem:[%s169 + $0x2cc] sm:$0xf]
      %v278 = vld [vmem:[%s169 + $0x2d0] sm:$0xff]
      %v279 = vld [vmem:[%s169 + $0x2d8] sm:$0xff]
      %v280 = vld [vmem:[%s169 + $0x2e0] sm:$0xff]
      %v281 = vld [vmem:[%s169 + $0x2e8] sm:$0xff]
      %v282 = vld [vmem:[%s169 + $0x2f0] sm:$0xf]
      %v283 = vld [vmem:[%s169 + $0x2f4] sm:$0xff]
      %v284 = vld [vmem:[%s169 + $0x2fc] sm:$0xff]
      %v285 = vld [vmem:[%s169 + $0x304] sm:$0xff]
      %v286 = vld [vmem:[%s169 + $0x30c] sm:$0xff]
      %v287 = vld [vmem:[%s169 + $0x314] sm:$0xf]
      %v288 = vld [vmem:[%s169 + $0x318] sm:$0xff]
      %v289 = vld [vmem:[%s169 + $0x320] sm:$0xff]
      %v290 = vld [vmem:[%s169 + $0x328] sm:$0xff]
      %v291 = vld [vmem:[%s169 + $0x330] sm:$0xff]
      %v292 = vld [vmem:[%s169 + $0x338] sm:$0xf]
      %v293 = vld [vmem:[%s169 + $0x33c] sm:$0xff]
      %v294 = vld [vmem:[%s169 + $0x344] sm:$0xff]
      %v295 = vld [vmem:[%s169 + $0x34c] sm:$0xff]
      %v296 = vld [vmem:[%s169 + $0x354] sm:$0xff]
      %v297 = vld [vmem:[%s169 + $0x35c] sm:$0xf]
      %v298 = vld [vmem:[%s169 + $0x360] sm:$0xff]
      %v299 = vld [vmem:[%s169 + $0x368] sm:$0xff]
      %v300 = vld [vmem:[%s169 + $0x370] sm:$0xff]
      %v301 = vld [vmem:[%s169 + $0x378] sm:$0xff]
      %v302 = vld [vmem:[%s169 + $0x380] sm:$0xf]
      %v303 = vld [vmem:[%s169 + $0x384] sm:$0xff]
      %v304 = vld [vmem:[%s169 + $0x38c] sm:$0xff]
      %v305 = vld [vmem:[%s169 + $0x394] sm:$0xff]
      %v306 = vld [vmem:[%s169 + $0x39c] sm:$0xff]
      %v307 = vld [vmem:[%s169 + $0x3a4] sm:$0xf]
      %v308 = vld [vmem:[%s169 + $0x3a8] sm:$0xff]
      %v309 = vld [vmem:[%s169 + $0x3b0] sm:$0xff]
      %v310 = vld [vmem:[%s169 + $0x3b8] sm:$0xff]
      %v311 = vld [vmem:[%s169 + $0x3c0] sm:$0xff]
      %v312 = vld [vmem:[%s169 + $0x3c8] sm:$0xf]
      %v313 = vld [vmem:[%s169 + $0x3cc] sm:$0xff]
      %v314 = vld [vmem:[%s169 + $0x3d4] sm:$0xff]
      %v315 = vld [vmem:[%s169 + $0x3dc] sm:$0xff]
      %v316 = vld [vmem:[%s169 + $0x3e4] sm:$0xff]
      %v317 = vld [vmem:[%s169 + $0x3ec] sm:$0xf]
      %v318 = vld [vmem:[%s169 + $0x3f0] sm:$0xff]
      %v319 = vld [vmem:[%s169 + $0x3f8] sm:$0xff]
      %v320 = vld [vmem:[%s169 + $0x400] sm:$0xff]
      %v321 = vld [vmem:[%s169 + $0x408] sm:$0xff]
      %v322 = vld [vmem:[%s169 + $0x410] sm:$0xf]
      %v323 = vld [vmem:[%s169 + $0x414] sm:$0xff]
      %v324 = vld [vmem:[%s169 + $0x41c] sm:$0xff]
      %v325 = vld [vmem:[%s169 + $0x424] sm:$0xff]
      %v326 = vld [vmem:[%s169 + $0x42c] sm:$0xff]
      %v327 = vld [vmem:[%s169 + $0x434] sm:$0xf]
      %v328 = vld [vmem:[%s169 + $0x438] sm:$0xff]
      %v329 = vld [vmem:[%s169 + $0x440] sm:$0xff]
      %v330 = vld [vmem:[%s169 + $0x448] sm:$0xff]
      %v331 = vld [vmem:[%s169 + $0x450] sm:$0xff]
      %v332 = vld [vmem:[%s169 + $0x458] sm:$0xf]
      %v333 = vld [vmem:[%s169 + $0x45c] sm:$0xff]
      %v334 = vld [vmem:[%s169 + $0x464] sm:$0xff]
      %v335 = vld [vmem:[%s169 + $0x46c] sm:$0xff]
      %v336 = vld [vmem:[%s169 + $0x474] sm:$0xff]
      %v337 = vld [vmem:[%s169 + $0x47c] sm:$0xf]
      %v338 = vld [vmem:[%s169 + $0x480] sm:$0xff]
      %v339 = vld [vmem:[%s169 + $0x488] sm:$0xff]
      %v340 = vld [vmem:[%s169 + $0x490] sm:$0xff]
      %v341 = vld [vmem:[%s169 + $0x498] sm:$0xff]
      %v342 = vld [vmem:[%s169 + $0x4a0] sm:$0xf]
      %v343 = vld [vmem:[%s169 + $0x4a4] sm:$0xff]
      %v344 = vld [vmem:[%s169 + $0x4ac] sm:$0xff]
      %v345 = vld [vmem:[%s169 + $0x4b4] sm:$0xff]
      %v346 = vld [vmem:[%s169 + $0x4bc] sm:$0xff]
      %v347 = vld [vmem:[%s169 + $0x4c4] sm:$0xf]
      %v348 = vld [vmem:[%s169 + $0x4c8] sm:$0xff]
      %v349 = vld [vmem:[%s169 + $0x4d0] sm:$0xff]
      %v350 = vld [vmem:[%s169 + $0x4d8] sm:$0xff]
      %v351 = vld [vmem:[%s169 + $0x4e0] sm:$0xff]
      %v352 = vld [vmem:[%s169 + $0x4e8] sm:$0xf]
      %v353 = vld [vmem:[%s169 + $0x4ec] sm:$0xff]
      %v354 = vld [vmem:[%s169 + $0x4f4] sm:$0xff]
      %v355 = vld [vmem:[%s169 + $0x4fc] sm:$0xff]
      %v356 = vld [vmem:[%s169 + $0x504] sm:$0xff]
      %v357 = vld [vmem:[%s169 + $0x50c] sm:$0xf]
      %v358 = vld [vmem:[%s169 + $0x510] sm:$0xff]
      %v359 = vld [vmem:[%s169 + $0x518] sm:$0xff]
      %v360 = vld [vmem:[%s169 + $0x520] sm:$0xff]
      %v361 = vld [vmem:[%s169 + $0x528] sm:$0xff]
      %v362 = vld [vmem:[%s169 + $0x530] sm:$0xf]
      %v363 = vld [vmem:[%s169 + $0x534] sm:$0xff]
      %v364 = vld [vmem:[%s169 + $0x53c] sm:$0xff]
      %v365 = vld [vmem:[%s169 + $0x544] sm:$0xff]
      %v366 = vld [vmem:[%s169 + $0x54c] sm:$0xff]
      %v367 = vld [vmem:[%s169 + $0x554] sm:$0xf]
      %v368 = vld [vmem:[%s169 + $0x558] sm:$0xff]
      %v369 = vld [vmem:[%s169 + $0x560] sm:$0xff]
      %v370 = vld [vmem:[%s169 + $0x568] sm:$0xff]
      %v371 = vld [vmem:[%s169 + $0x570] sm:$0xff]
      %v372 = vld [vmem:[%s169 + $0x578] sm:$0xf]
      %v373 = vld [vmem:[%s169 + $0x57c] sm:$0xff]
      %v374 = vld [vmem:[%s169 + $0x584] sm:$0xff]
      %v375 = vld [vmem:[%s169 + $0x58c] sm:$0xff]
      %v376 = vld [vmem:[%s169 + $0x594] sm:$0xff]
      %v377 = vld [vmem:[%s169 + $0x59c] sm:$0xf]
      %v378 = vld [vmem:[%s169 + $0x5a0] sm:$0xff]
      %v379 = vld [vmem:[%s169 + $0x5a8] sm:$0xff]
      %v380 = vld [vmem:[%s169 + $0x5b0] sm:$0xff]
      %v381 = vld [vmem:[%s169 + $0x5b8] sm:$0xff]
      %v382 = vld [vmem:[%s169 + $0x5c0] sm:$0xf]
      %v383 = vld [vmem:[%s169 + $0x5c4] sm:$0xff]
      %v384 = vld [vmem:[%s169 + $0x5cc] sm:$0xff]
      %v385 = vld [vmem:[%s169 + $0x5d4] sm:$0xff]
      %v386 = vld [vmem:[%s169 + $0x5dc] sm:$0xff]
      %v387 = vld [vmem:[%s169 + $0x5e4] sm:$0xf]
      %v388 = vld [vmem:[%s169 + $0x5e8] sm:$0xff]
      %v389 = vld [vmem:[%s169 + $0x5f0] sm:$0xff]
      %v390 = vld [vmem:[%s169 + $0x5f8] sm:$0xff]
      %v391 = vld [vmem:[%s169 + $0x600] sm:$0xff]
      %v392 = vld [vmem:[%s169 + $0x608] sm:$0xf]
      %v393 = vld [vmem:[%s169 + $0x60c] sm:$0xff]
      %v394 = vld [vmem:[%s169 + $0x614] sm:$0xff]
      %v395 = vld [vmem:[%s169 + $0x61c] sm:$0xff]
      %v396 = vld [vmem:[%s169 + $0x624] sm:$0xff]
      %v397 = vld [vmem:[%s169 + $0x62c] sm:$0xf]
      %v398 = vld [vmem:[%s169 + $0x630] sm:$0xff]
      %v399 = vld [vmem:[%s169 + $0x638] sm:$0xff]
      %v400 = vld [vmem:[%s169 + $0x640] sm:$0xff]
      %v401 = vld [vmem:[%s169 + $0x648] sm:$0xff]
      %v402 = vld [vmem:[%s169 + $0x650] sm:$0xf]
      %v403 = vld [vmem:[%s169 + $0x654] sm:$0xff]
      %v404 = vld [vmem:[%s169 + $0x65c] sm:$0xff]
      %v405 = vld [vmem:[%s169 + $0x664] sm:$0xff]
      %v406 = vld [vmem:[%s169 + $0x66c] sm:$0xff]
      %v407 = vld [vmem:[%s169 + $0x674] sm:$0xf]
      %v408 = vld [vmem:[%s169 + $0x678] sm:$0xff]
      %v409 = vld [vmem:[%s169 + $0x680] sm:$0xff]
      %v410 = vld [vmem:[%s169 + $0x688] sm:$0xff]
      %v411 = vld [vmem:[%s169 + $0x690] sm:$0xff]
      %v412 = vld [vmem:[%s169 + $0x698] sm:$0xf]
      %v413 = vld [vmem:[%s169 + $0x69c] sm:$0xff]
      %v414 = vld [vmem:[%s169 + $0x6a4] sm:$0xff]
      %v415 = vld [vmem:[%s169 + $0x6ac] sm:$0xff]
      %v416 = vld [vmem:[%s169 + $0x6b4] sm:$0xff]
      %v417 = vld [vmem:[%s169 + $0x6bc] sm:$0xf]
      %v418 = vld [vmem:[%s169 + $0x6c0] sm:$0xff]
      %v419 = vld [vmem:[%s169 + $0x6c8] sm:$0xff]
      %v420 = vld [vmem:[%s169 + $0x6d0] sm:$0xff]
      %v421 = vld [vmem:[%s169 + $0x6d8] sm:$0xff]
      %v422 = vld [vmem:[%s169 + $0x6e0] sm:$0xf]
      %v423 = vld [vmem:[%s169 + $0x6e4] sm:$0xff]
      %v424 = vld [vmem:[%s169 + $0x6ec] sm:$0xff]
      %v425 = vld [vmem:[%s169 + $0x6f4] sm:$0xff]
      %v426 = vld [vmem:[%s169 + $0x6fc] sm:$0xff]
      %v427 = vld [vmem:[%s169 + $0x704] sm:$0xf]
      %v428 = vld [vmem:[%s169 + $0x708] sm:$0xff]
      %v429 = vld [vmem:[%s169 + $0x710] sm:$0xff]
      %v430 = vld [vmem:[%s169 + $0x718] sm:$0xff]
      %v431 = vld [vmem:[%s169 + $0x720] sm:$0xff]
      %v432 = vld [vmem:[%s169 + $0x728] sm:$0xf]
      %v433 = vld [vmem:[%s169 + $0x72c] sm:$0xff]
      %v434 = vld [vmem:[%s169 + $0x734] sm:$0xff]
      %v435 = vld [vmem:[%s169 + $0x73c] sm:$0xff]
      %v436 = vld [vmem:[%s169 + $0x744] sm:$0xff]
      %v437 = vld [vmem:[%s169 + $0x74c] sm:$0xf]
      %v438 = vld [vmem:[%s169 + $0x750] sm:$0xff]
      %v439 = vld [vmem:[%s169 + $0x758] sm:$0xff]
      %v440 = vld [vmem:[%s169 + $0x760] sm:$0xff]
      %v441 = vld [vmem:[%s169 + $0x768] sm:$0xff]
      %v442 = vld [vmem:[%s169 + $0x770] sm:$0xf]
      %v443 = vld [vmem:[%s169 + $0x774] sm:$0xff]
      %v444 = vld [vmem:[%s169 + $0x77c] sm:$0xff]
      %v445 = vld [vmem:[%s169 + $0x784] sm:$0xff]
      %v446 = vld [vmem:[%s169 + $0x78c] sm:$0xff]
      %v447 = vld [vmem:[%s169 + $0x794] sm:$0xf]
      %v448 = vld [vmem:[%s169 + $0x798] sm:$0xff]
      %v449 = vld [vmem:[%s169 + $0x7a0] sm:$0xff]
      %v450 = vld [vmem:[%s169 + $0x7a8] sm:$0xff]
      %v451 = vld [vmem:[%s169 + $0x7b0] sm:$0xff]
      %v452 = vld [vmem:[%s169 + $0x7b8] sm:$0xf]
      %v453 = vld [vmem:[%s169 + $0x7bc] sm:$0xff]
      %v454 = vld [vmem:[%s169 + $0x7c4] sm:$0xff]
      %v455 = vld [vmem:[%s169 + $0x7cc] sm:$0xff]
      %v456 = vld [vmem:[%s169 + $0x7d4] sm:$0xff]
      %v457 = vld [vmem:[%s169 + $0x7dc] sm:$0xf]
      %v458 = vld [vmem:[%s169 + $0x7e0] sm:$0xff]
      %v459 = vld [vmem:[%s169 + $0x7e8] sm:$0xff]
      %v460 = vld [vmem:[%s169 + $0x7f0] sm:$0xff]
      %v461 = vld [vmem:[%s169 + $0x7f8] sm:$0xff]
      %v462 = vld [vmem:[%s169 + $0x800] sm:$0xf]
      %v463 = vld [vmem:[%s169 + $0x804] sm:$0xff]
      %v464 = vld [vmem:[%s169 + $0x80c] sm:$0xff]
      %v465 = vld [vmem:[%s169 + $0x814] sm:$0xff]
      %v466 = vld [vmem:[%s169 + $0x81c] sm:$0xff]
      %v467 = vld [vmem:[%s169 + $0x824] sm:$0xf]
      %v468 = vld [vmem:[%s169 + $0x828] sm:$0xff]
      %v469 = vld [vmem:[%s169 + $0x830] sm:$0xff]
      %v470 = vld [vmem:[%s169 + $0x838] sm:$0xff]
      %v471 = vld [vmem:[%s169 + $0x840] sm:$0xff]
      %v472 = vld [vmem:[%s169 + $0x848] sm:$0xf]
      %v473 = vld [vmem:[%s169 + $0x84c] sm:$0xff]
      %v474 = vld [vmem:[%s169 + $0x854] sm:$0xff]
      %v475 = vld [vmem:[%s169 + $0x85c] sm:$0xff]
      %v476 = vld [vmem:[%s169 + $0x864] sm:$0xff]
      %v477 = vld [vmem:[%s169 + $0x86c] sm:$0xf]
      %v478 = vld [vmem:[%s169 + $0x870] sm:$0xff]
      %v479 = vld [vmem:[%s169 + $0x878] sm:$0xff]
      %v480 = vld [vmem:[%s169 + $0x880] sm:$0xff]
      %v481 = vld [vmem:[%s169 + $0x888] sm:$0xff]
      %v482 = vld [vmem:[%s169 + $0x890] sm:$0xf]
      %v483 = vld [vmem:[%s169 + $0x894] sm:$0xff]
      %v484 = vld [vmem:[%s169 + $0x89c] sm:$0xff]
      %v485 = vld [vmem:[%s169 + $0x8a4] sm:$0xff]
      %v486 = vld [vmem:[%s169 + $0x8ac] sm:$0xff]
      %v487 = vld [vmem:[%s169 + $0x8b4] sm:$0xf]
      %v488 = vld [vmem:[%s169 + $0x8b8] sm:$0xff]
      %v489 = vld [vmem:[%s169 + $0x8c0] sm:$0xff]
      %v490 = vld [vmem:[%s169 + $0x8c8] sm:$0xff]
      %v491 = vld [vmem:[%s169 + $0x8d0] sm:$0xff]
      %v492 = vld [vmem:[%s169 + $0x8d8] sm:$0xf]
      %v493 = vld [vmem:[%s169 + $0x8dc] sm:$0xff]
      %v494 = vld [vmem:[%s169 + $0x8e4] sm:$0xff]
      %v495 = vld [vmem:[%s169 + $0x8ec] sm:$0xff]
      %v496 = vld [vmem:[%s169 + $0x8f4] sm:$0xff]
      %v497 = vld [vmem:[%s169 + $0x8fc] sm:$0xf]
      %v498 = vld [vmem:[%s1] sm:$0xf]
      %v499 = vld [vmem:[%s1 + $0x4] sm:$0xf]
      %v500 = vld [vmem:[%s1 + $0x8] sm:$0xf]
      %v501 = vld [vmem:[%s1 + $0xc] sm:$0xf]
      %v502 = vld [vmem:[%s1 + $0x10] sm:$0xf]
      %v503 = vld [vmem:[%s1 + $0x14] sm:$0xf]
      %v504 = vld [vmem:[%s1 + $0x18] sm:$0xf]
      %v505 = vld [vmem:[%s1 + $0x1c] sm:$0xf]
      %v506 = vld [vmem:[%s1 + $0x20] sm:$0xf]
      %v507 = vld [vmem:[%s1 + $0x24] sm:$0xf]
      %v508 = vld [vmem:[%s1 + $0x28] sm:$0xf]
      %v509 = vld [vmem:[%s1 + $0x2c] sm:$0xf]
      %v510 = vld [vmem:[%s1 + $0x30] sm:$0xf]
      %v511 = vld [vmem:[%s1 + $0x34] sm:$0xf]
      %v512 = vld [vmem:[%s1 + $0x38] sm:$0xf]
      %v513 = vld [vmem:[%s1 + $0x3c] sm:$0xf]
      %v514 = vld [vmem:[%s1 + $0x40] sm:$0xf]
      %v515 = vld [vmem:[%s1 + $0x44] sm:$0xf]
      %v516 = vld [vmem:[%s1 + $0x48] sm:$0xf]
      %v517 = vld [vmem:[%s1 + $0x4c] sm:$0xf]
      %v518 = vld [vmem:[%s1 + $0x50] sm:$0xf]
      %v519 = vld [vmem:[%s1 + $0x54] sm:$0xf]
      %v520 = vld [vmem:[%s1 + $0x58] sm:$0xf]
      %v521 = vld [vmem:[%s1 + $0x5c] sm:$0xf]
      %v522 = vld [vmem:[%s1 + $0x60] sm:$0xf]
      %v523 = vld [vmem:[%s1 + $0x64] sm:$0xf]
      %v524 = vld [vmem:[%s1 + $0x68] sm:$0xf]
      %v525 = vld [vmem:[%s1 + $0x6c] sm:$0xf]
      %v526 = vld [vmem:[%s1 + $0x70] sm:$0xf]
      %v527 = vld [vmem:[%s1 + $0x74] sm:$0xf]
      %v528 = vld [vmem:[%s1 + $0x78] sm:$0xf]
      %v529 = vld [vmem:[%s1 + $0x7c] sm:$0xf]
      %v530 = vld [vmem:[%s1 + $0x80] sm:$0xf]
      %v531 = vld [vmem:[%s1 + $0x84] sm:$0xf]
      %v532 = vld [vmem:[%s1 + $0x88] sm:$0xf]
      %v533 = vld [vmem:[%s1 + $0x8c] sm:$0xf]
      %v534 = vld [vmem:[%s1 + $0x90] sm:$0xf]
      %v535 = vld [vmem:[%s1 + $0x94] sm:$0xf]
      %v536 = vld [vmem:[%s1 + $0x98] sm:$0xf]
      %v537 = vld [vmem:[%s1 + $0x9c] sm:$0xf]
      %v538 = vld [vmem:[%s1 + $0xa0] sm:$0xf]
      %v539 = vld [vmem:[%s1 + $0xa4] sm:$0xf]
      %v540 = vld [vmem:[%s1 + $0xa8] sm:$0xf]
      %v541 = vld [vmem:[%s1 + $0xac] sm:$0xf]
      %v542 = vld [vmem:[%s1 + $0xb0] sm:$0xf]
      %v543 = vld [vmem:[%s1 + $0xb4] sm:$0xf]
      %v544 = vld [vmem:[%s1 + $0xb8] sm:$0xf]
      %v545 = vld [vmem:[%s1 + $0xbc] sm:$0xf]
      %v546 = vld [vmem:[%s1 + $0xc0] sm:$0xf]
      %v547 = vld [vmem:[%s1 + $0xc4] sm:$0xf]
      %v548 = vld [vmem:[%s1 + $0xc8] sm:$0xf]
      %v549 = vld [vmem:[%s1 + $0xcc] sm:$0xf]
      %v550 = vld [vmem:[%s1 + $0xd0] sm:$0xf]
      %v551 = vld [vmem:[%s1 + $0xd4] sm:$0xf]
      %v552 = vld [vmem:[%s1 + $0xd8] sm:$0xf]
      %v553 = vld [vmem:[%s1 + $0xdc] sm:$0xf]
      %v554 = vld [vmem:[%s1 + $0xe0] sm:$0xf]
      %v555 = vld [vmem:[%s1 + $0xe4] sm:$0xf]
      %v556 = vld [vmem:[%s1 + $0xe8] sm:$0xf]
      %v557 = vld [vmem:[%s1 + $0xec] sm:$0xf]
      %v558 = vld [vmem:[%s1 + $0xf0] sm:$0xf]
      %v559 = vld [vmem:[%s1 + $0xf4] sm:$0xf]
      %v560 = vld [vmem:[%s1 + $0xf8] sm:$0xf]
      %v561 = vld [vmem:[%s1 + $0xfc] sm:$0xf]
      %v562 = vld [vmem:[%s1 + $0x100] sm:$0xf]
      %v563 = vld [vmem:[%s1 + $0x104] sm:$0xf]
      %v564 = vld [vmem:[%s1 + $0x108] sm:$0xf]
      %v565 = vld [vmem:[%s1 + $0x10c] sm:$0xf]
      %v566 = vld [vmem:[%s1 + $0x110] sm:$0xf]
      %v567 = vld [vmem:[%s1 + $0x114] sm:$0xf]
      %v568 = vld [vmem:[%s1 + $0x118] sm:$0xf]
      %v569 = vld [vmem:[%s1 + $0x11c] sm:$0xf]
      %v570 = vld [vmem:[%s1 + $0x120] sm:$0xf]
      %v571 = vld [vmem:[%s1 + $0x124] sm:$0xf]
      %v572 = vld [vmem:[%s1 + $0x128] sm:$0xf]
      %v573 = vld [vmem:[%s1 + $0x12c] sm:$0xf]
      %v574 = vld [vmem:[%s1 + $0x130] sm:$0xf]
      %v575 = vld [vmem:[%s1 + $0x134] sm:$0xf]
      %v576 = vld [vmem:[%s1 + $0x138] sm:$0xf]
      %v577 = vld [vmem:[%s1 + $0x13c] sm:$0xf]
      %v578 = vld [vmem:[%s1 + $0x140] sm:$0xf]
      %v579 = vld [vmem:[%s1 + $0x144] sm:$0xf]
      %v580 = vld [vmem:[%s1 + $0x148] sm:$0xf]
      %v581 = vld [vmem:[%s1 + $0x14c] sm:$0xf]
      %v582 = vld [vmem:[%s1 + $0x150] sm:$0xf]
      %v583 = vld [vmem:[%s1 + $0x154] sm:$0xf]
      %v584 = vld [vmem:[%s1 + $0x158] sm:$0xf]
      %v585 = vld [vmem:[%s1 + $0x15c] sm:$0xf]
      %v586 = vld [vmem:[%s1 + $0x160] sm:$0xf]
      %v587 = vld [vmem:[%s1 + $0x164] sm:$0xf]
      %v588 = vld [vmem:[%s1 + $0x168] sm:$0xf]
      %v589 = vld [vmem:[%s1 + $0x16c] sm:$0xf]
      %v590 = vld [vmem:[%s1 + $0x170] sm:$0xf]
      %v591 = vld [vmem:[%s1 + $0x174] sm:$0xf]
      %v592 = vld [vmem:[%s1 + $0x178] sm:$0xf]
      %v593 = vld [vmem:[%s1 + $0x17c] sm:$0xf]
      %v594 = vld [vmem:[%s1 + $0x180] sm:$0xf]
      %v595 = vld [vmem:[%s1 + $0x184] sm:$0xf]
      %v596 = vld [vmem:[%s1 + $0x188] sm:$0xf]
      %v597 = vld [vmem:[%s1 + $0x18c] sm:$0xf]
      %v598 = vld [vmem:[%s1 + $0x190] sm:$0xf]
      %v599 = vld [vmem:[%s1 + $0x194] sm:$0xf]
      %v600 = vld [vmem:[%s1 + $0x198] sm:$0xf]
      %v601 = vld [vmem:[%s1 + $0x19c] sm:$0xf]
      %v602 = vld [vmem:[%s1 + $0x1a0] sm:$0xf]
      %v603 = vld [vmem:[%s1 + $0x1a4] sm:$0xf]
      %v604 = vld [vmem:[%s1 + $0x1a8] sm:$0xf]
      %v605 = vld [vmem:[%s1 + $0x1ac] sm:$0xf]
      %v606 = vld [vmem:[%s1 + $0x1b0] sm:$0xf]
      %v607 = vld [vmem:[%s1 + $0x1b4] sm:$0xf]
      %v608 = vld [vmem:[%s1 + $0x1b8] sm:$0xf]
      %v609 = vld [vmem:[%s1 + $0x1bc] sm:$0xf]
      %v610 = vld [vmem:[%s1 + $0x1c0] sm:$0xf]
      %v611 = vld [vmem:[%s1 + $0x1c4] sm:$0xf]
      %v612 = vld [vmem:[%s1 + $0x1c8] sm:$0xf]
      %v613 = vld [vmem:[%s1 + $0x1cc] sm:$0xf]
      %v614 = vld [vmem:[%s1 + $0x1d0] sm:$0xf]
      %v615 = vld [vmem:[%s1 + $0x1d4] sm:$0xf]
      %v616 = vld [vmem:[%s1 + $0x1d8] sm:$0xf]
      %v617 = vld [vmem:[%s1 + $0x1dc] sm:$0xf]
      %v618 = vld [vmem:[%s1 + $0x1e0] sm:$0xf]
      %v619 = vld [vmem:[%s1 + $0x1e4] sm:$0xf]
      %v620 = vld [vmem:[%s1 + $0x1e8] sm:$0xf]
      %v621 = vld [vmem:[%s1 + $0x1ec] sm:$0xf]
      %v622 = vld [vmem:[%s1 + $0x1f0] sm:$0xf]
      %v623 = vld [vmem:[%s1 + $0x1f4] sm:$0xf]
      %v624 = vld [vmem:[%s1 + $0x1f8] sm:$0xf]
      %v625 = vld [vmem:[%s1 + $0x1fc] sm:$0xf]
      %v626 = vld [vmem:[%s1 + $0x200] sm:$0xf]
      %v627 = vld [vmem:[%s1 + $0x204] sm:$0xf]
      %v628 = vld [vmem:[%s1 + $0x208] sm:$0xf]
      %v629 = vld [vmem:[%s1 + $0x20c] sm:$0xf]
      %v630 = vld [vmem:[%s1 + $0x210] sm:$0xf]
      %v631 = vld [vmem:[%s1 + $0x214] sm:$0xf]
      %v632 = vld [vmem:[%s1 + $0x218] sm:$0xf]
      %v633 = vld [vmem:[%s1 + $0x21c] sm:$0xf]
      %v634 = vld [vmem:[%s1 + $0x220] sm:$0xf]
      %v635 = vld [vmem:[%s1 + $0x224] sm:$0xf]
      %v636 = vld [vmem:[%s1 + $0x228] sm:$0xf]
      %v637 = vld [vmem:[%s1 + $0x22c] sm:$0xf]
      %v638 = vld [vmem:[%s1 + $0x230] sm:$0xf]
      %v639 = vld [vmem:[%s1 + $0x234] sm:$0xf]
      %v640 = vld [vmem:[%s1 + $0x238] sm:$0xf]
      %v641 = vld [vmem:[%s1 + $0x23c] sm:$0xf]
      %v642 = vld [vmem:[%s2] sm:$0x1]
      %v644 = vlaneseq
      %v645 = vshrl.u32 %v644, 7
      %v646 = vsub.s32 0, %v645
      %v647 = vrot.slane %v642, %v646
      %v969 = vunpack.c.l.b16 %v178
      %v970 = vunpack.c.h.b16 %v178
      %v971 = vunpack.c.l.b16 %v179
      %v972 = vunpack.c.h.b16 %v179
      %v973 = vunpack.c.l.b16 %v180
      %v974 = vunpack.c.h.b16 %v180
      %v975 = vunpack.c.l.b16 %v181
      %v976 = vunpack.c.h.b16 %v181
      %v977 = vunpack.c.l.b16 %v182
      %v978 = vunpack.c.l.b16 %v183
      %v979 = vunpack.c.h.b16 %v183
      %v980 = vunpack.c.l.b16 %v184
      %v981 = vunpack.c.h.b16 %v184
      %v982 = vunpack.c.l.b16 %v185
      %v983 = vunpack.c.h.b16 %v185
      %v984 = vunpack.c.l.b16 %v186
      %v985 = vunpack.c.h.b16 %v186
      %v986 = vunpack.c.l.b16 %v187
      %v987 = vunpack.c.l.b16 %v188
      %v988 = vunpack.c.h.b16 %v188
      %v989 = vunpack.c.l.b16 %v189
      %v990 = vunpack.c.h.b16 %v189
      %v991 = vunpack.c.l.b16 %v190
      %v992 = vunpack.c.h.b16 %v190
      %v993 = vunpack.c.l.b16 %v191
      %v994 = vunpack.c.h.b16 %v191
      %v995 = vunpack.c.l.b16 %v192
      %v996 = vunpack.c.l.b16 %v193
      %v997 = vunpack.c.h.b16 %v193
      %v998 = vunpack.c.l.b16 %v194
      %v999 = vunpack.c.h.b16 %v194
      %v1000 = vunpack.c.l.b16 %v195
      %v1001 = vunpack.c.h.b16 %v195
      %v1002 = vunpack.c.l.b16 %v196
      %v1003 = vunpack.c.h.b16 %v196
      %v1004 = vunpack.c.l.b16 %v197
      %v1005 = vunpack.c.l.b16 %v198
      %v1006 = vunpack.c.h.b16 %v198
      %v1007 = vunpack.c.l.b16 %v199
      %v1008 = vunpack.c.h.b16 %v199
      %v1009 = vunpack.c.l.b16 %v200
      %v1010 = vunpack.c.h.b16 %v200
      %v1011 = vunpack.c.l.b16 %v201
      %v1012 = vunpack.c.h.b16 %v201
      %v1013 = vunpack.c.l.b16 %v202
      %v1014 = vunpack.c.l.b16 %v203
      %v1015 = vunpack.c.h.b16 %v203
      %v1016 = vunpack.c.l.b16 %v204
      %v1017 = vunpack.c.h.b16 %v204
      %v1018 = vunpack.c.l.b16 %v205
      %v1019 = vunpack.c.h.b16 %v205
      %v1020 = vunpack.c.l.b16 %v206
      %v1021 = vunpack.c.h.b16 %v206
      %v1022 = vunpack.c.l.b16 %v207
      %v1023 = vunpack.c.l.b16 %v208
      %v1024 = vunpack.c.h.b16 %v208
      %v1025 = vunpack.c.l.b16 %v209
      %v1026 = vunpack.c.h.b16 %v209
      %v1027 = vunpack.c.l.b16 %v210
      %v1028 = vunpack.c.h.b16 %v210
      %v1029 = vunpack.c.l.b16 %v211
      %v1030 = vunpack.c.h.b16 %v211
      %v1031 = vunpack.c.l.b16 %v212
      %v1032 = vunpack.c.l.b16 %v213
      %v1033 = vunpack.c.h.b16 %v213
      %v1034 = vunpack.c.l.b16 %v214
      %v1035 = vunpack.c.h.b16 %v214
      %v1036 = vunpack.c.l.b16 %v215
      %v1037 = vunpack.c.h.b16 %v215
      %v1038 = vunpack.c.l.b16 %v216
      %v1039 = vunpack.c.h.b16 %v216
      %v1040 = vunpack.c.l.b16 %v217
      %v1041 = vunpack.c.l.b16 %v218
      %v1042 = vunpack.c.h.b16 %v218
      %v1043 = vunpack.c.l.b16 %v219
      %v1044 = vunpack.c.h.b16 %v219
      %v1045 = vunpack.c.l.b16 %v220
      %v1046 = vunpack.c.h.b16 %v220
      %v1047 = vunpack.c.l.b16 %v221
      %v1048 = vunpack.c.h.b16 %v221
      %v1049 = vunpack.c.l.b16 %v222
      %v1050 = vunpack.c.l.b16 %v223
      %v1051 = vunpack.c.h.b16 %v223
      %v1052 = vunpack.c.l.b16 %v224
      %v1053 = vunpack.c.h.b16 %v224
      %v1054 = vunpack.c.l.b16 %v225
      %v1055 = vunpack.c.h.b16 %v225
      %v1056 = vunpack.c.l.b16 %v226
      %v1057 = vunpack.c.h.b16 %v226
      %v1058 = vunpack.c.l.b16 %v227
      %v1059 = vunpack.c.l.b16 %v228
      %v1060 = vunpack.c.h.b16 %v228
      %v1061 = vunpack.c.l.b16 %v229
      %v1062 = vunpack.c.h.b16 %v229
      %v1063 = vunpack.c.l.b16 %v230
      %v1064 = vunpack.c.h.b16 %v230
      %v1065 = vunpack.c.l.b16 %v231
      %v1066 = vunpack.c.h.b16 %v231
      %v1067 = vunpack.c.l.b16 %v232
      %v1068 = vunpack.c.l.b16 %v233
      %v1069 = vunpack.c.h.b16 %v233
      %v1070 = vunpack.c.l.b16 %v234
      %v1071 = vunpack.c.h.b16 %v234
      %v1072 = vunpack.c.l.b16 %v235
      %v1073 = vunpack.c.h.b16 %v235
      %v1074 = vunpack.c.l.b16 %v236
      %v1075 = vunpack.c.h.b16 %v236
      %v1076 = vunpack.c.l.b16 %v237
      %v1077 = vunpack.c.l.b16 %v238
      %v1078 = vunpack.c.h.b16 %v238
      %v1079 = vunpack.c.l.b16 %v239
      %v1080 = vunpack.c.h.b16 %v239
      %v1081 = vunpack.c.l.b16 %v240
      %v1082 = vunpack.c.h.b16 %v240
      %v1083 = vunpack.c.l.b16 %v241
      %v1084 = vunpack.c.h.b16 %v241
      %v1085 = vunpack.c.l.b16 %v242
      %v1086 = vunpack.c.l.b16 %v243
      %v1087 = vunpack.c.h.b16 %v243
      %v1088 = vunpack.c.l.b16 %v244
      %v1089 = vunpack.c.h.b16 %v244
      %v1090 = vunpack.c.l.b16 %v245
      %v1091 = vunpack.c.h.b16 %v245
      %v1092 = vunpack.c.l.b16 %v246
      %v1093 = vunpack.c.h.b16 %v246
      %v1094 = vunpack.c.l.b16 %v247
      %v1095 = vunpack.c.l.b16 %v248
      %v1096 = vunpack.c.h.b16 %v248
      %v1097 = vunpack.c.l.b16 %v249
      %v1098 = vunpack.c.h.b16 %v249
      %v1099 = vunpack.c.l.b16 %v250
      %v1100 = vunpack.c.h.b16 %v250
      %v1101 = vunpack.c.l.b16 %v251
      %v1102 = vunpack.c.h.b16 %v251
      %v1103 = vunpack.c.l.b16 %v252
      %v1104 = vunpack.c.l.b16 %v253
      %v1105 = vunpack.c.h.b16 %v253
      %v1106 = vunpack.c.l.b16 %v254
      %v1107 = vunpack.c.h.b16 %v254
      %v1108 = vunpack.c.l.b16 %v255
      %v1109 = vunpack.c.h.b16 %v255
      %v1110 = vunpack.c.l.b16 %v256
      %v1111 = vunpack.c.h.b16 %v256
      %v1112 = vunpack.c.l.b16 %v257
      %v1113 = vunpack.c.l.b16 %v258
      %v1114 = vunpack.c.h.b16 %v258
      %v1115 = vunpack.c.l.b16 %v259
      %v1116 = vunpack.c.h.b16 %v259
      %v1117 = vunpack.c.l.b16 %v260
      %v1118 = vunpack.c.h.b16 %v260
      %v1119 = vunpack.c.l.b16 %v261
      %v1120 = vunpack.c.h.b16 %v261
      %v1121 = vunpack.c.l.b16 %v262
      %v1122 = vunpack.c.l.b16 %v263
      %v1123 = vunpack.c.h.b16 %v263
      %v1124 = vunpack.c.l.b16 %v264
      %v1125 = vunpack.c.h.b16 %v264
      %v1126 = vunpack.c.l.b16 %v265
      %v1127 = vunpack.c.h.b16 %v265
      %v1128 = vunpack.c.l.b16 %v266
      %v1129 = vunpack.c.h.b16 %v266
      %v1130 = vunpack.c.l.b16 %v267
      %v1131 = vunpack.c.l.b16 %v268
      %v1132 = vunpack.c.h.b16 %v268
      %v1133 = vunpack.c.l.b16 %v269
      %v1134 = vunpack.c.h.b16 %v269
      %v1135 = vunpack.c.l.b16 %v270
      %v1136 = vunpack.c.h.b16 %v270
      %v1137 = vunpack.c.l.b16 %v271
      %v1138 = vunpack.c.h.b16 %v271
      %v1139 = vunpack.c.l.b16 %v272
      %v1140 = vunpack.c.l.b16 %v273
      %v1141 = vunpack.c.h.b16 %v273
      %v1142 = vunpack.c.l.b16 %v274
      %v1143 = vunpack.c.h.b16 %v274
      %v1144 = vunpack.c.l.b16 %v275
      %v1145 = vunpack.c.h.b16 %v275
      %v1146 = vunpack.c.l.b16 %v276
      %v1147 = vunpack.c.h.b16 %v276
      %v1148 = vunpack.c.l.b16 %v277
      %v1149 = vunpack.c.l.b16 %v278
      %v1150 = vunpack.c.h.b16 %v278
      %v1151 = vunpack.c.l.b16 %v279
      %v1152 = vunpack.c.h.b16 %v279
      %v1153 = vunpack.c.l.b16 %v280
      %v1154 = vunpack.c.h.b16 %v280
      %v1155 = vunpack.c.l.b16 %v281
      %v1156 = vunpack.c.h.b16 %v281
      %v1157 = vunpack.c.l.b16 %v282
      %v1158 = vunpack.c.l.b16 %v283
      %v1159 = vunpack.c.h.b16 %v283
      %v1160 = vunpack.c.l.b16 %v284
      %v1161 = vunpack.c.h.b16 %v284
      %v1162 = vunpack.c.l.b16 %v285
      %v1163 = vunpack.c.h.b16 %v285
      %v1164 = vunpack.c.l.b16 %v286
      %v1165 = vunpack.c.h.b16 %v286
      %v1166 = vunpack.c.l.b16 %v287
      %v1167 = vunpack.c.l.b16 %v288
      %v1168 = vunpack.c.h.b16 %v288
      %v1169 = vunpack.c.l.b16 %v289
      %v1170 = vunpack.c.h.b16 %v289
      %v1171 = vunpack.c.l.b16 %v290
      %v1172 = vunpack.c.h.b16 %v290
      %v1173 = vunpack.c.l.b16 %v291
      %v1174 = vunpack.c.h.b16 %v291
      %v1175 = vunpack.c.l.b16 %v292
      %v1176 = vunpack.c.l.b16 %v293
      %v1177 = vunpack.c.h.b16 %v293
      %v1178 = vunpack.c.l.b16 %v294
      %v1179 = vunpack.c.h.b16 %v294
      %v1180 = vunpack.c.l.b16 %v295
      %v1181 = vunpack.c.h.b16 %v295
      %v1182 = vunpack.c.l.b16 %v296
      %v1183 = vunpack.c.h.b16 %v296
      %v1184 = vunpack.c.l.b16 %v297
      %v1185 = vunpack.c.l.b16 %v298
      %v1186 = vunpack.c.h.b16 %v298
      %v1187 = vunpack.c.l.b16 %v299
      %v1188 = vunpack.c.h.b16 %v299
      %v1189 = vunpack.c.l.b16 %v300
      %v1190 = vunpack.c.h.b16 %v300
      %v1191 = vunpack.c.l.b16 %v301
      %v1192 = vunpack.c.h.b16 %v301
      %v1193 = vunpack.c.l.b16 %v302
      %v1194 = vunpack.c.l.b16 %v303
      %v1195 = vunpack.c.h.b16 %v303
      %v1196 = vunpack.c.l.b16 %v304
      %v1197 = vunpack.c.h.b16 %v304
      %v1198 = vunpack.c.l.b16 %v305
      %v1199 = vunpack.c.h.b16 %v305
      %v1200 = vunpack.c.l.b16 %v306
      %v1201 = vunpack.c.h.b16 %v306
      %v1202 = vunpack.c.l.b16 %v307
      %v1203 = vunpack.c.l.b16 %v308
      %v1204 = vunpack.c.h.b16 %v308
      %v1205 = vunpack.c.l.b16 %v309
      %v1206 = vunpack.c.h.b16 %v309
      %v1207 = vunpack.c.l.b16 %v310
      %v1208 = vunpack.c.h.b16 %v310
      %v1209 = vunpack.c.l.b16 %v311
      %v1210 = vunpack.c.h.b16 %v311
      %v1211 = vunpack.c.l.b16 %v312
      %v1212 = vunpack.c.l.b16 %v313
      %v1213 = vunpack.c.h.b16 %v313
      %v1214 = vunpack.c.l.b16 %v314
      %v1215 = vunpack.c.h.b16 %v314
      %v1216 = vunpack.c.l.b16 %v315
      %v1217 = vunpack.c.h.b16 %v315
      %v1218 = vunpack.c.l.b16 %v316
      %v1219 = vunpack.c.h.b16 %v316
      %v1220 = vunpack.c.l.b16 %v317
      %v1221 = vunpack.c.l.b16 %v318
      %v1222 = vunpack.c.h.b16 %v318
      %v1223 = vunpack.c.l.b16 %v319
      %v1224 = vunpack.c.h.b16 %v319
      %v1225 = vunpack.c.l.b16 %v320
      %v1226 = vunpack.c.h.b16 %v320
      %v1227 = vunpack.c.l.b16 %v321
      %v1228 = vunpack.c.h.b16 %v321
      %v1229 = vunpack.c.l.b16 %v322
      %v1230 = vunpack.c.l.b16 %v323
      %v1231 = vunpack.c.h.b16 %v323
      %v1232 = vunpack.c.l.b16 %v324
      %v1233 = vunpack.c.h.b16 %v324
      %v1234 = vunpack.c.l.b16 %v325
      %v1235 = vunpack.c.h.b16 %v325
      %v1236 = vunpack.c.l.b16 %v326
      %v1237 = vunpack.c.h.b16 %v326
      %v1238 = vunpack.c.l.b16 %v327
      %v1239 = vunpack.c.l.b16 %v328
      %v1240 = vunpack.c.h.b16 %v328
      %v1241 = vunpack.c.l.b16 %v329
      %v1242 = vunpack.c.h.b16 %v329
      %v1243 = vunpack.c.l.b16 %v330
      %v1244 = vunpack.c.h.b16 %v330
      %v1245 = vunpack.c.l.b16 %v331
      %v1246 = vunpack.c.h.b16 %v331
      %v1247 = vunpack.c.l.b16 %v332
      %v1248 = vunpack.c.l.b16 %v333
      %v1249 = vunpack.c.h.b16 %v333
      %v1250 = vunpack.c.l.b16 %v334
      %v1251 = vunpack.c.h.b16 %v334
      %v1252 = vunpack.c.l.b16 %v335
      %v1253 = vunpack.c.h.b16 %v335
      %v1254 = vunpack.c.l.b16 %v336
      %v1255 = vunpack.c.h.b16 %v336
      %v1256 = vunpack.c.l.b16 %v337
      %v1257 = vunpack.c.l.b16 %v338
      %v1258 = vunpack.c.h.b16 %v338
      %v1259 = vunpack.c.l.b16 %v339
      %v1260 = vunpack.c.h.b16 %v339
      %v1261 = vunpack.c.l.b16 %v340
      %v1262 = vunpack.c.h.b16 %v340
      %v1263 = vunpack.c.l.b16 %v341
      %v1264 = vunpack.c.h.b16 %v341
      %v1265 = vunpack.c.l.b16 %v342
      %v1266 = vunpack.c.l.b16 %v343
      %v1267 = vunpack.c.h.b16 %v343
      %v1268 = vunpack.c.l.b16 %v344
      %v1269 = vunpack.c.h.b16 %v344
      %v1270 = vunpack.c.l.b16 %v345
      %v1271 = vunpack.c.h.b16 %v345
      %v1272 = vunpack.c.l.b16 %v346
      %v1273 = vunpack.c.h.b16 %v346
      %v1274 = vunpack.c.l.b16 %v347
      %v1275 = vunpack.c.l.b16 %v348
      %v1276 = vunpack.c.h.b16 %v348
      %v1277 = vunpack.c.l.b16 %v349
      %v1278 = vunpack.c.h.b16 %v349
      %v1279 = vunpack.c.l.b16 %v350
      %v1280 = vunpack.c.h.b16 %v350
      %v1281 = vunpack.c.l.b16 %v351
      %v1282 = vunpack.c.h.b16 %v351
      %v1283 = vunpack.c.l.b16 %v352
      %v1284 = vunpack.c.l.b16 %v353
      %v1285 = vunpack.c.h.b16 %v353
      %v1286 = vunpack.c.l.b16 %v354
      %v1287 = vunpack.c.h.b16 %v354
      %v1288 = vunpack.c.l.b16 %v355
      %v1289 = vunpack.c.h.b16 %v355
      %v1290 = vunpack.c.l.b16 %v356
      %v1291 = vunpack.c.h.b16 %v356
      %v1292 = vunpack.c.l.b16 %v357
      %v1293 = vunpack.c.l.b16 %v358
      %v1294 = vunpack.c.h.b16 %v358
      %v1295 = vunpack.c.l.b16 %v359
      %v1296 = vunpack.c.h.b16 %v359
      %v1297 = vunpack.c.l.b16 %v360
      %v1298 = vunpack.c.h.b16 %v360
      %v1299 = vunpack.c.l.b16 %v361
      %v1300 = vunpack.c.h.b16 %v361
      %v1301 = vunpack.c.l.b16 %v362
      %v1302 = vunpack.c.l.b16 %v363
      %v1303 = vunpack.c.h.b16 %v363
      %v1304 = vunpack.c.l.b16 %v364
      %v1305 = vunpack.c.h.b16 %v364
      %v1306 = vunpack.c.l.b16 %v365
      %v1307 = vunpack.c.h.b16 %v365
      %v1308 = vunpack.c.l.b16 %v366
      %v1309 = vunpack.c.h.b16 %v366
      %v1310 = vunpack.c.l.b16 %v367
      %v1311 = vunpack.c.l.b16 %v368
      %v1312 = vunpack.c.h.b16 %v368
      %v1313 = vunpack.c.l.b16 %v369
      %v1314 = vunpack.c.h.b16 %v369
      %v1315 = vunpack.c.l.b16 %v370
      %v1316 = vunpack.c.h.b16 %v370
      %v1317 = vunpack.c.l.b16 %v371
      %v1318 = vunpack.c.h.b16 %v371
      %v1319 = vunpack.c.l.b16 %v372
      %v1320 = vunpack.c.l.b16 %v373
      %v1321 = vunpack.c.h.b16 %v373
      %v1322 = vunpack.c.l.b16 %v374
      %v1323 = vunpack.c.h.b16 %v374
      %v1324 = vunpack.c.l.b16 %v375
      %v1325 = vunpack.c.h.b16 %v375
      %v1326 = vunpack.c.l.b16 %v376
      %v1327 = vunpack.c.h.b16 %v376
      %v1328 = vunpack.c.l.b16 %v377
      %v1329 = vunpack.c.l.b16 %v378
      %v1330 = vunpack.c.h.b16 %v378
      %v1331 = vunpack.c.l.b16 %v379
      %v1332 = vunpack.c.h.b16 %v379
      %v1333 = vunpack.c.l.b16 %v380
      %v1334 = vunpack.c.h.b16 %v380
      %v1335 = vunpack.c.l.b16 %v381
      %v1336 = vunpack.c.h.b16 %v381
      %v1337 = vunpack.c.l.b16 %v382
      %v1338 = vunpack.c.l.b16 %v383
      %v1339 = vunpack.c.h.b16 %v383
      %v1340 = vunpack.c.l.b16 %v384
      %v1341 = vunpack.c.h.b16 %v384
      %v1342 = vunpack.c.l.b16 %v385
      %v1343 = vunpack.c.h.b16 %v385
      %v1344 = vunpack.c.l.b16 %v386
      %v1345 = vunpack.c.h.b16 %v386
      %v1346 = vunpack.c.l.b16 %v387
      %v1347 = vunpack.c.l.b16 %v388
      %v1348 = vunpack.c.h.b16 %v388
      %v1349 = vunpack.c.l.b16 %v389
      %v1350 = vunpack.c.h.b16 %v389
      %v1351 = vunpack.c.l.b16 %v390
      %v1352 = vunpack.c.h.b16 %v390
      %v1353 = vunpack.c.l.b16 %v391
      %v1354 = vunpack.c.h.b16 %v391
      %v1355 = vunpack.c.l.b16 %v392
      %v1356 = vunpack.c.l.b16 %v393
      %v1357 = vunpack.c.h.b16 %v393
      %v1358 = vunpack.c.l.b16 %v394
      %v1359 = vunpack.c.h.b16 %v394
      %v1360 = vunpack.c.l.b16 %v395
      %v1361 = vunpack.c.h.b16 %v395
      %v1362 = vunpack.c.l.b16 %v396
      %v1363 = vunpack.c.h.b16 %v396
      %v1364 = vunpack.c.l.b16 %v397
      %v1365 = vunpack.c.l.b16 %v398
      %v1366 = vunpack.c.h.b16 %v398
      %v1367 = vunpack.c.l.b16 %v399
      %v1368 = vunpack.c.h.b16 %v399
      %v1369 = vunpack.c.l.b16 %v400
      %v1370 = vunpack.c.h.b16 %v400
      %v1371 = vunpack.c.l.b16 %v401
      %v1372 = vunpack.c.h.b16 %v401
      %v1373 = vunpack.c.l.b16 %v402
      %v1374 = vunpack.c.l.b16 %v403
      %v1375 = vunpack.c.h.b16 %v403
      %v1376 = vunpack.c.l.b16 %v404
      %v1377 = vunpack.c.h.b16 %v404
      %v1378 = vunpack.c.l.b16 %v405
      %v1379 = vunpack.c.h.b16 %v405
      %v1380 = vunpack.c.l.b16 %v406
      %v1381 = vunpack.c.h.b16 %v406
      %v1382 = vunpack.c.l.b16 %v407
      %v1383 = vunpack.c.l.b16 %v408
      %v1384 = vunpack.c.h.b16 %v408
      %v1385 = vunpack.c.l.b16 %v409
      %v1386 = vunpack.c.h.b16 %v409
      %v1387 = vunpack.c.l.b16 %v410
      %v1388 = vunpack.c.h.b16 %v410
      %v1389 = vunpack.c.l.b16 %v411
      %v1390 = vunpack.c.h.b16 %v411
      %v1391 = vunpack.c.l.b16 %v412
      %v1392 = vunpack.c.l.b16 %v413
      %v1393 = vunpack.c.h.b16 %v413
      %v1394 = vunpack.c.l.b16 %v414
      %v1395 = vunpack.c.h.b16 %v414
      %v1396 = vunpack.c.l.b16 %v415
      %v1397 = vunpack.c.h.b16 %v415
      %v1398 = vunpack.c.l.b16 %v416
      %v1399 = vunpack.c.h.b16 %v416
      %v1400 = vunpack.c.l.b16 %v417
      %v1401 = vunpack.c.l.b16 %v418
      %v1402 = vunpack.c.h.b16 %v418
      %v1403 = vunpack.c.l.b16 %v419
      %v1404 = vunpack.c.h.b16 %v419
      %v1405 = vunpack.c.l.b16 %v420
      %v1406 = vunpack.c.h.b16 %v420
      %v1407 = vunpack.c.l.b16 %v421
      %v1408 = vunpack.c.h.b16 %v421
      %v1409 = vunpack.c.l.b16 %v422
      %v1410 = vunpack.c.l.b16 %v423
      %v1411 = vunpack.c.h.b16 %v423
      %v1412 = vunpack.c.l.b16 %v424
      %v1413 = vunpack.c.h.b16 %v424
      %v1414 = vunpack.c.l.b16 %v425
      %v1415 = vunpack.c.h.b16 %v425
      %v1416 = vunpack.c.l.b16 %v426
      %v1417 = vunpack.c.h.b16 %v426
      %v1418 = vunpack.c.l.b16 %v427
      %v1419 = vunpack.c.l.b16 %v428
      %v1420 = vunpack.c.h.b16 %v428
      %v1421 = vunpack.c.l.b16 %v429
      %v1422 = vunpack.c.h.b16 %v429
      %v1423 = vunpack.c.l.b16 %v430
      %v1424 = vunpack.c.h.b16 %v430
      %v1425 = vunpack.c.l.b16 %v431
      %v1426 = vunpack.c.h.b16 %v431
      %v1427 = vunpack.c.l.b16 %v432
      %v1428 = vunpack.c.l.b16 %v433
      %v1429 = vunpack.c.h.b16 %v433
      %v1430 = vunpack.c.l.b16 %v434
      %v1431 = vunpack.c.h.b16 %v434
      %v1432 = vunpack.c.l.b16 %v435
      %v1433 = vunpack.c.h.b16 %v435
      %v1434 = vunpack.c.l.b16 %v436
      %v1435 = vunpack.c.h.b16 %v436
      %v1436 = vunpack.c.l.b16 %v437
      %v1437 = vunpack.c.l.b16 %v438
      %v1438 = vunpack.c.h.b16 %v438
      %v1439 = vunpack.c.l.b16 %v439
      %v1440 = vunpack.c.h.b16 %v439
      %v1441 = vunpack.c.l.b16 %v440
      %v1442 = vunpack.c.h.b16 %v440
      %v1443 = vunpack.c.l.b16 %v441
      %v1444 = vunpack.c.h.b16 %v441
      %v1445 = vunpack.c.l.b16 %v442
      %v1446 = vunpack.c.l.b16 %v443
      %v1447 = vunpack.c.h.b16 %v443
      %v1448 = vunpack.c.l.b16 %v444
      %v1449 = vunpack.c.h.b16 %v444
      %v1450 = vunpack.c.l.b16 %v445
      %v1451 = vunpack.c.h.b16 %v445
      %v1452 = vunpack.c.l.b16 %v446
      %v1453 = vunpack.c.h.b16 %v446
      %v1454 = vunpack.c.l.b16 %v447
      %v1455 = vunpack.c.l.b16 %v448
      %v1456 = vunpack.c.h.b16 %v448
      %v1457 = vunpack.c.l.b16 %v449
      %v1458 = vunpack.c.h.b16 %v449
      %v1459 = vunpack.c.l.b16 %v450
      %v1460 = vunpack.c.h.b16 %v450
      %v1461 = vunpack.c.l.b16 %v451
      %v1462 = vunpack.c.h.b16 %v451
      %v1463 = vunpack.c.l.b16 %v452
      %v1464 = vunpack.c.l.b16 %v453
      %v1465 = vunpack.c.h.b16 %v453
      %v1466 = vunpack.c.l.b16 %v454
      %v1467 = vunpack.c.h.b16 %v454
      %v1468 = vunpack.c.l.b16 %v455
      %v1469 = vunpack.c.h.b16 %v455
      %v1470 = vunpack.c.l.b16 %v456
      %v1471 = vunpack.c.h.b16 %v456
      %v1472 = vunpack.c.l.b16 %v457
      %v1473 = vunpack.c.l.b16 %v458
      %v1474 = vunpack.c.h.b16 %v458
      %v1475 = vunpack.c.l.b16 %v459
      %v1476 = vunpack.c.h.b16 %v459
      %v1477 = vunpack.c.l.b16 %v460
      %v1478 = vunpack.c.h.b16 %v460
      %v1479 = vunpack.c.l.b16 %v461
      %v1480 = vunpack.c.h.b16 %v461
      %v1481 = vunpack.c.l.b16 %v462
      %v1482 = vunpack.c.l.b16 %v463
      %v1483 = vunpack.c.h.b16 %v463
      %v1484 = vunpack.c.l.b16 %v464
      %v1485 = vunpack.c.h.b16 %v464
      %v1486 = vunpack.c.l.b16 %v465
      %v1487 = vunpack.c.h.b16 %v465
      %v1488 = vunpack.c.l.b16 %v466
      %v1489 = vunpack.c.h.b16 %v466
      %v1490 = vunpack.c.l.b16 %v467
      %v1491 = vunpack.c.l.b16 %v468
      %v1492 = vunpack.c.h.b16 %v468
      %v1493 = vunpack.c.l.b16 %v469
      %v1494 = vunpack.c.h.b16 %v469
      %v1495 = vunpack.c.l.b16 %v470
      %v1496 = vunpack.c.h.b16 %v470
      %v1497 = vunpack.c.l.b16 %v471
      %v1498 = vunpack.c.h.b16 %v471
      %v1499 = vunpack.c.l.b16 %v472
      %v1500 = vunpack.c.l.b16 %v473
      %v1501 = vunpack.c.h.b16 %v473
      %v1502 = vunpack.c.l.b16 %v474
      %v1503 = vunpack.c.h.b16 %v474
      %v1504 = vunpack.c.l.b16 %v475
      %v1505 = vunpack.c.h.b16 %v475
      %v1506 = vunpack.c.l.b16 %v476
      %v1507 = vunpack.c.h.b16 %v476
      %v1508 = vunpack.c.l.b16 %v477
      %v1509 = vunpack.c.l.b16 %v478
      %v1510 = vunpack.c.h.b16 %v478
      %v1511 = vunpack.c.l.b16 %v479
      %v1512 = vunpack.c.h.b16 %v479
      %v1513 = vunpack.c.l.b16 %v480
      %v1514 = vunpack.c.h.b16 %v480
      %v1515 = vunpack.c.l.b16 %v481
      %v1516 = vunpack.c.h.b16 %v481
      %v1517 = vunpack.c.l.b16 %v482
      %v1518 = vunpack.c.l.b16 %v483
      %v1519 = vunpack.c.h.b16 %v483
      %v1520 = vunpack.c.l.b16 %v484
      %v1521 = vunpack.c.h.b16 %v484
      %v1522 = vunpack.c.l.b16 %v485
      %v1523 = vunpack.c.h.b16 %v485
      %v1524 = vunpack.c.l.b16 %v486
      %v1525 = vunpack.c.h.b16 %v486
      %v1526 = vunpack.c.l.b16 %v487
      %v1527 = vunpack.c.l.b16 %v488
      %v1528 = vunpack.c.h.b16 %v488
      %v1529 = vunpack.c.l.b16 %v489
      %v1530 = vunpack.c.h.b16 %v489
      %v1531 = vunpack.c.l.b16 %v490
      %v1532 = vunpack.c.h.b16 %v490
      %v1533 = vunpack.c.l.b16 %v491
      %v1534 = vunpack.c.h.b16 %v491
      %v1535 = vunpack.c.l.b16 %v492
      %v1536 = vunpack.c.l.b16 %v493
      %v1537 = vunpack.c.h.b16 %v493
      %v1538 = vunpack.c.l.b16 %v494
      %v1539 = vunpack.c.h.b16 %v494
      %v1540 = vunpack.c.l.b16 %v495
      %v1541 = vunpack.c.h.b16 %v495
      %v1542 = vunpack.c.l.b16 %v496
      %v1543 = vunpack.c.h.b16 %v496
      %v1544 = vunpack.c.l.b16 %v497
      %v1545 = vpack.c.b16 %v978, %v969
      %v1546 = vpack.c.b16 %v979, %v970
      %v1547 = vpack.c.b16 %v980, %v971
      %v1548 = vpack.c.b16 %v981, %v972
      %v1549 = vpack.c.b16 %v982, %v973
      %v1550 = vpack.c.b16 %v983, %v974
      %v1551 = vpack.c.b16 %v984, %v975
      %v1552 = vpack.c.b16 %v985, %v976
      %v1553 = vpack.c.b16 %v986, %v977
      %v1554 = vpack.c.b16 %v996, %v987
      %v1555 = vpack.c.b16 %v997, %v988
      %v1556 = vpack.c.b16 %v998, %v989
      %v1557 = vpack.c.b16 %v999, %v990
      %v1558 = vpack.c.b16 %v1000, %v991
      %v1559 = vpack.c.b16 %v1001, %v992
      %v1560 = vpack.c.b16 %v1002, %v993
      %v1561 = vpack.c.b16 %v1003, %v994
      %v1562 = vpack.c.b16 %v1004, %v995
      %v1563 = vpack.c.b16 %v1014, %v1005
      %v1564 = vpack.c.b16 %v1015, %v1006
      %v1565 = vpack.c.b16 %v1016, %v1007
      %v1566 = vpack.c.b16 %v1017, %v1008
      %v1567 = vpack.c.b16 %v1018, %v1009
      %v1568 = vpack.c.b16 %v1019, %v1010
      %v1569 = vpack.c.b16 %v1020, %v1011
      %v1570 = vpack.c.b16 %v1021, %v1012
      %v1571 = vpack.c.b16 %v1022, %v1013
      %v1572 = vpack.c.b16 %v1032, %v1023
      %v1573 = vpack.c.b16 %v1033, %v1024
      %v1574 = vpack.c.b16 %v1034, %v1025
      %v1575 = vpack.c.b16 %v1035, %v1026
      %v1576 = vpack.c.b16 %v1036, %v1027
      %v1577 = vpack.c.b16 %v1037, %v1028
      %v1578 = vpack.c.b16 %v1038, %v1029
      %v1579 = vpack.c.b16 %v1039, %v1030
      %v1580 = vpack.c.b16 %v1040, %v1031
      %v1581 = vpack.c.b16 %v1050, %v1041
      %v1582 = vpack.c.b16 %v1051, %v1042
      %v1583 = vpack.c.b16 %v1052, %v1043
      %v1584 = vpack.c.b16 %v1053, %v1044
      %v1585 = vpack.c.b16 %v1054, %v1045
      %v1586 = vpack.c.b16 %v1055, %v1046
      %v1587 = vpack.c.b16 %v1056, %v1047
      %v1588 = vpack.c.b16 %v1057, %v1048
      %v1589 = vpack.c.b16 %v1058, %v1049
      %v1590 = vpack.c.b16 %v1068, %v1059
      %v1591 = vpack.c.b16 %v1069, %v1060
      %v1592 = vpack.c.b16 %v1070, %v1061
      %v1593 = vpack.c.b16 %v1071, %v1062
      %v1594 = vpack.c.b16 %v1072, %v1063
      %v1595 = vpack.c.b16 %v1073, %v1064
      %v1596 = vpack.c.b16 %v1074, %v1065
      %v1597 = vpack.c.b16 %v1075, %v1066
      %v1598 = vpack.c.b16 %v1076, %v1067
      %v1599 = vpack.c.b16 %v1086, %v1077
      %v1600 = vpack.c.b16 %v1087, %v1078
      %v1601 = vpack.c.b16 %v1088, %v1079
      %v1602 = vpack.c.b16 %v1089, %v1080
      %v1603 = vpack.c.b16 %v1090, %v1081
      %v1604 = vpack.c.b16 %v1091, %v1082
      %v1605 = vpack.c.b16 %v1092, %v1083
      %v1606 = vpack.c.b16 %v1093, %v1084
      %v1607 = vpack.c.b16 %v1094, %v1085
      %v1608 = vpack.c.b16 %v1104, %v1095
      %v1609 = vpack.c.b16 %v1105, %v1096
      %v1610 = vpack.c.b16 %v1106, %v1097
      %v1611 = vpack.c.b16 %v1107, %v1098
      %v1612 = vpack.c.b16 %v1108, %v1099
      %v1613 = vpack.c.b16 %v1109, %v1100
      %v1614 = vpack.c.b16 %v1110, %v1101
      %v1615 = vpack.c.b16 %v1111, %v1102
      %v1616 = vpack.c.b16 %v1112, %v1103
      %v1617 = vpack.c.b16 %v1122, %v1113
      %v1618 = vpack.c.b16 %v1123, %v1114
      %v1619 = vpack.c.b16 %v1124, %v1115
      %v1620 = vpack.c.b16 %v1125, %v1116
      %v1621 = vpack.c.b16 %v1126, %v1117
      %v1622 = vpack.c.b16 %v1127, %v1118
      %v1623 = vpack.c.b16 %v1128, %v1119
      %v1624 = vpack.c.b16 %v1129, %v1120
      %v1625 = vpack.c.b16 %v1130, %v1121
      %v1626 = vpack.c.b16 %v1140, %v1131
      %v1627 = vpack.c.b16 %v1141, %v1132
      %v1628 = vpack.c.b16 %v1142, %v1133
      %v1629 = vpack.c.b16 %v1143, %v1134
      %v1630 = vpack.c.b16 %v1144, %v1135
      %v1631 = vpack.c.b16 %v1145, %v1136
      %v1632 = vpack.c.b16 %v1146, %v1137
      %v1633 = vpack.c.b16 %v1147, %v1138
      %v1634 = vpack.c.b16 %v1148, %v1139
      %v1635 = vpack.c.b16 %v1158, %v1149
      %v1636 = vpack.c.b16 %v1159, %v1150
      %v1637 = vpack.c.b16 %v1160, %v1151
      %v1638 = vpack.c.b16 %v1161, %v1152
      %v1639 = vpack.c.b16 %v1162, %v1153
      %v1640 = vpack.c.b16 %v1163, %v1154
      %v1641 = vpack.c.b16 %v1164, %v1155
      %v1642 = vpack.c.b16 %v1165, %v1156
      %v1643 = vpack.c.b16 %v1166, %v1157
      %v1644 = vpack.c.b16 %v1176, %v1167
      %v1645 = vpack.c.b16 %v1177, %v1168
      %v1646 = vpack.c.b16 %v1178, %v1169
      %v1647 = vpack.c.b16 %v1179, %v1170
      %v1648 = vpack.c.b16 %v1180, %v1171
      %v1649 = vpack.c.b16 %v1181, %v1172
      %v1650 = vpack.c.b16 %v1182, %v1173
      %v1651 = vpack.c.b16 %v1183, %v1174
      %v1652 = vpack.c.b16 %v1184, %v1175
      %v1653 = vpack.c.b16 %v1194, %v1185
      %v1654 = vpack.c.b16 %v1195, %v1186
      %v1655 = vpack.c.b16 %v1196, %v1187
      %v1656 = vpack.c.b16 %v1197, %v1188
      %v1657 = vpack.c.b16 %v1198, %v1189
      %v1658 = vpack.c.b16 %v1199, %v1190
      %v1659 = vpack.c.b16 %v1200, %v1191
      %v1660 = vpack.c.b16 %v1201, %v1192
      %v1661 = vpack.c.b16 %v1202, %v1193
      %v1662 = vpack.c.b16 %v1212, %v1203
      %v1663 = vpack.c.b16 %v1213, %v1204
      %v1664 = vpack.c.b16 %v1214, %v1205
      %v1665 = vpack.c.b16 %v1215, %v1206
      %v1666 = vpack.c.b16 %v1216, %v1207
      %v1667 = vpack.c.b16 %v1217, %v1208
      %v1668 = vpack.c.b16 %v1218, %v1209
      %v1669 = vpack.c.b16 %v1219, %v1210
      %v1670 = vpack.c.b16 %v1220, %v1211
      %v1671 = vpack.c.b16 %v1230, %v1221
      %v1672 = vpack.c.b16 %v1231, %v1222
      %v1673 = vpack.c.b16 %v1232, %v1223
      %v1674 = vpack.c.b16 %v1233, %v1224
      %v1675 = vpack.c.b16 %v1234, %v1225
      %v1676 = vpack.c.b16 %v1235, %v1226
      %v1677 = vpack.c.b16 %v1236, %v1227
      %v1678 = vpack.c.b16 %v1237, %v1228
      %v1679 = vpack.c.b16 %v1238, %v1229
      %v1680 = vpack.c.b16 %v1248, %v1239
      %v1681 = vpack.c.b16 %v1249, %v1240
      %v1682 = vpack.c.b16 %v1250, %v1241
      %v1683 = vpack.c.b16 %v1251, %v1242
      %v1684 = vpack.c.b16 %v1252, %v1243
      %v1685 = vpack.c.b16 %v1253, %v1244
      %v1686 = vpack.c.b16 %v1254, %v1245
      %v1687 = vpack.c.b16 %v1255, %v1246
      %v1688 = vpack.c.b16 %v1256, %v1247
      %v1689 = vpack.c.b16 %v1266, %v1257
      %v1690 = vpack.c.b16 %v1267, %v1258
      %v1691 = vpack.c.b16 %v1268, %v1259
      %v1692 = vpack.c.b16 %v1269, %v1260
      %v1693 = vpack.c.b16 %v1270, %v1261
      %v1694 = vpack.c.b16 %v1271, %v1262
      %v1695 = vpack.c.b16 %v1272, %v1263
      %v1696 = vpack.c.b16 %v1273, %v1264
      %v1697 = vpack.c.b16 %v1274, %v1265
      %v1698 = vpack.c.b16 %v1284, %v1275
      %v1699 = vpack.c.b16 %v1285, %v1276
      %v1700 = vpack.c.b16 %v1286, %v1277
      %v1701 = vpack.c.b16 %v1287, %v1278
      %v1702 = vpack.c.b16 %v1288, %v1279
      %v1703 = vpack.c.b16 %v1289, %v1280
      %v1704 = vpack.c.b16 %v1290, %v1281
      %v1705 = vpack.c.b16 %v1291, %v1282
      %v1706 = vpack.c.b16 %v1292, %v1283
      %v1707 = vpack.c.b16 %v1302, %v1293
      %v1708 = vpack.c.b16 %v1303, %v1294
      %v1709 = vpack.c.b16 %v1304, %v1295
      %v1710 = vpack.c.b16 %v1305, %v1296
      %v1711 = vpack.c.b16 %v1306, %v1297
      %v1712 = vpack.c.b16 %v1307, %v1298
      %v1713 = vpack.c.b16 %v1308, %v1299
      %v1714 = vpack.c.b16 %v1309, %v1300
      %v1715 = vpack.c.b16 %v1310, %v1301
      %v1716 = vpack.c.b16 %v1320, %v1311
      %v1717 = vpack.c.b16 %v1321, %v1312
      %v1718 = vpack.c.b16 %v1322, %v1313
      %v1719 = vpack.c.b16 %v1323, %v1314
      %v1720 = vpack.c.b16 %v1324, %v1315
      %v1721 = vpack.c.b16 %v1325, %v1316
      %v1722 = vpack.c.b16 %v1326, %v1317
      %v1723 = vpack.c.b16 %v1327, %v1318
      %v1724 = vpack.c.b16 %v1328, %v1319
      %v1725 = vpack.c.b16 %v1338, %v1329
      %v1726 = vpack.c.b16 %v1339, %v1330
      %v1727 = vpack.c.b16 %v1340, %v1331
      %v1728 = vpack.c.b16 %v1341, %v1332
      %v1729 = vpack.c.b16 %v1342, %v1333
      %v1730 = vpack.c.b16 %v1343, %v1334
      %v1731 = vpack.c.b16 %v1344, %v1335
      %v1732 = vpack.c.b16 %v1345, %v1336
      %v1733 = vpack.c.b16 %v1346, %v1337
      %v1734 = vpack.c.b16 %v1356, %v1347
      %v1735 = vpack.c.b16 %v1357, %v1348
      %v1736 = vpack.c.b16 %v1358, %v1349
      %v1737 = vpack.c.b16 %v1359, %v1350
      %v1738 = vpack.c.b16 %v1360, %v1351
      %v1739 = vpack.c.b16 %v1361, %v1352
      %v1740 = vpack.c.b16 %v1362, %v1353
      %v1741 = vpack.c.b16 %v1363, %v1354
      %v1742 = vpack.c.b16 %v1364, %v1355
      %v1743 = vpack.c.b16 %v1374, %v1365
      %v1744 = vpack.c.b16 %v1375, %v1366
      %v1745 = vpack.c.b16 %v1376, %v1367
      %v1746 = vpack.c.b16 %v1377, %v1368
      %v1747 = vpack.c.b16 %v1378, %v1369
      %v1748 = vpack.c.b16 %v1379, %v1370
      %v1749 = vpack.c.b16 %v1380, %v1371
      %v1750 = vpack.c.b16 %v1381, %v1372
      %v1751 = vpack.c.b16 %v1382, %v1373
      %v1752 = vpack.c.b16 %v1392, %v1383
      %v1753 = vpack.c.b16 %v1393, %v1384
      %v1754 = vpack.c.b16 %v1394, %v1385
      %v1755 = vpack.c.b16 %v1395, %v1386
      %v1756 = vpack.c.b16 %v1396, %v1387
      %v1757 = vpack.c.b16 %v1397, %v1388
      %v1758 = vpack.c.b16 %v1398, %v1389
      %v1759 = vpack.c.b16 %v1399, %v1390
      %v1760 = vpack.c.b16 %v1400, %v1391
      %v1761 = vpack.c.b16 %v1410, %v1401
      %v1762 = vpack.c.b16 %v1411, %v1402
      %v1763 = vpack.c.b16 %v1412, %v1403
      %v1764 = vpack.c.b16 %v1413, %v1404
      %v1765 = vpack.c.b16 %v1414, %v1405
      %v1766 = vpack.c.b16 %v1415, %v1406
      %v1767 = vpack.c.b16 %v1416, %v1407
      %v1768 = vpack.c.b16 %v1417, %v1408
      %v1769 = vpack.c.b16 %v1418, %v1409
      %v1770 = vpack.c.b16 %v1428, %v1419
      %v1771 = vpack.c.b16 %v1429, %v1420
      %v1772 = vpack.c.b16 %v1430, %v1421
      %v1773 = vpack.c.b16 %v1431, %v1422
      %v1774 = vpack.c.b16 %v1432, %v1423
      %v1775 = vpack.c.b16 %v1433, %v1424
      %v1776 = vpack.c.b16 %v1434, %v1425
      %v1777 = vpack.c.b16 %v1435, %v1426
      %v1778 = vpack.c.b16 %v1436, %v1427
      %v1779 = vpack.c.b16 %v1446, %v1437
      %v1780 = vpack.c.b16 %v1447, %v1438
      %v1781 = vpack.c.b16 %v1448, %v1439
      %v1782 = vpack.c.b16 %v1449, %v1440
      %v1783 = vpack.c.b16 %v1450, %v1441
      %v1784 = vpack.c.b16 %v1451, %v1442
      %v1785 = vpack.c.b16 %v1452, %v1443
      %v1786 = vpack.c.b16 %v1453, %v1444
      %v1787 = vpack.c.b16 %v1454, %v1445
      %v1788 = vpack.c.b16 %v1464, %v1455
      %v1789 = vpack.c.b16 %v1465, %v1456
      %v1790 = vpack.c.b16 %v1466, %v1457
      %v1791 = vpack.c.b16 %v1467, %v1458
      %v1792 = vpack.c.b16 %v1468, %v1459
      %v1793 = vpack.c.b16 %v1469, %v1460
      %v1794 = vpack.c.b16 %v1470, %v1461
      %v1795 = vpack.c.b16 %v1471, %v1462
      %v1796 = vpack.c.b16 %v1472, %v1463
      %v1797 = vpack.c.b16 %v1482, %v1473
      %v1798 = vpack.c.b16 %v1483, %v1474
      %v1799 = vpack.c.b16 %v1484, %v1475
      %v1800 = vpack.c.b16 %v1485, %v1476
      %v1801 = vpack.c.b16 %v1486, %v1477
      %v1802 = vpack.c.b16 %v1487, %v1478
      %v1803 = vpack.c.b16 %v1488, %v1479
      %v1804 = vpack.c.b16 %v1489, %v1480
      %v1805 = vpack.c.b16 %v1490, %v1481
      %v1806 = vpack.c.b16 %v1500, %v1491
      %v1807 = vpack.c.b16 %v1501, %v1492
      %v1808 = vpack.c.b16 %v1502, %v1493
      %v1809 = vpack.c.b16 %v1503, %v1494
      %v1810 = vpack.c.b16 %v1504, %v1495
      %v1811 = vpack.c.b16 %v1505, %v1496
      %v1812 = vpack.c.b16 %v1506, %v1497
      %v1813 = vpack.c.b16 %v1507, %v1498
      %v1814 = vpack.c.b16 %v1508, %v1499
      %v1815 = vpack.c.b16 %v1518, %v1509
      %v1816 = vpack.c.b16 %v1519, %v1510
      %v1817 = vpack.c.b16 %v1520, %v1511
      %v1818 = vpack.c.b16 %v1521, %v1512
      %v1819 = vpack.c.b16 %v1522, %v1513
      %v1820 = vpack.c.b16 %v1523, %v1514
      %v1821 = vpack.c.b16 %v1524, %v1515
      %v1822 = vpack.c.b16 %v1525, %v1516
      %v1823 = vpack.c.b16 %v1526, %v1517
      %v1824 = vpack.c.b16 %v1536, %v1527
      %v1825 = vpack.c.b16 %v1537, %v1528
      %v1826 = vpack.c.b16 %v1538, %v1529
      %v1827 = vpack.c.b16 %v1539, %v1530
      %v1828 = vpack.c.b16 %v1540, %v1531
      %v1829 = vpack.c.b16 %v1541, %v1532
      %v1830 = vpack.c.b16 %v1542, %v1533
      %v1831 = vpack.c.b16 %v1543, %v1534
      %v1832 = vpack.c.b16 %v1544, %v1535
      %v2265 = vunpack.c.l.b16 %v498
      %v2266 = vunpack.c.l.b16 %v499
      %v2267 = vunpack.c.l.b16 %v500
      %v2268 = vunpack.c.l.b16 %v501
      %v2269 = vunpack.c.l.b16 %v502
      %v2270 = vunpack.c.l.b16 %v503
      %v2271 = vunpack.c.l.b16 %v504
      %v2272 = vunpack.c.l.b16 %v505
      %v2273 = vunpack.c.l.b16 %v506
      %v2274 = vunpack.c.l.b16 %v507
      %v2275 = vunpack.c.l.b16 %v508
      %v2276 = vunpack.c.l.b16 %v509
      %v2277 = vunpack.c.l.b16 %v510
      %v2278 = vunpack.c.l.b16 %v511
      %v2279 = vunpack.c.l.b16 %v512
      %v2280 = vunpack.c.l.b16 %v513
      %v2281 = vunpack.c.l.b16 %v514
      %v2282 = vunpack.c.l.b16 %v515
      %v2283 = vunpack.c.l.b16 %v516
      %v2284 = vunpack.c.l.b16 %v517
      %v2285 = vunpack.c.l.b16 %v518
      %v2286 = vunpack.c.l.b16 %v519
      %v2287 = vunpack.c.l.b16 %v520
      %v2288 = vunpack.c.l.b16 %v521
      %v2289 = vunpack.c.l.b16 %v522
      %v2290 = vunpack.c.l.b16 %v523
      %v2291 = vunpack.c.l.b16 %v524
      %v2292 = vunpack.c.l.b16 %v525
      %v2293 = vunpack.c.l.b16 %v526
      %v2294 = vunpack.c.l.b16 %v527
      %v2295 = vunpack.c.l.b16 %v528
      %v2296 = vunpack.c.l.b16 %v529
      %v2297 = vunpack.c.l.b16 %v530
      %v2298 = vunpack.c.l.b16 %v531
      %v2299 = vunpack.c.l.b16 %v532
      %v2300 = vunpack.c.l.b16 %v533
      %v2301 = vunpack.c.l.b16 %v534
      %v2302 = vunpack.c.l.b16 %v535
      %v2303 = vunpack.c.l.b16 %v536
      %v2304 = vunpack.c.l.b16 %v537
      %v2305 = vunpack.c.l.b16 %v538
      %v2306 = vunpack.c.l.b16 %v539
      %v2307 = vunpack.c.l.b16 %v540
      %v2308 = vunpack.c.l.b16 %v541
      %v2309 = vunpack.c.l.b16 %v542
      %v2310 = vunpack.c.l.b16 %v543
      %v2311 = vunpack.c.l.b16 %v544
      %v2312 = vunpack.c.l.b16 %v545
      %v2313 = vunpack.c.l.b16 %v546
      %v2314 = vunpack.c.l.b16 %v547
      %v2315 = vunpack.c.l.b16 %v548
      %v2316 = vunpack.c.l.b16 %v549
      %v2317 = vunpack.c.l.b16 %v550
      %v2318 = vunpack.c.l.b16 %v551
      %v2319 = vunpack.c.l.b16 %v552
      %v2320 = vunpack.c.l.b16 %v553
      %v2321 = vunpack.c.l.b16 %v554
      %v2322 = vunpack.c.l.b16 %v555
      %v2323 = vunpack.c.l.b16 %v556
      %v2324 = vunpack.c.l.b16 %v557
      %v2325 = vunpack.c.l.b16 %v558
      %v2326 = vunpack.c.l.b16 %v559
      %v2327 = vunpack.c.l.b16 %v560
      %v2328 = vunpack.c.l.b16 %v561
      %v2329 = vunpack.c.l.b16 %v562
      %v2330 = vunpack.c.l.b16 %v563
      %v2331 = vunpack.c.l.b16 %v564
      %v2332 = vunpack.c.l.b16 %v565
      %v2333 = vunpack.c.l.b16 %v566
      %v2334 = vunpack.c.l.b16 %v567
      %v2335 = vunpack.c.l.b16 %v568
      %v2336 = vunpack.c.l.b16 %v569
      %v2337 = vunpack.c.l.b16 %v570
      %v2338 = vunpack.c.l.b16 %v571
      %v2339 = vunpack.c.l.b16 %v572
      %v2340 = vunpack.c.l.b16 %v573
      %v2341 = vunpack.c.l.b16 %v574
      %v2342 = vunpack.c.l.b16 %v575
      %v2343 = vunpack.c.l.b16 %v576
      %v2344 = vunpack.c.l.b16 %v577
      %v2345 = vunpack.c.l.b16 %v578
      %v2346 = vunpack.c.l.b16 %v579
      %v2347 = vunpack.c.l.b16 %v580
      %v2348 = vunpack.c.l.b16 %v581
      %v2349 = vunpack.c.l.b16 %v582
      %v2350 = vunpack.c.l.b16 %v583
      %v2351 = vunpack.c.l.b16 %v584
      %v2352 = vunpack.c.l.b16 %v585
      %v2353 = vunpack.c.l.b16 %v586
      %v2354 = vunpack.c.l.b16 %v587
      %v2355 = vunpack.c.l.b16 %v588
      %v2356 = vunpack.c.l.b16 %v589
      %v2357 = vunpack.c.l.b16 %v590
      %v2358 = vunpack.c.l.b16 %v591
      %v2359 = vunpack.c.l.b16 %v592
      %v2360 = vunpack.c.l.b16 %v593
      %v2361 = vunpack.c.l.b16 %v594
      %v2362 = vunpack.c.l.b16 %v595
      %v2363 = vunpack.c.l.b16 %v596
      %v2364 = vunpack.c.l.b16 %v597
      %v2365 = vunpack.c.l.b16 %v598
      %v2366 = vunpack.c.l.b16 %v599
      %v2367 = vunpack.c.l.b16 %v600
      %v2368 = vunpack.c.l.b16 %v601
      %v2369 = vunpack.c.l.b16 %v602
      %v2370 = vunpack.c.l.b16 %v603
      %v2371 = vunpack.c.l.b16 %v604
      %v2372 = vunpack.c.l.b16 %v605
      %v2373 = vunpack.c.l.b16 %v606
      %v2374 = vunpack.c.l.b16 %v607
      %v2375 = vunpack.c.l.b16 %v608
      %v2376 = vunpack.c.l.b16 %v609
      %v2377 = vunpack.c.l.b16 %v610
      %v2378 = vunpack.c.l.b16 %v611
      %v2379 = vunpack.c.l.b16 %v612
      %v2380 = vunpack.c.l.b16 %v613
      %v2381 = vunpack.c.l.b16 %v614
      %v2382 = vunpack.c.l.b16 %v615
      %v2383 = vunpack.c.l.b16 %v616
      %v2384 = vunpack.c.l.b16 %v617
      %v2385 = vunpack.c.l.b16 %v618
      %v2386 = vunpack.c.l.b16 %v619
      %v2387 = vunpack.c.l.b16 %v620
      %v2388 = vunpack.c.l.b16 %v621
      %v2389 = vunpack.c.l.b16 %v622
      %v2390 = vunpack.c.l.b16 %v623
      %v2391 = vunpack.c.l.b16 %v624
      %v2392 = vunpack.c.l.b16 %v625
      %v2393 = vunpack.c.l.b16 %v626
      %v2394 = vunpack.c.l.b16 %v627
      %v2395 = vunpack.c.l.b16 %v628
      %v2396 = vunpack.c.l.b16 %v629
      %v2397 = vunpack.c.l.b16 %v630
      %v2398 = vunpack.c.l.b16 %v631
      %v2399 = vunpack.c.l.b16 %v632
      %v2400 = vunpack.c.l.b16 %v633
      %v2401 = vunpack.c.l.b16 %v634
      %v2402 = vunpack.c.l.b16 %v635
      %v2403 = vunpack.c.l.b16 %v636
      %v2404 = vunpack.c.l.b16 %v637
      %v2405 = vunpack.c.l.b16 %v638
      %v2406 = vunpack.c.l.b16 %v639
      %v2407 = vunpack.c.l.b16 %v640
      %v2408 = vunpack.c.l.b16 %v641
      %v2409 = vpack.c.b16 %v2266, %v2265
      %v2410 = vpack.c.b16 %v2268, %v2267
      %v2411 = vpack.c.b16 %v2270, %v2269
      %v2412 = vpack.c.b16 %v2272, %v2271
      %v2413 = vpack.c.b16 %v2274, %v2273
      %v2414 = vpack.c.b16 %v2276, %v2275
      %v2415 = vpack.c.b16 %v2278, %v2277
      %v2416 = vpack.c.b16 %v2280, %v2279
      %v2417 = vpack.c.b16 %v2282, %v2281
      %v2418 = vpack.c.b16 %v2284, %v2283
      %v2419 = vpack.c.b16 %v2286, %v2285
      %v2420 = vpack.c.b16 %v2288, %v2287
      %v2421 = vpack.c.b16 %v2290, %v2289
      %v2422 = vpack.c.b16 %v2292, %v2291
      %v2423 = vpack.c.b16 %v2294, %v2293
      %v2424 = vpack.c.b16 %v2296, %v2295
      %v2425 = vpack.c.b16 %v2298, %v2297
      %v2426 = vpack.c.b16 %v2300, %v2299
      %v2427 = vpack.c.b16 %v2302, %v2301
      %v2428 = vpack.c.b16 %v2304, %v2303
      %v2429 = vpack.c.b16 %v2306, %v2305
      %v2430 = vpack.c.b16 %v2308, %v2307
      %v2431 = vpack.c.b16 %v2310, %v2309
      %v2432 = vpack.c.b16 %v2312, %v2311
      %v2433 = vpack.c.b16 %v2314, %v2313
      %v2434 = vpack.c.b16 %v2316, %v2315
      %v2435 = vpack.c.b16 %v2318, %v2317
      %v2436 = vpack.c.b16 %v2320, %v2319
      %v2437 = vpack.c.b16 %v2322, %v2321
      %v2438 = vpack.c.b16 %v2324, %v2323
      %v2439 = vpack.c.b16 %v2326, %v2325
      %v2440 = vpack.c.b16 %v2328, %v2327
      %v2441 = vpack.c.b16 %v2330, %v2329
      %v2442 = vpack.c.b16 %v2332, %v2331
      %v2443 = vpack.c.b16 %v2334, %v2333
      %v2444 = vpack.c.b16 %v2336, %v2335
      %v2445 = vpack.c.b16 %v2338, %v2337
      %v2446 = vpack.c.b16 %v2340, %v2339
      %v2447 = vpack.c.b16 %v2342, %v2341
      %v2448 = vpack.c.b16 %v2344, %v2343
      %v2449 = vpack.c.b16 %v2346, %v2345
      %v2450 = vpack.c.b16 %v2348, %v2347
      %v2451 = vpack.c.b16 %v2350, %v2349
      %v2452 = vpack.c.b16 %v2352, %v2351
      %v2453 = vpack.c.b16 %v2354, %v2353
      %v2454 = vpack.c.b16 %v2356, %v2355
      %v2455 = vpack.c.b16 %v2358, %v2357
      %v2456 = vpack.c.b16 %v2360, %v2359
      %v2457 = vpack.c.b16 %v2362, %v2361
      %v2458 = vpack.c.b16 %v2364, %v2363
      %v2459 = vpack.c.b16 %v2366, %v2365
      %v2460 = vpack.c.b16 %v2368, %v2367
      %v2461 = vpack.c.b16 %v2370, %v2369
      %v2462 = vpack.c.b16 %v2372, %v2371
      %v2463 = vpack.c.b16 %v2374, %v2373
      %v2464 = vpack.c.b16 %v2376, %v2375
      %v2465 = vpack.c.b16 %v2378, %v2377
      %v2466 = vpack.c.b16 %v2380, %v2379
      %v2467 = vpack.c.b16 %v2382, %v2381
      %v2468 = vpack.c.b16 %v2384, %v2383
      %v2469 = vpack.c.b16 %v2386, %v2385
      %v2470 = vpack.c.b16 %v2388, %v2387
      %v2471 = vpack.c.b16 %v2390, %v2389
      %v2472 = vpack.c.b16 %v2392, %v2391
      %v2473 = vpack.c.b16 %v2394, %v2393
      %v2474 = vpack.c.b16 %v2396, %v2395
      %v2475 = vpack.c.b16 %v2398, %v2397
      %v2476 = vpack.c.b16 %v2400, %v2399
      %v2477 = vpack.c.b16 %v2402, %v2401
      %v2478 = vpack.c.b16 %v2404, %v2403
      %v2479 = vpack.c.b16 %v2406, %v2405
      %v2480 = vpack.c.b16 %v2408, %v2407
      %2553 = vmatprep.subr.bf16.mxu0 0
      %2554 = vmatpush1.bf16.msra.mxu0 %v2409
      %2555 = vmatprep.subr.bf16.mxu0 0
      %2556 = vmatpush1.bf16.msra.mxu0 %v2410
      %2557 = vmatprep.subr.bf16.mxu0 0
      %2558 = vmatpush1.bf16.msra.mxu0 %v2411
      %2559 = vmatprep.subr.bf16.mxu0 0
      %2560 = vmatpush1.bf16.msra.mxu0 %v2412
      %2561 = vmatprep.subr.bf16.mxu0 0
      %2562 = vmatpush1.bf16.msra.mxu0 %v2413
      %2563 = vmatprep.subr.bf16.mxu0 0
      %2564 = vmatpush1.bf16.msra.mxu0 %v2414
      %2565 = vmatprep.subr.bf16.mxu0 0
      %2566 = vmatpush1.bf16.msra.mxu0 %v2415
      %2567 = vmatprep.subr.bf16.mxu0 0
      %2568 = vmatpush1.bf16.msra.mxu0 %v2416
      %2569 = vmatprep.subr.bf16.mxu0 0
      %2570 = vmatpush1.bf16.msra.mxu0 %v2417
      %2571 = vmatprep.subr.bf16.mxu0 0
      %2572 = vmatpush1.bf16.msra.mxu0 %v2418
      %2573 = vmatprep.subr.bf16.mxu0 0
      %2574 = vmatpush1.bf16.msra.mxu0 %v2419
      %2575 = vmatprep.subr.bf16.mxu0 0
      %2576 = vmatpush1.bf16.msra.mxu0 %v2420
      %2577 = vmatprep.subr.bf16.mxu0 0
      %2578 = vmatpush1.bf16.msra.mxu0 %v2421
      %2579 = vmatprep.subr.bf16.mxu0 0
      %2580 = vmatpush1.bf16.msra.mxu0 %v2422
      %2581 = vmatprep.subr.bf16.mxu0 0
      %2582 = vmatpush1.bf16.msra.mxu0 %v2423
      %2583 = vmatprep.subr.bf16.mxu0 0
      %2584 = vmatpush1.bf16.msra.mxu0 %v2424
      %2585 = vmatprep.mubr.bf16.mxu0 %v1546
      %2586 = vmatmul.mubr.bf16.gmra.mrb[0].mxu0 %v1545
      %v2587 = vpop.f32.mrb[0].mxu0
      %v2588 = vadd.f32 %v647, %v2587
      %v2589 = vpop.f32.mrb[0].mxu0
      %v2590 = vpop.f32.mrb[0].mxu0
      %v2591 = vadd.f32 %v647, %v2590
      %v2592 = vpop.f32.mrb[0].mxu0
      %2593 = vmatprep.mubr.bf16.mxu0 %v1555
      %2594 = vmatmul.mubr.bf16.gmra.mrb[0].mxu0 %v1554
      %v2595 = vpop.f32.mrb[0].mxu0
      %v2596 = vadd.f32 %v647, %v2595
      %v2597 = vpop.f32.mrb[0].mxu0
      %v2598 = vpop.f32.mrb[0].mxu0
      %v2599 = vadd.f32 %v647, %v2598
      %v2600 = vpop.f32.mrb[0].mxu0
      %2601 = vmatprep.mubr.bf16.mxu0 %v1564
      %2602 = vmatmul.mubr.bf16.gmra.mrb[0].mxu0 %v1563
      %v2603 = vpop.f32.mrb[0].mxu0
      %v2604 = vadd.f32 %v647, %v2603
      %v2605 = vpop.f32.mrb[0].mxu0
      %v2606 = vpop.f32.mrb[0].mxu0
      %v2607 = vadd.f32 %v647, %v2606
      %v2608 = vpop.f32.mrb[0].mxu0
      %2609 = vmatprep.mubr.bf16.mxu0 %v1573
      %2610 = vmatmul.mubr.bf16.gmra.mrb[0].mxu0 %v1572
      %v2611 = vpop.f32.mrb[0].mxu0
      %v2612 = vadd.f32 %v647, %v2611
      %v2613 = vpop.f32.mrb[0].mxu0
      %v2614 = vpop.f32.mrb[0].mxu0
      %v2615 = vadd.f32 %v647, %v2614
      %v2616 = vpop.f32.mrb[0].mxu0
      %2617 = vmatprep.mubr.bf16.mxu0 %v1582
      %2618 = vmatmul.mubr.bf16.gmra.mrb[0].mxu0 %v1581
      %v2619 = vpop.f32.mrb[0].mxu0
      %v2620 = vadd.f32 %v647, %v2619
      %v2621 = vpop.f32.mrb[0].mxu0
      %v2622 = vpop.f32.mrb[0].mxu0
      %v2623 = vadd.f32 %v647, %v2622
      %v2624 = vpop.f32.mrb[0].mxu0
      %2625 = vmatprep.mubr.bf16.mxu0 %v1591
      %2626 = vmatmul.mubr.bf16.gmra.mrb[0].mxu0 %v1590
      %v2627 = vpop.f32.mrb[0].mxu0
      %v2628 = vadd.f32 %v647, %v2627
      %v2629 = vpop.f32.mrb[0].mxu0
      %v2630 = vpop.f32.mrb[0].mxu0
      %v2631 = vadd.f32 %v647, %v2630
      %v2632 = vpop.f32.mrb[0].mxu0
      %2633 = vmatprep.mubr.bf16.mxu0 %v1600
      %2634 = vmatmul.mubr.bf16.gmra.mrb[0].mxu0 %v1599
      %v2635 = vpop.f32.mrb[0].mxu0
      %v2636 = vadd.f32 %v647, %v2635
      %v2637 = vpop.f32.mrb[0].mxu0
      %v2638 = vpop.f32.mrb[0].mxu0
      %v2639 = vadd.f32 %v647, %v2638
      %v2640 = vpop.f32.mrb[0].mxu0
      %2641 = vmatprep.mubr.bf16.mxu0 %v1609
      %2642 = vmatmul.mubr.bf16.gmra.mrb[0].mxu0 %v1608
      %v2643 = vpop.f32.mrb[0].mxu0
      %v2644 = vadd.f32 %v647, %v2643
      %v2645 = vpop.f32.mrb[0].mxu0
      %v2646 = vpop.f32.mrb[0].mxu0
      %v2647 = vadd.f32 %v647, %v2646
      %v2648 = vpop.f32.mrb[0].mxu0
      %2649 = vmatprep.mubr.bf16.mxu0 %v1618
      %2650 = vmatmul.mubr.bf16.gmra.mrb[0].mxu0 %v1617
      %v2651 = vpop.f32.mrb[0].mxu0
      %v2652 = vadd.f32 %v647, %v2651
      %v2653 = vpop.f32.mrb[0].mxu0
      %v2654 = vpop.f32.mrb[0].mxu0
      %v2655 = vadd.f32 %v647, %v2654
      %v2656 = vpop.f32.mrb[0].mxu0
      %2657 = vmatprep.mubr.bf16.mxu0 %v1627
      %2658 = vmatmul.mubr.bf16.gmra.mrb[0].mxu0 %v1626
      %v2659 = vpop.f32.mrb[0].mxu0
      %v2660 = vadd.f32 %v647, %v2659
      %v2661 = vpop.f32.mrb[0].mxu0
      %v2662 = vpop.f32.mrb[0].mxu0
      %v2663 = vadd.f32 %v647, %v2662
      %v2664 = vpop.f32.mrb[0].mxu0
      %2665 = vmatprep.mubr.bf16.mxu0 %v1636
      %2666 = vmatmul.mubr.bf16.gmra.mrb[0].mxu0 %v1635
      %v2667 = vpop.f32.mrb[0].mxu0
      %v2668 = vadd.f32 %v647, %v2667
      %v2669 = vpop.f32.mrb[0].mxu0
      %v2670 = vpop.f32.mrb[0].mxu0
      %v2671 = vadd.f32 %v647, %v2670
      %v2672 = vpop.f32.mrb[0].mxu0
      %2673 = vmatprep.mubr.bf16.mxu0 %v1645
      %2674 = vmatmul.mubr.bf16.gmra.mrb[0].mxu0 %v1644
      %v2675 = vpop.f32.mrb[0].mxu0
      %v2676 = vadd.f32 %v647, %v2675
      %v2677 = vpop.f32.mrb[0].mxu0
      %v2678 = vpop.f32.mrb[0].mxu0
      %v2679 = vadd.f32 %v647, %v2678
      %v2680 = vpop.f32.mrb[0].mxu0
      %2681 = vmatprep.mubr.bf16.mxu0 %v1654
      %2682 = vmatmul.mubr.bf16.gmra.mrb[0].mxu0 %v1653
      %v2683 = vpop.f32.mrb[0].mxu0
      %v2684 = vadd.f32 %v647, %v2683
      %v2685 = vpop.f32.mrb[0].mxu0
      %v2686 = vpop.f32.mrb[0].mxu0
      %v2687 = vadd.f32 %v647, %v2686
      %v2688 = vpop.f32.mrb[0].mxu0
      %2689 = vmatprep.mubr.bf16.mxu0 %v1663
      %2690 = vmatmul.mubr.bf16.gmra.mrb[0].mxu0 %v1662
      %v2691 = vpop.f32.mrb[0].mxu0
      %v2692 = vadd.f32 %v647, %v2691
      %v2693 = vpop.f32.mrb[0].mxu0
      %v2694 = vpop.f32.mrb[0].mxu0
      %v2695 = vadd.f32 %v647, %v2694
      %v2696 = vpop.f32.mrb[0].mxu0
      %2697 = vmatprep.mubr.bf16.mxu0 %v1672
      %2698 = vmatmul.mubr.bf16.gmra.mrb[0].mxu0 %v1671
      %v2699 = vpop.f32.mrb[0].mxu0
      %v2700 = vadd.f32 %v647, %v2699
      %v2701 = vpop.f32.mrb[0].mxu0
      %v2702 = vpop.f32.mrb[0].mxu0
      %v2703 = vadd.f32 %v647, %v2702
      %v2704 = vpop.f32.mrb[0].mxu0
      %2705 = vmatprep.mubr.bf16.mxu0 %v1681
      %2706 = vmatmul.mubr.bf16.gmra.mrb[0].mxu0 %v1680
      %v2707 = vpop.f32.mrb[0].mxu0
      %v2708 = vadd.f32 %v647, %v2707
      %v2709 = vpop.f32.mrb[0].mxu0
      %v2710 = vpop.f32.mrb[0].mxu0
      %v2711 = vadd.f32 %v647, %v2710
      %v2712 = vpop.f32.mrb[0].mxu0
      %2713 = vmatprep.mubr.bf16.mxu0 %v1690
      %2714 = vmatmul.mubr.bf16.gmra.mrb[0].mxu0 %v1689
      %v2715 = vpop.f32.mrb[0].mxu0
      %v2716 = vadd.f32 %v647, %v2715
      %v2717 = vpop.f32.mrb[0].mxu0
      %v2718 = vpop.f32.mrb[0].mxu0
      %v2719 = vadd.f32 %v647, %v2718
      %v2720 = vpop.f32.mrb[0].mxu0
      %2721 = vmatprep.mubr.bf16.mxu0 %v1699
      %2722 = vmatmul.mubr.bf16.gmra.mrb[0].mxu0 %v1698
      %v2723 = vpop.f32.mrb[0].mxu0
      %v2724 = vadd.f32 %v647, %v2723
      %v2725 = vpop.f32.mrb[0].mxu0
      %v2726 = vpop.f32.mrb[0].mxu0
      %v2727 = vadd.f32 %v647, %v2726
      %v2728 = vpop.f32.mrb[0].mxu0
      %2729 = vmatprep.mubr.bf16.mxu0 %v1708
      %2730 = vmatmul.mubr.bf16.gmra.mrb[0].mxu0 %v1707
      %v2731 = vpop.f32.mrb[0].mxu0
      %v2732 = vadd.f32 %v647, %v2731
      %v2733 = vpop.f32.mrb[0].mxu0
      %v2734 = vpop.f32.mrb[0].mxu0
      %v2735 = vadd.f32 %v647, %v2734
      %v2736 = vpop.f32.mrb[0].mxu0
      %2737 = vmatprep.mubr.bf16.mxu0 %v1717
      %2738 = vmatmul.mubr.bf16.gmra.mrb[0].mxu0 %v1716
      %v2739 = vpop.f32.mrb[0].mxu0
      %v2740 = vadd.f32 %v647, %v2739
      %v2741 = vpop.f32.mrb[0].mxu0
      %v2742 = vpop.f32.mrb[0].mxu0
      %v2743 = vadd.f32 %v647, %v2742
      %v2744 = vpop.f32.mrb[0].mxu0
      %2745 = vmatprep.mubr.bf16.mxu0 %v1726
      %2746 = vmatmul.mubr.bf16.gmra.mrb[0].mxu0 %v1725
      %v2747 = vpop.f32.mrb[0].mxu0
      %v2748 = vadd.f32 %v647, %v2747
      %v2749 = vpop.f32.mrb[0].mxu0
      %v2750 = vpop.f32.mrb[0].mxu0
      %v2751 = vadd.f32 %v647, %v2750
      %v2752 = vpop.f32.mrb[0].mxu0
      %2753 = vmatprep.mubr.bf16.mxu0 %v1735
      %2754 = vmatmul.mubr.bf16.gmra.mrb[0].mxu0 %v1734
      %v2755 = vpop.f32.mrb[0].mxu0
      %v2756 = vadd.f32 %v647, %v2755
      %v2757 = vpop.f32.mrb[0].mxu0
      %v2758 = vpop.f32.mrb[0].mxu0
      %v2759 = vadd.f32 %v647, %v2758
      %v2760 = vpop.f32.mrb[0].mxu0
      %2761 = vmatprep.mubr.bf16.mxu0 %v1744
      %2762 = vmatmul.mubr.bf16.gmra.mrb[0].mxu0 %v1743
      %v2763 = vpop.f32.mrb[0].mxu0
      %v2764 = vadd.f32 %v647, %v2763
      %v2765 = vpop.f32.mrb[0].mxu0
      %v2766 = vpop.f32.mrb[0].mxu0
      %v2767 = vadd.f32 %v647, %v2766
      %v2768 = vpop.f32.mrb[0].mxu0
      %2769 = vmatprep.mubr.bf16.mxu0 %v1753
      %2770 = vmatmul.mubr.bf16.gmra.mrb[0].mxu0 %v1752
      %v2771 = vpop.f32.mrb[0].mxu0
      %v2772 = vadd.f32 %v647, %v2771
      %v2773 = vpop.f32.mrb[0].mxu0
      %v2774 = vpop.f32.mrb[0].mxu0
      %v2775 = vadd.f32 %v647, %v2774
      %v2776 = vpop.f32.mrb[0].mxu0
      %2777 = vmatprep.mubr.bf16.mxu0 %v1762
      %2778 = vmatmul.mubr.bf16.gmra.mrb[0].mxu0 %v1761
      %v2779 = vpop.f32.mrb[0].mxu0
      %v2780 = vadd.f32 %v647, %v2779
      %v2781 = vpop.f32.mrb[0].mxu0
      %v2782 = vpop.f32.mrb[0].mxu0
      %v2783 = vadd.f32 %v647, %v2782
      %v2784 = vpop.f32.mrb[0].mxu0
      %2785 = vmatprep.mubr.bf16.mxu0 %v1771
      %2786 = vmatmul.mubr.bf16.gmra.mrb[0].mxu0 %v1770
      %v2787 = vpop.f32.mrb[0].mxu0
      %v2788 = vadd.f32 %v647, %v2787
      %v2789 = vpop.f32.mrb[0].mxu0
      %v2790 = vpop.f32.mrb[0].mxu0
      %v2791 = vadd.f32 %v647, %v2790
      %v2792 = vpop.f32.mrb[0].mxu0
      %2793 = vmatprep.mubr.bf16.mxu0 %v1780
      %2794 = vmatmul.mubr.bf16.gmra.mrb[0].mxu0 %v1779
      %v2795 = vpop.f32.mrb[0].mxu0
      %v2796 = vadd.f32 %v647, %v2795
      %v2797 = vpop.f32.mrb[0].mxu0
      %v2798 = vpop.f32.mrb[0].mxu0
      %v2799 = vadd.f32 %v647, %v2798
      %v2800 = vpop.f32.mrb[0].mxu0
      %2801 = vmatprep.mubr.bf16.mxu0 %v1789
      %2802 = vmatmul.mubr.bf16.gmra.mrb[0].mxu0 %v1788
      %v2803 = vpop.f32.mrb[0].mxu0
      %v2804 = vadd.f32 %v647, %v2803
      %v2805 = vpop.f32.mrb[0].mxu0
      %v2806 = vpop.f32.mrb[0].mxu0
      %v2807 = vadd.f32 %v647, %v2806
      %v2808 = vpop.f32.mrb[0].mxu0
      %2809 = vmatprep.mubr.bf16.mxu0 %v1798
      %2810 = vmatmul.mubr.bf16.gmra.mrb[0].mxu0 %v1797
      %v2811 = vpop.f32.mrb[0].mxu0
      %v2812 = vadd.f32 %v647, %v2811
      %v2813 = vpop.f32.mrb[0].mxu0
      %v2814 = vpop.f32.mrb[0].mxu0
      %v2815 = vadd.f32 %v647, %v2814
      %v2816 = vpop.f32.mrb[0].mxu0
      %2817 = vmatprep.mubr.bf16.mxu0 %v1807
      %2818 = vmatmul.mubr.bf16.gmra.mrb[0].mxu0 %v1806
      %v2819 = vpop.f32.mrb[0].mxu0
      %v2820 = vadd.f32 %v647, %v2819
      %v2821 = vpop.f32.mrb[0].mxu0
      %v2822 = vpop.f32.mrb[0].mxu0
      %v2823 = vadd.f32 %v647, %v2822
      %v2824 = vpop.f32.mrb[0].mxu0
      %2825 = vmatprep.mubr.bf16.mxu0 %v1816
      %2826 = vmatmul.mubr.bf16.gmra.mrb[0].mxu0 %v1815
      %v2827 = vpop.f32.mrb[0].mxu0
      %v2828 = vadd.f32 %v647, %v2827
      %v2829 = vpop.f32.mrb[0].mxu0
      %v2830 = vpop.f32.mrb[0].mxu0
      %v2831 = vadd.f32 %v647, %v2830
      %v2832 = vpop.f32.mrb[0].mxu0
      %2833 = vmatprep.mubr.bf16.mxu0 %v1825
      %2834 = vmatmul.mubr.bf16.gmra.mrb[0].mxu0 %v1824
      %v2835 = vpop.f32.mrb[0].mxu0
      %v2836 = vadd.f32 %v647, %v2835
      %v2837 = vpop.f32.mrb[0].mxu0
      %v2838 = vpop.f32.mrb[0].mxu0
      %v2839 = vadd.f32 %v647, %v2838
      %v2840 = vpop.f32.mrb[0].mxu0
      %2841 = vdwg.mxu0
      %2842 = vmatprep.subr.bf16.mxu0 0
      %2843 = vmatpush1.bf16.msra.mxu0 %v2425
      %2844 = vmatprep.subr.bf16.mxu0 0
      %2845 = vmatpush1.bf16.msra.mxu0 %v2426
      %2846 = vmatprep.subr.bf16.mxu0 0
      %2847 = vmatpush1.bf16.msra.mxu0 %v2427
      %2848 = vmatprep.subr.bf16.mxu0 0
      %2849 = vmatpush1.bf16.msra.mxu0 %v2428
      %2850 = vmatprep.subr.bf16.mxu0 0
      %2851 = vmatpush1.bf16.msra.mxu0 %v2429
      %2852 = vmatprep.subr.bf16.mxu0 0
      %2853 = vmatpush1.bf16.msra.mxu0 %v2430
      %2854 = vmatprep.subr.bf16.mxu0 0
      %2855 = vmatpush1.bf16.msra.mxu0 %v2431
      %2856 = vmatprep.subr.bf16.mxu0 0
      %2857 = vmatpush1.bf16.msra.mxu0 %v2432
      %2858 = vmatprep.subr.bf16.mxu0 0
      %2859 = vmatpush1.bf16.msra.mxu0 %v2433
      %2860 = vmatprep.subr.bf16.mxu0 0
      %2861 = vmatpush1.bf16.msra.mxu0 %v2434
      %2862 = vmatprep.subr.bf16.mxu0 0
      %2863 = vmatpush1.bf16.msra.mxu0 %v2435
      %2864 = vmatprep.subr.bf16.mxu0 0
      %2865 = vmatpush1.bf16.msra.mxu0 %v2436
      %2866 = vmatprep.subr.bf16.mxu0 0
      %2867 = vmatpush1.bf16.msra.mxu0 %v2437
      %2868 = vmatprep.subr.bf16.mxu0 0
      %2869 = vmatpush1.bf16.msra.mxu0 %v2438
      %2870 = vmatprep.subr.bf16.mxu0 0
      %2871 = vmatpush1.bf16.msra.mxu0 %v2439
      %2872 = vmatprep.subr.bf16.mxu0 0
      %2873 = vmatpush1.bf16.msra.mxu0 %v2440
      %2874 = vmatprep.mubr.bf16.mxu0 %v1548
      %2875 = vmatmul.mubr.bf16.gmra.mrb[0].mxu0 %v1547
      %v2876 = vpop.f32.mrb[0].mxu0
      %v2877 = vadd.f32 %v2588, %v2876
      %v2878 = vpop.f32.mrb[0].mxu0
      %v2879 = vpop.f32.mrb[0].mxu0
      %v2880 = vadd.f32 %v2591, %v2879
      %v2881 = vpop.f32.mrb[0].mxu0
      %2882 = vmatprep.mubr.bf16.mxu0 %v1557
      %2883 = vmatmul.mubr.bf16.gmra.mrb[0].mxu0 %v1556
      %v2884 = vpop.f32.mrb[0].mxu0
      %v2885 = vadd.f32 %v2596, %v2884
      %v2886 = vpop.f32.mrb[0].mxu0
      %v2887 = vpop.f32.mrb[0].mxu0
      %v2888 = vadd.f32 %v2599, %v2887
      %v2889 = vpop.f32.mrb[0].mxu0
      %2890 = vmatprep.mubr.bf16.mxu0 %v1566
      %2891 = vmatmul.mubr.bf16.gmra.mrb[0].mxu0 %v1565
      %v2892 = vpop.f32.mrb[0].mxu0
      %v2893 = vadd.f32 %v2604, %v2892
      %v2894 = vpop.f32.mrb[0].mxu0
      %v2895 = vpop.f32.mrb[0].mxu0
      %v2896 = vadd.f32 %v2607, %v2895
      %v2897 = vpop.f32.mrb[0].mxu0
      %2898 = vmatprep.mubr.bf16.mxu0 %v1575
      %2899 = vmatmul.mubr.bf16.gmra.mrb[0].mxu0 %v1574
      %v2900 = vpop.f32.mrb[0].mxu0
      %v2901 = vadd.f32 %v2612, %v2900
      %v2902 = vpop.f32.mrb[0].mxu0
      %v2903 = vpop.f32.mrb[0].mxu0
      %v2904 = vadd.f32 %v2615, %v2903
      %v2905 = vpop.f32.mrb[0].mxu0
      %2906 = vmatprep.mubr.bf16.mxu0 %v1584
      %2907 = vmatmul.mubr.bf16.gmra.mrb[0].mxu0 %v1583
      %v2908 = vpop.f32.mrb[0].mxu0
      %v2909 = vadd.f32 %v2620, %v2908
      %v2910 = vpop.f32.mrb[0].mxu0
      %v2911 = vpop.f32.mrb[0].mxu0
      %v2912 = vadd.f32 %v2623, %v2911
      %v2913 = vpop.f32.mrb[0].mxu0
      %2914 = vmatprep.mubr.bf16.mxu0 %v1593
      %2915 = vmatmul.mubr.bf16.gmra.mrb[0].mxu0 %v1592
      %v2916 = vpop.f32.mrb[0].mxu0
      %v2917 = vadd.f32 %v2628, %v2916
      %v2918 = vpop.f32.mrb[0].mxu0
      %v2919 = vpop.f32.mrb[0].mxu0
      %v2920 = vadd.f32 %v2631, %v2919
      %v2921 = vpop.f32.mrb[0].mxu0
      %2922 = vmatprep.mubr.bf16.mxu0 %v1602
      %2923 = vmatmul.mubr.bf16.gmra.mrb[0].mxu0 %v1601
      %v2924 = vpop.f32.mrb[0].mxu0
      %v2925 = vadd.f32 %v2636, %v2924
      %v2926 = vpop.f32.mrb[0].mxu0
      %v2927 = vpop.f32.mrb[0].mxu0
      %v2928 = vadd.f32 %v2639, %v2927
      %v2929 = vpop.f32.mrb[0].mxu0
      %2930 = vmatprep.mubr.bf16.mxu0 %v1611
      %2931 = vmatmul.mubr.bf16.gmra.mrb[0].mxu0 %v1610
      %v2932 = vpop.f32.mrb[0].mxu0
      %v2933 = vadd.f32 %v2644, %v2932
      %v2934 = vpop.f32.mrb[0].mxu0
      %v2935 = vpop.f32.mrb[0].mxu0
      %v2936 = vadd.f32 %v2647, %v2935
      %v2937 = vpop.f32.mrb[0].mxu0
      %2938 = vmatprep.mubr.bf16.mxu0 %v1620
      %2939 = vmatmul.mubr.bf16.gmra.mrb[0].mxu0 %v1619
      %v2940 = vpop.f32.mrb[0].mxu0
      %v2941 = vadd.f32 %v2652, %v2940
      %v2942 = vpop.f32.mrb[0].mxu0
      %v2943 = vpop.f32.mrb[0].mxu0
      %v2944 = vadd.f32 %v2655, %v2943
      %v2945 = vpop.f32.mrb[0].mxu0
      %2946 = vmatprep.mubr.bf16.mxu0 %v1629
      %2947 = vmatmul.mubr.bf16.gmra.mrb[0].mxu0 %v1628
      %v2948 = vpop.f32.mrb[0].mxu0
      %v2949 = vadd.f32 %v2660, %v2948
      %v2950 = vpop.f32.mrb[0].mxu0
      %v2951 = vpop.f32.mrb[0].mxu0
      %v2952 = vadd.f32 %v2663, %v2951
      %v2953 = vpop.f32.mrb[0].mxu0
      %2954 = vmatprep.mubr.bf16.mxu0 %v1638
      %2955 = vmatmul.mubr.bf16.gmra.mrb[0].mxu0 %v1637
      %v2956 = vpop.f32.mrb[0].mxu0
      %v2957 = vadd.f32 %v2668, %v2956
      %v2958 = vpop.f32.mrb[0].mxu0
      %v2959 = vpop.f32.mrb[0].mxu0
      %v2960 = vadd.f32 %v2671, %v2959
      %v2961 = vpop.f32.mrb[0].mxu0
      %2962 = vmatprep.mubr.bf16.mxu0 %v1647
      %2963 = vmatmul.mubr.bf16.gmra.mrb[0].mxu0 %v1646
      %v2964 = vpop.f32.mrb[0].mxu0
      %v2965 = vadd.f32 %v2676, %v2964
      %v2966 = vpop.f32.mrb[0].mxu0
      %v2967 = vpop.f32.mrb[0].mxu0
      %v2968 = vadd.f32 %v2679, %v2967
      %v2969 = vpop.f32.mrb[0].mxu0
      %2970 = vmatprep.mubr.bf16.mxu0 %v1656
      %2971 = vmatmul.mubr.bf16.gmra.mrb[0].mxu0 %v1655
      %v2972 = vpop.f32.mrb[0].mxu0
      %v2973 = vadd.f32 %v2684, %v2972
      %v2974 = vpop.f32.mrb[0].mxu0
      %v2975 = vpop.f32.mrb[0].mxu0
      %v2976 = vadd.f32 %v2687, %v2975
      %v2977 = vpop.f32.mrb[0].mxu0
      %2978 = vmatprep.mubr.bf16.mxu0 %v1665
      %2979 = vmatmul.mubr.bf16.gmra.mrb[0].mxu0 %v1664
      %v2980 = vpop.f32.mrb[0].mxu0
      %v2981 = vadd.f32 %v2692, %v2980
      %v2982 = vpop.f32.mrb[0].mxu0
      %v2983 = vpop.f32.mrb[0].mxu0
      %v2984 = vadd.f32 %v2695, %v2983
      %v2985 = vpop.f32.mrb[0].mxu0
      %2986 = vmatprep.mubr.bf16.mxu0 %v1674
      %2987 = vmatmul.mubr.bf16.gmra.mrb[0].mxu0 %v1673
      %v2988 = vpop.f32.mrb[0].mxu0
      %v2989 = vadd.f32 %v2700, %v2988
      %v2990 = vpop.f32.mrb[0].mxu0
      %v2991 = vpop.f32.mrb[0].mxu0
      %v2992 = vadd.f32 %v2703, %v2991
      %v2993 = vpop.f32.mrb[0].mxu0
      %2994 = vmatprep.mubr.bf16.mxu0 %v1683
      %2995 = vmatmul.mubr.bf16.gmra.mrb[0].mxu0 %v1682
      %v2996 = vpop.f32.mrb[0].mxu0
      %v2997 = vadd.f32 %v2708, %v2996
      %v2998 = vpop.f32.mrb[0].mxu0
      %v2999 = vpop.f32.mrb[0].mxu0
      %v3000 = vadd.f32 %v2711, %v2999
      %v3001 = vpop.f32.mrb[0].mxu0
      %3002 = vmatprep.mubr.bf16.mxu0 %v1692
      %3003 = vmatmul.mubr.bf16.gmra.mrb[0].mxu0 %v1691
      %v3004 = vpop.f32.mrb[0].mxu0
      %v3005 = vadd.f32 %v2716, %v3004
      %v3006 = vpop.f32.mrb[0].mxu0
      %v3007 = vpop.f32.mrb[0].mxu0
      %v3008 = vadd.f32 %v2719, %v3007
      %v3009 = vpop.f32.mrb[0].mxu0
      %3010 = vmatprep.mubr.bf16.mxu0 %v1701
      %3011 = vmatmul.mubr.bf16.gmra.mrb[0].mxu0 %v1700
      %v3012 = vpop.f32.mrb[0].mxu0
      %v3013 = vadd.f32 %v2724, %v3012
      %v3014 = vpop.f32.mrb[0].mxu0
      %v3015 = vpop.f32.mrb[0].mxu0
      %v3016 = vadd.f32 %v2727, %v3015
      %v3017 = vpop.f32.mrb[0].mxu0
      %3018 = vmatprep.mubr.bf16.mxu0 %v1710
      %3019 = vmatmul.mubr.bf16.gmra.mrb[0].mxu0 %v1709
      %v3020 = vpop.f32.mrb[0].mxu0
      %v3021 = vadd.f32 %v2732, %v3020
      %v3022 = vpop.f32.mrb[0].mxu0
      %v3023 = vpop.f32.mrb[0].mxu0
      %v3024 = vadd.f32 %v2735, %v3023
      %v3025 = vpop.f32.mrb[0].mxu0
      %3026 = vmatprep.mubr.bf16.mxu0 %v1719
      %3027 = vmatmul.mubr.bf16.gmra.mrb[0].mxu0 %v1718
      %v3028 = vpop.f32.mrb[0].mxu0
      %v3029 = vadd.f32 %v2740, %v3028
      %v3030 = vpop.f32.mrb[0].mxu0
      %v3031 = vpop.f32.mrb[0].mxu0
      %v3032 = vadd.f32 %v2743, %v3031
      %v3033 = vpop.f32.mrb[0].mxu0
      %3034 = vmatprep.mubr.bf16.mxu0 %v1728
      %3035 = vmatmul.mubr.bf16.gmra.mrb[0].mxu0 %v1727
      %v3036 = vpop.f32.mrb[0].mxu0
      %v3037 = vadd.f32 %v2748, %v3036
      %v3038 = vpop.f32.mrb[0].mxu0
      %v3039 = vpop.f32.mrb[0].mxu0
      %v3040 = vadd.f32 %v2751, %v3039
      %v3041 = vpop.f32.mrb[0].mxu0
      %3042 = vmatprep.mubr.bf16.mxu0 %v1737
      %3043 = vmatmul.mubr.bf16.gmra.mrb[0].mxu0 %v1736
      %v3044 = vpop.f32.mrb[0].mxu0
      %v3045 = vadd.f32 %v2756, %v3044
      %v3046 = vpop.f32.mrb[0].mxu0
      %v3047 = vpop.f32.mrb[0].mxu0
      %v3048 = vadd.f32 %v2759, %v3047
      %v3049 = vpop.f32.mrb[0].mxu0
      %3050 = vmatprep.mubr.bf16.mxu0 %v1746
      %3051 = vmatmul.mubr.bf16.gmra.mrb[0].mxu0 %v1745
      %v3052 = vpop.f32.mrb[0].mxu0
      %v3053 = vadd.f32 %v2764, %v3052
      %v3054 = vpop.f32.mrb[0].mxu0
      %v3055 = vpop.f32.mrb[0].mxu0
      %v3056 = vadd.f32 %v2767, %v3055
      %v3057 = vpop.f32.mrb[0].mxu0
      %3058 = vmatprep.mubr.bf16.mxu0 %v1755
      %3059 = vmatmul.mubr.bf16.gmra.mrb[0].mxu0 %v1754
      %v3060 = vpop.f32.mrb[0].mxu0
      %v3061 = vadd.f32 %v2772, %v3060
      %v3062 = vpop.f32.mrb[0].mxu0
      %v3063 = vpop.f32.mrb[0].mxu0
      %v3064 = vadd.f32 %v2775, %v3063
      %v3065 = vpop.f32.mrb[0].mxu0
      %3066 = vmatprep.mubr.bf16.mxu0 %v1764
      %3067 = vmatmul.mubr.bf16.gmra.mrb[0].mxu0 %v1763
      %v3068 = vpop.f32.mrb[0].mxu0
      %v3069 = vadd.f32 %v2780, %v3068
      %v3070 = vpop.f32.mrb[0].mxu0
      %v3071 = vpop.f32.mrb[0].mxu0
      %v3072 = vadd.f32 %v2783, %v3071
      %v3073 = vpop.f32.mrb[0].mxu0
      %3074 = vmatprep.mubr.bf16.mxu0 %v1773
      %3075 = vmatmul.mubr.bf16.gmra.mrb[0].mxu0 %v1772
      %v3076 = vpop.f32.mrb[0].mxu0
      %v3077 = vadd.f32 %v2788, %v3076
      %v3078 = vpop.f32.mrb[0].mxu0
      %v3079 = vpop.f32.mrb[0].mxu0
      %v3080 = vadd.f32 %v2791, %v3079
      %v3081 = vpop.f32.mrb[0].mxu0
      %3082 = vmatprep.mubr.bf16.mxu0 %v1782
      %3083 = vmatmul.mubr.bf16.gmra.mrb[0].mxu0 %v1781
      %v3084 = vpop.f32.mrb[0].mxu0
      %v3085 = vadd.f32 %v2796, %v3084
      %v3086 = vpop.f32.mrb[0].mxu0
      %v3087 = vpop.f32.mrb[0].mxu0
      %v3088 = vadd.f32 %v2799, %v3087
      %v3089 = vpop.f32.mrb[0].mxu0
      %3090 = vmatprep.mubr.bf16.mxu0 %v1791
      %3091 = vmatmul.mubr.bf16.gmra.mrb[0].mxu0 %v1790
      %v3092 = vpop.f32.mrb[0].mxu0
      %v3093 = vadd.f32 %v2804, %v3092
      %v3094 = vpop.f32.mrb[0].mxu0
      %v3095 = vpop.f32.mrb[0].mxu0
      %v3096 = vadd.f32 %v2807, %v3095
      %v3097 = vpop.f32.mrb[0].mxu0
      %3098 = vmatprep.mubr.bf16.mxu0 %v1800
      %3099 = vmatmul.mubr.bf16.gmra.mrb[0].mxu0 %v1799
      %v3100 = vpop.f32.mrb[0].mxu0
      %v3101 = vadd.f32 %v2812, %v3100
      %v3102 = vpop.f32.mrb[0].mxu0
      %v3103 = vpop.f32.mrb[0].mxu0
      %v3104 = vadd.f32 %v2815, %v3103
      %v3105 = vpop.f32.mrb[0].mxu0
      %3106 = vmatprep.mubr.bf16.mxu0 %v1809
      %3107 = vmatmul.mubr.bf16.gmra.mrb[0].mxu0 %v1808
      %v3108 = vpop.f32.mrb[0].mxu0
      %v3109 = vadd.f32 %v2820, %v3108
      %v3110 = vpop.f32.mrb[0].mxu0
      %v3111 = vpop.f32.mrb[0].mxu0
      %v3112 = vadd.f32 %v2823, %v3111
      %v3113 = vpop.f32.mrb[0].mxu0
      %3114 = vmatprep.mubr.bf16.mxu0 %v1818
      %3115 = vmatmul.mubr.bf16.gmra.mrb[0].mxu0 %v1817
      %v3116 = vpop.f32.mrb[0].mxu0
      %v3117 = vadd.f32 %v2828, %v3116
      %v3118 = vpop.f32.mrb[0].mxu0
      %v3119 = vpop.f32.mrb[0].mxu0
      %v3120 = vadd.f32 %v2831, %v3119
      %v3121 = vpop.f32.mrb[0].mxu0
      %3122 = vmatprep.mubr.bf16.mxu0 %v1827
      %3123 = vmatmul.mubr.bf16.gmra.mrb[0].mxu0 %v1826
      %v3124 = vpop.f32.mrb[0].mxu0
      %v3125 = vadd.f32 %v2836, %v3124
      %v3126 = vpop.f32.mrb[0].mxu0
      %v3127 = vpop.f32.mrb[0].mxu0
      %v3128 = vadd.f32 %v2839, %v3127
      %v3129 = vpop.f32.mrb[0].mxu0
      %3130 = vdwg.mxu0
      %3131 = vmatprep.subr.bf16.mxu0 0
      %3132 = vmatpush1.bf16.msra.mxu0 %v2441
      %3133 = vmatprep.subr.bf16.mxu0 0
      %3134 = vmatpush1.bf16.msra.mxu0 %v2442
      %3135 = vmatprep.subr.bf16.mxu0 0
      %3136 = vmatpush1.bf16.msra.mxu0 %v2443
      %3137 = vmatprep.subr.bf16.mxu0 0
      %3138 = vmatpush1.bf16.msra.mxu0 %v2444
      %3139 = vmatprep.subr.bf16.mxu0 0
      %3140 = vmatpush1.bf16.msra.mxu0 %v2445
      %3141 = vmatprep.subr.bf16.mxu0 0
      %3142 = vmatpush1.bf16.msra.mxu0 %v2446
      %3143 = vmatprep.subr.bf16.mxu0 0
      %3144 = vmatpush1.bf16.msra.mxu0 %v2447
      %3145 = vmatprep.subr.bf16.mxu0 0
      %3146 = vmatpush1.bf16.msra.mxu0 %v2448
      %3147 = vmatprep.subr.bf16.mxu0 0
      %3148 = vmatpush1.bf16.msra.mxu0 %v2449
      %3149 = vmatprep.subr.bf16.mxu0 0
      %3150 = vmatpush1.bf16.msra.mxu0 %v2450
      %3151 = vmatprep.subr.bf16.mxu0 0
      %3152 = vmatpush1.bf16.msra.mxu0 %v2451
      %3153 = vmatprep.subr.bf16.mxu0 0
      %3154 = vmatpush1.bf16.msra.mxu0 %v2452
      %3155 = vmatprep.subr.bf16.mxu0 0
      %3156 = vmatpush1.bf16.msra.mxu0 %v2453
      %3157 = vmatprep.subr.bf16.mxu0 0
      %3158 = vmatpush1.bf16.msra.mxu0 %v2454
      %3159 = vmatprep.subr.bf16.mxu0 0
      %3160 = vmatpush1.bf16.msra.mxu0 %v2455
      %3161 = vmatprep.subr.bf16.mxu0 0
      %3162 = vmatpush1.bf16.msra.mxu0 %v2456
      %3163 = vmatprep.mubr.bf16.mxu0 %v1550
      %3164 = vmatmul.mubr.bf16.gmra.mrb[0].mxu0 %v1549
      %v3165 = vpop.f32.mrb[0].mxu0
      %v3166 = vadd.f32 %v2877, %v3165
      %v3167 = vpop.f32.mrb[0].mxu0
      %v3168 = vpop.f32.mrb[0].mxu0
      %v3169 = vadd.f32 %v2880, %v3168
      %v3170 = vpop.f32.mrb[0].mxu0
      %3171 = vmatprep.mubr.bf16.mxu0 %v1559
      %3172 = vmatmul.mubr.bf16.gmra.mrb[0].mxu0 %v1558
      %v3173 = vpop.f32.mrb[0].mxu0
      %v3174 = vadd.f32 %v2885, %v3173
      %v3175 = vpop.f32.mrb[0].mxu0
      %v3176 = vpop.f32.mrb[0].mxu0
      %v3177 = vadd.f32 %v2888, %v3176
      %v3178 = vpop.f32.mrb[0].mxu0
      %3179 = vmatprep.mubr.bf16.mxu0 %v1568
      %3180 = vmatmul.mubr.bf16.gmra.mrb[0].mxu0 %v1567
      %v3181 = vpop.f32.mrb[0].mxu0
      %v3182 = vadd.f32 %v2893, %v3181
      %v3183 = vpop.f32.mrb[0].mxu0
      %v3184 = vpop.f32.mrb[0].mxu0
      %v3185 = vadd.f32 %v2896, %v3184
      %v3186 = vpop.f32.mrb[0].mxu0
      %3187 = vmatprep.mubr.bf16.mxu0 %v1577
      %3188 = vmatmul.mubr.bf16.gmra.mrb[0].mxu0 %v1576
      %v3189 = vpop.f32.mrb[0].mxu0
      %v3190 = vadd.f32 %v2901, %v3189
      %v3191 = vpop.f32.mrb[0].mxu0
      %v3192 = vpop.f32.mrb[0].mxu0
      %v3193 = vadd.f32 %v2904, %v3192
      %v3194 = vpop.f32.mrb[0].mxu0
      %3195 = vmatprep.mubr.bf16.mxu0 %v1586
      %3196 = vmatmul.mubr.bf16.gmra.mrb[0].mxu0 %v1585
      %v3197 = vpop.f32.mrb[0].mxu0
      %v3198 = vadd.f32 %v2909, %v3197
      %v3199 = vpop.f32.mrb[0].mxu0
      %v3200 = vpop.f32.mrb[0].mxu0
      %v3201 = vadd.f32 %v2912, %v3200
      %v3202 = vpop.f32.mrb[0].mxu0
      %3203 = vmatprep.mubr.bf16.mxu0 %v1595
      %3204 = vmatmul.mubr.bf16.gmra.mrb[0].mxu0 %v1594
      %v3205 = vpop.f32.mrb[0].mxu0
      %v3206 = vadd.f32 %v2917, %v3205
      %v3207 = vpop.f32.mrb[0].mxu0
      %v3208 = vpop.f32.mrb[0].mxu0
      %v3209 = vadd.f32 %v2920, %v3208
      %v3210 = vpop.f32.mrb[0].mxu0
      %3211 = vmatprep.mubr.bf16.mxu0 %v1604
      %3212 = vmatmul.mubr.bf16.gmra.mrb[0].mxu0 %v1603
      %v3213 = vpop.f32.mrb[0].mxu0
      %v3214 = vadd.f32 %v2925, %v3213
      %v3215 = vpop.f32.mrb[0].mxu0
      %v3216 = vpop.f32.mrb[0].mxu0
      %v3217 = vadd.f32 %v2928, %v3216
      %v3218 = vpop.f32.mrb[0].mxu0
      %3219 = vmatprep.mubr.bf16.mxu0 %v1613
      %3220 = vmatmul.mubr.bf16.gmra.mrb[0].mxu0 %v1612
      %v3221 = vpop.f32.mrb[0].mxu0
      %v3222 = vadd.f32 %v2933, %v3221
      %v3223 = vpop.f32.mrb[0].mxu0
      %v3224 = vpop.f32.mrb[0].mxu0
      %v3225 = vadd.f32 %v2936, %v3224
      %v3226 = vpop.f32.mrb[0].mxu0
      %3227 = vmatprep.mubr.bf16.mxu0 %v1622
      %3228 = vmatmul.mubr.bf16.gmra.mrb[0].mxu0 %v1621
      %v3229 = vpop.f32.mrb[0].mxu0
      %v3230 = vadd.f32 %v2941, %v3229
      %v3231 = vpop.f32.mrb[0].mxu0
      %v3232 = vpop.f32.mrb[0].mxu0
      %v3233 = vadd.f32 %v2944, %v3232
      %v3234 = vpop.f32.mrb[0].mxu0
      %3235 = vmatprep.mubr.bf16.mxu0 %v1631
      %3236 = vmatmul.mubr.bf16.gmra.mrb[0].mxu0 %v1630
      %v3237 = vpop.f32.mrb[0].mxu0
      %v3238 = vadd.f32 %v2949, %v3237
      %v3239 = vpop.f32.mrb[0].mxu0
      %v3240 = vpop.f32.mrb[0].mxu0
      %v3241 = vadd.f32 %v2952, %v3240
      %v3242 = vpop.f32.mrb[0].mxu0
      %3243 = vmatprep.mubr.bf16.mxu0 %v1640
      %3244 = vmatmul.mubr.bf16.gmra.mrb[0].mxu0 %v1639
      %v3245 = vpop.f32.mrb[0].mxu0
      %v3246 = vadd.f32 %v2957, %v3245
      %v3247 = vpop.f32.mrb[0].mxu0
      %v3248 = vpop.f32.mrb[0].mxu0
      %v3249 = vadd.f32 %v2960, %v3248
      %v3250 = vpop.f32.mrb[0].mxu0
      %3251 = vmatprep.mubr.bf16.mxu0 %v1649
      %3252 = vmatmul.mubr.bf16.gmra.mrb[0].mxu0 %v1648
      %v3253 = vpop.f32.mrb[0].mxu0
      %v3254 = vadd.f32 %v2965, %v3253
      %v3255 = vpop.f32.mrb[0].mxu0
      %v3256 = vpop.f32.mrb[0].mxu0
      %v3257 = vadd.f32 %v2968, %v3256
      %v3258 = vpop.f32.mrb[0].mxu0
      %3259 = vmatprep.mubr.bf16.mxu0 %v1658
      %3260 = vmatmul.mubr.bf16.gmra.mrb[0].mxu0 %v1657
      %v3261 = vpop.f32.mrb[0].mxu0
      %v3262 = vadd.f32 %v2973, %v3261
      %v3263 = vpop.f32.mrb[0].mxu0
      %v3264 = vpop.f32.mrb[0].mxu0
      %v3265 = vadd.f32 %v2976, %v3264
      %v3266 = vpop.f32.mrb[0].mxu0
      %3267 = vmatprep.mubr.bf16.mxu0 %v1667
      %3268 = vmatmul.mubr.bf16.gmra.mrb[0].mxu0 %v1666
      %v3269 = vpop.f32.mrb[0].mxu0
      %v3270 = vadd.f32 %v2981, %v3269
      %v3271 = vpop.f32.mrb[0].mxu0
      %v3272 = vpop.f32.mrb[0].mxu0
      %v3273 = vadd.f32 %v2984, %v3272
      %v3274 = vpop.f32.mrb[0].mxu0
      %3275 = vmatprep.mubr.bf16.mxu0 %v1676
      %3276 = vmatmul.mubr.bf16.gmra.mrb[0].mxu0 %v1675
      %v3277 = vpop.f32.mrb[0].mxu0
      %v3278 = vadd.f32 %v2989, %v3277
      %v3279 = vpop.f32.mrb[0].mxu0
      %v3280 = vpop.f32.mrb[0].mxu0
      %v3281 = vadd.f32 %v2992, %v3280
      %v3282 = vpop.f32.mrb[0].mxu0
      %3283 = vmatprep.mubr.bf16.mxu0 %v1685
      %3284 = vmatmul.mubr.bf16.gmra.mrb[0].mxu0 %v1684
      %v3285 = vpop.f32.mrb[0].mxu0
      %v3286 = vadd.f32 %v2997, %v3285
      %v3287 = vpop.f32.mrb[0].mxu0
      %v3288 = vpop.f32.mrb[0].mxu0
      %v3289 = vadd.f32 %v3000, %v3288
      %v3290 = vpop.f32.mrb[0].mxu0
      %3291 = vmatprep.mubr.bf16.mxu0 %v1694
      %3292 = vmatmul.mubr.bf16.gmra.mrb[0].mxu0 %v1693
      %v3293 = vpop.f32.mrb[0].mxu0
      %v3294 = vadd.f32 %v3005, %v3293
      %v3295 = vpop.f32.mrb[0].mxu0
      %v3296 = vpop.f32.mrb[0].mxu0
      %v3297 = vadd.f32 %v3008, %v3296
      %v3298 = vpop.f32.mrb[0].mxu0
      %3299 = vmatprep.mubr.bf16.mxu0 %v1703
      %3300 = vmatmul.mubr.bf16.gmra.mrb[0].mxu0 %v1702
      %v3301 = vpop.f32.mrb[0].mxu0
      %v3302 = vadd.f32 %v3013, %v3301
      %v3303 = vpop.f32.mrb[0].mxu0
      %v3304 = vpop.f32.mrb[0].mxu0
      %v3305 = vadd.f32 %v3016, %v3304
      %v3306 = vpop.f32.mrb[0].mxu0
      %3307 = vmatprep.mubr.bf16.mxu0 %v1712
      %3308 = vmatmul.mubr.bf16.gmra.mrb[0].mxu0 %v1711
      %v3309 = vpop.f32.mrb[0].mxu0
      %v3310 = vadd.f32 %v3021, %v3309
      %v3311 = vpop.f32.mrb[0].mxu0
      %v3312 = vpop.f32.mrb[0].mxu0
      %v3313 = vadd.f32 %v3024, %v3312
      %v3314 = vpop.f32.mrb[0].mxu0
      %3315 = vmatprep.mubr.bf16.mxu0 %v1721
      %3316 = vmatmul.mubr.bf16.gmra.mrb[0].mxu0 %v1720
      %v3317 = vpop.f32.mrb[0].mxu0
      %v3318 = vadd.f32 %v3029, %v3317
      %v3319 = vpop.f32.mrb[0].mxu0
      %v3320 = vpop.f32.mrb[0].mxu0
      %v3321 = vadd.f32 %v3032, %v3320
      %v3322 = vpop.f32.mrb[0].mxu0
      %3323 = vmatprep.mubr.bf16.mxu0 %v1730
      %3324 = vmatmul.mubr.bf16.gmra.mrb[0].mxu0 %v1729
      %v3325 = vpop.f32.mrb[0].mxu0
      %v3326 = vadd.f32 %v3037, %v3325
      %v3327 = vpop.f32.mrb[0].mxu0
      %v3328 = vpop.f32.mrb[0].mxu0
      %v3329 = vadd.f32 %v3040, %v3328
      %v3330 = vpop.f32.mrb[0].mxu0
      %3331 = vmatprep.mubr.bf16.mxu0 %v1739
      %3332 = vmatmul.mubr.bf16.gmra.mrb[0].mxu0 %v1738
      %v3333 = vpop.f32.mrb[0].mxu0
      %v3334 = vadd.f32 %v3045, %v3333
      %v3335 = vpop.f32.mrb[0].mxu0
      %v3336 = vpop.f32.mrb[0].mxu0
      %v3337 = vadd.f32 %v3048, %v3336
      %v3338 = vpop.f32.mrb[0].mxu0
      %3339 = vmatprep.mubr.bf16.mxu0 %v1748
      %3340 = vmatmul.mubr.bf16.gmra.mrb[0].mxu0 %v1747
      %v3341 = vpop.f32.mrb[0].mxu0
      %v3342 = vadd.f32 %v3053, %v3341
      %v3343 = vpop.f32.mrb[0].mxu0
      %v3344 = vpop.f32.mrb[0].mxu0
      %v3345 = vadd.f32 %v3056, %v3344
      %v3346 = vpop.f32.mrb[0].mxu0
      %3347 = vmatprep.mubr.bf16.mxu0 %v1757
      %3348 = vmatmul.mubr.bf16.gmra.mrb[0].mxu0 %v1756
      %v3349 = vpop.f32.mrb[0].mxu0
      %v3350 = vadd.f32 %v3061, %v3349
      %v3351 = vpop.f32.mrb[0].mxu0
      %v3352 = vpop.f32.mrb[0].mxu0
      %v3353 = vadd.f32 %v3064, %v3352
      %v3354 = vpop.f32.mrb[0].mxu0
      %3355 = vmatprep.mubr.bf16.mxu0 %v1766
      %3356 = vmatmul.mubr.bf16.gmra.mrb[0].mxu0 %v1765
      %v3357 = vpop.f32.mrb[0].mxu0
      %v3358 = vadd.f32 %v3069, %v3357
      %v3359 = vpop.f32.mrb[0].mxu0
      %v3360 = vpop.f32.mrb[0].mxu0
      %v3361 = vadd.f32 %v3072, %v3360
      %v3362 = vpop.f32.mrb[0].mxu0
      %3363 = vmatprep.mubr.bf16.mxu0 %v1775
      %3364 = vmatmul.mubr.bf16.gmra.mrb[0].mxu0 %v1774
      %v3365 = vpop.f32.mrb[0].mxu0
      %v3366 = vadd.f32 %v3077, %v3365
      %v3367 = vpop.f32.mrb[0].mxu0
      %v3368 = vpop.f32.mrb[0].mxu0
      %v3369 = vadd.f32 %v3080, %v3368
      %v3370 = vpop.f32.mrb[0].mxu0
      %3371 = vmatprep.mubr.bf16.mxu0 %v1784
      %3372 = vmatmul.mubr.bf16.gmra.mrb[0].mxu0 %v1783
      %v3373 = vpop.f32.mrb[0].mxu0
      %v3374 = vadd.f32 %v3085, %v3373
      %v3375 = vpop.f32.mrb[0].mxu0
      %v3376 = vpop.f32.mrb[0].mxu0
      %v3377 = vadd.f32 %v3088, %v3376
      %v3378 = vpop.f32.mrb[0].mxu0
      %3379 = vmatprep.mubr.bf16.mxu0 %v1793
      %3380 = vmatmul.mubr.bf16.gmra.mrb[0].mxu0 %v1792
      %v3381 = vpop.f32.mrb[0].mxu0
      %v3382 = vadd.f32 %v3093, %v3381
      %v3383 = vpop.f32.mrb[0].mxu0
      %v3384 = vpop.f32.mrb[0].mxu0
      %v3385 = vadd.f32 %v3096, %v3384
      %v3386 = vpop.f32.mrb[0].mxu0
      %3387 = vmatprep.mubr.bf16.mxu0 %v1802
      %3388 = vmatmul.mubr.bf16.gmra.mrb[0].mxu0 %v1801
      %v3389 = vpop.f32.mrb[0].mxu0
      %v3390 = vadd.f32 %v3101, %v3389
      %v3391 = vpop.f32.mrb[0].mxu0
      %v3392 = vpop.f32.mrb[0].mxu0
      %v3393 = vadd.f32 %v3104, %v3392
      %v3394 = vpop.f32.mrb[0].mxu0
      %3395 = vmatprep.mubr.bf16.mxu0 %v1811
      %3396 = vmatmul.mubr.bf16.gmra.mrb[0].mxu0 %v1810
      %v3397 = vpop.f32.mrb[0].mxu0
      %v3398 = vadd.f32 %v3109, %v3397
      %v3399 = vpop.f32.mrb[0].mxu0
      %v3400 = vpop.f32.mrb[0].mxu0
      %v3401 = vadd.f32 %v3112, %v3400
      %v3402 = vpop.f32.mrb[0].mxu0
      %3403 = vmatprep.mubr.bf16.mxu0 %v1820
      %3404 = vmatmul.mubr.bf16.gmra.mrb[0].mxu0 %v1819
      %v3405 = vpop.f32.mrb[0].mxu0
      %v3406 = vadd.f32 %v3117, %v3405
      %v3407 = vpop.f32.mrb[0].mxu0
      %v3408 = vpop.f32.mrb[0].mxu0
      %v3409 = vadd.f32 %v3120, %v3408
      %v3410 = vpop.f32.mrb[0].mxu0
      %3411 = vmatprep.mubr.bf16.mxu0 %v1829
      %3412 = vmatmul.mubr.bf16.gmra.mrb[0].mxu0 %v1828
      %v3413 = vpop.f32.mrb[0].mxu0
      %v3414 = vadd.f32 %v3125, %v3413
      %v3415 = vpop.f32.mrb[0].mxu0
      %v3416 = vpop.f32.mrb[0].mxu0
      %v3417 = vadd.f32 %v3128, %v3416
      %v3418 = vpop.f32.mrb[0].mxu0
      %3419 = vdwg.mxu0
      %3420 = vmatprep.subr.bf16.mxu0 0
      %3421 = vmatpush1.bf16.msra.mxu0 %v2457
      %3422 = vmatprep.subr.bf16.mxu0 0
      %3423 = vmatpush1.bf16.msra.mxu0 %v2458
      %3424 = vmatprep.subr.bf16.mxu0 0
      %3425 = vmatpush1.bf16.msra.mxu0 %v2459
      %3426 = vmatprep.subr.bf16.mxu0 0
      %3427 = vmatpush1.bf16.msra.mxu0 %v2460
      %3428 = vmatprep.subr.bf16.mxu0 0
      %3429 = vmatpush1.bf16.msra.mxu0 %v2461
      %3430 = vmatprep.subr.bf16.mxu0 0
      %3431 = vmatpush1.bf16.msra.mxu0 %v2462
      %3432 = vmatprep.subr.bf16.mxu0 0
      %3433 = vmatpush1.bf16.msra.mxu0 %v2463
      %3434 = vmatprep.subr.bf16.mxu0 0
      %3435 = vmatpush1.bf16.msra.mxu0 %v2464
      %3436 = vmatprep.subr.bf16.mxu0 0
      %3437 = vmatpush1.bf16.msra.mxu0 %v2465
      %3438 = vmatprep.subr.bf16.mxu0 0
      %3439 = vmatpush1.bf16.msra.mxu0 %v2466
      %3440 = vmatprep.subr.bf16.mxu0 0
      %3441 = vmatpush1.bf16.msra.mxu0 %v2467
      %3442 = vmatprep.subr.bf16.mxu0 0
      %3443 = vmatpush1.bf16.msra.mxu0 %v2468
      %3444 = vmatprep.subr.bf16.mxu0 0
      %3445 = vmatpush1.bf16.msra.mxu0 %v2469
      %3446 = vmatprep.subr.bf16.mxu0 0
      %3447 = vmatpush1.bf16.msra.mxu0 %v2470
      %3448 = vmatprep.subr.bf16.mxu0 0
      %3449 = vmatpush1.bf16.msra.mxu0 %v2471
      %3450 = vmatprep.subr.bf16.mxu0 0
      %3451 = vmatpush1.bf16.msra.mxu0 %v2472
      %3452 = vmatprep.mubr.bf16.mxu0 %v1552
      %3453 = vmatmul.mubr.bf16.gmra.mrb[0].mxu0 %v1551
      %v3454 = vpop.f32.mrb[0].mxu0
      %v3455 = vadd.f32 %v3166, %v3454
      %v3456 = vpop.f32.mrb[0].mxu0
      %v3457 = vpop.f32.mrb[0].mxu0
      %v3458 = vadd.f32 %v3169, %v3457
      %v3459 = vpop.f32.mrb[0].mxu0
      %3460 = vmatprep.mubr.bf16.mxu0 %v1561
      %3461 = vmatmul.mubr.bf16.gmra.mrb[0].mxu0 %v1560
      %v3462 = vpop.f32.mrb[0].mxu0
      %v3463 = vadd.f32 %v3174, %v3462
      %v3464 = vpop.f32.mrb[0].mxu0
      %v3465 = vpop.f32.mrb[0].mxu0
      %v3466 = vadd.f32 %v3177, %v3465
      %v3467 = vpop.f32.mrb[0].mxu0
      %3468 = vmatprep.mubr.bf16.mxu0 %v1570
      %3469 = vmatmul.mubr.bf16.gmra.mrb[0].mxu0 %v1569
      %v3470 = vpop.f32.mrb[0].mxu0
      %v3471 = vadd.f32 %v3182, %v3470
      %v3472 = vpop.f32.mrb[0].mxu0
      %v3473 = vpop.f32.mrb[0].mxu0
      %v3474 = vadd.f32 %v3185, %v3473
      %v3475 = vpop.f32.mrb[0].mxu0
      %3476 = vmatprep.mubr.bf16.mxu0 %v1579
      %3477 = vmatmul.mubr.bf16.gmra.mrb[0].mxu0 %v1578
      %v3478 = vpop.f32.mrb[0].mxu0
      %v3479 = vadd.f32 %v3190, %v3478
      %v3480 = vpop.f32.mrb[0].mxu0
      %v3481 = vpop.f32.mrb[0].mxu0
      %v3482 = vadd.f32 %v3193, %v3481
      %v3483 = vpop.f32.mrb[0].mxu0
      %3484 = vmatprep.mubr.bf16.mxu0 %v1588
      %3485 = vmatmul.mubr.bf16.gmra.mrb[0].mxu0 %v1587
      %v3486 = vpop.f32.mrb[0].mxu0
      %v3487 = vadd.f32 %v3198, %v3486
      %v3488 = vpop.f32.mrb[0].mxu0
      %v3489 = vpop.f32.mrb[0].mxu0
      %v3490 = vadd.f32 %v3201, %v3489
      %v3491 = vpop.f32.mrb[0].mxu0
      %3492 = vmatprep.mubr.bf16.mxu0 %v1597
      %3493 = vmatmul.mubr.bf16.gmra.mrb[0].mxu0 %v1596
      %v3494 = vpop.f32.mrb[0].mxu0
      %v3495 = vadd.f32 %v3206, %v3494
      %v3496 = vpop.f32.mrb[0].mxu0
      %v3497 = vpop.f32.mrb[0].mxu0
      %v3498 = vadd.f32 %v3209, %v3497
      %v3499 = vpop.f32.mrb[0].mxu0
      %3500 = vmatprep.mubr.bf16.mxu0 %v1606
      %3501 = vmatmul.mubr.bf16.gmra.mrb[0].mxu0 %v1605
      %v3502 = vpop.f32.mrb[0].mxu0
      %v3503 = vadd.f32 %v3214, %v3502
      %v3504 = vpop.f32.mrb[0].mxu0
      %v3505 = vpop.f32.mrb[0].mxu0
      %v3506 = vadd.f32 %v3217, %v3505
      %v3507 = vpop.f32.mrb[0].mxu0
      %3508 = vmatprep.mubr.bf16.mxu0 %v1615
      %3509 = vmatmul.mubr.bf16.gmra.mrb[0].mxu0 %v1614
      %v3510 = vpop.f32.mrb[0].mxu0
      %v3511 = vadd.f32 %v3222, %v3510
      %v3512 = vpop.f32.mrb[0].mxu0
      %v3513 = vpop.f32.mrb[0].mxu0
      %v3514 = vadd.f32 %v3225, %v3513
      %v3515 = vpop.f32.mrb[0].mxu0
      %3516 = vmatprep.mubr.bf16.mxu0 %v1624
      %3517 = vmatmul.mubr.bf16.gmra.mrb[0].mxu0 %v1623
      %v3518 = vpop.f32.mrb[0].mxu0
      %v3519 = vadd.f32 %v3230, %v3518
      %v3520 = vpop.f32.mrb[0].mxu0
      %v3521 = vpop.f32.mrb[0].mxu0
      %v3522 = vadd.f32 %v3233, %v3521
      %v3523 = vpop.f32.mrb[0].mxu0
      %3524 = vmatprep.mubr.bf16.mxu0 %v1633
      %3525 = vmatmul.mubr.bf16.gmra.mrb[0].mxu0 %v1632
      %v3526 = vpop.f32.mrb[0].mxu0
      %v3527 = vadd.f32 %v3238, %v3526
      %v3528 = vpop.f32.mrb[0].mxu0
      %v3529 = vpop.f32.mrb[0].mxu0
      %v3530 = vadd.f32 %v3241, %v3529
      %v3531 = vpop.f32.mrb[0].mxu0
      %3532 = vmatprep.mubr.bf16.mxu0 %v1642
      %3533 = vmatmul.mubr.bf16.gmra.mrb[0].mxu0 %v1641
      %v3534 = vpop.f32.mrb[0].mxu0
      %v3535 = vadd.f32 %v3246, %v3534
      %v3536 = vpop.f32.mrb[0].mxu0
      %v3537 = vpop.f32.mrb[0].mxu0
      %v3538 = vadd.f32 %v3249, %v3537
      %v3539 = vpop.f32.mrb[0].mxu0
      %3540 = vmatprep.mubr.bf16.mxu0 %v1651
      %3541 = vmatmul.mubr.bf16.gmra.mrb[0].mxu0 %v1650
      %v3542 = vpop.f32.mrb[0].mxu0
      %v3543 = vadd.f32 %v3254, %v3542
      %v3544 = vpop.f32.mrb[0].mxu0
      %v3545 = vpop.f32.mrb[0].mxu0
      %v3546 = vadd.f32 %v3257, %v3545
      %v3547 = vpop.f32.mrb[0].mxu0
      %3548 = vmatprep.mubr.bf16.mxu0 %v1660
      %3549 = vmatmul.mubr.bf16.gmra.mrb[0].mxu0 %v1659
      %v3550 = vpop.f32.mrb[0].mxu0
      %v3551 = vadd.f32 %v3262, %v3550
      %v3552 = vpop.f32.mrb[0].mxu0
      %v3553 = vpop.f32.mrb[0].mxu0
      %v3554 = vadd.f32 %v3265, %v3553
      %v3555 = vpop.f32.mrb[0].mxu0
      %3556 = vmatprep.mubr.bf16.mxu0 %v1669
      %3557 = vmatmul.mubr.bf16.gmra.mrb[0].mxu0 %v1668
      %v3558 = vpop.f32.mrb[0].mxu0
      %v3559 = vadd.f32 %v3270, %v3558
      %v3560 = vpop.f32.mrb[0].mxu0
      %v3561 = vpop.f32.mrb[0].mxu0
      %v3562 = vadd.f32 %v3273, %v3561
      %v3563 = vpop.f32.mrb[0].mxu0
      %3564 = vmatprep.mubr.bf16.mxu0 %v1678
      %3565 = vmatmul.mubr.bf16.gmra.mrb[0].mxu0 %v1677
      %v3566 = vpop.f32.mrb[0].mxu0
      %v3567 = vadd.f32 %v3278, %v3566
      %v3568 = vpop.f32.mrb[0].mxu0
      %v3569 = vpop.f32.mrb[0].mxu0
      %v3570 = vadd.f32 %v3281, %v3569
      %v3571 = vpop.f32.mrb[0].mxu0
      %3572 = vmatprep.mubr.bf16.mxu0 %v1687
      %3573 = vmatmul.mubr.bf16.gmra.mrb[0].mxu0 %v1686
      %v3574 = vpop.f32.mrb[0].mxu0
      %v3575 = vadd.f32 %v3286, %v3574
      %v3576 = vpop.f32.mrb[0].mxu0
      %v3577 = vpop.f32.mrb[0].mxu0
      %v3578 = vadd.f32 %v3289, %v3577
      %v3579 = vpop.f32.mrb[0].mxu0
      %3580 = vmatprep.mubr.bf16.mxu0 %v1696
      %3581 = vmatmul.mubr.bf16.gmra.mrb[0].mxu0 %v1695
      %v3582 = vpop.f32.mrb[0].mxu0
      %v3583 = vadd.f32 %v3294, %v3582
      %v3584 = vpop.f32.mrb[0].mxu0
      %v3585 = vpop.f32.mrb[0].mxu0
      %v3586 = vadd.f32 %v3297, %v3585
      %v3587 = vpop.f32.mrb[0].mxu0
      %3588 = vmatprep.mubr.bf16.mxu0 %v1705
      %3589 = vmatmul.mubr.bf16.gmra.mrb[0].mxu0 %v1704
      %v3590 = vpop.f32.mrb[0].mxu0
      %v3591 = vadd.f32 %v3302, %v3590
      %v3592 = vpop.f32.mrb[0].mxu0
      %v3593 = vpop.f32.mrb[0].mxu0
      %v3594 = vadd.f32 %v3305, %v3593
      %v3595 = vpop.f32.mrb[0].mxu0
      %3596 = vmatprep.mubr.bf16.mxu0 %v1714
      %3597 = vmatmul.mubr.bf16.gmra.mrb[0].mxu0 %v1713
      %v3598 = vpop.f32.mrb[0].mxu0
      %v3599 = vadd.f32 %v3310, %v3598
      %v3600 = vpop.f32.mrb[0].mxu0
      %v3601 = vpop.f32.mrb[0].mxu0
      %v3602 = vadd.f32 %v3313, %v3601
      %v3603 = vpop.f32.mrb[0].mxu0
      %3604 = vmatprep.mubr.bf16.mxu0 %v1723
      %3605 = vmatmul.mubr.bf16.gmra.mrb[0].mxu0 %v1722
      %v3606 = vpop.f32.mrb[0].mxu0
      %v3607 = vadd.f32 %v3318, %v3606
      %v3608 = vpop.f32.mrb[0].mxu0
      %v3609 = vpop.f32.mrb[0].mxu0
      %v3610 = vadd.f32 %v3321, %v3609
      %v3611 = vpop.f32.mrb[0].mxu0
      %3612 = vmatprep.mubr.bf16.mxu0 %v1732
      %3613 = vmatmul.mubr.bf16.gmra.mrb[0].mxu0 %v1731
      %v3614 = vpop.f32.mrb[0].mxu0
      %v3615 = vadd.f32 %v3326, %v3614
      %v3616 = vpop.f32.mrb[0].mxu0
      %v3617 = vpop.f32.mrb[0].mxu0
      %v3618 = vadd.f32 %v3329, %v3617
      %v3619 = vpop.f32.mrb[0].mxu0
      %3620 = vmatprep.mubr.bf16.mxu0 %v1741
      %3621 = vmatmul.mubr.bf16.gmra.mrb[0].mxu0 %v1740
      %v3622 = vpop.f32.mrb[0].mxu0
      %v3623 = vadd.f32 %v3334, %v3622
      %v3624 = vpop.f32.mrb[0].mxu0
      %v3625 = vpop.f32.mrb[0].mxu0
      %v3626 = vadd.f32 %v3337, %v3625
      %v3627 = vpop.f32.mrb[0].mxu0
      %3628 = vmatprep.mubr.bf16.mxu0 %v1750
      %3629 = vmatmul.mubr.bf16.gmra.mrb[0].mxu0 %v1749
      %v3630 = vpop.f32.mrb[0].mxu0
      %v3631 = vadd.f32 %v3342, %v3630
      %v3632 = vpop.f32.mrb[0].mxu0
      %v3633 = vpop.f32.mrb[0].mxu0
      %v3634 = vadd.f32 %v3345, %v3633
      %v3635 = vpop.f32.mrb[0].mxu0
      %3636 = vmatprep.mubr.bf16.mxu0 %v1759
      %3637 = vmatmul.mubr.bf16.gmra.mrb[0].mxu0 %v1758
      %v3638 = vpop.f32.mrb[0].mxu0
      %v3639 = vadd.f32 %v3350, %v3638
      %v3640 = vpop.f32.mrb[0].mxu0
      %v3641 = vpop.f32.mrb[0].mxu0
      %v3642 = vadd.f32 %v3353, %v3641
      %v3643 = vpop.f32.mrb[0].mxu0
      %3644 = vmatprep.mubr.bf16.mxu0 %v1768
      %3645 = vmatmul.mubr.bf16.gmra.mrb[0].mxu0 %v1767
      %v3646 = vpop.f32.mrb[0].mxu0
      %v3647 = vadd.f32 %v3358, %v3646
      %v3648 = vpop.f32.mrb[0].mxu0
      %v3649 = vpop.f32.mrb[0].mxu0
      %v3650 = vadd.f32 %v3361, %v3649
      %v3651 = vpop.f32.mrb[0].mxu0
      %3652 = vmatprep.mubr.bf16.mxu0 %v1777
      %3653 = vmatmul.mubr.bf16.gmra.mrb[0].mxu0 %v1776
      %v3654 = vpop.f32.mrb[0].mxu0
      %v3655 = vadd.f32 %v3366, %v3654
      %v3656 = vpop.f32.mrb[0].mxu0
      %v3657 = vpop.f32.mrb[0].mxu0
      %v3658 = vadd.f32 %v3369, %v3657
      %v3659 = vpop.f32.mrb[0].mxu0
      %3660 = vmatprep.mubr.bf16.mxu0 %v1786
      %3661 = vmatmul.mubr.bf16.gmra.mrb[0].mxu0 %v1785
      %v3662 = vpop.f32.mrb[0].mxu0
      %v3663 = vadd.f32 %v3374, %v3662
      %v3664 = vpop.f32.mrb[0].mxu0
      %v3665 = vpop.f32.mrb[0].mxu0
      %v3666 = vadd.f32 %v3377, %v3665
      %v3667 = vpop.f32.mrb[0].mxu0
      %3668 = vmatprep.mubr.bf16.mxu0 %v1795
      %3669 = vmatmul.mubr.bf16.gmra.mrb[0].mxu0 %v1794
      %v3670 = vpop.f32.mrb[0].mxu0
      %v3671 = vadd.f32 %v3382, %v3670
      %v3672 = vpop.f32.mrb[0].mxu0
      %v3673 = vpop.f32.mrb[0].mxu0
      %v3674 = vadd.f32 %v3385, %v3673
      %v3675 = vpop.f32.mrb[0].mxu0
      %3676 = vmatprep.mubr.bf16.mxu0 %v1804
      %3677 = vmatmul.mubr.bf16.gmra.mrb[0].mxu0 %v1803
      %v3678 = vpop.f32.mrb[0].mxu0
      %v3679 = vadd.f32 %v3390, %v3678
      %v3680 = vpop.f32.mrb[0].mxu0
      %v3681 = vpop.f32.mrb[0].mxu0
      %v3682 = vadd.f32 %v3393, %v3681
      %v3683 = vpop.f32.mrb[0].mxu0
      %3684 = vmatprep.mubr.bf16.mxu0 %v1813
      %3685 = vmatmul.mubr.bf16.gmra.mrb[0].mxu0 %v1812
      %v3686 = vpop.f32.mrb[0].mxu0
      %v3687 = vadd.f32 %v3398, %v3686
      %v3688 = vpop.f32.mrb[0].mxu0
      %v3689 = vpop.f32.mrb[0].mxu0
      %v3690 = vadd.f32 %v3401, %v3689
      %v3691 = vpop.f32.mrb[0].mxu0
      %3692 = vmatprep.mubr.bf16.mxu0 %v1822
      %3693 = vmatmul.mubr.bf16.gmra.mrb[0].mxu0 %v1821
      %v3694 = vpop.f32.mrb[0].mxu0
      %v3695 = vadd.f32 %v3406, %v3694
      %v3696 = vpop.f32.mrb[0].mxu0
      %v3697 = vpop.f32.mrb[0].mxu0
      %v3698 = vadd.f32 %v3409, %v3697
      %v3699 = vpop.f32.mrb[0].mxu0
      %3700 = vmatprep.mubr.bf16.mxu0 %v1831
      %3701 = vmatmul.mubr.bf16.gmra.mrb[0].mxu0 %v1830
      %v3702 = vpop.f32.mrb[0].mxu0
      %v3703 = vadd.f32 %v3414, %v3702
      %v3704 = vpop.f32.mrb[0].mxu0
      %v3705 = vpop.f32.mrb[0].mxu0
      %v3706 = vadd.f32 %v3417, %v3705
      %v3707 = vpop.f32.mrb[0].mxu0
      %3708 = vdwg.mxu0
      %3709 = vmatprep.subr.bf16.mxu0 0
      %3710 = vmatpush1.bf16.msra.mxu0 %v2473
      %3711 = vmatprep.subr.bf16.mxu0 0
      %3712 = vmatpush1.bf16.msra.mxu0 %v2474
      %3713 = vmatprep.subr.bf16.mxu0 0
      %3714 = vmatpush1.bf16.msra.mxu0 %v2475
      %3715 = vmatprep.subr.bf16.mxu0 0
      %3716 = vmatpush1.bf16.msra.mxu0 %v2476
      %3717 = vmatprep.subr.bf16.mxu0 0
      %3718 = vmatpush1.bf16.msra.mxu0 %v2477
      %3719 = vmatprep.subr.bf16.mxu0 0
      %3720 = vmatpush1.bf16.msra.mxu0 %v2478
      %3721 = vmatprep.subr.bf16.mxu0 0
      %3722 = vmatpush1.bf16.msra.mxu0 %v2479
      %3723 = vmatprep.subr.bf16.mxu0 0
      %3724 = vmatpush1.bf16.msra.mxu0 %v2480
      %3725 = vmatprep.subr.bf16.mxu0 0
      %3726 = vmatpush1.bf16.msra.mxu0 0
      %3727 = vmatprep.subr.bf16.mxu0 0
      %3728 = vmatpush1.bf16.msra.mxu0 0
      %3729 = vmatprep.subr.bf16.mxu0 0
      %3730 = vmatpush1.bf16.msra.mxu0 0
      %3731 = vmatprep.subr.bf16.mxu0 0
      %3732 = vmatpush1.bf16.msra.mxu0 0
      %3733 = vmatprep.subr.bf16.mxu0 0
      %3734 = vmatpush1.bf16.msra.mxu0 0
      %3735 = vmatprep.subr.bf16.mxu0 0
      %3736 = vmatpush1.bf16.msra.mxu0 0
      %3737 = vmatprep.subr.bf16.mxu0 0
      %3738 = vmatpush1.bf16.msra.mxu0 0
      %3739 = vmatprep.subr.bf16.mxu0 0
      %3740 = vmatpush1.bf16.msra.mxu0 0
      %3741 = vmatprep.mubr.bf16.mxu0 0
      %3742 = vmatmul.mubr.bf16.gmra.mrb[0].mxu0 %v1553
      %v3743 = vpop.f32.mrb[0].mxu0
      %v3744 = vadd.f32 %v3455, %v3743
      %v3745 = vpop.f32.mrb[0].mxu0
      %v3746 = vpop.f32.mrb[0].mxu0
      %v3747 = vadd.f32 %v3458, %v3746
      %v3748 = vpop.f32.mrb[0].mxu0
      %3749 = vmatprep.mubr.bf16.mxu0 0
      %3750 = vmatmul.mubr.bf16.gmra.mrb[0].mxu0 %v1562
      %v3751 = vpop.f32.mrb[0].mxu0
      %v3752 = vadd.f32 %v3463, %v3751
      %v3753 = vpop.f32.mrb[0].mxu0
      %v3754 = vpop.f32.mrb[0].mxu0
      %v3755 = vadd.f32 %v3466, %v3754
      %v3756 = vpop.f32.mrb[0].mxu0
      %3757 = vmatprep.mubr.bf16.mxu0 0
      %3758 = vmatmul.mubr.bf16.gmra.mrb[0].mxu0 %v1571
      %v3759 = vpop.f32.mrb[0].mxu0
      %v3760 = vadd.f32 %v3471, %v3759
      %v3761 = vpop.f32.mrb[0].mxu0
      %v3762 = vpop.f32.mrb[0].mxu0
      %v3763 = vadd.f32 %v3474, %v3762
      %v3764 = vpop.f32.mrb[0].mxu0
      %3765 = vmatprep.mubr.bf16.mxu0 0
      %3766 = vmatmul.mubr.bf16.gmra.mrb[0].mxu0 %v1580
      %v3767 = vpop.f32.mrb[0].mxu0
      %v3768 = vadd.f32 %v3479, %v3767
      %v3769 = vpop.f32.mrb[0].mxu0
      %v3770 = vpop.f32.mrb[0].mxu0
      %v3771 = vadd.f32 %v3482, %v3770
      %v3772 = vpop.f32.mrb[0].mxu0
      %3773 = vmatprep.mubr.bf16.mxu0 0
      %3774 = vmatmul.mubr.bf16.gmra.mrb[0].mxu0 %v1589
      %v3775 = vpop.f32.mrb[0].mxu0
      %v3776 = vadd.f32 %v3487, %v3775
      %v3777 = vpop.f32.mrb[0].mxu0
      %v3778 = vpop.f32.mrb[0].mxu0
      %v3779 = vadd.f32 %v3490, %v3778
      %v3780 = vpop.f32.mrb[0].mxu0
      %3781 = vmatprep.mubr.bf16.mxu0 0
      %3782 = vmatmul.mubr.bf16.gmra.mrb[0].mxu0 %v1598
      %v3783 = vpop.f32.mrb[0].mxu0
      %v3784 = vadd.f32 %v3495, %v3783
      %v3785 = vpop.f32.mrb[0].mxu0
      %v3786 = vpop.f32.mrb[0].mxu0
      %v3787 = vadd.f32 %v3498, %v3786
      %v3788 = vpop.f32.mrb[0].mxu0
      %3789 = vmatprep.mubr.bf16.mxu0 0
      %3790 = vmatmul.mubr.bf16.gmra.mrb[0].mxu0 %v1607
      %v3791 = vpop.f32.mrb[0].mxu0
      %v3792 = vadd.f32 %v3503, %v3791
      %v3793 = vpop.f32.mrb[0].mxu0
      %v3794 = vpop.f32.mrb[0].mxu0
      %v3795 = vadd.f32 %v3506, %v3794
      %v3796 = vpop.f32.mrb[0].mxu0
      %3797 = vmatprep.mubr.bf16.mxu0 0
      %3798 = vmatmul.mubr.bf16.gmra.mrb[0].mxu0 %v1616
      %v3799 = vpop.f32.mrb[0].mxu0
      %v3800 = vadd.f32 %v3511, %v3799
      %v3801 = vpop.f32.mrb[0].mxu0
      %v3802 = vpop.f32.mrb[0].mxu0
      %v3803 = vadd.f32 %v3514, %v3802
      %v3804 = vpop.f32.mrb[0].mxu0
      %3805 = vmatprep.mubr.bf16.mxu0 0
      %3806 = vmatmul.mubr.bf16.gmra.mrb[0].mxu0 %v1625
      %v3807 = vpop.f32.mrb[0].mxu0
      %v3808 = vadd.f32 %v3519, %v3807
      %v3809 = vpop.f32.mrb[0].mxu0
      %v3810 = vpop.f32.mrb[0].mxu0
      %v3811 = vadd.f32 %v3522, %v3810
      %v3812 = vpop.f32.mrb[0].mxu0
      %3813 = vmatprep.mubr.bf16.mxu0 0
      %3814 = vmatmul.mubr.bf16.gmra.mrb[0].mxu0 %v1634
      %v3815 = vpop.f32.mrb[0].mxu0
      %v3816 = vadd.f32 %v3527, %v3815
      %v3817 = vpop.f32.mrb[0].mxu0
      %v3818 = vpop.f32.mrb[0].mxu0
      %v3819 = vadd.f32 %v3530, %v3818
      %v3820 = vpop.f32.mrb[0].mxu0
      %3821 = vmatprep.mubr.bf16.mxu0 0
      %3822 = vmatmul.mubr.bf16.gmra.mrb[0].mxu0 %v1643
      %v3823 = vpop.f32.mrb[0].mxu0
      %v3824 = vadd.f32 %v3535, %v3823
      %v3825 = vpop.f32.mrb[0].mxu0
      %v3826 = vpop.f32.mrb[0].mxu0
      %v3827 = vadd.f32 %v3538, %v3826
      %v3828 = vpop.f32.mrb[0].mxu0
      %3829 = vmatprep.mubr.bf16.mxu0 0
      %3830 = vmatmul.mubr.bf16.gmra.mrb[0].mxu0 %v1652
      %v3831 = vpop.f32.mrb[0].mxu0
      %v3832 = vadd.f32 %v3543, %v3831
      %v3833 = vpop.f32.mrb[0].mxu0
      %v3834 = vpop.f32.mrb[0].mxu0
      %v3835 = vadd.f32 %v3546, %v3834
      %v3836 = vpop.f32.mrb[0].mxu0
      %3837 = vmatprep.mubr.bf16.mxu0 0
      %3838 = vmatmul.mubr.bf16.gmra.mrb[0].mxu0 %v1661
      %v3839 = vpop.f32.mrb[0].mxu0
      %v3840 = vadd.f32 %v3551, %v3839
      %v3841 = vpop.f32.mrb[0].mxu0
      %v3842 = vpop.f32.mrb[0].mxu0
      %v3843 = vadd.f32 %v3554, %v3842
      %v3844 = vpop.f32.mrb[0].mxu0
      %3845 = vmatprep.mubr.bf16.mxu0 0
      %3846 = vmatmul.mubr.bf16.gmra.mrb[0].mxu0 %v1670
      %v3847 = vpop.f32.mrb[0].mxu0
      %v3848 = vadd.f32 %v3559, %v3847
      %v3849 = vpop.f32.mrb[0].mxu0
      %v3850 = vpop.f32.mrb[0].mxu0
      %v3851 = vadd.f32 %v3562, %v3850
      %v3852 = vpop.f32.mrb[0].mxu0
      %3853 = vmatprep.mubr.bf16.mxu0 0
      %3854 = vmatmul.mubr.bf16.gmra.mrb[0].mxu0 %v1679
      %v3855 = vpop.f32.mrb[0].mxu0
      %v3856 = vadd.f32 %v3567, %v3855
      %v3857 = vpop.f32.mrb[0].mxu0
      %v3858 = vpop.f32.mrb[0].mxu0
      %v3859 = vadd.f32 %v3570, %v3858
      %v3860 = vpop.f32.mrb[0].mxu0
      %3861 = vmatprep.mubr.bf16.mxu0 0
      %3862 = vmatmul.mubr.bf16.gmra.mrb[0].mxu0 %v1688
      %v3863 = vpop.f32.mrb[0].mxu0
      %v3864 = vadd.f32 %v3575, %v3863
      %v3865 = vpop.f32.mrb[0].mxu0
      %v3866 = vpop.f32.mrb[0].mxu0
      %v3867 = vadd.f32 %v3578, %v3866
      %v3868 = vpop.f32.mrb[0].mxu0
      %3869 = vmatprep.mubr.bf16.mxu0 0
      %3870 = vmatmul.mubr.bf16.gmra.mrb[0].mxu0 %v1697
      %v3871 = vpop.f32.mrb[0].mxu0
      %v3872 = vadd.f32 %v3583, %v3871
      %v3873 = vpop.f32.mrb[0].mxu0
      %v3874 = vpop.f32.mrb[0].mxu0
      %v3875 = vadd.f32 %v3586, %v3874
      %v3876 = vpop.f32.mrb[0].mxu0
      %3877 = vmatprep.mubr.bf16.mxu0 0
      %3878 = vmatmul.mubr.bf16.gmra.mrb[0].mxu0 %v1706
      %v3879 = vpop.f32.mrb[0].mxu0
      %v3880 = vadd.f32 %v3591, %v3879
      %v3881 = vpop.f32.mrb[0].mxu0
      %v3882 = vpop.f32.mrb[0].mxu0
      %v3883 = vadd.f32 %v3594, %v3882
      %v3884 = vpop.f32.mrb[0].mxu0
      %3885 = vmatprep.mubr.bf16.mxu0 0
      %3886 = vmatmul.mubr.bf16.gmra.mrb[0].mxu0 %v1715
      %v3887 = vpop.f32.mrb[0].mxu0
      %v3888 = vadd.f32 %v3599, %v3887
      %v3889 = vpop.f32.mrb[0].mxu0
      %v3890 = vpop.f32.mrb[0].mxu0
      %v3891 = vadd.f32 %v3602, %v3890
      %v3892 = vpop.f32.mrb[0].mxu0
      %3893 = vmatprep.mubr.bf16.mxu0 0
      %3894 = vmatmul.mubr.bf16.gmra.mrb[0].mxu0 %v1724
      %v3895 = vpop.f32.mrb[0].mxu0
      %v3896 = vadd.f32 %v3607, %v3895
      %v3897 = vpop.f32.mrb[0].mxu0
      %v3898 = vpop.f32.mrb[0].mxu0
      %v3899 = vadd.f32 %v3610, %v3898
      %v3900 = vpop.f32.mrb[0].mxu0
      %3901 = vmatprep.mubr.bf16.mxu0 0
      %3902 = vmatmul.mubr.bf16.gmra.mrb[0].mxu0 %v1733
      %v3903 = vpop.f32.mrb[0].mxu0
      %v3904 = vadd.f32 %v3615, %v3903
      %v3905 = vpop.f32.mrb[0].mxu0
      %v3906 = vpop.f32.mrb[0].mxu0
      %v3907 = vadd.f32 %v3618, %v3906
      %v3908 = vpop.f32.mrb[0].mxu0
      %3909 = vmatprep.mubr.bf16.mxu0 0
      %3910 = vmatmul.mubr.bf16.gmra.mrb[0].mxu0 %v1742
      %v3911 = vpop.f32.mrb[0].mxu0
      %v3912 = vadd.f32 %v3623, %v3911
      %v3913 = vpop.f32.mrb[0].mxu0
      %v3914 = vpop.f32.mrb[0].mxu0
      %v3915 = vadd.f32 %v3626, %v3914
      %v3916 = vpop.f32.mrb[0].mxu0
      %3917 = vmatprep.mubr.bf16.mxu0 0
      %3918 = vmatmul.mubr.bf16.gmra.mrb[0].mxu0 %v1751
      %v3919 = vpop.f32.mrb[0].mxu0
      %v3920 = vadd.f32 %v3631, %v3919
      %v3921 = vpop.f32.mrb[0].mxu0
      %v3922 = vpop.f32.mrb[0].mxu0
      %v3923 = vadd.f32 %v3634, %v3922
      %v3924 = vpop.f32.mrb[0].mxu0
      %3925 = vmatprep.mubr.bf16.mxu0 0
      %3926 = vmatmul.mubr.bf16.gmra.mrb[0].mxu0 %v1760
      %v3927 = vpop.f32.mrb[0].mxu0
      %v3928 = vadd.f32 %v3639, %v3927
      %v3929 = vpop.f32.mrb[0].mxu0
      %v3930 = vpop.f32.mrb[0].mxu0
      %v3931 = vadd.f32 %v3642, %v3930
      %v3932 = vpop.f32.mrb[0].mxu0
      %3933 = vmatprep.mubr.bf16.mxu0 0
      %3934 = vmatmul.mubr.bf16.gmra.mrb[0].mxu0 %v1769
      %v3935 = vpop.f32.mrb[0].mxu0
      %v3936 = vadd.f32 %v3647, %v3935
      %v3937 = vpop.f32.mrb[0].mxu0
      %v3938 = vpop.f32.mrb[0].mxu0
      %v3939 = vadd.f32 %v3650, %v3938
      %v3940 = vpop.f32.mrb[0].mxu0
      %3941 = vmatprep.mubr.bf16.mxu0 0
      %3942 = vmatmul.mubr.bf16.gmra.mrb[0].mxu0 %v1778
      %v3943 = vpop.f32.mrb[0].mxu0
      %v3944 = vadd.f32 %v3655, %v3943
      %v3945 = vpop.f32.mrb[0].mxu0
      %v3946 = vpop.f32.mrb[0].mxu0
      %v3947 = vadd.f32 %v3658, %v3946
      %v3948 = vpop.f32.mrb[0].mxu0
      %3949 = vmatprep.mubr.bf16.mxu0 0
      %3950 = vmatmul.mubr.bf16.gmra.mrb[0].mxu0 %v1787
      %v3951 = vpop.f32.mrb[0].mxu0
      %v3952 = vadd.f32 %v3663, %v3951
      %v3953 = vpop.f32.mrb[0].mxu0
      %v3954 = vpop.f32.mrb[0].mxu0
      %v3955 = vadd.f32 %v3666, %v3954
      %v3956 = vpop.f32.mrb[0].mxu0
      %3957 = vmatprep.mubr.bf16.mxu0 0
      %3958 = vmatmul.mubr.bf16.gmra.mrb[0].mxu0 %v1796
      %v3959 = vpop.f32.mrb[0].mxu0
      %v3960 = vadd.f32 %v3671, %v3959
      %v3961 = vpop.f32.mrb[0].mxu0
      %v3962 = vpop.f32.mrb[0].mxu0
      %v3963 = vadd.f32 %v3674, %v3962
      %v3964 = vpop.f32.mrb[0].mxu0
      %3965 = vmatprep.mubr.bf16.mxu0 0
      %3966 = vmatmul.mubr.bf16.gmra.mrb[0].mxu0 %v1805
      %v3967 = vpop.f32.mrb[0].mxu0
      %v3968 = vadd.f32 %v3679, %v3967
      %v3969 = vpop.f32.mrb[0].mxu0
      %v3970 = vpop.f32.mrb[0].mxu0
      %v3971 = vadd.f32 %v3682, %v3970
      %v3972 = vpop.f32.mrb[0].mxu0
      %3973 = vmatprep.mubr.bf16.mxu0 0
      %3974 = vmatmul.mubr.bf16.gmra.mrb[0].mxu0 %v1814
      %v3975 = vpop.f32.mrb[0].mxu0
      %v3976 = vadd.f32 %v3687, %v3975
      %v3977 = vpop.f32.mrb[0].mxu0
      %v3978 = vpop.f32.mrb[0].mxu0
      %v3979 = vadd.f32 %v3690, %v3978
      %v3980 = vpop.f32.mrb[0].mxu0
      %3981 = vmatprep.mubr.bf16.mxu0 0
      %3982 = vmatmul.mubr.bf16.gmra.mrb[0].mxu0 %v1823
      %v3983 = vpop.f32.mrb[0].mxu0
      %v3984 = vadd.f32 %v3695, %v3983
      %v3985 = vpop.f32.mrb[0].mxu0
      %v3986 = vpop.f32.mrb[0].mxu0
      %v3987 = vadd.f32 %v3698, %v3986
      %v3988 = vpop.f32.mrb[0].mxu0
      %3989 = vmatprep.mubr.bf16.mxu0 0
      %3990 = vmatmul.mubr.bf16.gmra.mrb[0].mxu0 %v1832
      %v3991 = vpop.f32.mrb[0].mxu0
      %v3992 = vadd.f32 %v3703, %v3991
      %v3993 = vpop.f32.mrb[0].mxu0
      %v3994 = vpop.f32.mrb[0].mxu0
      %v3995 = vadd.f32 %v3706, %v3994
      %v3996 = vpop.f32.mrb[0].mxu0
      %3997 = vdwg.mxu0
      %v3998 = vmul.f32 %v3744, 0.5
      %v3999 = vmul.f32 %v3747, 0.5
      %v4000 = vmul.f32 %v3752, 0.5
      %v4001 = vmul.f32 %v3755, 0.5
      %v4002 = vmul.f32 %v3760, 0.5
      %v4003 = vmul.f32 %v3763, 0.5
      %v4004 = vmul.f32 %v3768, 0.5
      %v4005 = vmul.f32 %v3771, 0.5
      %v4006 = vmul.f32 %v3776, 0.5
      %v4007 = vmul.f32 %v3779, 0.5
      %v4008 = vmul.f32 %v3784, 0.5
      %v4009 = vmul.f32 %v3787, 0.5
      %v4010 = vmul.f32 %v3792, 0.5
      %v4011 = vmul.f32 %v3795, 0.5
      %v4012 = vmul.f32 %v3800, 0.5
      %v4013 = vmul.f32 %v3803, 0.5
      %v4014 = vmul.f32 %v3808, 0.5
      %v4015 = vmul.f32 %v3811, 0.5
      %v4016 = vmul.f32 %v3816, 0.5
      %v4017 = vmul.f32 %v3819, 0.5
      %v4018 = vmul.f32 %v3824, 0.5
      %v4019 = vmul.f32 %v3827, 0.5
      %v4020 = vmul.f32 %v3832, 0.5
      %v4021 = vmul.f32 %v3835, 0.5
      %v4022 = vmul.f32 %v3840, 0.5
      %v4023 = vmul.f32 %v3843, 0.5
      %v4024 = vmul.f32 %v3848, 0.5
      %v4025 = vmul.f32 %v3851, 0.5
      %v4026 = vmul.f32 %v3856, 0.5
      %v4027 = vmul.f32 %v3859, 0.5
      %v4028 = vmul.f32 %v3864, 0.5
      %v4029 = vmul.f32 %v3867, 0.5
      %v4030 = vmul.f32 %v3872, 0.5
      %v4031 = vmul.f32 %v3875, 0.5
      %v4032 = vmul.f32 %v3880, 0.5
      %v4033 = vmul.f32 %v3883, 0.5
      %v4034 = vmul.f32 %v3888, 0.5
      %v4035 = vmul.f32 %v3891, 0.5
      %v4036 = vmul.f32 %v3896, 0.5
      %v4037 = vmul.f32 %v3899, 0.5
      %v4038 = vmul.f32 %v3904, 0.5
      %v4039 = vmul.f32 %v3907, 0.5
      %v4040 = vmul.f32 %v3912, 0.5
      %v4041 = vmul.f32 %v3915, 0.5
      %v4042 = vmul.f32 %v3920, 0.5
      %v4043 = vmul.f32 %v3923, 0.5
      %v4044 = vmul.f32 %v3928, 0.5
      %v4045 = vmul.f32 %v3931, 0.5
      %v4046 = vmul.f32 %v3936, 0.5
      %v4047 = vmul.f32 %v3939, 0.5
      %v4048 = vmul.f32 %v3944, 0.5
      %v4049 = vmul.f32 %v3947, 0.5
      %v4050 = vmul.f32 %v3952, 0.5
      %v4051 = vmul.f32 %v3955, 0.5
      %v4052 = vmul.f32 %v3960, 0.5
      %v4053 = vmul.f32 %v3963, 0.5
      %v4054 = vmul.f32 %v3968, 0.5
      %v4055 = vmul.f32 %v3971, 0.5
      %v4056 = vmul.f32 %v3976, 0.5
      %v4057 = vmul.f32 %v3979, 0.5
      %v4058 = vmul.f32 %v3984, 0.5
      %v4059 = vmul.f32 %v3987, 0.5
      %v4060 = vmul.f32 %v3992, 0.5
      %v4061 = vmul.f32 %v3995, 0.5
      %v4062 = vmul.f32 %v3744, %v3744
      %v4063 = vmul.f32 %v3747, %v3747
      %v4064 = vmul.f32 %v3752, %v3752
      %v4065 = vmul.f32 %v3755, %v3755
      %v4066 = vmul.f32 %v3760, %v3760
      %v4067 = vmul.f32 %v3763, %v3763
      %v4068 = vmul.f32 %v3768, %v3768
      %v4069 = vmul.f32 %v3771, %v3771
      %v4070 = vmul.f32 %v3776, %v3776
      %v4071 = vmul.f32 %v3779, %v3779
      %v4072 = vmul.f32 %v3784, %v3784
      %v4073 = vmul.f32 %v3787, %v3787
      %v4074 = vmul.f32 %v3792, %v3792
      %v4075 = vmul.f32 %v3795, %v3795
      %v4076 = vmul.f32 %v3800, %v3800
      %v4077 = vmul.f32 %v3803, %v3803
      %v4078 = vmul.f32 %v3808, %v3808
      %v4079 = vmul.f32 %v3811, %v3811
      %v4080 = vmul.f32 %v3816, %v3816
      %v4081 = vmul.f32 %v3819, %v3819
      %v4082 = vmul.f32 %v3824, %v3824
      %v4083 = vmul.f32 %v3827, %v3827
      %v4084 = vmul.f32 %v3832, %v3832
      %v4085 = vmul.f32 %v3835, %v3835
      %v4086 = vmul.f32 %v3840, %v3840
      %v4087 = vmul.f32 %v3843, %v3843
      %v4088 = vmul.f32 %v3848, %v3848
      %v4089 = vmul.f32 %v3851, %v3851
      %v4090 = vmul.f32 %v3856, %v3856
      %v4091 = vmul.f32 %v3859, %v3859
      %v4092 = vmul.f32 %v3864, %v3864
      %v4093 = vmul.f32 %v3867, %v3867
      %v4094 = vmul.f32 %v3872, %v3872
      %v4095 = vmul.f32 %v3875, %v3875
      %v4096 = vmul.f32 %v3880, %v3880
      %v4097 = vmul.f32 %v3883, %v3883
      %v4098 = vmul.f32 %v3888, %v3888
      %v4099 = vmul.f32 %v3891, %v3891
      %v4100 = vmul.f32 %v3896, %v3896
      %v4101 = vmul.f32 %v3899, %v3899
      %v4102 = vmul.f32 %v3904, %v3904
      %v4103 = vmul.f32 %v3907, %v3907
      %v4104 = vmul.f32 %v3912, %v3912
      %v4105 = vmul.f32 %v3915, %v3915
      %v4106 = vmul.f32 %v3920, %v3920
      %v4107 = vmul.f32 %v3923, %v3923
      %v4108 = vmul.f32 %v3928, %v3928
      %v4109 = vmul.f32 %v3931, %v3931
      %v4110 = vmul.f32 %v3936, %v3936
      %v4111 = vmul.f32 %v3939, %v3939
      %v4112 = vmul.f32 %v3944, %v3944
      %v4113 = vmul.f32 %v3947, %v3947
      %v4114 = vmul.f32 %v3952, %v3952
      %v4115 = vmul.f32 %v3955, %v3955
      %v4116 = vmul.f32 %v3960, %v3960
      %v4117 = vmul.f32 %v3963, %v3963
      %v4118 = vmul.f32 %v3968, %v3968
      %v4119 = vmul.f32 %v3971, %v3971
      %v4120 = vmul.f32 %v3976, %v3976
      %v4121 = vmul.f32 %v3979, %v3979
      %v4122 = vmul.f32 %v3984, %v3984
      %v4123 = vmul.f32 %v3987, %v3987
      %v4124 = vmul.f32 %v3992, %v3992
      %v4125 = vmul.f32 %v3995, %v3995
      %v4126 = vmul.f32 %v4062, %v3744
      %v4127 = vmul.f32 %v4063, %v3747
      %v4128 = vmul.f32 %v4064, %v3752
      %v4129 = vmul.f32 %v4065, %v3755
      %v4130 = vmul.f32 %v4066, %v3760
      %v4131 = vmul.f32 %v4067, %v3763
      %v4132 = vmul.f32 %v4068, %v3768
      %v4133 = vmul.f32 %v4069, %v3771
      %v4134 = vmul.f32 %v4070, %v3776
      %v4135 = vmul.f32 %v4071, %v3779
      %v4136 = vmul.f32 %v4072, %v3784
      %v4137 = vmul.f32 %v4073, %v3787
      %v4138 = vmul.f32 %v4074, %v3792
      %v4139 = vmul.f32 %v4075, %v3795
      %v4140 = vmul.f32 %v4076, %v3800
      %v4141 = vmul.f32 %v4077, %v3803
      %v4142 = vmul.f32 %v4078, %v3808
      %v4143 = vmul.f32 %v4079, %v3811
      %v4144 = vmul.f32 %v4080, %v3816
      %v4145 = vmul.f32 %v4081, %v3819
      %v4146 = vmul.f32 %v4082, %v3824
      %v4147 = vmul.f32 %v4083, %v3827
      %v4148 = vmul.f32 %v4084, %v3832
      %v4149 = vmul.f32 %v4085, %v3835
      %v4150 = vmul.f32 %v4086, %v3840
      %v4151 = vmul.f32 %v4087, %v3843
      %v4152 = vmul.f32 %v4088, %v3848
      %v4153 = vmul.f32 %v4089, %v3851
      %v4154 = vmul.f32 %v4090, %v3856
      %v4155 = vmul.f32 %v4091, %v3859
      %v4156 = vmul.f32 %v4092, %v3864
      %v4157 = vmul.f32 %v4093, %v3867
      %v4158 = vmul.f32 %v4094, %v3872
      %v4159 = vmul.f32 %v4095, %v3875
      %v4160 = vmul.f32 %v4096, %v3880
      %v4161 = vmul.f32 %v4097, %v3883
      %v4162 = vmul.f32 %v4098, %v3888
      %v4163 = vmul.f32 %v4099, %v3891
      %v4164 = vmul.f32 %v4100, %v3896
      %v4165 = vmul.f32 %v4101, %v3899
      %v4166 = vmul.f32 %v4102, %v3904
      %v4167 = vmul.f32 %v4103, %v3907
      %v4168 = vmul.f32 %v4104, %v3912
      %v4169 = vmul.f32 %v4105, %v3915
      %v4170 = vmul.f32 %v4106, %v3920
      %v4171 = vmul.f32 %v4107, %v3923
      %v4172 = vmul.f32 %v4108, %v3928
      %v4173 = vmul.f32 %v4109, %v3931
      %v4174 = vmul.f32 %v4110, %v3936
      %v4175 = vmul.f32 %v4111, %v3939
      %v4176 = vmul.f32 %v4112, %v3944
      %v4177 = vmul.f32 %v4113, %v3947
      %v4178 = vmul.f32 %v4114, %v3952
      %v4179 = vmul.f32 %v4115, %v3955
      %v4180 = vmul.f32 %v4116, %v3960
      %v4181 = vmul.f32 %v4117, %v3963
      %v4182 = vmul.f32 %v4118, %v3968
      %v4183 = vmul.f32 %v4119, %v3971
      %v4184 = vmul.f32 %v4120, %v3976
      %v4185 = vmul.f32 %v4121, %v3979
      %v4186 = vmul.f32 %v4122, %v3984
      %v4187 = vmul.f32 %v4123, %v3987
      %v4188 = vmul.f32 %v4124, %v3992
      %v4189 = vmul.f32 %v4125, %v3995
      %v4190 = vmul.f32 %v4126, 0.044715
      %v4191 = vmul.f32 %v4127, 0.044715
      %v4192 = vmul.f32 %v4128, 0.044715
      %v4193 = vmul.f32 %v4129, 0.044715
      %v4194 = vmul.f32 %v4130, 0.044715
      %v4195 = vmul.f32 %v4131, 0.044715
      %v4196 = vmul.f32 %v4132, 0.044715
      %v4197 = vmul.f32 %v4133, 0.044715
      %v4198 = vmul.f32 %v4134, 0.044715
      %v4199 = vmul.f32 %v4135, 0.044715
      %v4200 = vmul.f32 %v4136, 0.044715
      %v4201 = vmul.f32 %v4137, 0.044715
      %v4202 = vmul.f32 %v4138, 0.044715
      %v4203 = vmul.f32 %v4139, 0.044715
      %v4204 = vmul.f32 %v4140, 0.044715
      %v4205 = vmul.f32 %v4141, 0.044715
      %v4206 = vmul.f32 %v4142, 0.044715
      %v4207 = vmul.f32 %v4143, 0.044715
      %v4208 = vmul.f32 %v4144, 0.044715
      %v4209 = vmul.f32 %v4145, 0.044715
      %v4210 = vmul.f32 %v4146, 0.044715
      %v4211 = vmul.f32 %v4147, 0.044715
      %v4212 = vmul.f32 %v4148, 0.044715
      %v4213 = vmul.f32 %v4149, 0.044715
      %v4214 = vmul.f32 %v4150, 0.044715
      %v4215 = vmul.f32 %v4151, 0.044715
      %v4216 = vmul.f32 %v4152, 0.044715
      %v4217 = vmul.f32 %v4153, 0.044715
      %v4218 = vmul.f32 %v4154, 0.044715
      %v4219 = vmul.f32 %v4155, 0.044715
      %v4220 = vmul.f32 %v4156, 0.044715
      %v4221 = vmul.f32 %v4157, 0.044715
      %v4222 = vmul.f32 %v4158, 0.044715
      %v4223 = vmul.f32 %v4159, 0.044715
      %v4224 = vmul.f32 %v4160, 0.044715
      %v4225 = vmul.f32 %v4161, 0.044715
      %v4226 = vmul.f32 %v4162, 0.044715
      %v4227 = vmul.f32 %v4163, 0.044715
      %v4228 = vmul.f32 %v4164, 0.044715
      %v4229 = vmul.f32 %v4165, 0.044715
      %v4230 = vmul.f32 %v4166, 0.044715
      %v4231 = vmul.f32 %v4167, 0.044715
      %v4232 = vmul.f32 %v4168, 0.044715
      %v4233 = vmul.f32 %v4169, 0.044715
      %v4234 = vmul.f32 %v4170, 0.044715
      %v4235 = vmul.f32 %v4171, 0.044715
      %v4236 = vmul.f32 %v4172, 0.044715
      %v4237 = vmul.f32 %v4173, 0.044715
      %v4238 = vmul.f32 %v4174, 0.044715
      %v4239 = vmul.f32 %v4175, 0.044715
      %v4240 = vmul.f32 %v4176, 0.044715
      %v4241 = vmul.f32 %v4177, 0.044715
      %v4242 = vmul.f32 %v4178, 0.044715
      %v4243 = vmul.f32 %v4179, 0.044715
      %v4244 = vmul.f32 %v4180, 0.044715
      %v4245 = vmul.f32 %v4181, 0.044715
      %v4246 = vmul.f32 %v4182, 0.044715
      %v4247 = vmul.f32 %v4183, 0.044715
      %v4248 = vmul.f32 %v4184, 0.044715
      %v4249 = vmul.f32 %v4185, 0.044715
      %v4250 = vmul.f32 %v4186, 0.044715
      %v4251 = vmul.f32 %v4187, 0.044715
      %v4252 = vmul.f32 %v4188, 0.044715
      %v4253 = vmul.f32 %v4189, 0.044715
      %v4254 = vadd.f32 %v3744, %v4190
      %v4255 = vadd.f32 %v3747, %v4191
      %v4256 = vadd.f32 %v3752, %v4192
      %v4257 = vadd.f32 %v3755, %v4193
      %v4258 = vadd.f32 %v3760, %v4194
      %v4259 = vadd.f32 %v3763, %v4195
      %v4260 = vadd.f32 %v3768, %v4196
      %v4261 = vadd.f32 %v3771, %v4197
      %v4262 = vadd.f32 %v3776, %v4198
      %v4263 = vadd.f32 %v3779, %v4199
      %v4264 = vadd.f32 %v3784, %v4200
      %v4265 = vadd.f32 %v3787, %v4201
      %v4266 = vadd.f32 %v3792, %v4202
      %v4267 = vadd.f32 %v3795, %v4203
      %v4268 = vadd.f32 %v3800, %v4204
      %v4269 = vadd.f32 %v3803, %v4205
      %v4270 = vadd.f32 %v3808, %v4206
      %v4271 = vadd.f32 %v3811, %v4207
      %v4272 = vadd.f32 %v3816, %v4208
      %v4273 = vadd.f32 %v3819, %v4209
      %v4274 = vadd.f32 %v3824, %v4210
      %v4275 = vadd.f32 %v3827, %v4211
      %v4276 = vadd.f32 %v3832, %v4212
      %v4277 = vadd.f32 %v3835, %v4213
      %v4278 = vadd.f32 %v3840, %v4214
      %v4279 = vadd.f32 %v3843, %v4215
      %v4280 = vadd.f32 %v3848, %v4216
      %v4281 = vadd.f32 %v3851, %v4217
      %v4282 = vadd.f32 %v3856, %v4218
      %v4283 = vadd.f32 %v3859, %v4219
      %v4284 = vadd.f32 %v3864, %v4220
      %v4285 = vadd.f32 %v3867, %v4221
      %v4286 = vadd.f32 %v3872, %v4222
      %v4287 = vadd.f32 %v3875, %v4223
      %v4288 = vadd.f32 %v3880, %v4224
      %v4289 = vadd.f32 %v3883, %v4225
      %v4290 = vadd.f32 %v3888, %v4226
      %v4291 = vadd.f32 %v3891, %v4227
      %v4292 = vadd.f32 %v3896, %v4228
      %v4293 = vadd.f32 %v3899, %v4229
      %v4294 = vadd.f32 %v3904, %v4230
      %v4295 = vadd.f32 %v3907, %v4231
      %v4296 = vadd.f32 %v3912, %v4232
      %v4297 = vadd.f32 %v3915, %v4233
      %v4298 = vadd.f32 %v3920, %v4234
      %v4299 = vadd.f32 %v3923, %v4235
      %v4300 = vadd.f32 %v3928, %v4236
      %v4301 = vadd.f32 %v3931, %v4237
      %v4302 = vadd.f32 %v3936, %v4238
      %v4303 = vadd.f32 %v3939, %v4239
      %v4304 = vadd.f32 %v3944, %v4240
      %v4305 = vadd.f32 %v3947, %v4241
      %v4306 = vadd.f32 %v3952, %v4242
      %v4307 = vadd.f32 %v3955, %v4243
      %v4308 = vadd.f32 %v3960, %v4244
      %v4309 = vadd.f32 %v3963, %v4245
      %v4310 = vadd.f32 %v3968, %v4246
      %v4311 = vadd.f32 %v3971, %v4247
      %v4312 = vadd.f32 %v3976, %v4248
      %v4313 = vadd.f32 %v3979, %v4249
      %v4314 = vadd.f32 %v3984, %v4250
      %v4315 = vadd.f32 %v3987, %v4251
      %v4316 = vadd.f32 %v3992, %v4252
      %v4317 = vadd.f32 %v3995, %v4253
      %v4318 = vmul.f32 %v4254, 0.7978846
      %v4319 = vmul.f32 %v4255, 0.7978846
      %v4320 = vmul.f32 %v4256, 0.7978846
      %v4321 = vmul.f32 %v4257, 0.7978846
      %v4322 = vmul.f32 %v4258, 0.7978846
      %v4323 = vmul.f32 %v4259, 0.7978846
      %v4324 = vmul.f32 %v4260, 0.7978846
      %v4325 = vmul.f32 %v4261, 0.7978846
      %v4326 = vmul.f32 %v4262, 0.7978846
      %v4327 = vmul.f32 %v4263, 0.7978846
      %v4328 = vmul.f32 %v4264, 0.7978846
      %v4329 = vmul.f32 %v4265, 0.7978846
      %v4330 = vmul.f32 %v4266, 0.7978846
      %v4331 = vmul.f32 %v4267, 0.7978846
      %v4332 = vmul.f32 %v4268, 0.7978846
      %v4333 = vmul.f32 %v4269, 0.7978846
      %v4334 = vmul.f32 %v4270, 0.7978846
      %v4335 = vmul.f32 %v4271, 0.7978846
      %v4336 = vmul.f32 %v4272, 0.7978846
      %v4337 = vmul.f32 %v4273, 0.7978846
      %v4338 = vmul.f32 %v4274, 0.7978846
      %v4339 = vmul.f32 %v4275, 0.7978846
      %v4340 = vmul.f32 %v4276, 0.7978846
      %v4341 = vmul.f32 %v4277, 0.7978846
      %v4342 = vmul.f32 %v4278, 0.7978846
      %v4343 = vmul.f32 %v4279, 0.7978846
      %v4344 = vmul.f32 %v4280, 0.7978846
      %v4345 = vmul.f32 %v4281, 0.7978846
      %v4346 = vmul.f32 %v4282, 0.7978846
      %v4347 = vmul.f32 %v4283, 0.7978846
      %v4348 = vmul.f32 %v4284, 0.7978846
      %v4349 = vmul.f32 %v4285, 0.7978846
      %v4350 = vmul.f32 %v4286, 0.7978846
      %v4351 = vmul.f32 %v4287, 0.7978846
      %v4352 = vmul.f32 %v4288, 0.7978846
      %v4353 = vmul.f32 %v4289, 0.7978846
      %v4354 = vmul.f32 %v4290, 0.7978846
      %v4355 = vmul.f32 %v4291, 0.7978846
      %v4356 = vmul.f32 %v4292, 0.7978846
      %v4357 = vmul.f32 %v4293, 0.7978846
      %v4358 = vmul.f32 %v4294, 0.7978846
      %v4359 = vmul.f32 %v4295, 0.7978846
      %v4360 = vmul.f32 %v4296, 0.7978846
      %v4361 = vmul.f32 %v4297, 0.7978846
      %v4362 = vmul.f32 %v4298, 0.7978846
      %v4363 = vmul.f32 %v4299, 0.7978846
      %v4364 = vmul.f32 %v4300, 0.7978846
      %v4365 = vmul.f32 %v4301, 0.7978846
      %v4366 = vmul.f32 %v4302, 0.7978846
      %v4367 = vmul.f32 %v4303, 0.7978846
      %v4368 = vmul.f32 %v4304, 0.7978846
      %v4369 = vmul.f32 %v4305, 0.7978846
      %v4370 = vmul.f32 %v4306, 0.7978846
      %v4371 = vmul.f32 %v4307, 0.7978846
      %v4372 = vmul.f32 %v4308, 0.7978846
      %v4373 = vmul.f32 %v4309, 0.7978846
      %v4374 = vmul.f32 %v4310, 0.7978846
      %v4375 = vmul.f32 %v4311, 0.7978846
      %v4376 = vmul.f32 %v4312, 0.7978846
      %v4377 = vmul.f32 %v4313, 0.7978846
      %v4378 = vmul.f32 %v4314, 0.7978846
      %v4379 = vmul.f32 %v4315, 0.7978846
      %v4380 = vmul.f32 %v4316, 0.7978846
      %v4381 = vmul.f32 %v4317, 0.7978846
      %v4382 = vtanh.pop %v4318
      %v4383 = vtanh.pop %v4319
      %v4384 = vtanh.pop %v4320
      %v4385 = vtanh.pop %v4321
      %v4386 = vtanh.pop %v4322
      %v4387 = vtanh.pop %v4323
      %v4388 = vtanh.pop %v4324
      %v4389 = vtanh.pop %v4325
      %v4390 = vtanh.pop %v4326
      %v4391 = vtanh.pop %v4327
      %v4392 = vtanh.pop %v4328
      %v4393 = vtanh.pop %v4329
      %v4394 = vtanh.pop %v4330
      %v4395 = vtanh.pop %v4331
      %v4396 = vtanh.pop %v4332
      %v4397 = vtanh.pop %v4333
      %v4398 = vtanh.pop %v4334
      %v4399 = vtanh.pop %v4335
      %v4400 = vtanh.pop %v4336
      %v4401 = vtanh.pop %v4337
      %v4402 = vtanh.pop %v4338
      %v4403 = vtanh.pop %v4339
      %v4404 = vtanh.pop %v4340
      %v4405 = vtanh.pop %v4341
      %v4406 = vtanh.pop %v4342
      %v4407 = vtanh.pop %v4343
      %v4408 = vtanh.pop %v4344
      %v4409 = vtanh.pop %v4345
      %v4410 = vtanh.pop %v4346
      %v4411 = vtanh.pop %v4347
      %v4412 = vtanh.pop %v4348
      %v4413 = vtanh.pop %v4349
      %v4414 = vtanh.pop %v4350
      %v4415 = vtanh.pop %v4351
      %v4416 = vtanh.pop %v4352
      %v4417 = vtanh.pop %v4353
      %v4418 = vtanh.pop %v4354
      %v4419 = vtanh.pop %v4355
      %v4420 = vtanh.pop %v4356
      %v4421 = vtanh.pop %v4357
      %v4422 = vtanh.pop %v4358
      %v4423 = vtanh.pop %v4359
      %v4424 = vtanh.pop %v4360
      %v4425 = vtanh.pop %v4361
      %v4426 = vtanh.pop %v4362
      %v4427 = vtanh.pop %v4363
      %v4428 = vtanh.pop %v4364
      %v4429 = vtanh.pop %v4365
      %v4430 = vtanh.pop %v4366
      %v4431 = vtanh.pop %v4367
      %v4432 = vtanh.pop %v4368
      %v4433 = vtanh.pop %v4369
      %v4434 = vtanh.pop %v4370
      %v4435 = vtanh.pop %v4371
      %v4436 = vtanh.pop %v4372
      %v4437 = vtanh.pop %v4373
      %v4438 = vtanh.pop %v4374
      %v4439 = vtanh.pop %v4375
      %v4440 = vtanh.pop %v4376
      %v4441 = vtanh.pop %v4377
      %v4442 = vtanh.pop %v4378
      %v4443 = vtanh.pop %v4379
      %v4444 = vtanh.pop %v4380
      %v4445 = vtanh.pop %v4381
      %v4446 = vadd.f32 %v4382, 1.0
      %v4447 = vadd.f32 %v4383, 1.0
      %v4448 = vadd.f32 %v4384, 1.0
      %v4449 = vadd.f32 %v4385, 1.0
      %v4450 = vadd.f32 %v4386, 1.0
      %v4451 = vadd.f32 %v4387, 1.0
      %v4452 = vadd.f32 %v4388, 1.0
      %v4453 = vadd.f32 %v4389, 1.0
      %v4454 = vadd.f32 %v4390, 1.0
      %v4455 = vadd.f32 %v4391, 1.0
      %v4456 = vadd.f32 %v4392, 1.0
      %v4457 = vadd.f32 %v4393, 1.0
      %v4458 = vadd.f32 %v4394, 1.0
      %v4459 = vadd.f32 %v4395, 1.0
      %v4460 = vadd.f32 %v4396, 1.0
      %v4461 = vadd.f32 %v4397, 1.0
      %v4462 = vadd.f32 %v4398, 1.0
      %v4463 = vadd.f32 %v4399, 1.0
      %v4464 = vadd.f32 %v4400, 1.0
      %v4465 = vadd.f32 %v4401, 1.0
      %v4466 = vadd.f32 %v4402, 1.0
      %v4467 = vadd.f32 %v4403, 1.0
      %v4468 = vadd.f32 %v4404, 1.0
      %v4469 = vadd.f32 %v4405, 1.0
      %v4470 = vadd.f32 %v4406, 1.0
      %v4471 = vadd.f32 %v4407, 1.0
      %v4472 = vadd.f32 %v4408, 1.0
      %v4473 = vadd.f32 %v4409, 1.0
      %v4474 = vadd.f32 %v4410, 1.0
      %v4475 = vadd.f32 %v4411, 1.0
      %v4476 = vadd.f32 %v4412, 1.0
      %v4477 = vadd.f32 %v4413, 1.0
      %v4478 = vadd.f32 %v4414, 1.0
      %v4479 = vadd.f32 %v4415, 1.0
      %v4480 = vadd.f32 %v4416, 1.0
      %v4481 = vadd.f32 %v4417, 1.0
      %v4482 = vadd.f32 %v4418, 1.0
      %v4483 = vadd.f32 %v4419, 1.0
      %v4484 = vadd.f32 %v4420, 1.0
      %v4485 = vadd.f32 %v4421, 1.0
      %v4486 = vadd.f32 %v4422, 1.0
      %v4487 = vadd.f32 %v4423, 1.0
      %v4488 = vadd.f32 %v4424, 1.0
      %v4489 = vadd.f32 %v4425, 1.0
      %v4490 = vadd.f32 %v4426, 1.0
      %v4491 = vadd.f32 %v4427, 1.0
      %v4492 = vadd.f32 %v4428, 1.0
      %v4493 = vadd.f32 %v4429, 1.0
      %v4494 = vadd.f32 %v4430, 1.0
      %v4495 = vadd.f32 %v4431, 1.0
      %v4496 = vadd.f32 %v4432, 1.0
      %v4497 = vadd.f32 %v4433, 1.0
      %v4498 = vadd.f32 %v4434, 1.0
      %v4499 = vadd.f32 %v4435, 1.0
      %v4500 = vadd.f32 %v4436, 1.0
      %v4501 = vadd.f32 %v4437, 1.0
      %v4502 = vadd.f32 %v4438, 1.0
      %v4503 = vadd.f32 %v4439, 1.0
      %v4504 = vadd.f32 %v4440, 1.0
      %v4505 = vadd.f32 %v4441, 1.0
      %v4506 = vadd.f32 %v4442, 1.0
      %v4507 = vadd.f32 %v4443, 1.0
      %v4508 = vadd.f32 %v4444, 1.0
      %v4509 = vadd.f32 %v4445, 1.0
      %v4510 = vmul.f32 %v3998, %v4446
      %v4511 = vmul.f32 %v3999, %v4447
      %v4512 = vmul.f32 %v4000, %v4448
      %v4513 = vmul.f32 %v4001, %v4449
      %v4514 = vmul.f32 %v4002, %v4450
      %v4515 = vmul.f32 %v4003, %v4451
      %v4516 = vmul.f32 %v4004, %v4452
      %v4517 = vmul.f32 %v4005, %v4453
      %v4518 = vmul.f32 %v4006, %v4454
      %v4519 = vmul.f32 %v4007, %v4455
      %v4520 = vmul.f32 %v4008, %v4456
      %v4521 = vmul.f32 %v4009, %v4457
      %v4522 = vmul.f32 %v4010, %v4458
      %v4523 = vmul.f32 %v4011, %v4459
      %v4524 = vmul.f32 %v4012, %v4460
      %v4525 = vmul.f32 %v4013, %v4461
      %v4526 = vmul.f32 %v4014, %v4462
      %v4527 = vmul.f32 %v4015, %v4463
      %v4528 = vmul.f32 %v4016, %v4464
      %v4529 = vmul.f32 %v4017, %v4465
      %v4530 = vmul.f32 %v4018, %v4466
      %v4531 = vmul.f32 %v4019, %v4467
      %v4532 = vmul.f32 %v4020, %v4468
      %v4533 = vmul.f32 %v4021, %v4469
      %v4534 = vmul.f32 %v4022, %v4470
      %v4535 = vmul.f32 %v4023, %v4471
      %v4536 = vmul.f32 %v4024, %v4472
      %v4537 = vmul.f32 %v4025, %v4473
      %v4538 = vmul.f32 %v4026, %v4474
      %v4539 = vmul.f32 %v4027, %v4475
      %v4540 = vmul.f32 %v4028, %v4476
      %v4541 = vmul.f32 %v4029, %v4477
      %v4542 = vmul.f32 %v4030, %v4478
      %v4543 = vmul.f32 %v4031, %v4479
      %v4544 = vmul.f32 %v4032, %v4480
      %v4545 = vmul.f32 %v4033, %v4481
      %v4546 = vmul.f32 %v4034, %v4482
      %v4547 = vmul.f32 %v4035, %v4483
      %v4548 = vmul.f32 %v4036, %v4484
      %v4549 = vmul.f32 %v4037, %v4485
      %v4550 = vmul.f32 %v4038, %v4486
      %v4551 = vmul.f32 %v4039, %v4487
      %v4552 = vmul.f32 %v4040, %v4488
      %v4553 = vmul.f32 %v4041, %v4489
      %v4554 = vmul.f32 %v4042, %v4490
      %v4555 = vmul.f32 %v4043, %v4491
      %v4556 = vmul.f32 %v4044, %v4492
      %v4557 = vmul.f32 %v4045, %v4493
      %v4558 = vmul.f32 %v4046, %v4494
      %v4559 = vmul.f32 %v4047, %v4495
      %v4560 = vmul.f32 %v4048, %v4496
      %v4561 = vmul.f32 %v4049, %v4497
      %v4562 = vmul.f32 %v4050, %v4498
      %v4563 = vmul.f32 %v4051, %v4499
      %v4564 = vmul.f32 %v4052, %v4500
      %v4565 = vmul.f32 %v4053, %v4501
      %v4566 = vmul.f32 %v4054, %v4502
      %v4567 = vmul.f32 %v4055, %v4503
      %v4568 = vmul.f32 %v4056, %v4504
      %v4569 = vmul.f32 %v4057, %v4505
      %v4570 = vmul.f32 %v4058, %v4506
      %v4571 = vmul.f32 %v4059, %v4507
      %v4572 = vmul.f32 %v4060, %v4508
      %v4573 = vmul.f32 %v4061, %v4509
      %4574 = vst [vmem:[%s175] sm:$0xff] %v4510
      %4575 = vst [vmem:[%s175 + $0x8] sm:$0xff] %v4511
      %4576 = vst [vmem:[%s175 + $0x10] sm:$0xff] %v4512
      %4577 = vst [vmem:[%s175 + $0x18] sm:$0xff] %v4513
      %4578 = vst [vmem:[%s175 + $0x20] sm:$0xff] %v4514
      %4579 = vst [vmem:[%s175 + $0x28] sm:$0xff] %v4515
      %4580 = vst [vmem:[%s175 + $0x30] sm:$0xff] %v4516
      %4581 = vst [vmem:[%s175 + $0x38] sm:$0xff] %v4517
      %4582 = vst [vmem:[%s175 + $0x40] sm:$0xff] %v4518
      %4583 = vst [vmem:[%s175 + $0x48] sm:$0xff] %v4519
      %4584 = vst [vmem:[%s175 + $0x50] sm:$0xff] %v4520
      %4585 = vst [vmem:[%s175 + $0x58] sm:$0xff] %v4521
      %4586 = vst [vmem:[%s175 + $0x60] sm:$0xff] %v4522
      %4587 = vst [vmem:[%s175 + $0x68] sm:$0xff] %v4523
      %4588 = vst [vmem:[%s175 + $0x70] sm:$0xff] %v4524
      %4589 = vst [vmem:[%s175 + $0x78] sm:$0xff] %v4525
      %4590 = vst [vmem:[%s175 + $0x80] sm:$0xff] %v4526
      %4591 = vst [vmem:[%s175 + $0x88] sm:$0xff] %v4527
      %4592 = vst [vmem:[%s175 + $0x90] sm:$0xff] %v4528
      %4593 = vst [vmem:[%s175 + $0x98] sm:$0xff] %v4529
      %4594 = vst [vmem:[%s175 + $0xa0] sm:$0xff] %v4530
      %4595 = vst [vmem:[%s175 + $0xa8] sm:$0xff] %v4531
      %4596 = vst [vmem:[%s175 + $0xb0] sm:$0xff] %v4532
      %4597 = vst [vmem:[%s175 + $0xb8] sm:$0xff] %v4533
      %4598 = vst [vmem:[%s175 + $0xc0] sm:$0xff] %v4534
      %4599 = vst [vmem:[%s175 + $0xc8] sm:$0xff] %v4535
      %4600 = vst [vmem:[%s175 + $0xd0] sm:$0xff] %v4536
      %4601 = vst [vmem:[%s175 + $0xd8] sm:$0xff] %v4537
      %4602 = vst [vmem:[%s175 + $0xe0] sm:$0xff] %v4538
      %4603 = vst [vmem:[%s175 + $0xe8] sm:$0xff] %v4539
      %4604 = vst [vmem:[%s175 + $0xf0] sm:$0xff] %v4540
      %4605 = vst [vmem:[%s175 + $0xf8] sm:$0xff] %v4541
      %4606 = vst [vmem:[%s175 + $0x100] sm:$0xff] %v4542
      %4607 = vst [vmem:[%s175 + $0x108] sm:$0xff] %v4543
      %4608 = vst [vmem:[%s175 + $0x110] sm:$0xff] %v4544
      %4609 = vst [vmem:[%s175 + $0x118] sm:$0xff] %v4545
      %4610 = vst [vmem:[%s175 + $0x120] sm:$0xff] %v4546
      %4611 = vst [vmem:[%s175 + $0x128] sm:$0xff] %v4547
      %4612 = vst [vmem:[%s175 + $0x130] sm:$0xff] %v4548
      %4613 = vst [vmem:[%s175 + $0x138] sm:$0xff] %v4549
      %4614 = vst [vmem:[%s175 + $0x140] sm:$0xff] %v4550
      %4615 = vst [vmem:[%s175 + $0x148] sm:$0xff] %v4551
      %4616 = vst [vmem:[%s175 + $0x150] sm:$0xff] %v4552
      %4617 = vst [vmem:[%s175 + $0x158] sm:$0xff] %v4553
      %4618 = vst [vmem:[%s175 + $0x160] sm:$0xff] %v4554
      %4619 = vst [vmem:[%s175 + $0x168] sm:$0xff] %v4555
      %4620 = vst [vmem:[%s175 + $0x170] sm:$0xff] %v4556
      %4621 = vst [vmem:[%s175 + $0x178] sm:$0xff] %v4557
      %4622 = vst [vmem:[%s175 + $0x180] sm:$0xff] %v4558
      %4623 = vst [vmem:[%s175 + $0x188] sm:$0xff] %v4559
      %4624 = vst [vmem:[%s175 + $0x190] sm:$0xff] %v4560
      %4625 = vst [vmem:[%s175 + $0x198] sm:$0xff] %v4561
      %4626 = vst [vmem:[%s175 + $0x1a0] sm:$0xff] %v4562
      %4627 = vst [vmem:[%s175 + $0x1a8] sm:$0xff] %v4563
      %4628 = vst [vmem:[%s175 + $0x1b0] sm:$0xff] %v4564
      %4629 = vst [vmem:[%s175 + $0x1b8] sm:$0xff] %v4565
      %4630 = vst [vmem:[%s175 + $0x1c0] sm:$0xff] %v4566
      %4631 = vst [vmem:[%s175 + $0x1c8] sm:$0xff] %v4567
      %4632 = vst [vmem:[%s175 + $0x1d0] sm:$0xff] %v4568
      %4633 = vst [vmem:[%s175 + $0x1d8] sm:$0xff] %v4569
      %4634 = vst [vmem:[%s175 + $0x1e0] sm:$0xff] %v4570
      %4635 = vst [vmem:[%s175 + $0x1e8] sm:$0xff] %v4571
      %4636 = vst [vmem:[%s175 + $0x1f0] sm:$0xff] %v4572
      %4637 = vst [vmem:[%s175 + $0x1f8] sm:$0xff] %v4573
      %s4638 = smul.u32 64, %s14
      %p4639 = scmp.lt.s32.totalorder %s4638, 127
      %s4640 = scalar_select %p4639, %s4638, 127
      %s4641 = smul.addr %s4640, 8
      %s4642 = scalar_lea.vmem %s3, %s4641
      // Predicated region
      $region33: #{middle_block.4} parent=31 // pred_check
        %p4643 = pneg %p100
      $region34: #{middle_block.4} parent=31 // pred_check_branch
        %4645 = sbr.rel (%p4643) target = $region36
      $region35: #{middle_block.4} parent=31 // pred_region
        %s4646 = smul.u32 64, %s14
      $region36: #{middle_block.4} parent=31 // pred_fallthru
        _
    $region32: #{middle_block.4} parent=5 // pred_fallthru
      _
    %p4647 = scmp.le.s32.totalorder 2, %s9
    // Predicated region
    $region37: #{middle_block.4} parent=5 // pred_check
      %p4648 = pneg %p4647
    $region38: #{middle_block.4} parent=5 // pred_check_branch
      %4650 = sbr.rel (%p4648) target = $region40
    $region39: #{middle_block.4} parent=5 // pred_region
      %s4651 = ssub.s32 %s9, 2
      // Predicated region
      $region41: #{middle_block.4} parent=39 // pred_check
        %p4652 = pneg %p106
      $region42: #{middle_block.4} parent=39 // pred_check_branch
        %4654 = sbr.rel (%p4652) target = $region44
      $region43: #{middle_block.4} parent=39 // pred_region
        %s4655 = smul.u32 64, %s15
        %p4656 = scmp.lt.s32.totalorder %s4655, 127
        %s4657 = scalar_select %p4656, %s4655, 127
        %s4658 = smul.addr %s4657, 8
        %s4659 = scalar_lea.vmem %s3, %s4658
      $region44: #{middle_block.4} parent=39 // pred_fallthru
        _
    $region40: #{middle_block.4} parent=5 // pred_fallthru
      _
  $region6: #{middle_block.4} parent=0 // loop_footer
    %s13 = sadd.s32 1, %s9
  $region7: #{middle_block.4} parent=0 // loop_footer_branch
    %8 = sbr.rel target = $region3
  $region8: #{middle_block.4} parent=0 // loop_exit
    _

// kernel: middle_block.5
$region0: #{middle_block.5}
  #allocation0 [shape = 'u32[]', space=smem, size = 0x4, offset = 0x4, fixed_abs, tag = 'smem constant byte address 0x4 - core index']
  #allocation1 [shape = 'u32[144,128]{1,0:T(1,128)}', space=vmem, size = 0x12000, scoped, tag = 'internal scratch']
  %s0 = inlined_call_operand.vmem [shape: bf16[1024,1152], index: 0, kind: input, shape index: {}]
  %s1 = inlined_call_operand.vmem [shape: bf16[1152,128], index: 1, kind: input, shape index: {}]
  %s2 = inlined_call_operand.vmem [shape: f32[1,128], index: 2, kind: input, shape index: {}]
  %s3 = inlined_call_operand.vmem [shape: f32[1024,128], index: 3, kind: input, shape index: {}]
  %s4 = inlined_call_operand.vmem [shape: f32[1024,128], index: 4, kind: output, shape index: {}]
  %s5 = sld [smem:[#allocation0]]
  $region49: #{middle_block.5} parent=0
    _
  %s7 = ssub.s32 1, %s5
  %s8 = scalar_select 0, %s7, %s5
  loop: start=0, step=1, limit=4
  $region2: #{middle_block.5} parent=0 // loop_pre_header
    _
  $region3: #{middle_block.5} parent=0 // loop_header
    %s10 = sphi 0, %s14
    %p11 = scmp.ge.s32.totalorder %s10, 4
    %s20 = sphi 0, %s22
    %s23 = sphi 0, %s20
    %s24 = sphi 0, %s23
    %s40 = sphi 0, %s24
    %s44 = sphi 0, %s44
    %s46 = sphi 0, %s44
    %s47 = sphi 0, %s46
    %s61 = sphi 0, %s47
    %s65 = sphi 0, %s65
    %s67 = sphi 0, %s65
    %s68 = sphi 0, %s67
    %s82 = sphi 0, %s68
    %s88 = sphi 0, %s90
    %s91 = sphi 0, %s88
    %s92 = sphi 0, %s91
    %s108 = sphi 0, %s92
    %s114 = sphi 0, %s116
    %s117 = sphi 0, %s114
    %s118 = sphi 0, %s117
    %s134 = sphi 0, %s118
  $region4: #{middle_block.5} parent=0 // loop_header_branch
    %13 = sbr.rel (%p11) target = $region8
  $region5: #{middle_block.5} parent=0 // loop_body
    %s15 = ssub.s32 %s10, 1
    %s16 = ssub.s32 %s10, 2
    %s17 = sadd.s32 %s10, 1
    %s18 = ssub.s32 %s10, %s17
    %p19 = scmp.eq.s32.totalorder %s18, 0
    %s21 = sadd.s32 %s20, 1
    %s22 = scalar_select %p19, %s20, %s21
    %p25 = pneg %p19
    %p26 = scmp.eq.s32.totalorder %s10, 1
    %p27 = por %p25, %p26
    %p28 = scmp.ne.s32.totalorder %s20, %s23
    %p29 = scmp.eq.s32.totalorder %s10, 0
    %p30 = por %p28, %p29
    %p31 = scmp.ne.s32.totalorder %s20, %s23
    %p32 = scmp.eq.s32.totalorder %s15, 1
    %p33 = por %p31, %p32
    %p34 = scmp.ne.s32.totalorder %s23, %s24
    %p35 = scmp.eq.s32.totalorder %s15, 0
    %p36 = por %p34, %p35
    %p37 = scmp.ne.s32.totalorder %s23, %s24
    %p38 = scmp.eq.s32.totalorder %s16, 1
    %p39 = por %p37, %p38
    %p41 = scmp.ne.s32.totalorder %s24, %s40
    %p42 = scmp.eq.s32.totalorder %s16, 0
    %p43 = por %p41, %p42
    %s45 = sadd.s32 %s44, 1
    %p48 = scmp.eq.s32.totalorder %s10, 1
    %p49 = scmp.ne.s32.totalorder %s44, %s46
    %p50 = scmp.eq.s32.totalorder %s10, 0
    %p51 = por %p49, %p50
    %p52 = scmp.ne.s32.totalorder %s44, %s46
    %p53 = scmp.eq.s32.totalorder %s15, 1
    %p54 = por %p52, %p53
    %p55 = scmp.ne.s32.totalorder %s46, %s47
    %p56 = scmp.eq.s32.totalorder %s15, 0
    %p57 = por %p55, %p56
    %p58 = scmp.ne.s32.totalorder %s46, %s47
    %p59 = scmp.eq.s32.totalorder %s16, 1
    %p60 = por %p58, %p59
    %p62 = scmp.ne.s32.totalorder %s47, %s61
    %p63 = scmp.eq.s32.totalorder %s16, 0
    %p64 = por %p62, %p63
    %s66 = sadd.s32 %s65, 1
    %p69 = scmp.eq.s32.totalorder %s10, 1
    %p70 = scmp.ne.s32.totalorder %s65, %s67
    %p71 = scmp.eq.s32.totalorder %s10, 0
    %p72 = por %p70, %p71
    %p73 = scmp.ne.s32.totalorder %s65, %s67
    %p74 = scmp.eq.s32.totalorder %s15, 1
    %p75 = por %p73, %p74
    %p76 = scmp.ne.s32.totalorder %s67, %s68
    %p77 = scmp.eq.s32.totalorder %s15, 0
    %p78 = por %p76, %p77
    %p79 = scmp.ne.s32.totalorder %s67, %s68
    %p80 = scmp.eq.s32.totalorder %s16, 1
    %p81 = por %p79, %p80
    %p83 = scmp.ne.s32.totalorder %s68, %s82
    %p84 = scmp.eq.s32.totalorder %s16, 0
    %p85 = por %p83, %p84
    %s86 = ssub.s32 %s10, %s17
    %p87 = scmp.eq.s32.totalorder %s86, 0
    %s89 = sadd.s32 %s88, 1
    %s90 = scalar_select %p87, %s88, %s89
    %p93 = pneg %p87
    %p94 = scmp.eq.s32.totalorder %s10, 1
    %p95 = por %p93, %p94
    %p96 = scmp.ne.s32.totalorder %s88, %s91
    %p97 = scmp.eq.s32.totalorder %s10, 0
    %p98 = por %p96, %p97
    %p99 = scmp.ne.s32.totalorder %s88, %s91
    %p100 = scmp.eq.s32.totalorder %s15, 1
    %p101 = por %p99, %p100
    %p102 = scmp.ne.s32.totalorder %s91, %s92
    %p103 = scmp.eq.s32.totalorder %s15, 0
    %p104 = por %p102, %p103
    %p105 = scmp.ne.s32.totalorder %s91, %s92
    %p106 = scmp.eq.s32.totalorder %s16, 1
    %p107 = por %p105, %p106
    %p109 = scmp.ne.s32.totalorder %s92, %s108
    %p110 = scmp.eq.s32.totalorder %s16, 0
    %p111 = por %p109, %p110
    %s112 = ssub.s32 %s10, %s17
    %p113 = scmp.eq.s32.totalorder %s112, 0
    %s115 = sadd.s32 %s114, 1
    %s116 = scalar_select %p113, %s114, %s115
    %p119 = pneg %p113
    %p120 = scmp.eq.s32.totalorder %s10, 1
    %p121 = por %p119, %p120
    %p122 = scmp.ne.s32.totalorder %s114, %s117
    %p123 = scmp.eq.s32.totalorder %s10, 0
    %p124 = por %p122, %p123
    %p125 = scmp.ne.s32.totalorder %s114, %s117
    %p126 = scmp.eq.s32.totalorder %s15, 1
    %p127 = por %p125, %p126
    %p128 = scmp.ne.s32.totalorder %s117, %s118
    %p129 = scmp.eq.s32.totalorder %s15, 0
    %p130 = por %p128, %p129
    %p131 = scmp.ne.s32.totalorder %s117, %s118
    %p132 = scmp.eq.s32.totalorder %s16, 1
    %p133 = por %p131, %p132
    %p135 = scmp.ne.s32.totalorder %s118, %s134
    %p136 = scmp.eq.s32.totalorder %s16, 0
    %p137 = por %p135, %p136
    %p138 = scmp.le.s32.totalorder 1, %s10
    %p139 = scmp.lt.s32.totalorder %s10, 3
    %p140 = pnand %p138, %p139
    %p141 = pneg %p140
    // Predicated region
    $region9: #{middle_block.5} parent=5 // pred_check
      _
    $region10: #{middle_block.5} parent=5 // pred_check_branch
      %143 = sbr.rel (%p140) target = $region12
    $region11: #{middle_block.5} parent=5 // pred_region
      %s144 = ssub.s32 %s10, 1
      // Predicated region
      $region13: #{middle_block.5} parent=11 // pred_check
        %p145 = pneg %p57
      $region14: #{middle_block.5} parent=11 // pred_check_branch
        %147 = sbr.rel (%p145) target = $region16
      $region15: #{middle_block.5} parent=11 // pred_region
        _
      $region16: #{middle_block.5} parent=11 // pred_fallthru
        _
      // Predicated region
      $region17: #{middle_block.5} parent=11 // pred_check
        %p148 = pneg %p78
      $region18: #{middle_block.5} parent=11 // pred_check_branch
        %150 = sbr.rel (%p148) target = $region20
      $region19: #{middle_block.5} parent=11 // pred_region
        _
      $region20: #{middle_block.5} parent=11 // pred_fallthru
        _
    $region12: #{middle_block.5} parent=5 // pred_fallthru
      _
    %p151 = scmp.lt.s32.totalorder %s10, 2
    // Predicated region
    $region21: #{middle_block.5} parent=5 // pred_check
      %p152 = pneg %p151
    $region22: #{middle_block.5} parent=5 // pred_check_branch
      %154 = sbr.rel (%p152) target = $region24
    $region23: #{middle_block.5} parent=5 // pred_region
      // Predicated region
      $region25: #{middle_block.5} parent=23 // pred_check
        %p155 = pneg %p30
      $region26: #{middle_block.5} parent=23 // pred_check_branch
        %157 = sbr.rel (%p155) target = $region28
      $region27: #{middle_block.5} parent=23 // pred_region
        %s158 = smul.u32 64, %s10
        %p159 = scmp.lt.s32.totalorder %s158, 127
        %s160 = scalar_select %p159, %s158, 127
        %s161 = smul.addr %s160, 9
        %s162 = smul.addr %s161, 4
        %s163 = scalar_lea.vmem %s0, %s162
        %s164 = smul.u32 64, %s10
      $region28: #{middle_block.5} parent=23 // pred_fallthru
        _
      // Predicated region
      $region29: #{middle_block.5} parent=23 // pred_check
        %p165 = pneg %p98
      $region30: #{middle_block.5} parent=23 // pred_check_branch
        %167 = sbr.rel (%p165) target = $region32
      $region31: #{middle_block.5} parent=23 // pred_region
        %s168 = smul.u32 64, %s10
        %p169 = scmp.lt.s32.totalorder %s168, 127
        %s170 = scalar_select %p169, %s168, 127
        %s171 = smul.addr %s170, 8
        %s172 = scalar_lea.vmem %s3, %s171
        %s173 = smul.u32 64, %s10
      $region32: #{middle_block.5} parent=23 // pred_fallthru
        _
    $region24: #{middle_block.5} parent=5 // pred_fallthru
      _
    %p174 = scmp.le.s32.totalorder 1, %s10
    %p175 = scmp.lt.s32.totalorder %s10, 3
    %p176 = pnand %p174, %p175
    %p177 = pneg %p176
    // Predicated region
    $region33: #{middle_block.5} parent=5 // pred_check
      _
    $region34: #{middle_block.5} parent=5 // pred_check_branch
      %179 = sbr.rel (%p176) target = $region36
    $region35: #{middle_block.5} parent=5 // pred_region
      %s180 = ssub.s32 %s10, 1
      %s181 = smul.u32 64, %s15
      %p182 = scmp.lt.s32.totalorder %s181, 127
      %s183 = scalar_select %p182, %s181, 127
      %s184 = smul.addr %s183, 9
      %s185 = smul.addr %s184, 4
      %s186 = scalar_lea.vmem %s0, %s185
      %p187 = pneg %p36
      %p188 = pneg %p33
      %p189 = pneg %p57
      %p190 = pneg %p54
      %p191 = pneg %p78
      %p192 = pneg %p75
      %s193 = smul.u32 64, %s15
      %p194 = scmp.lt.s32.totalorder %s193, 127
      %s195 = scalar_select %p194, %s193, 127
      %s196 = smul.addr %s195, 8
      %s197 = scalar_lea.vmem %s3, %s196
      %p198 = pneg %p104
      %p199 = pneg %p101
      %p200 = pneg %p130
      %p201 = pneg %p127
      %s202 = smul.u32 64, %s15
      %p203 = scmp.lt.s32.totalorder %s202, 127
      %s204 = scalar_select %p203, %s202, 127
      %s205 = smul.addr %s204, 8
      %s206 = scalar_lea.vmem %s4, %s205
      %s207 = smul.u32 64, %s15
      %p208 = scmp.lt.s32.totalorder %s207, 127
      %s209 = scalar_select %p208, %s207, 127
      %s210 = smul.addr %s209, 9
      %s211 = smul.addr %s210, 4
      %s212 = scalar_lea.vmem %s0, %s211
      %s213 = smul.u32 64, %s15
      %s214 = smul.u32 64, %s15
      %p215 = scmp.lt.s32.totalorder %s214, 127
      %s216 = scalar_select %p215, %s214, 127
      %s217 = smul.addr %s216, 8
      %s218 = scalar_lea.vmem %s3, %s217
      %s219 = smul.u32 64, %s15
      %s220 = smul.u32 64, %s15
      %p221 = scmp.lt.s32.totalorder %s220, 127
      %s222 = scalar_select %p221, %s220, 127
      %s223 = smul.addr %s222, 8
      %s224 = scalar_lea.vmem %s4, %s223
      %s225 = smul.u32 64, %s15
      %v227 = vld [vmem:[%s212] sm:$0xff]
      %v228 = vld [vmem:[%s212 + $0x8] sm:$0xff]
      %v229 = vld [vmem:[%s212 + $0x10] sm:$0xff]
      %v230 = vld [vmem:[%s212 + $0x18] sm:$0xff]
      %v231 = vld [vmem:[%s212 + $0x20] sm:$0xf]
      %v232 = vld [vmem:[%s212 + $0x24] sm:$0xff]
      %v233 = vld [vmem:[%s212 + $0x2c] sm:$0xff]
      %v234 = vld [vmem:[%s212 + $0x34] sm:$0xff]
      %v235 = vld [vmem:[%s212 + $0x3c] sm:$0xff]
      %v236 = vld [vmem:[%s212 + $0x44] sm:$0xf]
      %v237 = vld [vmem:[%s212 + $0x48] sm:$0xff]
      %v238 = vld [vmem:[%s212 + $0x50] sm:$0xff]
      %v239 = vld [vmem:[%s212 + $0x58] sm:$0xff]
      %v240 = vld [vmem:[%s212 + $0x60] sm:$0xff]
      %v241 = vld [vmem:[%s212 + $0x68] sm:$0xf]
      %v242 = vld [vmem:[%s212 + $0x6c] sm:$0xff]
      %v243 = vld [vmem:[%s212 + $0x74] sm:$0xff]
      %v244 = vld [vmem:[%s212 + $0x7c] sm:$0xff]
      %v245 = vld [vmem:[%s212 + $0x84] sm:$0xff]
      %v246 = vld [vmem:[%s212 + $0x8c] sm:$0xf]
      %v247 = vld [vmem:[%s212 + $0x90] sm:$0xff]
      %v248 = vld [vmem:[%s212 + $0x98] sm:$0xff]
      %v249 = vld [vmem:[%s212 + $0xa0] sm:$0xff]
      %v250 = vld [vmem:[%s212 + $0xa8] sm:$0xff]
      %v251 = vld [vmem:[%s212 + $0xb0] sm:$0xf]
      %v252 = vld [vmem:[%s212 + $0xb4] sm:$0xff]
      %v253 = vld [vmem:[%s212 + $0xbc] sm:$0xff]
      %v254 = vld [vmem:[%s212 + $0xc4] sm:$0xff]
      %v255 = vld [vmem:[%s212 + $0xcc] sm:$0xff]
      %v256 = vld [vmem:[%s212 + $0xd4] sm:$0xf]
      %v257 = vld [vmem:[%s212 + $0xd8] sm:$0xff]
      %v258 = vld [vmem:[%s212 + $0xe0] sm:$0xff]
      %v259 = vld [vmem:[%s212 + $0xe8] sm:$0xff]
      %v260 = vld [vmem:[%s212 + $0xf0] sm:$0xff]
      %v261 = vld [vmem:[%s212 + $0xf8] sm:$0xf]
      %v262 = vld [vmem:[%s212 + $0xfc] sm:$0xff]
      %v263 = vld [vmem:[%s212 + $0x104] sm:$0xff]
      %v264 = vld [vmem:[%s212 + $0x10c] sm:$0xff]
      %v265 = vld [vmem:[%s212 + $0x114] sm:$0xff]
      %v266 = vld [vmem:[%s212 + $0x11c] sm:$0xf]
      %v267 = vld [vmem:[%s212 + $0x120] sm:$0xff]
      %v268 = vld [vmem:[%s212 + $0x128] sm:$0xff]
      %v269 = vld [vmem:[%s212 + $0x130] sm:$0xff]
      %v270 = vld [vmem:[%s212 + $0x138] sm:$0xff]
      %v271 = vld [vmem:[%s212 + $0x140] sm:$0xf]
      %v272 = vld [vmem:[%s212 + $0x144] sm:$0xff]
      %v273 = vld [vmem:[%s212 + $0x14c] sm:$0xff]
      %v274 = vld [vmem:[%s212 + $0x154] sm:$0xff]
      %v275 = vld [vmem:[%s212 + $0x15c] sm:$0xff]
      %v276 = vld [vmem:[%s212 + $0x164] sm:$0xf]
      %v277 = vld [vmem:[%s212 + $0x168] sm:$0xff]
      %v278 = vld [vmem:[%s212 + $0x170] sm:$0xff]
      %v279 = vld [vmem:[%s212 + $0x178] sm:$0xff]
      %v280 = vld [vmem:[%s212 + $0x180] sm:$0xff]
      %v281 = vld [vmem:[%s212 + $0x188] sm:$0xf]
      %v282 = vld [vmem:[%s212 + $0x18c] sm:$0xff]
      %v283 = vld [vmem:[%s212 + $0x194] sm:$0xff]
      %v284 = vld [vmem:[%s212 + $0x19c] sm:$0xff]
      %v285 = vld [vmem:[%s212 + $0x1a4] sm:$0xff]
      %v286 = vld [vmem:[%s212 + $0x1ac] sm:$0xf]
      %v287 = vld [vmem:[%s212 + $0x1b0] sm:$0xff]
      %v288 = vld [vmem:[%s212 + $0x1b8] sm:$0xff]
      %v289 = vld [vmem:[%s212 + $0x1c0] sm:$0xff]
      %v290 = vld [vmem:[%s212 + $0x1c8] sm:$0xff]
      %v291 = vld [vmem:[%s212 + $0x1d0] sm:$0xf]
      %v292 = vld [vmem:[%s212 + $0x1d4] sm:$0xff]
      %v293 = vld [vmem:[%s212 + $0x1dc] sm:$0xff]
      %v294 = vld [vmem:[%s212 + $0x1e4] sm:$0xff]
      %v295 = vld [vmem:[%s212 + $0x1ec] sm:$0xff]
      %v296 = vld [vmem:[%s212 + $0x1f4] sm:$0xf]
      %v297 = vld [vmem:[%s212 + $0x1f8] sm:$0xff]
      %v298 = vld [vmem:[%s212 + $0x200] sm:$0xff]
      %v299 = vld [vmem:[%s212 + $0x208] sm:$0xff]
      %v300 = vld [vmem:[%s212 + $0x210] sm:$0xff]
      %v301 = vld [vmem:[%s212 + $0x218] sm:$0xf]
      %v302 = vld [vmem:[%s212 + $0x21c] sm:$0xff]
      %v303 = vld [vmem:[%s212 + $0x224] sm:$0xff]
      %v304 = vld [vmem:[%s212 + $0x22c] sm:$0xff]
      %v305 = vld [vmem:[%s212 + $0x234] sm:$0xff]
      %v306 = vld [vmem:[%s212 + $0x23c] sm:$0xf]
      %v307 = vld [vmem:[%s212 + $0x240] sm:$0xff]
      %v308 = vld [vmem:[%s212 + $0x248] sm:$0xff]
      %v309 = vld [vmem:[%s212 + $0x250] sm:$0xff]
      %v310 = vld [vmem:[%s212 + $0x258] sm:$0xff]
      %v311 = vld [vmem:[%s212 + $0x260] sm:$0xf]
      %v312 = vld [vmem:[%s212 + $0x264] sm:$0xff]
      %v313 = vld [vmem:[%s212 + $0x26c] sm:$0xff]
      %v314 = vld [vmem:[%s212 + $0x274] sm:$0xff]
      %v315 = vld [vmem:[%s212 + $0x27c] sm:$0xff]
      %v316 = vld [vmem:[%s212 + $0x284] sm:$0xf]
      %v317 = vld [vmem:[%s212 + $0x288] sm:$0xff]
      %v318 = vld [vmem:[%s212 + $0x290] sm:$0xff]
      %v319 = vld [vmem:[%s212 + $0x298] sm:$0xff]
      %v320 = vld [vmem:[%s212 + $0x2a0] sm:$0xff]
      %v321 = vld [vmem:[%s212 + $0x2a8] sm:$0xf]
      %v322 = vld [vmem:[%s212 + $0x2ac] sm:$0xff]
      %v323 = vld [vmem:[%s212 + $0x2b4] sm:$0xff]
      %v324 = vld [vmem:[%s212 + $0x2bc] sm:$0xff]
      %v325 = vld [vmem:[%s212 + $0x2c4] sm:$0xff]
      %v326 = vld [vmem:[%s212 + $0x2cc] sm:$0xf]
      %v327 = vld [vmem:[%s212 + $0x2d0] sm:$0xff]
      %v328 = vld [vmem:[%s212 + $0x2d8] sm:$0xff]
      %v329 = vld [vmem:[%s212 + $0x2e0] sm:$0xff]
      %v330 = vld [vmem:[%s212 + $0x2e8] sm:$0xff]
      %v331 = vld [vmem:[%s212 + $0x2f0] sm:$0xf]
      %v332 = vld [vmem:[%s212 + $0x2f4] sm:$0xff]
      %v333 = vld [vmem:[%s212 + $0x2fc] sm:$0xff]
      %v334 = vld [vmem:[%s212 + $0x304] sm:$0xff]
      %v335 = vld [vmem:[%s212 + $0x30c] sm:$0xff]
      %v336 = vld [vmem:[%s212 + $0x314] sm:$0xf]
      %v337 = vld [vmem:[%s212 + $0x318] sm:$0xff]
      %v338 = vld [vmem:[%s212 + $0x320] sm:$0xff]
      %v339 = vld [vmem:[%s212 + $0x328] sm:$0xff]
      %v340 = vld [vmem:[%s212 + $0x330] sm:$0xff]
      %v341 = vld [vmem:[%s212 + $0x338] sm:$0xf]
      %v342 = vld [vmem:[%s212 + $0x33c] sm:$0xff]
      %v343 = vld [vmem:[%s212 + $0x344] sm:$0xff]
      %v344 = vld [vmem:[%s212 + $0x34c] sm:$0xff]
      %v345 = vld [vmem:[%s212 + $0x354] sm:$0xff]
      %v346 = vld [vmem:[%s212 + $0x35c] sm:$0xf]
      %v347 = vld [vmem:[%s212 + $0x360] sm:$0xff]
      %v348 = vld [vmem:[%s212 + $0x368] sm:$0xff]
      %v349 = vld [vmem:[%s212 + $0x370] sm:$0xff]
      %v350 = vld [vmem:[%s212 + $0x378] sm:$0xff]
      %v351 = vld [vmem:[%s212 + $0x380] sm:$0xf]
      %v352 = vld [vmem:[%s212 + $0x384] sm:$0xff]
      %v353 = vld [vmem:[%s212 + $0x38c] sm:$0xff]
      %v354 = vld [vmem:[%s212 + $0x394] sm:$0xff]
      %v355 = vld [vmem:[%s212 + $0x39c] sm:$0xff]
      %v356 = vld [vmem:[%s212 + $0x3a4] sm:$0xf]
      %v357 = vld [vmem:[%s212 + $0x3a8] sm:$0xff]
      %v358 = vld [vmem:[%s212 + $0x3b0] sm:$0xff]
      %v359 = vld [vmem:[%s212 + $0x3b8] sm:$0xff]
      %v360 = vld [vmem:[%s212 + $0x3c0] sm:$0xff]
      %v361 = vld [vmem:[%s212 + $0x3c8] sm:$0xf]
      %v362 = vld [vmem:[%s212 + $0x3cc] sm:$0xff]
      %v363 = vld [vmem:[%s212 + $0x3d4] sm:$0xff]
      %v364 = vld [vmem:[%s212 + $0x3dc] sm:$0xff]
      %v365 = vld [vmem:[%s212 + $0x3e4] sm:$0xff]
      %v366 = vld [vmem:[%s212 + $0x3ec] sm:$0xf]
      %v367 = vld [vmem:[%s212 + $0x3f0] sm:$0xff]
      %v368 = vld [vmem:[%s212 + $0x3f8] sm:$0xff]
      %v369 = vld [vmem:[%s212 + $0x400] sm:$0xff]
      %v370 = vld [vmem:[%s212 + $0x408] sm:$0xff]
      %v371 = vld [vmem:[%s212 + $0x410] sm:$0xf]
      %v372 = vld [vmem:[%s212 + $0x414] sm:$0xff]
      %v373 = vld [vmem:[%s212 + $0x41c] sm:$0xff]
      %v374 = vld [vmem:[%s212 + $0x424] sm:$0xff]
      %v375 = vld [vmem:[%s212 + $0x42c] sm:$0xff]
      %v376 = vld [vmem:[%s212 + $0x434] sm:$0xf]
      %v377 = vld [vmem:[%s212 + $0x438] sm:$0xff]
      %v378 = vld [vmem:[%s212 + $0x440] sm:$0xff]
      %v379 = vld [vmem:[%s212 + $0x448] sm:$0xff]
      %v380 = vld [vmem:[%s212 + $0x450] sm:$0xff]
      %v381 = vld [vmem:[%s212 + $0x458] sm:$0xf]
      %v382 = vld [vmem:[%s212 + $0x45c] sm:$0xff]
      %v383 = vld [vmem:[%s212 + $0x464] sm:$0xff]
      %v384 = vld [vmem:[%s212 + $0x46c] sm:$0xff]
      %v385 = vld [vmem:[%s212 + $0x474] sm:$0xff]
      %v386 = vld [vmem:[%s212 + $0x47c] sm:$0xf]
      %v387 = vld [vmem:[%s212 + $0x480] sm:$0xff]
      %v388 = vld [vmem:[%s212 + $0x488] sm:$0xff]
      %v389 = vld [vmem:[%s212 + $0x490] sm:$0xff]
      %v390 = vld [vmem:[%s212 + $0x498] sm:$0xff]
      %v391 = vld [vmem:[%s212 + $0x4a0] sm:$0xf]
      %v392 = vld [vmem:[%s212 + $0x4a4] sm:$0xff]
      %v393 = vld [vmem:[%s212 + $0x4ac] sm:$0xff]
      %v394 = vld [vmem:[%s212 + $0x4b4] sm:$0xff]
      %v395 = vld [vmem:[%s212 + $0x4bc] sm:$0xff]
      %v396 = vld [vmem:[%s212 + $0x4c4] sm:$0xf]
      %v397 = vld [vmem:[%s212 + $0x4c8] sm:$0xff]
      %v398 = vld [vmem:[%s212 + $0x4d0] sm:$0xff]
      %v399 = vld [vmem:[%s212 + $0x4d8] sm:$0xff]
      %v400 = vld [vmem:[%s212 + $0x4e0] sm:$0xff]
      %v401 = vld [vmem:[%s212 + $0x4e8] sm:$0xf]
      %v402 = vld [vmem:[%s212 + $0x4ec] sm:$0xff]
      %v403 = vld [vmem:[%s212 + $0x4f4] sm:$0xff]
      %v404 = vld [vmem:[%s212 + $0x4fc] sm:$0xff]
      %v405 = vld [vmem:[%s212 + $0x504] sm:$0xff]
      %v406 = vld [vmem:[%s212 + $0x50c] sm:$0xf]
      %v407 = vld [vmem:[%s212 + $0x510] sm:$0xff]
      %v408 = vld [vmem:[%s212 + $0x518] sm:$0xff]
      %v409 = vld [vmem:[%s212 + $0x520] sm:$0xff]
      %v410 = vld [vmem:[%s212 + $0x528] sm:$0xff]
      %v411 = vld [vmem:[%s212 + $0x530] sm:$0xf]
      %v412 = vld [vmem:[%s212 + $0x534] sm:$0xff]
      %v413 = vld [vmem:[%s212 + $0x53c] sm:$0xff]
      %v414 = vld [vmem:[%s212 + $0x544] sm:$0xff]
      %v415 = vld [vmem:[%s212 + $0x54c] sm:$0xff]
      %v416 = vld [vmem:[%s212 + $0x554] sm:$0xf]
      %v417 = vld [vmem:[%s212 + $0x558] sm:$0xff]
      %v418 = vld [vmem:[%s212 + $0x560] sm:$0xff]
      %v419 = vld [vmem:[%s212 + $0x568] sm:$0xff]
      %v420 = vld [vmem:[%s212 + $0x570] sm:$0xff]
      %v421 = vld [vmem:[%s212 + $0x578] sm:$0xf]
      %v422 = vld [vmem:[%s212 + $0x57c] sm:$0xff]
      %v423 = vld [vmem:[%s212 + $0x584] sm:$0xff]
      %v424 = vld [vmem:[%s212 + $0x58c] sm:$0xff]
      %v425 = vld [vmem:[%s212 + $0x594] sm:$0xff]
      %v426 = vld [vmem:[%s212 + $0x59c] sm:$0xf]
      %v427 = vld [vmem:[%s212 + $0x5a0] sm:$0xff]
      %v428 = vld [vmem:[%s212 + $0x5a8] sm:$0xff]
      %v429 = vld [vmem:[%s212 + $0x5b0] sm:$0xff]
      %v430 = vld [vmem:[%s212 + $0x5b8] sm:$0xff]
      %v431 = vld [vmem:[%s212 + $0x5c0] sm:$0xf]
      %v432 = vld [vmem:[%s212 + $0x5c4] sm:$0xff]
      %v433 = vld [vmem:[%s212 + $0x5cc] sm:$0xff]
      %v434 = vld [vmem:[%s212 + $0x5d4] sm:$0xff]
      %v435 = vld [vmem:[%s212 + $0x5dc] sm:$0xff]
      %v436 = vld [vmem:[%s212 + $0x5e4] sm:$0xf]
      %v437 = vld [vmem:[%s212 + $0x5e8] sm:$0xff]
      %v438 = vld [vmem:[%s212 + $0x5f0] sm:$0xff]
      %v439 = vld [vmem:[%s212 + $0x5f8] sm:$0xff]
      %v440 = vld [vmem:[%s212 + $0x600] sm:$0xff]
      %v441 = vld [vmem:[%s212 + $0x608] sm:$0xf]
      %v442 = vld [vmem:[%s212 + $0x60c] sm:$0xff]
      %v443 = vld [vmem:[%s212 + $0x614] sm:$0xff]
      %v444 = vld [vmem:[%s212 + $0x61c] sm:$0xff]
      %v445 = vld [vmem:[%s212 + $0x624] sm:$0xff]
      %v446 = vld [vmem:[%s212 + $0x62c] sm:$0xf]
      %v447 = vld [vmem:[%s212 + $0x630] sm:$0xff]
      %v448 = vld [vmem:[%s212 + $0x638] sm:$0xff]
      %v449 = vld [vmem:[%s212 + $0x640] sm:$0xff]
      %v450 = vld [vmem:[%s212 + $0x648] sm:$0xff]
      %v451 = vld [vmem:[%s212 + $0x650] sm:$0xf]
      %v452 = vld [vmem:[%s212 + $0x654] sm:$0xff]
      %v453 = vld [vmem:[%s212 + $0x65c] sm:$0xff]
      %v454 = vld [vmem:[%s212 + $0x664] sm:$0xff]
      %v455 = vld [vmem:[%s212 + $0x66c] sm:$0xff]
      %v456 = vld [vmem:[%s212 + $0x674] sm:$0xf]
      %v457 = vld [vmem:[%s212 + $0x678] sm:$0xff]
      %v458 = vld [vmem:[%s212 + $0x680] sm:$0xff]
      %v459 = vld [vmem:[%s212 + $0x688] sm:$0xff]
      %v460 = vld [vmem:[%s212 + $0x690] sm:$0xff]
      %v461 = vld [vmem:[%s212 + $0x698] sm:$0xf]
      %v462 = vld [vmem:[%s212 + $0x69c] sm:$0xff]
      %v463 = vld [vmem:[%s212 + $0x6a4] sm:$0xff]
      %v464 = vld [vmem:[%s212 + $0x6ac] sm:$0xff]
      %v465 = vld [vmem:[%s212 + $0x6b4] sm:$0xff]
      %v466 = vld [vmem:[%s212 + $0x6bc] sm:$0xf]
      %v467 = vld [vmem:[%s212 + $0x6c0] sm:$0xff]
      %v468 = vld [vmem:[%s212 + $0x6c8] sm:$0xff]
      %v469 = vld [vmem:[%s212 + $0x6d0] sm:$0xff]
      %v470 = vld [vmem:[%s212 + $0x6d8] sm:$0xff]
      %v471 = vld [vmem:[%s212 + $0x6e0] sm:$0xf]
      %v472 = vld [vmem:[%s212 + $0x6e4] sm:$0xff]
      %v473 = vld [vmem:[%s212 + $0x6ec] sm:$0xff]
      %v474 = vld [vmem:[%s212 + $0x6f4] sm:$0xff]
      %v475 = vld [vmem:[%s212 + $0x6fc] sm:$0xff]
      %v476 = vld [vmem:[%s212 + $0x704] sm:$0xf]
      %v477 = vld [vmem:[%s212 + $0x708] sm:$0xff]
      %v478 = vld [vmem:[%s212 + $0x710] sm:$0xff]
      %v479 = vld [vmem:[%s212 + $0x718] sm:$0xff]
      %v480 = vld [vmem:[%s212 + $0x720] sm:$0xff]
      %v481 = vld [vmem:[%s212 + $0x728] sm:$0xf]
      %v482 = vld [vmem:[%s212 + $0x72c] sm:$0xff]
      %v483 = vld [vmem:[%s212 + $0x734] sm:$0xff]
      %v484 = vld [vmem:[%s212 + $0x73c] sm:$0xff]
      %v485 = vld [vmem:[%s212 + $0x744] sm:$0xff]
      %v486 = vld [vmem:[%s212 + $0x74c] sm:$0xf]
      %v487 = vld [vmem:[%s212 + $0x750] sm:$0xff]
      %v488 = vld [vmem:[%s212 + $0x758] sm:$0xff]
      %v489 = vld [vmem:[%s212 + $0x760] sm:$0xff]
      %v490 = vld [vmem:[%s212 + $0x768] sm:$0xff]
      %v491 = vld [vmem:[%s212 + $0x770] sm:$0xf]
      %v492 = vld [vmem:[%s212 + $0x774] sm:$0xff]
      %v493 = vld [vmem:[%s212 + $0x77c] sm:$0xff]
      %v494 = vld [vmem:[%s212 + $0x784] sm:$0xff]
      %v495 = vld [vmem:[%s212 + $0x78c] sm:$0xff]
      %v496 = vld [vmem:[%s212 + $0x794] sm:$0xf]
      %v497 = vld [vmem:[%s212 + $0x798] sm:$0xff]
      %v498 = vld [vmem:[%s212 + $0x7a0] sm:$0xff]
      %v499 = vld [vmem:[%s212 + $0x7a8] sm:$0xff]
      %v500 = vld [vmem:[%s212 + $0x7b0] sm:$0xff]
      %v501 = vld [vmem:[%s212 + $0x7b8] sm:$0xf]
      %v502 = vld [vmem:[%s212 + $0x7bc] sm:$0xff]
      %v503 = vld [vmem:[%s212 + $0x7c4] sm:$0xff]
      %v504 = vld [vmem:[%s212 + $0x7cc] sm:$0xff]
      %v505 = vld [vmem:[%s212 + $0x7d4] sm:$0xff]
      %v506 = vld [vmem:[%s212 + $0x7dc] sm:$0xf]
      %v507 = vld [vmem:[%s212 + $0x7e0] sm:$0xff]
      %v508 = vld [vmem:[%s212 + $0x7e8] sm:$0xff]
      %v509 = vld [vmem:[%s212 + $0x7f0] sm:$0xff]
      %v510 = vld [vmem:[%s212 + $0x7f8] sm:$0xff]
      %v511 = vld [vmem:[%s212 + $0x800] sm:$0xf]
      %v512 = vld [vmem:[%s212 + $0x804] sm:$0xff]
      %v513 = vld [vmem:[%s212 + $0x80c] sm:$0xff]
      %v514 = vld [vmem:[%s212 + $0x814] sm:$0xff]
      %v515 = vld [vmem:[%s212 + $0x81c] sm:$0xff]
      %v516 = vld [vmem:[%s212 + $0x824] sm:$0xf]
      %v517 = vld [vmem:[%s212 + $0x828] sm:$0xff]
      %v518 = vld [vmem:[%s212 + $0x830] sm:$0xff]
      %v519 = vld [vmem:[%s212 + $0x838] sm:$0xff]
      %v520 = vld [vmem:[%s212 + $0x840] sm:$0xff]
      %v521 = vld [vmem:[%s212 + $0x848] sm:$0xf]
      %v522 = vld [vmem:[%s212 + $0x84c] sm:$0xff]
      %v523 = vld [vmem:[%s212 + $0x854] sm:$0xff]
      %v524 = vld [vmem:[%s212 + $0x85c] sm:$0xff]
      %v525 = vld [vmem:[%s212 + $0x864] sm:$0xff]
      %v526 = vld [vmem:[%s212 + $0x86c] sm:$0xf]
      %v527 = vld [vmem:[%s212 + $0x870] sm:$0xff]
      %v528 = vld [vmem:[%s212 + $0x878] sm:$0xff]
      %v529 = vld [vmem:[%s212 + $0x880] sm:$0xff]
      %v530 = vld [vmem:[%s212 + $0x888] sm:$0xff]
      %v531 = vld [vmem:[%s212 + $0x890] sm:$0xf]
      %v532 = vld [vmem:[%s212 + $0x894] sm:$0xff]
      %v533 = vld [vmem:[%s212 + $0x89c] sm:$0xff]
      %v534 = vld [vmem:[%s212 + $0x8a4] sm:$0xff]
      %v535 = vld [vmem:[%s212 + $0x8ac] sm:$0xff]
      %v536 = vld [vmem:[%s212 + $0x8b4] sm:$0xf]
      %v537 = vld [vmem:[%s212 + $0x8b8] sm:$0xff]
      %v538 = vld [vmem:[%s212 + $0x8c0] sm:$0xff]
      %v539 = vld [vmem:[%s212 + $0x8c8] sm:$0xff]
      %v540 = vld [vmem:[%s212 + $0x8d0] sm:$0xff]
      %v541 = vld [vmem:[%s212 + $0x8d8] sm:$0xf]
      %v542 = vld [vmem:[%s212 + $0x8dc] sm:$0xff]
      %v543 = vld [vmem:[%s212 + $0x8e4] sm:$0xff]
      %v544 = vld [vmem:[%s212 + $0x8ec] sm:$0xff]
      %v545 = vld [vmem:[%s212 + $0x8f4] sm:$0xff]
      %v546 = vld [vmem:[%s212 + $0x8fc] sm:$0xf]
      %v547 = vld [vmem:[%s1] sm:$0xf]
      %v548 = vld [vmem:[%s1 + $0x4] sm:$0xf]
      %v549 = vld [vmem:[%s1 + $0x8] sm:$0xf]
      %v550 = vld [vmem:[%s1 + $0xc] sm:$0xf]
      %v551 = vld [vmem:[%s1 + $0x10] sm:$0xf]
      %v552 = vld [vmem:[%s1 + $0x14] sm:$0xf]
      %v553 = vld [vmem:[%s1 + $0x18] sm:$0xf]
      %v554 = vld [vmem:[%s1 + $0x1c] sm:$0xf]
      %v555 = vld [vmem:[%s1 + $0x20] sm:$0xf]
      %v556 = vld [vmem:[%s1 + $0x24] sm:$0xf]
      %v557 = vld [vmem:[%s1 + $0x28] sm:$0xf]
      %v558 = vld [vmem:[%s1 + $0x2c] sm:$0xf]
      %v559 = vld [vmem:[%s1 + $0x30] sm:$0xf]
      %v560 = vld [vmem:[%s1 + $0x34] sm:$0xf]
      %v561 = vld [vmem:[%s1 + $0x38] sm:$0xf]
      %v562 = vld [vmem:[%s1 + $0x3c] sm:$0xf]
      %v563 = vld [vmem:[%s1 + $0x40] sm:$0xf]
      %v564 = vld [vmem:[%s1 + $0x44] sm:$0xf]
      %v565 = vld [vmem:[%s1 + $0x48] sm:$0xf]
      %v566 = vld [vmem:[%s1 + $0x4c] sm:$0xf]
      %v567 = vld [vmem:[%s1 + $0x50] sm:$0xf]
      %v568 = vld [vmem:[%s1 + $0x54] sm:$0xf]
      %v569 = vld [vmem:[%s1 + $0x58] sm:$0xf]
      %v570 = vld [vmem:[%s1 + $0x5c] sm:$0xf]
      %v571 = vld [vmem:[%s1 + $0x60] sm:$0xf]
      %v572 = vld [vmem:[%s1 + $0x64] sm:$0xf]
      %v573 = vld [vmem:[%s1 + $0x68] sm:$0xf]
      %v574 = vld [vmem:[%s1 + $0x6c] sm:$0xf]
      %v575 = vld [vmem:[%s1 + $0x70] sm:$0xf]
      %v576 = vld [vmem:[%s1 + $0x74] sm:$0xf]
      %v577 = vld [vmem:[%s1 + $0x78] sm:$0xf]
      %v578 = vld [vmem:[%s1 + $0x7c] sm:$0xf]
      %v579 = vld [vmem:[%s1 + $0x80] sm:$0xf]
      %v580 = vld [vmem:[%s1 + $0x84] sm:$0xf]
      %v581 = vld [vmem:[%s1 + $0x88] sm:$0xf]
      %v582 = vld [vmem:[%s1 + $0x8c] sm:$0xf]
      %v583 = vld [vmem:[%s1 + $0x90] sm:$0xf]
      %v584 = vld [vmem:[%s1 + $0x94] sm:$0xf]
      %v585 = vld [vmem:[%s1 + $0x98] sm:$0xf]
      %v586 = vld [vmem:[%s1 + $0x9c] sm:$0xf]
      %v587 = vld [vmem:[%s1 + $0xa0] sm:$0xf]
      %v588 = vld [vmem:[%s1 + $0xa4] sm:$0xf]
      %v589 = vld [vmem:[%s1 + $0xa8] sm:$0xf]
      %v590 = vld [vmem:[%s1 + $0xac] sm:$0xf]
      %v591 = vld [vmem:[%s1 + $0xb0] sm:$0xf]
      %v592 = vld [vmem:[%s1 + $0xb4] sm:$0xf]
      %v593 = vld [vmem:[%s1 + $0xb8] sm:$0xf]
      %v594 = vld [vmem:[%s1 + $0xbc] sm:$0xf]
      %v595 = vld [vmem:[%s1 + $0xc0] sm:$0xf]
      %v596 = vld [vmem:[%s1 + $0xc4] sm:$0xf]
      %v597 = vld [vmem:[%s1 + $0xc8] sm:$0xf]
      %v598 = vld [vmem:[%s1 + $0xcc] sm:$0xf]
      %v599 = vld [vmem:[%s1 + $0xd0] sm:$0xf]
      %v600 = vld [vmem:[%s1 + $0xd4] sm:$0xf]
      %v601 = vld [vmem:[%s1 + $0xd8] sm:$0xf]
      %v602 = vld [vmem:[%s1 + $0xdc] sm:$0xf]
      %v603 = vld [vmem:[%s1 + $0xe0] sm:$0xf]
      %v604 = vld [vmem:[%s1 + $0xe4] sm:$0xf]
      %v605 = vld [vmem:[%s1 + $0xe8] sm:$0xf]
      %v606 = vld [vmem:[%s1 + $0xec] sm:$0xf]
      %v607 = vld [vmem:[%s1 + $0xf0] sm:$0xf]
      %v608 = vld [vmem:[%s1 + $0xf4] sm:$0xf]
      %v609 = vld [vmem:[%s1 + $0xf8] sm:$0xf]
      %v610 = vld [vmem:[%s1 + $0xfc] sm:$0xf]
      %v611 = vld [vmem:[%s1 + $0x100] sm:$0xf]
      %v612 = vld [vmem:[%s1 + $0x104] sm:$0xf]
      %v613 = vld [vmem:[%s1 + $0x108] sm:$0xf]
      %v614 = vld [vmem:[%s1 + $0x10c] sm:$0xf]
      %v615 = vld [vmem:[%s1 + $0x110] sm:$0xf]
      %v616 = vld [vmem:[%s1 + $0x114] sm:$0xf]
      %v617 = vld [vmem:[%s1 + $0x118] sm:$0xf]
      %v618 = vld [vmem:[%s1 + $0x11c] sm:$0xf]
      %v619 = vld [vmem:[%s1 + $0x120] sm:$0xf]
      %v620 = vld [vmem:[%s1 + $0x124] sm:$0xf]
      %v621 = vld [vmem:[%s1 + $0x128] sm:$0xf]
      %v622 = vld [vmem:[%s1 + $0x12c] sm:$0xf]
      %v623 = vld [vmem:[%s1 + $0x130] sm:$0xf]
      %v624 = vld [vmem:[%s1 + $0x134] sm:$0xf]
      %v625 = vld [vmem:[%s1 + $0x138] sm:$0xf]
      %v626 = vld [vmem:[%s1 + $0x13c] sm:$0xf]
      %v627 = vld [vmem:[%s1 + $0x140] sm:$0xf]
      %v628 = vld [vmem:[%s1 + $0x144] sm:$0xf]
      %v629 = vld [vmem:[%s1 + $0x148] sm:$0xf]
      %v630 = vld [vmem:[%s1 + $0x14c] sm:$0xf]
      %v631 = vld [vmem:[%s1 + $0x150] sm:$0xf]
      %v632 = vld [vmem:[%s1 + $0x154] sm:$0xf]
      %v633 = vld [vmem:[%s1 + $0x158] sm:$0xf]
      %v634 = vld [vmem:[%s1 + $0x15c] sm:$0xf]
      %v635 = vld [vmem:[%s1 + $0x160] sm:$0xf]
      %v636 = vld [vmem:[%s1 + $0x164] sm:$0xf]
      %v637 = vld [vmem:[%s1 + $0x168] sm:$0xf]
      %v638 = vld [vmem:[%s1 + $0x16c] sm:$0xf]
      %v639 = vld [vmem:[%s1 + $0x170] sm:$0xf]
      %v640 = vld [vmem:[%s1 + $0x174] sm:$0xf]
      %v641 = vld [vmem:[%s1 + $0x178] sm:$0xf]
      %v642 = vld [vmem:[%s1 + $0x17c] sm:$0xf]
      %v643 = vld [vmem:[%s1 + $0x180] sm:$0xf]
      %v644 = vld [vmem:[%s1 + $0x184] sm:$0xf]
      %v645 = vld [vmem:[%s1 + $0x188] sm:$0xf]
      %v646 = vld [vmem:[%s1 + $0x18c] sm:$0xf]
      %v647 = vld [vmem:[%s1 + $0x190] sm:$0xf]
      %v648 = vld [vmem:[%s1 + $0x194] sm:$0xf]
      %v649 = vld [vmem:[%s1 + $0x198] sm:$0xf]
      %v650 = vld [vmem:[%s1 + $0x19c] sm:$0xf]
      %v651 = vld [vmem:[%s1 + $0x1a0] sm:$0xf]
      %v652 = vld [vmem:[%s1 + $0x1a4] sm:$0xf]
      %v653 = vld [vmem:[%s1 + $0x1a8] sm:$0xf]
      %v654 = vld [vmem:[%s1 + $0x1ac] sm:$0xf]
      %v655 = vld [vmem:[%s1 + $0x1b0] sm:$0xf]
      %v656 = vld [vmem:[%s1 + $0x1b4] sm:$0xf]
      %v657 = vld [vmem:[%s1 + $0x1b8] sm:$0xf]
      %v658 = vld [vmem:[%s1 + $0x1bc] sm:$0xf]
      %v659 = vld [vmem:[%s1 + $0x1c0] sm:$0xf]
      %v660 = vld [vmem:[%s1 + $0x1c4] sm:$0xf]
      %v661 = vld [vmem:[%s1 + $0x1c8] sm:$0xf]
      %v662 = vld [vmem:[%s1 + $0x1cc] sm:$0xf]
      %v663 = vld [vmem:[%s1 + $0x1d0] sm:$0xf]
      %v664 = vld [vmem:[%s1 + $0x1d4] sm:$0xf]
      %v665 = vld [vmem:[%s1 + $0x1d8] sm:$0xf]
      %v666 = vld [vmem:[%s1 + $0x1dc] sm:$0xf]
      %v667 = vld [vmem:[%s1 + $0x1e0] sm:$0xf]
      %v668 = vld [vmem:[%s1 + $0x1e4] sm:$0xf]
      %v669 = vld [vmem:[%s1 + $0x1e8] sm:$0xf]
      %v670 = vld [vmem:[%s1 + $0x1ec] sm:$0xf]
      %v671 = vld [vmem:[%s1 + $0x1f0] sm:$0xf]
      %v672 = vld [vmem:[%s1 + $0x1f4] sm:$0xf]
      %v673 = vld [vmem:[%s1 + $0x1f8] sm:$0xf]
      %v674 = vld [vmem:[%s1 + $0x1fc] sm:$0xf]
      %v675 = vld [vmem:[%s1 + $0x200] sm:$0xf]
      %v676 = vld [vmem:[%s1 + $0x204] sm:$0xf]
      %v677 = vld [vmem:[%s1 + $0x208] sm:$0xf]
      %v678 = vld [vmem:[%s1 + $0x20c] sm:$0xf]
      %v679 = vld [vmem:[%s1 + $0x210] sm:$0xf]
      %v680 = vld [vmem:[%s1 + $0x214] sm:$0xf]
      %v681 = vld [vmem:[%s1 + $0x218] sm:$0xf]
      %v682 = vld [vmem:[%s1 + $0x21c] sm:$0xf]
      %v683 = vld [vmem:[%s1 + $0x220] sm:$0xf]
      %v684 = vld [vmem:[%s1 + $0x224] sm:$0xf]
      %v685 = vld [vmem:[%s1 + $0x228] sm:$0xf]
      %v686 = vld [vmem:[%s1 + $0x22c] sm:$0xf]
      %v687 = vld [vmem:[%s1 + $0x230] sm:$0xf]
      %v688 = vld [vmem:[%s1 + $0x234] sm:$0xf]
      %v689 = vld [vmem:[%s1 + $0x238] sm:$0xf]
      %v690 = vld [vmem:[%s1 + $0x23c] sm:$0xf]
      %v691 = vld [vmem:[%s2] sm:$0x1]
      %v693 = vlaneseq
      %v694 = vshrl.u32 %v693, 7
      %v695 = vsub.s32 0, %v694
      %v696 = vrot.slane %v691, %v695
      %v1018 = vunpack.c.l.b16 %v227
      %v1019 = vunpack.c.h.b16 %v227
      %v1020 = vunpack.c.l.b16 %v228
      %v1021 = vunpack.c.h.b16 %v228
      %v1022 = vunpack.c.l.b16 %v229
      %v1023 = vunpack.c.h.b16 %v229
      %v1024 = vunpack.c.l.b16 %v230
      %v1025 = vunpack.c.h.b16 %v230
      %v1026 = vunpack.c.l.b16 %v231
      %v1027 = vunpack.c.l.b16 %v232
      %v1028 = vunpack.c.h.b16 %v232
      %v1029 = vunpack.c.l.b16 %v233
      %v1030 = vunpack.c.h.b16 %v233
      %v1031 = vunpack.c.l.b16 %v234
      %v1032 = vunpack.c.h.b16 %v234
      %v1033 = vunpack.c.l.b16 %v235
      %v1034 = vunpack.c.h.b16 %v235
      %v1035 = vunpack.c.l.b16 %v236
      %v1036 = vunpack.c.l.b16 %v237
      %v1037 = vunpack.c.h.b16 %v237
      %v1038 = vunpack.c.l.b16 %v238
      %v1039 = vunpack.c.h.b16 %v238
      %v1040 = vunpack.c.l.b16 %v239
      %v1041 = vunpack.c.h.b16 %v239
      %v1042 = vunpack.c.l.b16 %v240
      %v1043 = vunpack.c.h.b16 %v240
      %v1044 = vunpack.c.l.b16 %v241
      %v1045 = vunpack.c.l.b16 %v242
      %v1046 = vunpack.c.h.b16 %v242
      %v1047 = vunpack.c.l.b16 %v243
      %v1048 = vunpack.c.h.b16 %v243
      %v1049 = vunpack.c.l.b16 %v244
      %v1050 = vunpack.c.h.b16 %v244
      %v1051 = vunpack.c.l.b16 %v245
      %v1052 = vunpack.c.h.b16 %v245
      %v1053 = vunpack.c.l.b16 %v246
      %v1054 = vunpack.c.l.b16 %v247
      %v1055 = vunpack.c.h.b16 %v247
      %v1056 = vunpack.c.l.b16 %v248
      %v1057 = vunpack.c.h.b16 %v248
      %v1058 = vunpack.c.l.b16 %v249
      %v1059 = vunpack.c.h.b16 %v249
      %v1060 = vunpack.c.l.b16 %v250
      %v1061 = vunpack.c.h.b16 %v250
      %v1062 = vunpack.c.l.b16 %v251
      %v1063 = vunpack.c.l.b16 %v252
      %v1064 = vunpack.c.h.b16 %v252
      %v1065 = vunpack.c.l.b16 %v253
      %v1066 = vunpack.c.h.b16 %v253
      %v1067 = vunpack.c.l.b16 %v254
      %v1068 = vunpack.c.h.b16 %v254
      %v1069 = vunpack.c.l.b16 %v255
      %v1070 = vunpack.c.h.b16 %v255
      %v1071 = vunpack.c.l.b16 %v256
      %v1072 = vunpack.c.l.b16 %v257
      %v1073 = vunpack.c.h.b16 %v257
      %v1074 = vunpack.c.l.b16 %v258
      %v1075 = vunpack.c.h.b16 %v258
      %v1076 = vunpack.c.l.b16 %v259
      %v1077 = vunpack.c.h.b16 %v259
      %v1078 = vunpack.c.l.b16 %v260
      %v1079 = vunpack.c.h.b16 %v260
      %v1080 = vunpack.c.l.b16 %v261
      %v1081 = vunpack.c.l.b16 %v262
      %v1082 = vunpack.c.h.b16 %v262
      %v1083 = vunpack.c.l.b16 %v263
      %v1084 = vunpack.c.h.b16 %v263
      %v1085 = vunpack.c.l.b16 %v264
      %v1086 = vunpack.c.h.b16 %v264
      %v1087 = vunpack.c.l.b16 %v265
      %v1088 = vunpack.c.h.b16 %v265
      %v1089 = vunpack.c.l.b16 %v266
      %v1090 = vunpack.c.l.b16 %v267
      %v1091 = vunpack.c.h.b16 %v267
      %v1092 = vunpack.c.l.b16 %v268
      %v1093 = vunpack.c.h.b16 %v268
      %v1094 = vunpack.c.l.b16 %v269
      %v1095 = vunpack.c.h.b16 %v269
      %v1096 = vunpack.c.l.b16 %v270
      %v1097 = vunpack.c.h.b16 %v270
      %v1098 = vunpack.c.l.b16 %v271
      %v1099 = vunpack.c.l.b16 %v272
      %v1100 = vunpack.c.h.b16 %v272
      %v1101 = vunpack.c.l.b16 %v273
      %v1102 = vunpack.c.h.b16 %v273
      %v1103 = vunpack.c.l.b16 %v274
      %v1104 = vunpack.c.h.b16 %v274
      %v1105 = vunpack.c.l.b16 %v275
      %v1106 = vunpack.c.h.b16 %v275
      %v1107 = vunpack.c.l.b16 %v276
      %v1108 = vunpack.c.l.b16 %v277
      %v1109 = vunpack.c.h.b16 %v277
      %v1110 = vunpack.c.l.b16 %v278
      %v1111 = vunpack.c.h.b16 %v278
      %v1112 = vunpack.c.l.b16 %v279
      %v1113 = vunpack.c.h.b16 %v279
      %v1114 = vunpack.c.l.b16 %v280
      %v1115 = vunpack.c.h.b16 %v280
      %v1116 = vunpack.c.l.b16 %v281
      %v1117 = vunpack.c.l.b16 %v282
      %v1118 = vunpack.c.h.b16 %v282
      %v1119 = vunpack.c.l.b16 %v283
      %v1120 = vunpack.c.h.b16 %v283
      %v1121 = vunpack.c.l.b16 %v284
      %v1122 = vunpack.c.h.b16 %v284
      %v1123 = vunpack.c.l.b16 %v285
      %v1124 = vunpack.c.h.b16 %v285
      %v1125 = vunpack.c.l.b16 %v286
      %v1126 = vunpack.c.l.b16 %v287
      %v1127 = vunpack.c.h.b16 %v287
      %v1128 = vunpack.c.l.b16 %v288
      %v1129 = vunpack.c.h.b16 %v288
      %v1130 = vunpack.c.l.b16 %v289
      %v1131 = vunpack.c.h.b16 %v289
      %v1132 = vunpack.c.l.b16 %v290
      %v1133 = vunpack.c.h.b16 %v290
      %v1134 = vunpack.c.l.b16 %v291
      %v1135 = vunpack.c.l.b16 %v292
      %v1136 = vunpack.c.h.b16 %v292
      %v1137 = vunpack.c.l.b16 %v293
      %v1138 = vunpack.c.h.b16 %v293
      %v1139 = vunpack.c.l.b16 %v294
      %v1140 = vunpack.c.h.b16 %v294
      %v1141 = vunpack.c.l.b16 %v295
      %v1142 = vunpack.c.h.b16 %v295
      %v1143 = vunpack.c.l.b16 %v296
      %v1144 = vunpack.c.l.b16 %v297
      %v1145 = vunpack.c.h.b16 %v297
      %v1146 = vunpack.c.l.b16 %v298
      %v1147 = vunpack.c.h.b16 %v298
      %v1148 = vunpack.c.l.b16 %v299
      %v1149 = vunpack.c.h.b16 %v299
      %v1150 = vunpack.c.l.b16 %v300
      %v1151 = vunpack.c.h.b16 %v300
      %v1152 = vunpack.c.l.b16 %v301
      %v1153 = vunpack.c.l.b16 %v302
      %v1154 = vunpack.c.h.b16 %v302
      %v1155 = vunpack.c.l.b16 %v303
      %v1156 = vunpack.c.h.b16 %v303
      %v1157 = vunpack.c.l.b16 %v304
      %v1158 = vunpack.c.h.b16 %v304
      %v1159 = vunpack.c.l.b16 %v305
      %v1160 = vunpack.c.h.b16 %v305
      %v1161 = vunpack.c.l.b16 %v306
      %v1162 = vunpack.c.l.b16 %v307
      %v1163 = vunpack.c.h.b16 %v307
      %v1164 = vunpack.c.l.b16 %v308
      %v1165 = vunpack.c.h.b16 %v308
      %v1166 = vunpack.c.l.b16 %v309
      %v1167 = vunpack.c.h.b16 %v309
      %v1168 = vunpack.c.l.b16 %v310
      %v1169 = vunpack.c.h.b16 %v310
      %v1170 = vunpack.c.l.b16 %v311
      %v1171 = vunpack.c.l.b16 %v312
      %v1172 = vunpack.c.h.b16 %v312
      %v1173 = vunpack.c.l.b16 %v313
      %v1174 = vunpack.c.h.b16 %v313
      %v1175 = vunpack.c.l.b16 %v314
      %v1176 = vunpack.c.h.b16 %v314
      %v1177 = vunpack.c.l.b16 %v315
      %v1178 = vunpack.c.h.b16 %v315
      %v1179 = vunpack.c.l.b16 %v316
      %v1180 = vunpack.c.l.b16 %v317
      %v1181 = vunpack.c.h.b16 %v317
      %v1182 = vunpack.c.l.b16 %v318
      %v1183 = vunpack.c.h.b16 %v318
      %v1184 = vunpack.c.l.b16 %v319
      %v1185 = vunpack.c.h.b16 %v319
      %v1186 = vunpack.c.l.b16 %v320
      %v1187 = vunpack.c.h.b16 %v320
      %v1188 = vunpack.c.l.b16 %v321
      %v1189 = vunpack.c.l.b16 %v322
      %v1190 = vunpack.c.h.b16 %v322
      %v1191 = vunpack.c.l.b16 %v323
      %v1192 = vunpack.c.h.b16 %v323
      %v1193 = vunpack.c.l.b16 %v324
      %v1194 = vunpack.c.h.b16 %v324
      %v1195 = vunpack.c.l.b16 %v325
      %v1196 = vunpack.c.h.b16 %v325
      %v1197 = vunpack.c.l.b16 %v326
      %v1198 = vunpack.c.l.b16 %v327
      %v1199 = vunpack.c.h.b16 %v327
      %v1200 = vunpack.c.l.b16 %v328
      %v1201 = vunpack.c.h.b16 %v328
      %v1202 = vunpack.c.l.b16 %v329
      %v1203 = vunpack.c.h.b16 %v329
      %v1204 = vunpack.c.l.b16 %v330
      %v1205 = vunpack.c.h.b16 %v330
      %v1206 = vunpack.c.l.b16 %v331
      %v1207 = vunpack.c.l.b16 %v332
      %v1208 = vunpack.c.h.b16 %v332
      %v1209 = vunpack.c.l.b16 %v333
      %v1210 = vunpack.c.h.b16 %v333
      %v1211 = vunpack.c.l.b16 %v334
      %v1212 = vunpack.c.h.b16 %v334
      %v1213 = vunpack.c.l.b16 %v335
      %v1214 = vunpack.c.h.b16 %v335
      %v1215 = vunpack.c.l.b16 %v336
      %v1216 = vunpack.c.l.b16 %v337
      %v1217 = vunpack.c.h.b16 %v337
      %v1218 = vunpack.c.l.b16 %v338
      %v1219 = vunpack.c.h.b16 %v338
      %v1220 = vunpack.c.l.b16 %v339
      %v1221 = vunpack.c.h.b16 %v339
      %v1222 = vunpack.c.l.b16 %v340
      %v1223 = vunpack.c.h.b16 %v340
      %v1224 = vunpack.c.l.b16 %v341
      %v1225 = vunpack.c.l.b16 %v342
      %v1226 = vunpack.c.h.b16 %v342
      %v1227 = vunpack.c.l.b16 %v343
      %v1228 = vunpack.c.h.b16 %v343
      %v1229 = vunpack.c.l.b16 %v344
      %v1230 = vunpack.c.h.b16 %v344
      %v1231 = vunpack.c.l.b16 %v345
      %v1232 = vunpack.c.h.b16 %v345
      %v1233 = vunpack.c.l.b16 %v346
      %v1234 = vunpack.c.l.b16 %v347
      %v1235 = vunpack.c.h.b16 %v347
      %v1236 = vunpack.c.l.b16 %v348
      %v1237 = vunpack.c.h.b16 %v348
      %v1238 = vunpack.c.l.b16 %v349
      %v1239 = vunpack.c.h.b16 %v349
      %v1240 = vunpack.c.l.b16 %v350
      %v1241 = vunpack.c.h.b16 %v350
      %v1242 = vunpack.c.l.b16 %v351
      %v1243 = vunpack.c.l.b16 %v352
      %v1244 = vunpack.c.h.b16 %v352
      %v1245 = vunpack.c.l.b16 %v353
      %v1246 = vunpack.c.h.b16 %v353
      %v1247 = vunpack.c.l.b16 %v354
      %v1248 = vunpack.c.h.b16 %v354
      %v1249 = vunpack.c.l.b16 %v355
      %v1250 = vunpack.c.h.b16 %v355
      %v1251 = vunpack.c.l.b16 %v356
      %v1252 = vunpack.c.l.b16 %v357
      %v1253 = vunpack.c.h.b16 %v357
      %v1254 = vunpack.c.l.b16 %v358
      %v1255 = vunpack.c.h.b16 %v358
      %v1256 = vunpack.c.l.b16 %v359
      %v1257 = vunpack.c.h.b16 %v359
      %v1258 = vunpack.c.l.b16 %v360
      %v1259 = vunpack.c.h.b16 %v360
      %v1260 = vunpack.c.l.b16 %v361
      %v1261 = vunpack.c.l.b16 %v362
      %v1262 = vunpack.c.h.b16 %v362
      %v1263 = vunpack.c.l.b16 %v363
      %v1264 = vunpack.c.h.b16 %v363
      %v1265 = vunpack.c.l.b16 %v364
      %v1266 = vunpack.c.h.b16 %v364
      %v1267 = vunpack.c.l.b16 %v365
      %v1268 = vunpack.c.h.b16 %v365
      %v1269 = vunpack.c.l.b16 %v366
      %v1270 = vunpack.c.l.b16 %v367
      %v1271 = vunpack.c.h.b16 %v367
      %v1272 = vunpack.c.l.b16 %v368
      %v1273 = vunpack.c.h.b16 %v368
      %v1274 = vunpack.c.l.b16 %v369
      %v1275 = vunpack.c.h.b16 %v369
      %v1276 = vunpack.c.l.b16 %v370
      %v1277 = vunpack.c.h.b16 %v370
      %v1278 = vunpack.c.l.b16 %v371
      %v1279 = vunpack.c.l.b16 %v372
      %v1280 = vunpack.c.h.b16 %v372
      %v1281 = vunpack.c.l.b16 %v373
      %v1282 = vunpack.c.h.b16 %v373
      %v1283 = vunpack.c.l.b16 %v374
      %v1284 = vunpack.c.h.b16 %v374
      %v1285 = vunpack.c.l.b16 %v375
      %v1286 = vunpack.c.h.b16 %v375
      %v1287 = vunpack.c.l.b16 %v376
      %v1288 = vunpack.c.l.b16 %v377
      %v1289 = vunpack.c.h.b16 %v377
      %v1290 = vunpack.c.l.b16 %v378
      %v1291 = vunpack.c.h.b16 %v378
      %v1292 = vunpack.c.l.b16 %v379
      %v1293 = vunpack.c.h.b16 %v379
      %v1294 = vunpack.c.l.b16 %v380
      %v1295 = vunpack.c.h.b16 %v380
      %v1296 = vunpack.c.l.b16 %v381
      %v1297 = vunpack.c.l.b16 %v382
      %v1298 = vunpack.c.h.b16 %v382
      %v1299 = vunpack.c.l.b16 %v383
      %v1300 = vunpack.c.h.b16 %v383
      %v1301 = vunpack.c.l.b16 %v384
      %v1302 = vunpack.c.h.b16 %v384
      %v1303 = vunpack.c.l.b16 %v385
      %v1304 = vunpack.c.h.b16 %v385
      %v1305 = vunpack.c.l.b16 %v386
      %v1306 = vunpack.c.l.b16 %v387
      %v1307 = vunpack.c.h.b16 %v387
      %v1308 = vunpack.c.l.b16 %v388
      %v1309 = vunpack.c.h.b16 %v388
      %v1310 = vunpack.c.l.b16 %v389
      %v1311 = vunpack.c.h.b16 %v389
      %v1312 = vunpack.c.l.b16 %v390
      %v1313 = vunpack.c.h.b16 %v390
      %v1314 = vunpack.c.l.b16 %v391
      %v1315 = vunpack.c.l.b16 %v392
      %v1316 = vunpack.c.h.b16 %v392
      %v1317 = vunpack.c.l.b16 %v393
      %v1318 = vunpack.c.h.b16 %v393
      %v1319 = vunpack.c.l.b16 %v394
      %v1320 = vunpack.c.h.b16 %v394
      %v1321 = vunpack.c.l.b16 %v395
      %v1322 = vunpack.c.h.b16 %v395
      %v1323 = vunpack.c.l.b16 %v396
      %v1324 = vunpack.c.l.b16 %v397
      %v1325 = vunpack.c.h.b16 %v397
      %v1326 = vunpack.c.l.b16 %v398
      %v1327 = vunpack.c.h.b16 %v398
      %v1328 = vunpack.c.l.b16 %v399
      %v1329 = vunpack.c.h.b16 %v399
      %v1330 = vunpack.c.l.b16 %v400
      %v1331 = vunpack.c.h.b16 %v400
      %v1332 = vunpack.c.l.b16 %v401
      %v1333 = vunpack.c.l.b16 %v402
      %v1334 = vunpack.c.h.b16 %v402
      %v1335 = vunpack.c.l.b16 %v403
      %v1336 = vunpack.c.h.b16 %v403
      %v1337 = vunpack.c.l.b16 %v404
      %v1338 = vunpack.c.h.b16 %v404
      %v1339 = vunpack.c.l.b16 %v405
      %v1340 = vunpack.c.h.b16 %v405
      %v1341 = vunpack.c.l.b16 %v406
      %v1342 = vunpack.c.l.b16 %v407
      %v1343 = vunpack.c.h.b16 %v407
      %v1344 = vunpack.c.l.b16 %v408
      %v1345 = vunpack.c.h.b16 %v408
      %v1346 = vunpack.c.l.b16 %v409
      %v1347 = vunpack.c.h.b16 %v409
      %v1348 = vunpack.c.l.b16 %v410
      %v1349 = vunpack.c.h.b16 %v410
      %v1350 = vunpack.c.l.b16 %v411
      %v1351 = vunpack.c.l.b16 %v412
      %v1352 = vunpack.c.h.b16 %v412
      %v1353 = vunpack.c.l.b16 %v413
      %v1354 = vunpack.c.h.b16 %v413
      %v1355 = vunpack.c.l.b16 %v414
      %v1356 = vunpack.c.h.b16 %v414
      %v1357 = vunpack.c.l.b16 %v415
      %v1358 = vunpack.c.h.b16 %v415
      %v1359 = vunpack.c.l.b16 %v416
      %v1360 = vunpack.c.l.b16 %v417
      %v1361 = vunpack.c.h.b16 %v417
      %v1362 = vunpack.c.l.b16 %v418
      %v1363 = vunpack.c.h.b16 %v418
      %v1364 = vunpack.c.l.b16 %v419
      %v1365 = vunpack.c.h.b16 %v419
      %v1366 = vunpack.c.l.b16 %v420
      %v1367 = vunpack.c.h.b16 %v420
      %v1368 = vunpack.c.l.b16 %v421
      %v1369 = vunpack.c.l.b16 %v422
      %v1370 = vunpack.c.h.b16 %v422
      %v1371 = vunpack.c.l.b16 %v423
      %v1372 = vunpack.c.h.b16 %v423
      %v1373 = vunpack.c.l.b16 %v424
      %v1374 = vunpack.c.h.b16 %v424
      %v1375 = vunpack.c.l.b16 %v425
      %v1376 = vunpack.c.h.b16 %v425
      %v1377 = vunpack.c.l.b16 %v426
      %v1378 = vunpack.c.l.b16 %v427
      %v1379 = vunpack.c.h.b16 %v427
      %v1380 = vunpack.c.l.b16 %v428
      %v1381 = vunpack.c.h.b16 %v428
      %v1382 = vunpack.c.l.b16 %v429
      %v1383 = vunpack.c.h.b16 %v429
      %v1384 = vunpack.c.l.b16 %v430
      %v1385 = vunpack.c.h.b16 %v430
      %v1386 = vunpack.c.l.b16 %v431
      %v1387 = vunpack.c.l.b16 %v432
      %v1388 = vunpack.c.h.b16 %v432
      %v1389 = vunpack.c.l.b16 %v433
      %v1390 = vunpack.c.h.b16 %v433
      %v1391 = vunpack.c.l.b16 %v434
      %v1392 = vunpack.c.h.b16 %v434
      %v1393 = vunpack.c.l.b16 %v435
      %v1394 = vunpack.c.h.b16 %v435
      %v1395 = vunpack.c.l.b16 %v436
      %v1396 = vunpack.c.l.b16 %v437
      %v1397 = vunpack.c.h.b16 %v437
      %v1398 = vunpack.c.l.b16 %v438
      %v1399 = vunpack.c.h.b16 %v438
      %v1400 = vunpack.c.l.b16 %v439
      %v1401 = vunpack.c.h.b16 %v439
      %v1402 = vunpack.c.l.b16 %v440
      %v1403 = vunpack.c.h.b16 %v440
      %v1404 = vunpack.c.l.b16 %v441
      %v1405 = vunpack.c.l.b16 %v442
      %v1406 = vunpack.c.h.b16 %v442
      %v1407 = vunpack.c.l.b16 %v443
      %v1408 = vunpack.c.h.b16 %v443
      %v1409 = vunpack.c.l.b16 %v444
      %v1410 = vunpack.c.h.b16 %v444
      %v1411 = vunpack.c.l.b16 %v445
      %v1412 = vunpack.c.h.b16 %v445
      %v1413 = vunpack.c.l.b16 %v446
      %v1414 = vunpack.c.l.b16 %v447
      %v1415 = vunpack.c.h.b16 %v447
      %v1416 = vunpack.c.l.b16 %v448
      %v1417 = vunpack.c.h.b16 %v448
      %v1418 = vunpack.c.l.b16 %v449
      %v1419 = vunpack.c.h.b16 %v449
      %v1420 = vunpack.c.l.b16 %v450
      %v1421 = vunpack.c.h.b16 %v450
      %v1422 = vunpack.c.l.b16 %v451
      %v1423 = vunpack.c.l.b16 %v452
      %v1424 = vunpack.c.h.b16 %v452
      %v1425 = vunpack.c.l.b16 %v453
      %v1426 = vunpack.c.h.b16 %v453
      %v1427 = vunpack.c.l.b16 %v454
      %v1428 = vunpack.c.h.b16 %v454
      %v1429 = vunpack.c.l.b16 %v455
      %v1430 = vunpack.c.h.b16 %v455
      %v1431 = vunpack.c.l.b16 %v456
      %v1432 = vunpack.c.l.b16 %v457
      %v1433 = vunpack.c.h.b16 %v457
      %v1434 = vunpack.c.l.b16 %v458
      %v1435 = vunpack.c.h.b16 %v458
      %v1436 = vunpack.c.l.b16 %v459
      %v1437 = vunpack.c.h.b16 %v459
      %v1438 = vunpack.c.l.b16 %v460
      %v1439 = vunpack.c.h.b16 %v460
      %v1440 = vunpack.c.l.b16 %v461
      %v1441 = vunpack.c.l.b16 %v462
      %v1442 = vunpack.c.h.b16 %v462
      %v1443 = vunpack.c.l.b16 %v463
      %v1444 = vunpack.c.h.b16 %v463
      %v1445 = vunpack.c.l.b16 %v464
      %v1446 = vunpack.c.h.b16 %v464
      %v1447 = vunpack.c.l.b16 %v465
      %v1448 = vunpack.c.h.b16 %v465
      %v1449 = vunpack.c.l.b16 %v466
      %v1450 = vunpack.c.l.b16 %v467
      %v1451 = vunpack.c.h.b16 %v467
      %v1452 = vunpack.c.l.b16 %v468
      %v1453 = vunpack.c.h.b16 %v468
      %v1454 = vunpack.c.l.b16 %v469
      %v1455 = vunpack.c.h.b16 %v469
      %v1456 = vunpack.c.l.b16 %v470
      %v1457 = vunpack.c.h.b16 %v470
      %v1458 = vunpack.c.l.b16 %v471
      %v1459 = vunpack.c.l.b16 %v472
      %v1460 = vunpack.c.h.b16 %v472
      %v1461 = vunpack.c.l.b16 %v473
      %v1462 = vunpack.c.h.b16 %v473
      %v1463 = vunpack.c.l.b16 %v474
      %v1464 = vunpack.c.h.b16 %v474
      %v1465 = vunpack.c.l.b16 %v475
      %v1466 = vunpack.c.h.b16 %v475
      %v1467 = vunpack.c.l.b16 %v476
      %v1468 = vunpack.c.l.b16 %v477
      %v1469 = vunpack.c.h.b16 %v477
      %v1470 = vunpack.c.l.b16 %v478
      %v1471 = vunpack.c.h.b16 %v478
      %v1472 = vunpack.c.l.b16 %v479
      %v1473 = vunpack.c.h.b16 %v479
      %v1474 = vunpack.c.l.b16 %v480
      %v1475 = vunpack.c.h.b16 %v480
      %v1476 = vunpack.c.l.b16 %v481
      %v1477 = vunpack.c.l.b16 %v482
      %v1478 = vunpack.c.h.b16 %v482
      %v1479 = vunpack.c.l.b16 %v483
      %v1480 = vunpack.c.h.b16 %v483
      %v1481 = vunpack.c.l.b16 %v484
      %v1482 = vunpack.c.h.b16 %v484
      %v1483 = vunpack.c.l.b16 %v485
      %v1484 = vunpack.c.h.b16 %v485
      %v1485 = vunpack.c.l.b16 %v486
      %v1486 = vunpack.c.l.b16 %v487
      %v1487 = vunpack.c.h.b16 %v487
      %v1488 = vunpack.c.l.b16 %v488
      %v1489 = vunpack.c.h.b16 %v488
      %v1490 = vunpack.c.l.b16 %v489
      %v1491 = vunpack.c.h.b16 %v489
      %v1492 = vunpack.c.l.b16 %v490
      %v1493 = vunpack.c.h.b16 %v490
      %v1494 = vunpack.c.l.b16 %v491
      %v1495 = vunpack.c.l.b16 %v492
      %v1496 = vunpack.c.h.b16 %v492
      %v1497 = vunpack.c.l.b16 %v493
      %v1498 = vunpack.c.h.b16 %v493
      %v1499 = vunpack.c.l.b16 %v494
      %v1500 = vunpack.c.h.b16 %v494
      %v1501 = vunpack.c.l.b16 %v495
      %v1502 = vunpack.c.h.b16 %v495
      %v1503 = vunpack.c.l.b16 %v496
      %v1504 = vunpack.c.l.b16 %v497
      %v1505 = vunpack.c.h.b16 %v497
      %v1506 = vunpack.c.l.b16 %v498
      %v1507 = vunpack.c.h.b16 %v498
      %v1508 = vunpack.c.l.b16 %v499
      %v1509 = vunpack.c.h.b16 %v499
      %v1510 = vunpack.c.l.b16 %v500
      %v1511 = vunpack.c.h.b16 %v500
      %v1512 = vunpack.c.l.b16 %v501
      %v1513 = vunpack.c.l.b16 %v502
      %v1514 = vunpack.c.h.b16 %v502
      %v1515 = vunpack.c.l.b16 %v503
      %v1516 = vunpack.c.h.b16 %v503
      %v1517 = vunpack.c.l.b16 %v504
      %v1518 = vunpack.c.h.b16 %v504
      %v1519 = vunpack.c.l.b16 %v505
      %v1520 = vunpack.c.h.b16 %v505
      %v1521 = vunpack.c.l.b16 %v506
      %v1522 = vunpack.c.l.b16 %v507
      %v1523 = vunpack.c.h.b16 %v507
      %v1524 = vunpack.c.l.b16 %v508
      %v1525 = vunpack.c.h.b16 %v508
      %v1526 = vunpack.c.l.b16 %v509
      %v1527 = vunpack.c.h.b16 %v509
      %v1528 = vunpack.c.l.b16 %v510
      %v1529 = vunpack.c.h.b16 %v510
      %v1530 = vunpack.c.l.b16 %v511
      %v1531 = vunpack.c.l.b16 %v512
      %v1532 = vunpack.c.h.b16 %v512
      %v1533 = vunpack.c.l.b16 %v513
      %v1534 = vunpack.c.h.b16 %v513
      %v1535 = vunpack.c.l.b16 %v514
      %v1536 = vunpack.c.h.b16 %v514
      %v1537 = vunpack.c.l.b16 %v515
      %v1538 = vunpack.c.h.b16 %v515
      %v1539 = vunpack.c.l.b16 %v516
      %v1540 = vunpack.c.l.b16 %v517
      %v1541 = vunpack.c.h.b16 %v517
      %v1542 = vunpack.c.l.b16 %v518
      %v1543 = vunpack.c.h.b16 %v518
      %v1544 = vunpack.c.l.b16 %v519
      %v1545 = vunpack.c.h.b16 %v519
      %v1546 = vunpack.c.l.b16 %v520
      %v1547 = vunpack.c.h.b16 %v520
      %v1548 = vunpack.c.l.b16 %v521
      %v1549 = vunpack.c.l.b16 %v522
      %v1550 = vunpack.c.h.b16 %v522
      %v1551 = vunpack.c.l.b16 %v523
      %v1552 = vunpack.c.h.b16 %v523
      %v1553 = vunpack.c.l.b16 %v524
      %v1554 = vunpack.c.h.b16 %v524
      %v1555 = vunpack.c.l.b16 %v525
      %v1556 = vunpack.c.h.b16 %v525
      %v1557 = vunpack.c.l.b16 %v526
      %v1558 = vunpack.c.l.b16 %v527
      %v1559 = vunpack.c.h.b16 %v527
      %v1560 = vunpack.c.l.b16 %v528
      %v1561 = vunpack.c.h.b16 %v528
      %v1562 = vunpack.c.l.b16 %v529
      %v1563 = vunpack.c.h.b16 %v529
      %v1564 = vunpack.c.l.b16 %v530
      %v1565 = vunpack.c.h.b16 %v530
      %v1566 = vunpack.c.l.b16 %v531
      %v1567 = vunpack.c.l.b16 %v532
      %v1568 = vunpack.c.h.b16 %v532
      %v1569 = vunpack.c.l.b16 %v533
      %v1570 = vunpack.c.h.b16 %v533
      %v1571 = vunpack.c.l.b16 %v534
      %v1572 = vunpack.c.h.b16 %v534
      %v1573 = vunpack.c.l.b16 %v535
      %v1574 = vunpack.c.h.b16 %v535
      %v1575 = vunpack.c.l.b16 %v536
      %v1576 = vunpack.c.l.b16 %v537
      %v1577 = vunpack.c.h.b16 %v537
      %v1578 = vunpack.c.l.b16 %v538
      %v1579 = vunpack.c.h.b16 %v538
      %v1580 = vunpack.c.l.b16 %v539
      %v1581 = vunpack.c.h.b16 %v539
      %v1582 = vunpack.c.l.b16 %v540
      %v1583 = vunpack.c.h.b16 %v540
      %v1584 = vunpack.c.l.b16 %v541
      %v1585 = vunpack.c.l.b16 %v542
      %v1586 = vunpack.c.h.b16 %v542
      %v1587 = vunpack.c.l.b16 %v543
      %v1588 = vunpack.c.h.b16 %v543
      %v1589 = vunpack.c.l.b16 %v544
      %v1590 = vunpack.c.h.b16 %v544
      %v1591 = vunpack.c.l.b16 %v545
      %v1592 = vunpack.c.h.b16 %v545
      %v1593 = vunpack.c.l.b16 %v546
      %v1594 = vpack.c.b16 %v1027, %v1018
      %v1595 = vpack.c.b16 %v1028, %v1019
      %v1596 = vpack.c.b16 %v1029, %v1020
      %v1597 = vpack.c.b16 %v1030, %v1021
      %v1598 = vpack.c.b16 %v1031, %v1022
      %v1599 = vpack.c.b16 %v1032, %v1023
      %v1600 = vpack.c.b16 %v1033, %v1024
      %v1601 = vpack.c.b16 %v1034, %v1025
      %v1602 = vpack.c.b16 %v1035, %v1026
      %v1603 = vpack.c.b16 %v1045, %v1036
      %v1604 = vpack.c.b16 %v1046, %v1037
      %v1605 = vpack.c.b16 %v1047, %v1038
      %v1606 = vpack.c.b16 %v1048, %v1039
      %v1607 = vpack.c.b16 %v1049, %v1040
      %v1608 = vpack.c.b16 %v1050, %v1041
      %v1609 = vpack.c.b16 %v1051, %v1042
      %v1610 = vpack.c.b16 %v1052, %v1043
      %v1611 = vpack.c.b16 %v1053, %v1044
      %v1612 = vpack.c.b16 %v1063, %v1054
      %v1613 = vpack.c.b16 %v1064, %v1055
      %v1614 = vpack.c.b16 %v1065, %v1056
      %v1615 = vpack.c.b16 %v1066, %v1057
      %v1616 = vpack.c.b16 %v1067, %v1058
      %v1617 = vpack.c.b16 %v1068, %v1059
      %v1618 = vpack.c.b16 %v1069, %v1060
      %v1619 = vpack.c.b16 %v1070, %v1061
      %v1620 = vpack.c.b16 %v1071, %v1062
      %v1621 = vpack.c.b16 %v1081, %v1072
      %v1622 = vpack.c.b16 %v1082, %v1073
      %v1623 = vpack.c.b16 %v1083, %v1074
      %v1624 = vpack.c.b16 %v1084, %v1075
      %v1625 = vpack.c.b16 %v1085, %v1076
      %v1626 = vpack.c.b16 %v1086, %v1077
      %v1627 = vpack.c.b16 %v1087, %v1078
      %v1628 = vpack.c.b16 %v1088, %v1079
      %v1629 = vpack.c.b16 %v1089, %v1080
      %v1630 = vpack.c.b16 %v1099, %v1090
      %v1631 = vpack.c.b16 %v1100, %v1091
      %v1632 = vpack.c.b16 %v1101, %v1092
      %v1633 = vpack.c.b16 %v1102, %v1093
      %v1634 = vpack.c.b16 %v1103, %v1094
      %v1635 = vpack.c.b16 %v1104, %v1095
      %v1636 = vpack.c.b16 %v1105, %v1096
      %v1637 = vpack.c.b16 %v1106, %v1097
      %v1638 = vpack.c.b16 %v1107, %v1098
      %v1639 = vpack.c.b16 %v1117, %v1108
      %v1640 = vpack.c.b16 %v1118, %v1109
      %v1641 = vpack.c.b16 %v1119, %v1110
      %v1642 = vpack.c.b16 %v1120, %v1111
      %v1643 = vpack.c.b16 %v1121, %v1112
      %v1644 = vpack.c.b16 %v1122, %v1113
      %v1645 = vpack.c.b16 %v1123, %v1114
      %v1646 = vpack.c.b16 %v1124, %v1115
      %v1647 = vpack.c.b16 %v1125, %v1116
      %v1648 = vpack.c.b16 %v1135, %v1126
      %v1649 = vpack.c.b16 %v1136, %v1127
      %v1650 = vpack.c.b16 %v1137, %v1128
      %v1651 = vpack.c.b16 %v1138, %v1129
      %v1652 = vpack.c.b16 %v1139, %v1130
      %v1653 = vpack.c.b16 %v1140, %v1131
      %v1654 = vpack.c.b16 %v1141, %v1132
      %v1655 = vpack.c.b16 %v1142, %v1133
      %v1656 = vpack.c.b16 %v1143, %v1134
      %v1657 = vpack.c.b16 %v1153, %v1144
      %v1658 = vpack.c.b16 %v1154, %v1145
      %v1659 = vpack.c.b16 %v1155, %v1146
      %v1660 = vpack.c.b16 %v1156, %v1147
      %v1661 = vpack.c.b16 %v1157, %v1148
      %v1662 = vpack.c.b16 %v1158, %v1149
      %v1663 = vpack.c.b16 %v1159, %v1150
      %v1664 = vpack.c.b16 %v1160, %v1151
      %v1665 = vpack.c.b16 %v1161, %v1152
      %v1666 = vpack.c.b16 %v1171, %v1162
      %v1667 = vpack.c.b16 %v1172, %v1163
      %v1668 = vpack.c.b16 %v1173, %v1164
      %v1669 = vpack.c.b16 %v1174, %v1165
      %v1670 = vpack.c.b16 %v1175, %v1166
      %v1671 = vpack.c.b16 %v1176, %v1167
      %v1672 = vpack.c.b16 %v1177, %v1168
      %v1673 = vpack.c.b16 %v1178, %v1169
      %v1674 = vpack.c.b16 %v1179, %v1170
      %v1675 = vpack.c.b16 %v1189, %v1180
      %v1676 = vpack.c.b16 %v1190, %v1181
      %v1677 = vpack.c.b16 %v1191, %v1182
      %v1678 = vpack.c.b16 %v1192, %v1183
      %v1679 = vpack.c.b16 %v1193, %v1184
      %v1680 = vpack.c.b16 %v1194, %v1185
      %v1681 = vpack.c.b16 %v1195, %v1186
      %v1682 = vpack.c.b16 %v1196, %v1187
      %v1683 = vpack.c.b16 %v1197, %v1188
      %v1684 = vpack.c.b16 %v1207, %v1198
      %v1685 = vpack.c.b16 %v1208, %v1199
      %v1686 = vpack.c.b16 %v1209, %v1200
      %v1687 = vpack.c.b16 %v1210, %v1201
      %v1688 = vpack.c.b16 %v1211, %v1202
      %v1689 = vpack.c.b16 %v1212, %v1203
      %v1690 = vpack.c.b16 %v1213, %v1204
      %v1691 = vpack.c.b16 %v1214, %v1205
      %v1692 = vpack.c.b16 %v1215, %v1206
      %v1693 = vpack.c.b16 %v1225, %v1216
      %v1694 = vpack.c.b16 %v1226, %v1217
      %v1695 = vpack.c.b16 %v1227, %v1218
      %v1696 = vpack.c.b16 %v1228, %v1219
      %v1697 = vpack.c.b16 %v1229, %v1220
      %v1698 = vpack.c.b16 %v1230, %v1221
      %v1699 = vpack.c.b16 %v1231, %v1222
      %v1700 = vpack.c.b16 %v1232, %v1223
      %v1701 = vpack.c.b16 %v1233, %v1224
      %v1702 = vpack.c.b16 %v1243, %v1234
      %v1703 = vpack.c.b16 %v1244, %v1235
      %v1704 = vpack.c.b16 %v1245, %v1236
      %v1705 = vpack.c.b16 %v1246, %v1237
      %v1706 = vpack.c.b16 %v1247, %v1238
      %v1707 = vpack.c.b16 %v1248, %v1239
      %v1708 = vpack.c.b16 %v1249, %v1240
      %v1709 = vpack.c.b16 %v1250, %v1241
      %v1710 = vpack.c.b16 %v1251, %v1242
      %v1711 = vpack.c.b16 %v1261, %v1252
      %v1712 = vpack.c.b16 %v1262, %v1253
      %v1713 = vpack.c.b16 %v1263, %v1254
      %v1714 = vpack.c.b16 %v1264, %v1255
      %v1715 = vpack.c.b16 %v1265, %v1256
      %v1716 = vpack.c.b16 %v1266, %v1257
      %v1717 = vpack.c.b16 %v1267, %v1258
      %v1718 = vpack.c.b16 %v1268, %v1259
      %v1719 = vpack.c.b16 %v1269, %v1260
      %v1720 = vpack.c.b16 %v1279, %v1270
      %v1721 = vpack.c.b16 %v1280, %v1271
      %v1722 = vpack.c.b16 %v1281, %v1272
      %v1723 = vpack.c.b16 %v1282, %v1273
      %v1724 = vpack.c.b16 %v1283, %v1274
      %v1725 = vpack.c.b16 %v1284, %v1275
      %v1726 = vpack.c.b16 %v1285, %v1276
      %v1727 = vpack.c.b16 %v1286, %v1277
      %v1728 = vpack.c.b16 %v1287, %v1278
      %v1729 = vpack.c.b16 %v1297, %v1288
      %v1730 = vpack.c.b16 %v1298, %v1289
      %v1731 = vpack.c.b16 %v1299, %v1290
      %v1732 = vpack.c.b16 %v1300, %v1291
      %v1733 = vpack.c.b16 %v1301, %v1292
      %v1734 = vpack.c.b16 %v1302, %v1293
      %v1735 = vpack.c.b16 %v1303, %v1294
      %v1736 = vpack.c.b16 %v1304, %v1295
      %v1737 = vpack.c.b16 %v1305, %v1296
      %v1738 = vpack.c.b16 %v1315, %v1306
      %v1739 = vpack.c.b16 %v1316, %v1307
      %v1740 = vpack.c.b16 %v1317, %v1308
      %v1741 = vpack.c.b16 %v1318, %v1309
      %v1742 = vpack.c.b16 %v1319, %v1310
      %v1743 = vpack.c.b16 %v1320, %v1311
      %v1744 = vpack.c.b16 %v1321, %v1312
      %v1745 = vpack.c.b16 %v1322, %v1313
      %v1746 = vpack.c.b16 %v1323, %v1314
      %v1747 = vpack.c.b16 %v1333, %v1324
      %v1748 = vpack.c.b16 %v1334, %v1325
      %v1749 = vpack.c.b16 %v1335, %v1326
      %v1750 = vpack.c.b16 %v1336, %v1327
      %v1751 = vpack.c.b16 %v1337, %v1328
      %v1752 = vpack.c.b16 %v1338, %v1329
      %v1753 = vpack.c.b16 %v1339, %v1330
      %v1754 = vpack.c.b16 %v1340, %v1331
      %v1755 = vpack.c.b16 %v1341, %v1332
      %v1756 = vpack.c.b16 %v1351, %v1342
      %v1757 = vpack.c.b16 %v1352, %v1343
      %v1758 = vpack.c.b16 %v1353, %v1344
      %v1759 = vpack.c.b16 %v1354, %v1345
      %v1760 = vpack.c.b16 %v1355, %v1346
      %v1761 = vpack.c.b16 %v1356, %v1347
      %v1762 = vpack.c.b16 %v1357, %v1348
      %v1763 = vpack.c.b16 %v1358, %v1349
      %v1764 = vpack.c.b16 %v1359, %v1350
      %v1765 = vpack.c.b16 %v1369, %v1360
      %v1766 = vpack.c.b16 %v1370, %v1361
      %v1767 = vpack.c.b16 %v1371, %v1362
      %v1768 = vpack.c.b16 %v1372, %v1363
      %v1769 = vpack.c.b16 %v1373, %v1364
      %v1770 = vpack.c.b16 %v1374, %v1365
      %v1771 = vpack.c.b16 %v1375, %v1366
      %v1772 = vpack.c.b16 %v1376, %v1367
      %v1773 = vpack.c.b16 %v1377, %v1368
      %v1774 = vpack.c.b16 %v1387, %v1378
      %v1775 = vpack.c.b16 %v1388, %v1379
      %v1776 = vpack.c.b16 %v1389, %v1380
      %v1777 = vpack.c.b16 %v1390, %v1381
      %v1778 = vpack.c.b16 %v1391, %v1382
      %v1779 = vpack.c.b16 %v1392, %v1383
      %v1780 = vpack.c.b16 %v1393, %v1384
      %v1781 = vpack.c.b16 %v1394, %v1385
      %v1782 = vpack.c.b16 %v1395, %v1386
      %v1783 = vpack.c.b16 %v1405, %v1396
      %v1784 = vpack.c.b16 %v1406, %v1397
      %v1785 = vpack.c.b16 %v1407, %v1398
      %v1786 = vpack.c.b16 %v1408, %v1399
      %v1787 = vpack.c.b16 %v1409, %v1400
      %v1788 = vpack.c.b16 %v1410, %v1401
      %v1789 = vpack.c.b16 %v1411, %v1402
      %v1790 = vpack.c.b16 %v1412, %v1403
      %v1791 = vpack.c.b16 %v1413, %v1404
      %v1792 = vpack.c.b16 %v1423, %v1414
      %v1793 = vpack.c.b16 %v1424, %v1415
      %v1794 = vpack.c.b16 %v1425, %v1416
      %v1795 = vpack.c.b16 %v1426, %v1417
      %v1796 = vpack.c.b16 %v1427, %v1418
      %v1797 = vpack.c.b16 %v1428, %v1419
      %v1798 = vpack.c.b16 %v1429, %v1420
      %v1799 = vpack.c.b16 %v1430, %v1421
      %v1800 = vpack.c.b16 %v1431, %v1422
      %v1801 = vpack.c.b16 %v1441, %v1432
      %v1802 = vpack.c.b16 %v1442, %v1433
      %v1803 = vpack.c.b16 %v1443, %v1434
      %v1804 = vpack.c.b16 %v1444, %v1435
      %v1805 = vpack.c.b16 %v1445, %v1436
      %v1806 = vpack.c.b16 %v1446, %v1437
      %v1807 = vpack.c.b16 %v1447, %v1438
      %v1808 = vpack.c.b16 %v1448, %v1439
      %v1809 = vpack.c.b16 %v1449, %v1440
      %v1810 = vpack.c.b16 %v1459, %v1450
      %v1811 = vpack.c.b16 %v1460, %v1451
      %v1812 = vpack.c.b16 %v1461, %v1452
      %v1813 = vpack.c.b16 %v1462, %v1453
      %v1814 = vpack.c.b16 %v1463, %v1454
      %v1815 = vpack.c.b16 %v1464, %v1455
      %v1816 = vpack.c.b16 %v1465, %v1456
      %v1817 = vpack.c.b16 %v1466, %v1457
      %v1818 = vpack.c.b16 %v1467, %v1458
      %v1819 = vpack.c.b16 %v1477, %v1468
      %v1820 = vpack.c.b16 %v1478, %v1469
      %v1821 = vpack.c.b16 %v1479, %v1470
      %v1822 = vpack.c.b16 %v1480, %v1471
      %v1823 = vpack.c.b16 %v1481, %v1472
      %v1824 = vpack.c.b16 %v1482, %v1473
      %v1825 = vpack.c.b16 %v1483, %v1474
      %v1826 = vpack.c.b16 %v1484, %v1475
      %v1827 = vpack.c.b16 %v1485, %v1476
      %v1828 = vpack.c.b16 %v1495, %v1486
      %v1829 = vpack.c.b16 %v1496, %v1487
      %v1830 = vpack.c.b16 %v1497, %v1488
      %v1831 = vpack.c.b16 %v1498, %v1489
      %v1832 = vpack.c.b16 %v1499, %v1490
      %v1833 = vpack.c.b16 %v1500, %v1491
      %v1834 = vpack.c.b16 %v1501, %v1492
      %v1835 = vpack.c.b16 %v1502, %v1493
      %v1836 = vpack.c.b16 %v1503, %v1494
      %v1837 = vpack.c.b16 %v1513, %v1504
      %v1838 = vpack.c.b16 %v1514, %v1505
      %v1839 = vpack.c.b16 %v1515, %v1506
      %v1840 = vpack.c.b16 %v1516, %v1507
      %v1841 = vpack.c.b16 %v1517, %v1508
      %v1842 = vpack.c.b16 %v1518, %v1509
      %v1843 = vpack.c.b16 %v1519, %v1510
      %v1844 = vpack.c.b16 %v1520, %v1511
      %v1845 = vpack.c.b16 %v1521, %v1512
      %v1846 = vpack.c.b16 %v1531, %v1522
      %v1847 = vpack.c.b16 %v1532, %v1523
      %v1848 = vpack.c.b16 %v1533, %v1524
      %v1849 = vpack.c.b16 %v1534, %v1525
      %v1850 = vpack.c.b16 %v1535, %v1526
      %v1851 = vpack.c.b16 %v1536, %v1527
      %v1852 = vpack.c.b16 %v1537, %v1528
      %v1853 = vpack.c.b16 %v1538, %v1529
      %v1854 = vpack.c.b16 %v1539, %v1530
      %v1855 = vpack.c.b16 %v1549, %v1540
      %v1856 = vpack.c.b16 %v1550, %v1541
      %v1857 = vpack.c.b16 %v1551, %v1542
      %v1858 = vpack.c.b16 %v1552, %v1543
      %v1859 = vpack.c.b16 %v1553, %v1544
      %v1860 = vpack.c.b16 %v1554, %v1545
      %v1861 = vpack.c.b16 %v1555, %v1546
      %v1862 = vpack.c.b16 %v1556, %v1547
      %v1863 = vpack.c.b16 %v1557, %v1548
      %v1864 = vpack.c.b16 %v1567, %v1558
      %v1865 = vpack.c.b16 %v1568, %v1559
      %v1866 = vpack.c.b16 %v1569, %v1560
      %v1867 = vpack.c.b16 %v1570, %v1561
      %v1868 = vpack.c.b16 %v1571, %v1562
      %v1869 = vpack.c.b16 %v1572, %v1563
      %v1870 = vpack.c.b16 %v1573, %v1564
      %v1871 = vpack.c.b16 %v1574, %v1565
      %v1872 = vpack.c.b16 %v1575, %v1566
      %v1873 = vpack.c.b16 %v1585, %v1576
      %v1874 = vpack.c.b16 %v1586, %v1577
      %v1875 = vpack.c.b16 %v1587, %v1578
      %v1876 = vpack.c.b16 %v1588, %v1579
      %v1877 = vpack.c.b16 %v1589, %v1580
      %v1878 = vpack.c.b16 %v1590, %v1581
      %v1879 = vpack.c.b16 %v1591, %v1582
      %v1880 = vpack.c.b16 %v1592, %v1583
      %v1881 = vpack.c.b16 %v1593, %v1584
      %v2314 = vunpack.c.l.b16 %v547
      %v2315 = vunpack.c.l.b16 %v548
      %v2316 = vunpack.c.l.b16 %v549
      %v2317 = vunpack.c.l.b16 %v550
      %v2318 = vunpack.c.l.b16 %v551
      %v2319 = vunpack.c.l.b16 %v552
      %v2320 = vunpack.c.l.b16 %v553
      %v2321 = vunpack.c.l.b16 %v554
      %v2322 = vunpack.c.l.b16 %v555
      %v2323 = vunpack.c.l.b16 %v556
      %v2324 = vunpack.c.l.b16 %v557
      %v2325 = vunpack.c.l.b16 %v558
      %v2326 = vunpack.c.l.b16 %v559
      %v2327 = vunpack.c.l.b16 %v560
      %v2328 = vunpack.c.l.b16 %v561
      %v2329 = vunpack.c.l.b16 %v562
      %v2330 = vunpack.c.l.b16 %v563
      %v2331 = vunpack.c.l.b16 %v564
      %v2332 = vunpack.c.l.b16 %v565
      %v2333 = vunpack.c.l.b16 %v566
      %v2334 = vunpack.c.l.b16 %v567
      %v2335 = vunpack.c.l.b16 %v568
      %v2336 = vunpack.c.l.b16 %v569
      %v2337 = vunpack.c.l.b16 %v570
      %v2338 = vunpack.c.l.b16 %v571
      %v2339 = vunpack.c.l.b16 %v572
      %v2340 = vunpack.c.l.b16 %v573
      %v2341 = vunpack.c.l.b16 %v574
      %v2342 = vunpack.c.l.b16 %v575
      %v2343 = vunpack.c.l.b16 %v576
      %v2344 = vunpack.c.l.b16 %v577
      %v2345 = vunpack.c.l.b16 %v578
      %v2346 = vunpack.c.l.b16 %v579
      %v2347 = vunpack.c.l.b16 %v580
      %v2348 = vunpack.c.l.b16 %v581
      %v2349 = vunpack.c.l.b16 %v582
      %v2350 = vunpack.c.l.b16 %v583
      %v2351 = vunpack.c.l.b16 %v584
      %v2352 = vunpack.c.l.b16 %v585
      %v2353 = vunpack.c.l.b16 %v586
      %v2354 = vunpack.c.l.b16 %v587
      %v2355 = vunpack.c.l.b16 %v588
      %v2356 = vunpack.c.l.b16 %v589
      %v2357 = vunpack.c.l.b16 %v590
      %v2358 = vunpack.c.l.b16 %v591
      %v2359 = vunpack.c.l.b16 %v592
      %v2360 = vunpack.c.l.b16 %v593
      %v2361 = vunpack.c.l.b16 %v594
      %v2362 = vunpack.c.l.b16 %v595
      %v2363 = vunpack.c.l.b16 %v596
      %v2364 = vunpack.c.l.b16 %v597
      %v2365 = vunpack.c.l.b16 %v598
      %v2366 = vunpack.c.l.b16 %v599
      %v2367 = vunpack.c.l.b16 %v600
      %v2368 = vunpack.c.l.b16 %v601
      %v2369 = vunpack.c.l.b16 %v602
      %v2370 = vunpack.c.l.b16 %v603
      %v2371 = vunpack.c.l.b16 %v604
      %v2372 = vunpack.c.l.b16 %v605
      %v2373 = vunpack.c.l.b16 %v606
      %v2374 = vunpack.c.l.b16 %v607
      %v2375 = vunpack.c.l.b16 %v608
      %v2376 = vunpack.c.l.b16 %v609
      %v2377 = vunpack.c.l.b16 %v610
      %v2378 = vunpack.c.l.b16 %v611
      %v2379 = vunpack.c.l.b16 %v612
      %v2380 = vunpack.c.l.b16 %v613
      %v2381 = vunpack.c.l.b16 %v614
      %v2382 = vunpack.c.l.b16 %v615
      %v2383 = vunpack.c.l.b16 %v616
      %v2384 = vunpack.c.l.b16 %v617
      %v2385 = vunpack.c.l.b16 %v618
      %v2386 = vunpack.c.l.b16 %v619
      %v2387 = vunpack.c.l.b16 %v620
      %v2388 = vunpack.c.l.b16 %v621
      %v2389 = vunpack.c.l.b16 %v622
      %v2390 = vunpack.c.l.b16 %v623
      %v2391 = vunpack.c.l.b16 %v624
      %v2392 = vunpack.c.l.b16 %v625
      %v2393 = vunpack.c.l.b16 %v626
      %v2394 = vunpack.c.l.b16 %v627
      %v2395 = vunpack.c.l.b16 %v628
      %v2396 = vunpack.c.l.b16 %v629
      %v2397 = vunpack.c.l.b16 %v630
      %v2398 = vunpack.c.l.b16 %v631
      %v2399 = vunpack.c.l.b16 %v632
      %v2400 = vunpack.c.l.b16 %v633
      %v2401 = vunpack.c.l.b16 %v634
      %v2402 = vunpack.c.l.b16 %v635
      %v2403 = vunpack.c.l.b16 %v636
      %v2404 = vunpack.c.l.b16 %v637
      %v2405 = vunpack.c.l.b16 %v638
      %v2406 = vunpack.c.l.b16 %v639
      %v2407 = vunpack.c.l.b16 %v640
      %v2408 = vunpack.c.l.b16 %v641
      %v2409 = vunpack.c.l.b16 %v642
      %v2410 = vunpack.c.l.b16 %v643
      %v2411 = vunpack.c.l.b16 %v644
      %v2412 = vunpack.c.l.b16 %v645
      %v2413 = vunpack.c.l.b16 %v646
      %v2414 = vunpack.c.l.b16 %v647
      %v2415 = vunpack.c.l.b16 %v648
      %v2416 = vunpack.c.l.b16 %v649
      %v2417 = vunpack.c.l.b16 %v650
      %v2418 = vunpack.c.l.b16 %v651
      %v2419 = vunpack.c.l.b16 %v652
      %v2420 = vunpack.c.l.b16 %v653
      %v2421 = vunpack.c.l.b16 %v654
      %v2422 = vunpack.c.l.b16 %v655
      %v2423 = vunpack.c.l.b16 %v656
      %v2424 = vunpack.c.l.b16 %v657
      %v2425 = vunpack.c.l.b16 %v658
      %v2426 = vunpack.c.l.b16 %v659
      %v2427 = vunpack.c.l.b16 %v660
      %v2428 = vunpack.c.l.b16 %v661
      %v2429 = vunpack.c.l.b16 %v662
      %v2430 = vunpack.c.l.b16 %v663
      %v2431 = vunpack.c.l.b16 %v664
      %v2432 = vunpack.c.l.b16 %v665
      %v2433 = vunpack.c.l.b16 %v666
      %v2434 = vunpack.c.l.b16 %v667
      %v2435 = vunpack.c.l.b16 %v668
      %v2436 = vunpack.c.l.b16 %v669
      %v2437 = vunpack.c.l.b16 %v670
      %v2438 = vunpack.c.l.b16 %v671
      %v2439 = vunpack.c.l.b16 %v672
      %v2440 = vunpack.c.l.b16 %v673
      %v2441 = vunpack.c.l.b16 %v674
      %v2442 = vunpack.c.l.b16 %v675
      %v2443 = vunpack.c.l.b16 %v676
      %v2444 = vunpack.c.l.b16 %v677
      %v2445 = vunpack.c.l.b16 %v678
      %v2446 = vunpack.c.l.b16 %v679
      %v2447 = vunpack.c.l.b16 %v680
      %v2448 = vunpack.c.l.b16 %v681
      %v2449 = vunpack.c.l.b16 %v682
      %v2450 = vunpack.c.l.b16 %v683
      %v2451 = vunpack.c.l.b16 %v684
      %v2452 = vunpack.c.l.b16 %v685
      %v2453 = vunpack.c.l.b16 %v686
      %v2454 = vunpack.c.l.b16 %v687
      %v2455 = vunpack.c.l.b16 %v688
      %v2456 = vunpack.c.l.b16 %v689
      %v2457 = vunpack.c.l.b16 %v690
      %v2458 = vpack.c.b16 %v2315, %v2314
      %v2459 = vpack.c.b16 %v2317, %v2316
      %v2460 = vpack.c.b16 %v2319, %v2318
      %v2461 = vpack.c.b16 %v2321, %v2320
      %v2462 = vpack.c.b16 %v2323, %v2322
      %v2463 = vpack.c.b16 %v2325, %v2324
      %v2464 = vpack.c.b16 %v2327, %v2326
      %v2465 = vpack.c.b16 %v2329, %v2328
      %v2466 = vpack.c.b16 %v2331, %v2330
      %v2467 = vpack.c.b16 %v2333, %v2332
      %v2468 = vpack.c.b16 %v2335, %v2334
      %v2469 = vpack.c.b16 %v2337, %v2336
      %v2470 = vpack.c.b16 %v2339, %v2338
      %v2471 = vpack.c.b16 %v2341, %v2340
      %v2472 = vpack.c.b16 %v2343, %v2342
      %v2473 = vpack.c.b16 %v2345, %v2344
      %v2474 = vpack.c.b16 %v2347, %v2346
      %v2475 = vpack.c.b16 %v2349, %v2348
      %v2476 = vpack.c.b16 %v2351, %v2350
      %v2477 = vpack.c.b16 %v2353, %v2352
      %v2478 = vpack.c.b16 %v2355, %v2354
      %v2479 = vpack.c.b16 %v2357, %v2356
      %v2480 = vpack.c.b16 %v2359, %v2358
      %v2481 = vpack.c.b16 %v2361, %v2360
      %v2482 = vpack.c.b16 %v2363, %v2362
      %v2483 = vpack.c.b16 %v2365, %v2364
      %v2484 = vpack.c.b16 %v2367, %v2366
      %v2485 = vpack.c.b16 %v2369, %v2368
      %v2486 = vpack.c.b16 %v2371, %v2370
      %v2487 = vpack.c.b16 %v2373, %v2372
      %v2488 = vpack.c.b16 %v2375, %v2374
      %v2489 = vpack.c.b16 %v2377, %v2376
      %v2490 = vpack.c.b16 %v2379, %v2378
      %v2491 = vpack.c.b16 %v2381, %v2380
      %v2492 = vpack.c.b16 %v2383, %v2382
      %v2493 = vpack.c.b16 %v2385, %v2384
      %v2494 = vpack.c.b16 %v2387, %v2386
      %v2495 = vpack.c.b16 %v2389, %v2388
      %v2496 = vpack.c.b16 %v2391, %v2390
      %v2497 = vpack.c.b16 %v2393, %v2392
      %v2498 = vpack.c.b16 %v2395, %v2394
      %v2499 = vpack.c.b16 %v2397, %v2396
      %v2500 = vpack.c.b16 %v2399, %v2398
      %v2501 = vpack.c.b16 %v2401, %v2400
      %v2502 = vpack.c.b16 %v2403, %v2402
      %v2503 = vpack.c.b16 %v2405, %v2404
      %v2504 = vpack.c.b16 %v2407, %v2406
      %v2505 = vpack.c.b16 %v2409, %v2408
      %v2506 = vpack.c.b16 %v2411, %v2410
      %v2507 = vpack.c.b16 %v2413, %v2412
      %v2508 = vpack.c.b16 %v2415, %v2414
      %v2509 = vpack.c.b16 %v2417, %v2416
      %v2510 = vpack.c.b16 %v2419, %v2418
      %v2511 = vpack.c.b16 %v2421, %v2420
      %v2512 = vpack.c.b16 %v2423, %v2422
      %v2513 = vpack.c.b16 %v2425, %v2424
      %v2514 = vpack.c.b16 %v2427, %v2426
      %v2515 = vpack.c.b16 %v2429, %v2428
      %v2516 = vpack.c.b16 %v2431, %v2430
      %v2517 = vpack.c.b16 %v2433, %v2432
      %v2518 = vpack.c.b16 %v2435, %v2434
      %v2519 = vpack.c.b16 %v2437, %v2436
      %v2520 = vpack.c.b16 %v2439, %v2438
      %v2521 = vpack.c.b16 %v2441, %v2440
      %v2522 = vpack.c.b16 %v2443, %v2442
      %v2523 = vpack.c.b16 %v2445, %v2444
      %v2524 = vpack.c.b16 %v2447, %v2446
      %v2525 = vpack.c.b16 %v2449, %v2448
      %v2526 = vpack.c.b16 %v2451, %v2450
      %v2527 = vpack.c.b16 %v2453, %v2452
      %v2528 = vpack.c.b16 %v2455, %v2454
      %v2529 = vpack.c.b16 %v2457, %v2456
      %2602 = vmatprep.subr.bf16.mxu0 0
      %2603 = vmatpush1.bf16.msra.mxu0 %v2458
      %2604 = vmatprep.subr.bf16.mxu0 0
      %2605 = vmatpush1.bf16.msra.mxu0 %v2459
      %2606 = vmatprep.subr.bf16.mxu0 0
      %2607 = vmatpush1.bf16.msra.mxu0 %v2460
      %2608 = vmatprep.subr.bf16.mxu0 0
      %2609 = vmatpush1.bf16.msra.mxu0 %v2461
      %2610 = vmatprep.subr.bf16.mxu0 0
      %2611 = vmatpush1.bf16.msra.mxu0 %v2462
      %2612 = vmatprep.subr.bf16.mxu0 0
      %2613 = vmatpush1.bf16.msra.mxu0 %v2463
      %2614 = vmatprep.subr.bf16.mxu0 0
      %2615 = vmatpush1.bf16.msra.mxu0 %v2464
      %2616 = vmatprep.subr.bf16.mxu0 0
      %2617 = vmatpush1.bf16.msra.mxu0 %v2465
      %2618 = vmatprep.subr.bf16.mxu0 0
      %2619 = vmatpush1.bf16.msra.mxu0 %v2466
      %2620 = vmatprep.subr.bf16.mxu0 0
      %2621 = vmatpush1.bf16.msra.mxu0 %v2467
      %2622 = vmatprep.subr.bf16.mxu0 0
      %2623 = vmatpush1.bf16.msra.mxu0 %v2468
      %2624 = vmatprep.subr.bf16.mxu0 0
      %2625 = vmatpush1.bf16.msra.mxu0 %v2469
      %2626 = vmatprep.subr.bf16.mxu0 0
      %2627 = vmatpush1.bf16.msra.mxu0 %v2470
      %2628 = vmatprep.subr.bf16.mxu0 0
      %2629 = vmatpush1.bf16.msra.mxu0 %v2471
      %2630 = vmatprep.subr.bf16.mxu0 0
      %2631 = vmatpush1.bf16.msra.mxu0 %v2472
      %2632 = vmatprep.subr.bf16.mxu0 0
      %2633 = vmatpush1.bf16.msra.mxu0 %v2473
      %2634 = vmatprep.mubr.bf16.mxu0 %v1595
      %2635 = vmatmul.mubr.bf16.gmra.mrb[0].mxu0 %v1594
      %v2636 = vpop.f32.mrb[0].mxu0
      %v2637 = vadd.f32 %v696, %v2636
      %v2638 = vpop.f32.mrb[0].mxu0
      %v2639 = vpop.f32.mrb[0].mxu0
      %v2640 = vadd.f32 %v696, %v2639
      %v2641 = vpop.f32.mrb[0].mxu0
      %2642 = vmatprep.mubr.bf16.mxu0 %v1604
      %2643 = vmatmul.mubr.bf16.gmra.mrb[0].mxu0 %v1603
      %v2644 = vpop.f32.mrb[0].mxu0
      %v2645 = vadd.f32 %v696, %v2644
      %v2646 = vpop.f32.mrb[0].mxu0
      %v2647 = vpop.f32.mrb[0].mxu0
      %v2648 = vadd.f32 %v696, %v2647
      %v2649 = vpop.f32.mrb[0].mxu0
      %2650 = vmatprep.mubr.bf16.mxu0 %v1613
      %2651 = vmatmul.mubr.bf16.gmra.mrb[0].mxu0 %v1612
      %v2652 = vpop.f32.mrb[0].mxu0
      %v2653 = vadd.f32 %v696, %v2652
      %v2654 = vpop.f32.mrb[0].mxu0
      %v2655 = vpop.f32.mrb[0].mxu0
      %v2656 = vadd.f32 %v696, %v2655
      %v2657 = vpop.f32.mrb[0].mxu0
      %2658 = vmatprep.mubr.bf16.mxu0 %v1622
      %2659 = vmatmul.mubr.bf16.gmra.mrb[0].mxu0 %v1621
      %v2660 = vpop.f32.mrb[0].mxu0
      %v2661 = vadd.f32 %v696, %v2660
      %v2662 = vpop.f32.mrb[0].mxu0
      %v2663 = vpop.f32.mrb[0].mxu0
      %v2664 = vadd.f32 %v696, %v2663
      %v2665 = vpop.f32.mrb[0].mxu0
      %2666 = vmatprep.mubr.bf16.mxu0 %v1631
      %2667 = vmatmul.mubr.bf16.gmra.mrb[0].mxu0 %v1630
      %v2668 = vpop.f32.mrb[0].mxu0
      %v2669 = vadd.f32 %v696, %v2668
      %v2670 = vpop.f32.mrb[0].mxu0
      %v2671 = vpop.f32.mrb[0].mxu0
      %v2672 = vadd.f32 %v696, %v2671
      %v2673 = vpop.f32.mrb[0].mxu0
      %2674 = vmatprep.mubr.bf16.mxu0 %v1640
      %2675 = vmatmul.mubr.bf16.gmra.mrb[0].mxu0 %v1639
      %v2676 = vpop.f32.mrb[0].mxu0
      %v2677 = vadd.f32 %v696, %v2676
      %v2678 = vpop.f32.mrb[0].mxu0
      %v2679 = vpop.f32.mrb[0].mxu0
      %v2680 = vadd.f32 %v696, %v2679
      %v2681 = vpop.f32.mrb[0].mxu0
      %2682 = vmatprep.mubr.bf16.mxu0 %v1649
      %2683 = vmatmul.mubr.bf16.gmra.mrb[0].mxu0 %v1648
      %v2684 = vpop.f32.mrb[0].mxu0
      %v2685 = vadd.f32 %v696, %v2684
      %v2686 = vpop.f32.mrb[0].mxu0
      %v2687 = vpop.f32.mrb[0].mxu0
      %v2688 = vadd.f32 %v696, %v2687
      %v2689 = vpop.f32.mrb[0].mxu0
      %2690 = vmatprep.mubr.bf16.mxu0 %v1658
      %2691 = vmatmul.mubr.bf16.gmra.mrb[0].mxu0 %v1657
      %v2692 = vpop.f32.mrb[0].mxu0
      %v2693 = vadd.f32 %v696, %v2692
      %v2694 = vpop.f32.mrb[0].mxu0
      %v2695 = vpop.f32.mrb[0].mxu0
      %v2696 = vadd.f32 %v696, %v2695
      %v2697 = vpop.f32.mrb[0].mxu0
      %2698 = vmatprep.mubr.bf16.mxu0 %v1667
      %2699 = vmatmul.mubr.bf16.gmra.mrb[0].mxu0 %v1666
      %v2700 = vpop.f32.mrb[0].mxu0
      %v2701 = vadd.f32 %v696, %v2700
      %v2702 = vpop.f32.mrb[0].mxu0
      %v2703 = vpop.f32.mrb[0].mxu0
      %v2704 = vadd.f32 %v696, %v2703
      %v2705 = vpop.f32.mrb[0].mxu0
      %2706 = vmatprep.mubr.bf16.mxu0 %v1676
      %2707 = vmatmul.mubr.bf16.gmra.mrb[0].mxu0 %v1675
      %v2708 = vpop.f32.mrb[0].mxu0
      %v2709 = vadd.f32 %v696, %v2708
      %v2710 = vpop.f32.mrb[0].mxu0
      %v2711 = vpop.f32.mrb[0].mxu0
      %v2712 = vadd.f32 %v696, %v2711
      %v2713 = vpop.f32.mrb[0].mxu0
      %2714 = vmatprep.mubr.bf16.mxu0 %v1685
      %2715 = vmatmul.mubr.bf16.gmra.mrb[0].mxu0 %v1684
      %v2716 = vpop.f32.mrb[0].mxu0
      %v2717 = vadd.f32 %v696, %v2716
      %v2718 = vpop.f32.mrb[0].mxu0
      %v2719 = vpop.f32.mrb[0].mxu0
      %v2720 = vadd.f32 %v696, %v2719
      %v2721 = vpop.f32.mrb[0].mxu0
      %2722 = vmatprep.mubr.bf16.mxu0 %v1694
      %2723 = vmatmul.mubr.bf16.gmra.mrb[0].mxu0 %v1693
      %v2724 = vpop.f32.mrb[0].mxu0
      %v2725 = vadd.f32 %v696, %v2724
      %v2726 = vpop.f32.mrb[0].mxu0
      %v2727 = vpop.f32.mrb[0].mxu0
      %v2728 = vadd.f32 %v696, %v2727
      %v2729 = vpop.f32.mrb[0].mxu0
      %2730 = vmatprep.mubr.bf16.mxu0 %v1703
      %2731 = vmatmul.mubr.bf16.gmra.mrb[0].mxu0 %v1702
      %v2732 = vpop.f32.mrb[0].mxu0
      %v2733 = vadd.f32 %v696, %v2732
      %v2734 = vpop.f32.mrb[0].mxu0
      %v2735 = vpop.f32.mrb[0].mxu0
      %v2736 = vadd.f32 %v696, %v2735
      %v2737 = vpop.f32.mrb[0].mxu0
      %2738 = vmatprep.mubr.bf16.mxu0 %v1712
      %2739 = vmatmul.mubr.bf16.gmra.mrb[0].mxu0 %v1711
      %v2740 = vpop.f32.mrb[0].mxu0
      %v2741 = vadd.f32 %v696, %v2740
      %v2742 = vpop.f32.mrb[0].mxu0
      %v2743 = vpop.f32.mrb[0].mxu0
      %v2744 = vadd.f32 %v696, %v2743
      %v2745 = vpop.f32.mrb[0].mxu0
      %2746 = vmatprep.mubr.bf16.mxu0 %v1721
      %2747 = vmatmul.mubr.bf16.gmra.mrb[0].mxu0 %v1720
      %v2748 = vpop.f32.mrb[0].mxu0
      %v2749 = vadd.f32 %v696, %v2748
      %v2750 = vpop.f32.mrb[0].mxu0
      %v2751 = vpop.f32.mrb[0].mxu0
      %v2752 = vadd.f32 %v696, %v2751
      %v2753 = vpop.f32.mrb[0].mxu0
      %2754 = vmatprep.mubr.bf16.mxu0 %v1730
      %2755 = vmatmul.mubr.bf16.gmra.mrb[0].mxu0 %v1729
      %v2756 = vpop.f32.mrb[0].mxu0
      %v2757 = vadd.f32 %v696, %v2756
      %v2758 = vpop.f32.mrb[0].mxu0
      %v2759 = vpop.f32.mrb[0].mxu0
      %v2760 = vadd.f32 %v696, %v2759
      %v2761 = vpop.f32.mrb[0].mxu0
      %2762 = vmatprep.mubr.bf16.mxu0 %v1739
      %2763 = vmatmul.mubr.bf16.gmra.mrb[0].mxu0 %v1738
      %v2764 = vpop.f32.mrb[0].mxu0
      %v2765 = vadd.f32 %v696, %v2764
      %v2766 = vpop.f32.mrb[0].mxu0
      %v2767 = vpop.f32.mrb[0].mxu0
      %v2768 = vadd.f32 %v696, %v2767
      %v2769 = vpop.f32.mrb[0].mxu0
      %2770 = vmatprep.mubr.bf16.mxu0 %v1748
      %2771 = vmatmul.mubr.bf16.gmra.mrb[0].mxu0 %v1747
      %v2772 = vpop.f32.mrb[0].mxu0
      %v2773 = vadd.f32 %v696, %v2772
      %v2774 = vpop.f32.mrb[0].mxu0
      %v2775 = vpop.f32.mrb[0].mxu0
      %v2776 = vadd.f32 %v696, %v2775
      %v2777 = vpop.f32.mrb[0].mxu0
      %2778 = vmatprep.mubr.bf16.mxu0 %v1757
      %2779 = vmatmul.mubr.bf16.gmra.mrb[0].mxu0 %v1756
      %v2780 = vpop.f32.mrb[0].mxu0
      %v2781 = vadd.f32 %v696, %v2780
      %v2782 = vpop.f32.mrb[0].mxu0
      %v2783 = vpop.f32.mrb[0].mxu0
      %v2784 = vadd.f32 %v696, %v2783
      %v2785 = vpop.f32.mrb[0].mxu0
      %2786 = vmatprep.mubr.bf16.mxu0 %v1766
      %2787 = vmatmul.mubr.bf16.gmra.mrb[0].mxu0 %v1765
      %v2788 = vpop.f32.mrb[0].mxu0
      %v2789 = vadd.f32 %v696, %v2788
      %v2790 = vpop.f32.mrb[0].mxu0
      %v2791 = vpop.f32.mrb[0].mxu0
      %v2792 = vadd.f32 %v696, %v2791
      %v2793 = vpop.f32.mrb[0].mxu0
      %2794 = vmatprep.mubr.bf16.mxu0 %v1775
      %2795 = vmatmul.mubr.bf16.gmra.mrb[0].mxu0 %v1774
      %v2796 = vpop.f32.mrb[0].mxu0
      %v2797 = vadd.f32 %v696, %v2796
      %v2798 = vpop.f32.mrb[0].mxu0
      %v2799 = vpop.f32.mrb[0].mxu0
      %v2800 = vadd.f32 %v696, %v2799
      %v2801 = vpop.f32.mrb[0].mxu0
      %2802 = vmatprep.mubr.bf16.mxu0 %v1784
      %2803 = vmatmul.mubr.bf16.gmra.mrb[0].mxu0 %v1783
      %v2804 = vpop.f32.mrb[0].mxu0
      %v2805 = vadd.f32 %v696, %v2804
      %v2806 = vpop.f32.mrb[0].mxu0
      %v2807 = vpop.f32.mrb[0].mxu0
      %v2808 = vadd.f32 %v696, %v2807
      %v2809 = vpop.f32.mrb[0].mxu0
      %2810 = vmatprep.mubr.bf16.mxu0 %v1793
      %2811 = vmatmul.mubr.bf16.gmra.mrb[0].mxu0 %v1792
      %v2812 = vpop.f32.mrb[0].mxu0
      %v2813 = vadd.f32 %v696, %v2812
      %v2814 = vpop.f32.mrb[0].mxu0
      %v2815 = vpop.f32.mrb[0].mxu0
      %v2816 = vadd.f32 %v696, %v2815
      %v2817 = vpop.f32.mrb[0].mxu0
      %2818 = vmatprep.mubr.bf16.mxu0 %v1802
      %2819 = vmatmul.mubr.bf16.gmra.mrb[0].mxu0 %v1801
      %v2820 = vpop.f32.mrb[0].mxu0
      %v2821 = vadd.f32 %v696, %v2820
      %v2822 = vpop.f32.mrb[0].mxu0
      %v2823 = vpop.f32.mrb[0].mxu0
      %v2824 = vadd.f32 %v696, %v2823
      %v2825 = vpop.f32.mrb[0].mxu0
      %2826 = vmatprep.mubr.bf16.mxu0 %v1811
      %2827 = vmatmul.mubr.bf16.gmra.mrb[0].mxu0 %v1810
      %v2828 = vpop.f32.mrb[0].mxu0
      %v2829 = vadd.f32 %v696, %v2828
      %v2830 = vpop.f32.mrb[0].mxu0
      %v2831 = vpop.f32.mrb[0].mxu0
      %v2832 = vadd.f32 %v696, %v2831
      %v2833 = vpop.f32.mrb[0].mxu0
      %2834 = vmatprep.mubr.bf16.mxu0 %v1820
      %2835 = vmatmul.mubr.bf16.gmra.mrb[0].mxu0 %v1819
      %v2836 = vpop.f32.mrb[0].mxu0
      %v2837 = vadd.f32 %v696, %v2836
      %v2838 = vpop.f32.mrb[0].mxu0
      %v2839 = vpop.f32.mrb[0].mxu0
      %v2840 = vadd.f32 %v696, %v2839
      %v2841 = vpop.f32.mrb[0].mxu0
      %2842 = vmatprep.mubr.bf16.mxu0 %v1829
      %2843 = vmatmul.mubr.bf16.gmra.mrb[0].mxu0 %v1828
      %v2844 = vpop.f32.mrb[0].mxu0
      %v2845 = vadd.f32 %v696, %v2844
      %v2846 = vpop.f32.mrb[0].mxu0
      %v2847 = vpop.f32.mrb[0].mxu0
      %v2848 = vadd.f32 %v696, %v2847
      %v2849 = vpop.f32.mrb[0].mxu0
      %2850 = vmatprep.mubr.bf16.mxu0 %v1838
      %2851 = vmatmul.mubr.bf16.gmra.mrb[0].mxu0 %v1837
      %v2852 = vpop.f32.mrb[0].mxu0
      %v2853 = vadd.f32 %v696, %v2852
      %v2854 = vpop.f32.mrb[0].mxu0
      %v2855 = vpop.f32.mrb[0].mxu0
      %v2856 = vadd.f32 %v696, %v2855
      %v2857 = vpop.f32.mrb[0].mxu0
      %2858 = vmatprep.mubr.bf16.mxu0 %v1847
      %2859 = vmatmul.mubr.bf16.gmra.mrb[0].mxu0 %v1846
      %v2860 = vpop.f32.mrb[0].mxu0
      %v2861 = vadd.f32 %v696, %v2860
      %v2862 = vpop.f32.mrb[0].mxu0
      %v2863 = vpop.f32.mrb[0].mxu0
      %v2864 = vadd.f32 %v696, %v2863
      %v2865 = vpop.f32.mrb[0].mxu0
      %2866 = vmatprep.mubr.bf16.mxu0 %v1856
      %2867 = vmatmul.mubr.bf16.gmra.mrb[0].mxu0 %v1855
      %v2868 = vpop.f32.mrb[0].mxu0
      %v2869 = vadd.f32 %v696, %v2868
      %v2870 = vpop.f32.mrb[0].mxu0
      %v2871 = vpop.f32.mrb[0].mxu0
      %v2872 = vadd.f32 %v696, %v2871
      %v2873 = vpop.f32.mrb[0].mxu0
      %2874 = vmatprep.mubr.bf16.mxu0 %v1865
      %2875 = vmatmul.mubr.bf16.gmra.mrb[0].mxu0 %v1864
      %v2876 = vpop.f32.mrb[0].mxu0
      %v2877 = vadd.f32 %v696, %v2876
      %v2878 = vpop.f32.mrb[0].mxu0
      %v2879 = vpop.f32.mrb[0].mxu0
      %v2880 = vadd.f32 %v696, %v2879
      %v2881 = vpop.f32.mrb[0].mxu0
      %2882 = vmatprep.mubr.bf16.mxu0 %v1874
      %2883 = vmatmul.mubr.bf16.gmra.mrb[0].mxu0 %v1873
      %v2884 = vpop.f32.mrb[0].mxu0
      %v2885 = vadd.f32 %v696, %v2884
      %v2886 = vpop.f32.mrb[0].mxu0
      %v2887 = vpop.f32.mrb[0].mxu0
      %v2888 = vadd.f32 %v696, %v2887
      %v2889 = vpop.f32.mrb[0].mxu0
      %2890 = vdwg.mxu0
      %2891 = vmatprep.subr.bf16.mxu0 0
      %2892 = vmatpush1.bf16.msra.mxu0 %v2474
      %2893 = vmatprep.subr.bf16.mxu0 0
      %2894 = vmatpush1.bf16.msra.mxu0 %v2475
      %2895 = vmatprep.subr.bf16.mxu0 0
      %2896 = vmatpush1.bf16.msra.mxu0 %v2476
      %2897 = vmatprep.subr.bf16.mxu0 0
      %2898 = vmatpush1.bf16.msra.mxu0 %v2477
      %2899 = vmatprep.subr.bf16.mxu0 0
      %2900 = vmatpush1.bf16.msra.mxu0 %v2478
      %2901 = vmatprep.subr.bf16.mxu0 0
      %2902 = vmatpush1.bf16.msra.mxu0 %v2479
      %2903 = vmatprep.subr.bf16.mxu0 0
      %2904 = vmatpush1.bf16.msra.mxu0 %v2480
      %2905 = vmatprep.subr.bf16.mxu0 0
      %2906 = vmatpush1.bf16.msra.mxu0 %v2481
      %2907 = vmatprep.subr.bf16.mxu0 0
      %2908 = vmatpush1.bf16.msra.mxu0 %v2482
      %2909 = vmatprep.subr.bf16.mxu0 0
      %2910 = vmatpush1.bf16.msra.mxu0 %v2483
      %2911 = vmatprep.subr.bf16.mxu0 0
      %2912 = vmatpush1.bf16.msra.mxu0 %v2484
      %2913 = vmatprep.subr.bf16.mxu0 0
      %2914 = vmatpush1.bf16.msra.mxu0 %v2485
      %2915 = vmatprep.subr.bf16.mxu0 0
      %2916 = vmatpush1.bf16.msra.mxu0 %v2486
      %2917 = vmatprep.subr.bf16.mxu0 0
      %2918 = vmatpush1.bf16.msra.mxu0 %v2487
      %2919 = vmatprep.subr.bf16.mxu0 0
      %2920 = vmatpush1.bf16.msra.mxu0 %v2488
      %2921 = vmatprep.subr.bf16.mxu0 0
      %2922 = vmatpush1.bf16.msra.mxu0 %v2489
      %2923 = vmatprep.mubr.bf16.mxu0 %v1597
      %2924 = vmatmul.mubr.bf16.gmra.mrb[0].mxu0 %v1596
      %v2925 = vpop.f32.mrb[0].mxu0
      %v2926 = vadd.f32 %v2637, %v2925
      %v2927 = vpop.f32.mrb[0].mxu0
      %v2928 = vpop.f32.mrb[0].mxu0
      %v2929 = vadd.f32 %v2640, %v2928
      %v2930 = vpop.f32.mrb[0].mxu0
      %2931 = vmatprep.mubr.bf16.mxu0 %v1606
      %2932 = vmatmul.mubr.bf16.gmra.mrb[0].mxu0 %v1605
      %v2933 = vpop.f32.mrb[0].mxu0
      %v2934 = vadd.f32 %v2645, %v2933
      %v2935 = vpop.f32.mrb[0].mxu0
      %v2936 = vpop.f32.mrb[0].mxu0
      %v2937 = vadd.f32 %v2648, %v2936
      %v2938 = vpop.f32.mrb[0].mxu0
      %2939 = vmatprep.mubr.bf16.mxu0 %v1615
      %2940 = vmatmul.mubr.bf16.gmra.mrb[0].mxu0 %v1614
      %v2941 = vpop.f32.mrb[0].mxu0
      %v2942 = vadd.f32 %v2653, %v2941
      %v2943 = vpop.f32.mrb[0].mxu0
      %v2944 = vpop.f32.mrb[0].mxu0
      %v2945 = vadd.f32 %v2656, %v2944
      %v2946 = vpop.f32.mrb[0].mxu0
      %2947 = vmatprep.mubr.bf16.mxu0 %v1624
      %2948 = vmatmul.mubr.bf16.gmra.mrb[0].mxu0 %v1623
      %v2949 = vpop.f32.mrb[0].mxu0
      %v2950 = vadd.f32 %v2661, %v2949
      %v2951 = vpop.f32.mrb[0].mxu0
      %v2952 = vpop.f32.mrb[0].mxu0
      %v2953 = vadd.f32 %v2664, %v2952
      %v2954 = vpop.f32.mrb[0].mxu0
      %2955 = vmatprep.mubr.bf16.mxu0 %v1633
      %2956 = vmatmul.mubr.bf16.gmra.mrb[0].mxu0 %v1632
      %v2957 = vpop.f32.mrb[0].mxu0
      %v2958 = vadd.f32 %v2669, %v2957
      %v2959 = vpop.f32.mrb[0].mxu0
      %v2960 = vpop.f32.mrb[0].mxu0
      %v2961 = vadd.f32 %v2672, %v2960
      %v2962 = vpop.f32.mrb[0].mxu0
      %2963 = vmatprep.mubr.bf16.mxu0 %v1642
      %2964 = vmatmul.mubr.bf16.gmra.mrb[0].mxu0 %v1641
      %v2965 = vpop.f32.mrb[0].mxu0
      %v2966 = vadd.f32 %v2677, %v2965
      %v2967 = vpop.f32.mrb[0].mxu0
      %v2968 = vpop.f32.mrb[0].mxu0
      %v2969 = vadd.f32 %v2680, %v2968
      %v2970 = vpop.f32.mrb[0].mxu0
      %2971 = vmatprep.mubr.bf16.mxu0 %v1651
      %2972 = vmatmul.mubr.bf16.gmra.mrb[0].mxu0 %v1650
      %v2973 = vpop.f32.mrb[0].mxu0
      %v2974 = vadd.f32 %v2685, %v2973
      %v2975 = vpop.f32.mrb[0].mxu0
      %v2976 = vpop.f32.mrb[0].mxu0
      %v2977 = vadd.f32 %v2688, %v2976
      %v2978 = vpop.f32.mrb[0].mxu0
      %2979 = vmatprep.mubr.bf16.mxu0 %v1660
      %2980 = vmatmul.mubr.bf16.gmra.mrb[0].mxu0 %v1659
      %v2981 = vpop.f32.mrb[0].mxu0
      %v2982 = vadd.f32 %v2693, %v2981
      %v2983 = vpop.f32.mrb[0].mxu0
      %v2984 = vpop.f32.mrb[0].mxu0
      %v2985 = vadd.f32 %v2696, %v2984
      %v2986 = vpop.f32.mrb[0].mxu0
      %2987 = vmatprep.mubr.bf16.mxu0 %v1669
      %2988 = vmatmul.mubr.bf16.gmra.mrb[0].mxu0 %v1668
      %v2989 = vpop.f32.mrb[0].mxu0
      %v2990 = vadd.f32 %v2701, %v2989
      %v2991 = vpop.f32.mrb[0].mxu0
      %v2992 = vpop.f32.mrb[0].mxu0
      %v2993 = vadd.f32 %v2704, %v2992
      %v2994 = vpop.f32.mrb[0].mxu0
      %2995 = vmatprep.mubr.bf16.mxu0 %v1678
      %2996 = vmatmul.mubr.bf16.gmra.mrb[0].mxu0 %v1677
      %v2997 = vpop.f32.mrb[0].mxu0
      %v2998 = vadd.f32 %v2709, %v2997
      %v2999 = vpop.f32.mrb[0].mxu0
      %v3000 = vpop.f32.mrb[0].mxu0
      %v3001 = vadd.f32 %v2712, %v3000
      %v3002 = vpop.f32.mrb[0].mxu0
      %3003 = vmatprep.mubr.bf16.mxu0 %v1687
      %3004 = vmatmul.mubr.bf16.gmra.mrb[0].mxu0 %v1686
      %v3005 = vpop.f32.mrb[0].mxu0
      %v3006 = vadd.f32 %v2717, %v3005
      %v3007 = vpop.f32.mrb[0].mxu0
      %v3008 = vpop.f32.mrb[0].mxu0
      %v3009 = vadd.f32 %v2720, %v3008
      %v3010 = vpop.f32.mrb[0].mxu0
      %3011 = vmatprep.mubr.bf16.mxu0 %v1696
      %3012 = vmatmul.mubr.bf16.gmra.mrb[0].mxu0 %v1695
      %v3013 = vpop.f32.mrb[0].mxu0
      %v3014 = vadd.f32 %v2725, %v3013
      %v3015 = vpop.f32.mrb[0].mxu0
      %v3016 = vpop.f32.mrb[0].mxu0
      %v3017 = vadd.f32 %v2728, %v3016
      %v3018 = vpop.f32.mrb[0].mxu0
      %3019 = vmatprep.mubr.bf16.mxu0 %v1705
      %3020 = vmatmul.mubr.bf16.gmra.mrb[0].mxu0 %v1704
      %v3021 = vpop.f32.mrb[0].mxu0
      %v3022 = vadd.f32 %v2733, %v3021
      %v3023 = vpop.f32.mrb[0].mxu0
      %v3024 = vpop.f32.mrb[0].mxu0
      %v3025 = vadd.f32 %v2736, %v3024
      %v3026 = vpop.f32.mrb[0].mxu0
      %3027 = vmatprep.mubr.bf16.mxu0 %v1714
      %3028 = vmatmul.mubr.bf16.gmra.mrb[0].mxu0 %v1713
      %v3029 = vpop.f32.mrb[0].mxu0
      %v3030 = vadd.f32 %v2741, %v3029
      %v3031 = vpop.f32.mrb[0].mxu0
      %v3032 = vpop.f32.mrb[0].mxu0
      %v3033 = vadd.f32 %v2744, %v3032
      %v3034 = vpop.f32.mrb[0].mxu0
      %3035 = vmatprep.mubr.bf16.mxu0 %v1723
      %3036 = vmatmul.mubr.bf16.gmra.mrb[0].mxu0 %v1722
      %v3037 = vpop.f32.mrb[0].mxu0
      %v3038 = vadd.f32 %v2749, %v3037
      %v3039 = vpop.f32.mrb[0].mxu0
      %v3040 = vpop.f32.mrb[0].mxu0
      %v3041 = vadd.f32 %v2752, %v3040
      %v3042 = vpop.f32.mrb[0].mxu0
      %3043 = vmatprep.mubr.bf16.mxu0 %v1732
      %3044 = vmatmul.mubr.bf16.gmra.mrb[0].mxu0 %v1731
      %v3045 = vpop.f32.mrb[0].mxu0
      %v3046 = vadd.f32 %v2757, %v3045
      %v3047 = vpop.f32.mrb[0].mxu0
      %v3048 = vpop.f32.mrb[0].mxu0
      %v3049 = vadd.f32 %v2760, %v3048
      %v3050 = vpop.f32.mrb[0].mxu0
      %3051 = vmatprep.mubr.bf16.mxu0 %v1741
      %3052 = vmatmul.mubr.bf16.gmra.mrb[0].mxu0 %v1740
      %v3053 = vpop.f32.mrb[0].mxu0
      %v3054 = vadd.f32 %v2765, %v3053
      %v3055 = vpop.f32.mrb[0].mxu0
      %v3056 = vpop.f32.mrb[0].mxu0
      %v3057 = vadd.f32 %v2768, %v3056
      %v3058 = vpop.f32.mrb[0].mxu0
      %3059 = vmatprep.mubr.bf16.mxu0 %v1750
      %3060 = vmatmul.mubr.bf16.gmra.mrb[0].mxu0 %v1749
      %v3061 = vpop.f32.mrb[0].mxu0
      %v3062 = vadd.f32 %v2773, %v3061
      %v3063 = vpop.f32.mrb[0].mxu0
      %v3064 = vpop.f32.mrb[0].mxu0
      %v3065 = vadd.f32 %v2776, %v3064
      %v3066 = vpop.f32.mrb[0].mxu0
      %3067 = vmatprep.mubr.bf16.mxu0 %v1759
      %3068 = vmatmul.mubr.bf16.gmra.mrb[0].mxu0 %v1758
      %v3069 = vpop.f32.mrb[0].mxu0
      %v3070 = vadd.f32 %v2781, %v3069
      %v3071 = vpop.f32.mrb[0].mxu0
      %v3072 = vpop.f32.mrb[0].mxu0
      %v3073 = vadd.f32 %v2784, %v3072
      %v3074 = vpop.f32.mrb[0].mxu0
      %3075 = vmatprep.mubr.bf16.mxu0 %v1768
      %3076 = vmatmul.mubr.bf16.gmra.mrb[0].mxu0 %v1767
      %v3077 = vpop.f32.mrb[0].mxu0
      %v3078 = vadd.f32 %v2789, %v3077
      %v3079 = vpop.f32.mrb[0].mxu0
      %v3080 = vpop.f32.mrb[0].mxu0
      %v3081 = vadd.f32 %v2792, %v3080
      %v3082 = vpop.f32.mrb[0].mxu0
      %3083 = vmatprep.mubr.bf16.mxu0 %v1777
      %3084 = vmatmul.mubr.bf16.gmra.mrb[0].mxu0 %v1776
      %v3085 = vpop.f32.mrb[0].mxu0
      %v3086 = vadd.f32 %v2797, %v3085
      %v3087 = vpop.f32.mrb[0].mxu0
      %v3088 = vpop.f32.mrb[0].mxu0
      %v3089 = vadd.f32 %v2800, %v3088
      %v3090 = vpop.f32.mrb[0].mxu0
      %3091 = vmatprep.mubr.bf16.mxu0 %v1786
      %3092 = vmatmul.mubr.bf16.gmra.mrb[0].mxu0 %v1785
      %v3093 = vpop.f32.mrb[0].mxu0
      %v3094 = vadd.f32 %v2805, %v3093
      %v3095 = vpop.f32.mrb[0].mxu0
      %v3096 = vpop.f32.mrb[0].mxu0
      %v3097 = vadd.f32 %v2808, %v3096
      %v3098 = vpop.f32.mrb[0].mxu0
      %3099 = vmatprep.mubr.bf16.mxu0 %v1795
      %3100 = vmatmul.mubr.bf16.gmra.mrb[0].mxu0 %v1794
      %v3101 = vpop.f32.mrb[0].mxu0
      %v3102 = vadd.f32 %v2813, %v3101
      %v3103 = vpop.f32.mrb[0].mxu0
      %v3104 = vpop.f32.mrb[0].mxu0
      %v3105 = vadd.f32 %v2816, %v3104
      %v3106 = vpop.f32.mrb[0].mxu0
      %3107 = vmatprep.mubr.bf16.mxu0 %v1804
      %3108 = vmatmul.mubr.bf16.gmra.mrb[0].mxu0 %v1803
      %v3109 = vpop.f32.mrb[0].mxu0
      %v3110 = vadd.f32 %v2821, %v3109
      %v3111 = vpop.f32.mrb[0].mxu0
      %v3112 = vpop.f32.mrb[0].mxu0
      %v3113 = vadd.f32 %v2824, %v3112
      %v3114 = vpop.f32.mrb[0].mxu0
      %3115 = vmatprep.mubr.bf16.mxu0 %v1813
      %3116 = vmatmul.mubr.bf16.gmra.mrb[0].mxu0 %v1812
      %v3117 = vpop.f32.mrb[0].mxu0
      %v3118 = vadd.f32 %v2829, %v3117
      %v3119 = vpop.f32.mrb[0].mxu0
      %v3120 = vpop.f32.mrb[0].mxu0
      %v3121 = vadd.f32 %v2832, %v3120
      %v3122 = vpop.f32.mrb[0].mxu0
      %3123 = vmatprep.mubr.bf16.mxu0 %v1822
      %3124 = vmatmul.mubr.bf16.gmra.mrb[0].mxu0 %v1821
      %v3125 = vpop.f32.mrb[0].mxu0
      %v3126 = vadd.f32 %v2837, %v3125
      %v3127 = vpop.f32.mrb[0].mxu0
      %v3128 = vpop.f32.mrb[0].mxu0
      %v3129 = vadd.f32 %v2840, %v3128
      %v3130 = vpop.f32.mrb[0].mxu0
      %3131 = vmatprep.mubr.bf16.mxu0 %v1831
      %3132 = vmatmul.mubr.bf16.gmra.mrb[0].mxu0 %v1830
      %v3133 = vpop.f32.mrb[0].mxu0
      %v3134 = vadd.f32 %v2845, %v3133
      %v3135 = vpop.f32.mrb[0].mxu0
      %v3136 = vpop.f32.mrb[0].mxu0
      %v3137 = vadd.f32 %v2848, %v3136
      %v3138 = vpop.f32.mrb[0].mxu0
      %3139 = vmatprep.mubr.bf16.mxu0 %v1840
      %3140 = vmatmul.mubr.bf16.gmra.mrb[0].mxu0 %v1839
      %v3141 = vpop.f32.mrb[0].mxu0
      %v3142 = vadd.f32 %v2853, %v3141
      %v3143 = vpop.f32.mrb[0].mxu0
      %v3144 = vpop.f32.mrb[0].mxu0
      %v3145 = vadd.f32 %v2856, %v3144
      %v3146 = vpop.f32.mrb[0].mxu0
      %3147 = vmatprep.mubr.bf16.mxu0 %v1849
      %3148 = vmatmul.mubr.bf16.gmra.mrb[0].mxu0 %v1848
      %v3149 = vpop.f32.mrb[0].mxu0
      %v3150 = vadd.f32 %v2861, %v3149
      %v3151 = vpop.f32.mrb[0].mxu0
      %v3152 = vpop.f32.mrb[0].mxu0
      %v3153 = vadd.f32 %v2864, %v3152
      %v3154 = vpop.f32.mrb[0].mxu0
      %3155 = vmatprep.mubr.bf16.mxu0 %v1858
      %3156 = vmatmul.mubr.bf16.gmra.mrb[0].mxu0 %v1857
      %v3157 = vpop.f32.mrb[0].mxu0
      %v3158 = vadd.f32 %v2869, %v3157
      %v3159 = vpop.f32.mrb[0].mxu0
      %v3160 = vpop.f32.mrb[0].mxu0
      %v3161 = vadd.f32 %v2872, %v3160
      %v3162 = vpop.f32.mrb[0].mxu0
      %3163 = vmatprep.mubr.bf16.mxu0 %v1867
      %3164 = vmatmul.mubr.bf16.gmra.mrb[0].mxu0 %v1866
      %v3165 = vpop.f32.mrb[0].mxu0
      %v3166 = vadd.f32 %v2877, %v3165
      %v3167 = vpop.f32.mrb[0].mxu0
      %v3168 = vpop.f32.mrb[0].mxu0
      %v3169 = vadd.f32 %v2880, %v3168
      %v3170 = vpop.f32.mrb[0].mxu0
      %3171 = vmatprep.mubr.bf16.mxu0 %v1876
      %3172 = vmatmul.mubr.bf16.gmra.mrb[0].mxu0 %v1875
      %v3173 = vpop.f32.mrb[0].mxu0
      %v3174 = vadd.f32 %v2885, %v3173
      %v3175 = vpop.f32.mrb[0].mxu0
      %v3176 = vpop.f32.mrb[0].mxu0
      %v3177 = vadd.f32 %v2888, %v3176
      %v3178 = vpop.f32.mrb[0].mxu0
      %3179 = vdwg.mxu0
      %3180 = vmatprep.subr.bf16.mxu0 0
      %3181 = vmatpush1.bf16.msra.mxu0 %v2490
      %3182 = vmatprep.subr.bf16.mxu0 0
      %3183 = vmatpush1.bf16.msra.mxu0 %v2491
      %3184 = vmatprep.subr.bf16.mxu0 0
      %3185 = vmatpush1.bf16.msra.mxu0 %v2492
      %3186 = vmatprep.subr.bf16.mxu0 0
      %3187 = vmatpush1.bf16.msra.mxu0 %v2493
      %3188 = vmatprep.subr.bf16.mxu0 0
      %3189 = vmatpush1.bf16.msra.mxu0 %v2494
      %3190 = vmatprep.subr.bf16.mxu0 0
      %3191 = vmatpush1.bf16.msra.mxu0 %v2495
      %3192 = vmatprep.subr.bf16.mxu0 0
      %3193 = vmatpush1.bf16.msra.mxu0 %v2496
      %3194 = vmatprep.subr.bf16.mxu0 0
      %3195 = vmatpush1.bf16.msra.mxu0 %v2497
      %3196 = vmatprep.subr.bf16.mxu0 0
      %3197 = vmatpush1.bf16.msra.mxu0 %v2498
      %3198 = vmatprep.subr.bf16.mxu0 0
      %3199 = vmatpush1.bf16.msra.mxu0 %v2499
      %3200 = vmatprep.subr.bf16.mxu0 0
      %3201 = vmatpush1.bf16.msra.mxu0 %v2500
      %3202 = vmatprep.subr.bf16.mxu0 0
      %3203 = vmatpush1.bf16.msra.mxu0 %v2501
      %3204 = vmatprep.subr.bf16.mxu0 0
      %3205 = vmatpush1.bf16.msra.mxu0 %v2502
      %3206 = vmatprep.subr.bf16.mxu0 0
      %3207 = vmatpush1.bf16.msra.mxu0 %v2503
      %3208 = vmatprep.subr.bf16.mxu0 0
      %3209 = vmatpush1.bf16.msra.mxu0 %v2504
      %3210 = vmatprep.subr.bf16.mxu0 0
      %3211 = vmatpush1.bf16.msra.mxu0 %v2505
      %3212 = vmatprep.mubr.bf16.mxu0 %v1599
      %3213 = vmatmul.mubr.bf16.gmra.mrb[0].mxu0 %v1598
      %v3214 = vpop.f32.mrb[0].mxu0
      %v3215 = vadd.f32 %v2926, %v3214
      %v3216 = vpop.f32.mrb[0].mxu0
      %v3217 = vpop.f32.mrb[0].mxu0
      %v3218 = vadd.f32 %v2929, %v3217
      %v3219 = vpop.f32.mrb[0].mxu0
      %3220 = vmatprep.mubr.bf16.mxu0 %v1608
      %3221 = vmatmul.mubr.bf16.gmra.mrb[0].mxu0 %v1607
      %v3222 = vpop.f32.mrb[0].mxu0
      %v3223 = vadd.f32 %v2934, %v3222
      %v3224 = vpop.f32.mrb[0].mxu0
      %v3225 = vpop.f32.mrb[0].mxu0
      %v3226 = vadd.f32 %v2937, %v3225
      %v3227 = vpop.f32.mrb[0].mxu0
      %3228 = vmatprep.mubr.bf16.mxu0 %v1617
      %3229 = vmatmul.mubr.bf16.gmra.mrb[0].mxu0 %v1616
      %v3230 = vpop.f32.mrb[0].mxu0
      %v3231 = vadd.f32 %v2942, %v3230
      %v3232 = vpop.f32.mrb[0].mxu0
      %v3233 = vpop.f32.mrb[0].mxu0
      %v3234 = vadd.f32 %v2945, %v3233
      %v3235 = vpop.f32.mrb[0].mxu0
      %3236 = vmatprep.mubr.bf16.mxu0 %v1626
      %3237 = vmatmul.mubr.bf16.gmra.mrb[0].mxu0 %v1625
      %v3238 = vpop.f32.mrb[0].mxu0
      %v3239 = vadd.f32 %v2950, %v3238
      %v3240 = vpop.f32.mrb[0].mxu0
      %v3241 = vpop.f32.mrb[0].mxu0
      %v3242 = vadd.f32 %v2953, %v3241
      %v3243 = vpop.f32.mrb[0].mxu0
      %3244 = vmatprep.mubr.bf16.mxu0 %v1635
      %3245 = vmatmul.mubr.bf16.gmra.mrb[0].mxu0 %v1634
      %v3246 = vpop.f32.mrb[0].mxu0
      %v3247 = vadd.f32 %v2958, %v3246
      %v3248 = vpop.f32.mrb[0].mxu0
      %v3249 = vpop.f32.mrb[0].mxu0
      %v3250 = vadd.f32 %v2961, %v3249
      %v3251 = vpop.f32.mrb[0].mxu0
      %3252 = vmatprep.mubr.bf16.mxu0 %v1644
      %3253 = vmatmul.mubr.bf16.gmra.mrb[0].mxu0 %v1643
      %v3254 = vpop.f32.mrb[0].mxu0
      %v3255 = vadd.f32 %v2966, %v3254
      %v3256 = vpop.f32.mrb[0].mxu0
      %v3257 = vpop.f32.mrb[0].mxu0
      %v3258 = vadd.f32 %v2969, %v3257
      %v3259 = vpop.f32.mrb[0].mxu0
      %3260 = vmatprep.mubr.bf16.mxu0 %v1653
      %3261 = vmatmul.mubr.bf16.gmra.mrb[0].mxu0 %v1652
      %v3262 = vpop.f32.mrb[0].mxu0
      %v3263 = vadd.f32 %v2974, %v3262
      %v3264 = vpop.f32.mrb[0].mxu0
      %v3265 = vpop.f32.mrb[0].mxu0
      %v3266 = vadd.f32 %v2977, %v3265
      %v3267 = vpop.f32.mrb[0].mxu0
      %3268 = vmatprep.mubr.bf16.mxu0 %v1662
      %3269 = vmatmul.mubr.bf16.gmra.mrb[0].mxu0 %v1661
      %v3270 = vpop.f32.mrb[0].mxu0
      %v3271 = vadd.f32 %v2982, %v3270
      %v3272 = vpop.f32.mrb[0].mxu0
      %v3273 = vpop.f32.mrb[0].mxu0
      %v3274 = vadd.f32 %v2985, %v3273
      %v3275 = vpop.f32.mrb[0].mxu0
      %3276 = vmatprep.mubr.bf16.mxu0 %v1671
      %3277 = vmatmul.mubr.bf16.gmra.mrb[0].mxu0 %v1670
      %v3278 = vpop.f32.mrb[0].mxu0
      %v3279 = vadd.f32 %v2990, %v3278
      %v3280 = vpop.f32.mrb[0].mxu0
      %v3281 = vpop.f32.mrb[0].mxu0
      %v3282 = vadd.f32 %v2993, %v3281
      %v3283 = vpop.f32.mrb[0].mxu0
      %3284 = vmatprep.mubr.bf16.mxu0 %v1680
      %3285 = vmatmul.mubr.bf16.gmra.mrb[0].mxu0 %v1679
      %v3286 = vpop.f32.mrb[0].mxu0
      %v3287 = vadd.f32 %v2998, %v3286
      %v3288 = vpop.f32.mrb[0].mxu0
      %v3289 = vpop.f32.mrb[0].mxu0
      %v3290 = vadd.f32 %v3001, %v3289
      %v3291 = vpop.f32.mrb[0].mxu0
      %3292 = vmatprep.mubr.bf16.mxu0 %v1689
      %3293 = vmatmul.mubr.bf16.gmra.mrb[0].mxu0 %v1688
      %v3294 = vpop.f32.mrb[0].mxu0
      %v3295 = vadd.f32 %v3006, %v3294
      %v3296 = vpop.f32.mrb[0].mxu0
      %v3297 = vpop.f32.mrb[0].mxu0
      %v3298 = vadd.f32 %v3009, %v3297
      %v3299 = vpop.f32.mrb[0].mxu0
      %3300 = vmatprep.mubr.bf16.mxu0 %v1698
      %3301 = vmatmul.mubr.bf16.gmra.mrb[0].mxu0 %v1697
      %v3302 = vpop.f32.mrb[0].mxu0
      %v3303 = vadd.f32 %v3014, %v3302
      %v3304 = vpop.f32.mrb[0].mxu0
      %v3305 = vpop.f32.mrb[0].mxu0
      %v3306 = vadd.f32 %v3017, %v3305
      %v3307 = vpop.f32.mrb[0].mxu0
      %3308 = vmatprep.mubr.bf16.mxu0 %v1707
      %3309 = vmatmul.mubr.bf16.gmra.mrb[0].mxu0 %v1706
      %v3310 = vpop.f32.mrb[0].mxu0
      %v3311 = vadd.f32 %v3022, %v3310
      %v3312 = vpop.f32.mrb[0].mxu0
      %v3313 = vpop.f32.mrb[0].mxu0
      %v3314 = vadd.f32 %v3025, %v3313
      %v3315 = vpop.f32.mrb[0].mxu0
      %3316 = vmatprep.mubr.bf16.mxu0 %v1716
      %3317 = vmatmul.mubr.bf16.gmra.mrb[0].mxu0 %v1715
      %v3318 = vpop.f32.mrb[0].mxu0
      %v3319 = vadd.f32 %v3030, %v3318
      %v3320 = vpop.f32.mrb[0].mxu0
      %v3321 = vpop.f32.mrb[0].mxu0
      %v3322 = vadd.f32 %v3033, %v3321
      %v3323 = vpop.f32.mrb[0].mxu0
      %3324 = vmatprep.mubr.bf16.mxu0 %v1725
      %3325 = vmatmul.mubr.bf16.gmra.mrb[0].mxu0 %v1724
      %v3326 = vpop.f32.mrb[0].mxu0
      %v3327 = vadd.f32 %v3038, %v3326
      %v3328 = vpop.f32.mrb[0].mxu0
      %v3329 = vpop.f32.mrb[0].mxu0
      %v3330 = vadd.f32 %v3041, %v3329
      %v3331 = vpop.f32.mrb[0].mxu0
      %3332 = vmatprep.mubr.bf16.mxu0 %v1734
      %3333 = vmatmul.mubr.bf16.gmra.mrb[0].mxu0 %v1733
      %v3334 = vpop.f32.mrb[0].mxu0
      %v3335 = vadd.f32 %v3046, %v3334
      %v3336 = vpop.f32.mrb[0].mxu0
      %v3337 = vpop.f32.mrb[0].mxu0
      %v3338 = vadd.f32 %v3049, %v3337
      %v3339 = vpop.f32.mrb[0].mxu0
      %3340 = vmatprep.mubr.bf16.mxu0 %v1743
      %3341 = vmatmul.mubr.bf16.gmra.mrb[0].mxu0 %v1742
      %v3342 = vpop.f32.mrb[0].mxu0
      %v3343 = vadd.f32 %v3054, %v3342
      %v3344 = vpop.f32.mrb[0].mxu0
      %v3345 = vpop.f32.mrb[0].mxu0
      %v3346 = vadd.f32 %v3057, %v3345
      %v3347 = vpop.f32.mrb[0].mxu0
      %3348 = vmatprep.mubr.bf16.mxu0 %v1752
      %3349 = vmatmul.mubr.bf16.gmra.mrb[0].mxu0 %v1751
      %v3350 = vpop.f32.mrb[0].mxu0
      %v3351 = vadd.f32 %v3062, %v3350
      %v3352 = vpop.f32.mrb[0].mxu0
      %v3353 = vpop.f32.mrb[0].mxu0
      %v3354 = vadd.f32 %v3065, %v3353
      %v3355 = vpop.f32.mrb[0].mxu0
      %3356 = vmatprep.mubr.bf16.mxu0 %v1761
      %3357 = vmatmul.mubr.bf16.gmra.mrb[0].mxu0 %v1760
      %v3358 = vpop.f32.mrb[0].mxu0
      %v3359 = vadd.f32 %v3070, %v3358
      %v3360 = vpop.f32.mrb[0].mxu0
      %v3361 = vpop.f32.mrb[0].mxu0
      %v3362 = vadd.f32 %v3073, %v3361
      %v3363 = vpop.f32.mrb[0].mxu0
      %3364 = vmatprep.mubr.bf16.mxu0 %v1770
      %3365 = vmatmul.mubr.bf16.gmra.mrb[0].mxu0 %v1769
      %v3366 = vpop.f32.mrb[0].mxu0
      %v3367 = vadd.f32 %v3078, %v3366
      %v3368 = vpop.f32.mrb[0].mxu0
      %v3369 = vpop.f32.mrb[0].mxu0
      %v3370 = vadd.f32 %v3081, %v3369
      %v3371 = vpop.f32.mrb[0].mxu0
      %3372 = vmatprep.mubr.bf16.mxu0 %v1779
      %3373 = vmatmul.mubr.bf16.gmra.mrb[0].mxu0 %v1778
      %v3374 = vpop.f32.mrb[0].mxu0
      %v3375 = vadd.f32 %v3086, %v3374
      %v3376 = vpop.f32.mrb[0].mxu0
      %v3377 = vpop.f32.mrb[0].mxu0
      %v3378 = vadd.f32 %v3089, %v3377
      %v3379 = vpop.f32.mrb[0].mxu0
      %3380 = vmatprep.mubr.bf16.mxu0 %v1788
      %3381 = vmatmul.mubr.bf16.gmra.mrb[0].mxu0 %v1787
      %v3382 = vpop.f32.mrb[0].mxu0
      %v3383 = vadd.f32 %v3094, %v3382
      %v3384 = vpop.f32.mrb[0].mxu0
      %v3385 = vpop.f32.mrb[0].mxu0
      %v3386 = vadd.f32 %v3097, %v3385
      %v3387 = vpop.f32.mrb[0].mxu0
      %3388 = vmatprep.mubr.bf16.mxu0 %v1797
      %3389 = vmatmul.mubr.bf16.gmra.mrb[0].mxu0 %v1796
      %v3390 = vpop.f32.mrb[0].mxu0
      %v3391 = vadd.f32 %v3102, %v3390
      %v3392 = vpop.f32.mrb[0].mxu0
      %v3393 = vpop.f32.mrb[0].mxu0
      %v3394 = vadd.f32 %v3105, %v3393
      %v3395 = vpop.f32.mrb[0].mxu0
      %3396 = vmatprep.mubr.bf16.mxu0 %v1806
      %3397 = vmatmul.mubr.bf16.gmra.mrb[0].mxu0 %v1805
      %v3398 = vpop.f32.mrb[0].mxu0
      %v3399 = vadd.f32 %v3110, %v3398
      %v3400 = vpop.f32.mrb[0].mxu0
      %v3401 = vpop.f32.mrb[0].mxu0
      %v3402 = vadd.f32 %v3113, %v3401
      %v3403 = vpop.f32.mrb[0].mxu0
      %3404 = vmatprep.mubr.bf16.mxu0 %v1815
      %3405 = vmatmul.mubr.bf16.gmra.mrb[0].mxu0 %v1814
      %v3406 = vpop.f32.mrb[0].mxu0
      %v3407 = vadd.f32 %v3118, %v3406
      %v3408 = vpop.f32.mrb[0].mxu0
      %v3409 = vpop.f32.mrb[0].mxu0
      %v3410 = vadd.f32 %v3121, %v3409
      %v3411 = vpop.f32.mrb[0].mxu0
      %3412 = vmatprep.mubr.bf16.mxu0 %v1824
      %3413 = vmatmul.mubr.bf16.gmra.mrb[0].mxu0 %v1823
      %v3414 = vpop.f32.mrb[0].mxu0
      %v3415 = vadd.f32 %v3126, %v3414
      %v3416 = vpop.f32.mrb[0].mxu0
      %v3417 = vpop.f32.mrb[0].mxu0
      %v3418 = vadd.f32 %v3129, %v3417
      %v3419 = vpop.f32.mrb[0].mxu0
      %3420 = vmatprep.mubr.bf16.mxu0 %v1833
      %3421 = vmatmul.mubr.bf16.gmra.mrb[0].mxu0 %v1832
      %v3422 = vpop.f32.mrb[0].mxu0
      %v3423 = vadd.f32 %v3134, %v3422
      %v3424 = vpop.f32.mrb[0].mxu0
      %v3425 = vpop.f32.mrb[0].mxu0
      %v3426 = vadd.f32 %v3137, %v3425
      %v3427 = vpop.f32.mrb[0].mxu0
      %3428 = vmatprep.mubr.bf16.mxu0 %v1842
      %3429 = vmatmul.mubr.bf16.gmra.mrb[0].mxu0 %v1841
      %v3430 = vpop.f32.mrb[0].mxu0
      %v3431 = vadd.f32 %v3142, %v3430
      %v3432 = vpop.f32.mrb[0].mxu0
      %v3433 = vpop.f32.mrb[0].mxu0
      %v3434 = vadd.f32 %v3145, %v3433
      %v3435 = vpop.f32.mrb[0].mxu0
      %3436 = vmatprep.mubr.bf16.mxu0 %v1851
      %3437 = vmatmul.mubr.bf16.gmra.mrb[0].mxu0 %v1850
      %v3438 = vpop.f32.mrb[0].mxu0
      %v3439 = vadd.f32 %v3150, %v3438
      %v3440 = vpop.f32.mrb[0].mxu0
      %v3441 = vpop.f32.mrb[0].mxu0
      %v3442 = vadd.f32 %v3153, %v3441
      %v3443 = vpop.f32.mrb[0].mxu0
      %3444 = vmatprep.mubr.bf16.mxu0 %v1860
      %3445 = vmatmul.mubr.bf16.gmra.mrb[0].mxu0 %v1859
      %v3446 = vpop.f32.mrb[0].mxu0
      %v3447 = vadd.f32 %v3158, %v3446
      %v3448 = vpop.f32.mrb[0].mxu0
      %v3449 = vpop.f32.mrb[0].mxu0
      %v3450 = vadd.f32 %v3161, %v3449
      %v3451 = vpop.f32.mrb[0].mxu0
      %3452 = vmatprep.mubr.bf16.mxu0 %v1869
      %3453 = vmatmul.mubr.bf16.gmra.mrb[0].mxu0 %v1868
      %v3454 = vpop.f32.mrb[0].mxu0
      %v3455 = vadd.f32 %v3166, %v3454
      %v3456 = vpop.f32.mrb[0].mxu0
      %v3457 = vpop.f32.mrb[0].mxu0
      %v3458 = vadd.f32 %v3169, %v3457
      %v3459 = vpop.f32.mrb[0].mxu0
      %3460 = vmatprep.mubr.bf16.mxu0 %v1878
      %3461 = vmatmul.mubr.bf16.gmra.mrb[0].mxu0 %v1877
      %v3462 = vpop.f32.mrb[0].mxu0
      %v3463 = vadd.f32 %v3174, %v3462
      %v3464 = vpop.f32.mrb[0].mxu0
      %v3465 = vpop.f32.mrb[0].mxu0
      %v3466 = vadd.f32 %v3177, %v3465
      %v3467 = vpop.f32.mrb[0].mxu0
      %3468 = vdwg.mxu0
      %3469 = vmatprep.subr.bf16.mxu0 0
      %3470 = vmatpush1.bf16.msra.mxu0 %v2506
      %3471 = vmatprep.subr.bf16.mxu0 0
      %3472 = vmatpush1.bf16.msra.mxu0 %v2507
      %3473 = vmatprep.subr.bf16.mxu0 0
      %3474 = vmatpush1.bf16.msra.mxu0 %v2508
      %3475 = vmatprep.subr.bf16.mxu0 0
      %3476 = vmatpush1.bf16.msra.mxu0 %v2509
      %3477 = vmatprep.subr.bf16.mxu0 0
      %3478 = vmatpush1.bf16.msra.mxu0 %v2510
      %3479 = vmatprep.subr.bf16.mxu0 0
      %3480 = vmatpush1.bf16.msra.mxu0 %v2511
      %3481 = vmatprep.subr.bf16.mxu0 0
      %3482 = vmatpush1.bf16.msra.mxu0 %v2512
      %3483 = vmatprep.subr.bf16.mxu0 0
      %3484 = vmatpush1.bf16.msra.mxu0 %v2513
      %3485 = vmatprep.subr.bf16.mxu0 0
      %3486 = vmatpush1.bf16.msra.mxu0 %v2514
      %3487 = vmatprep.subr.bf16.mxu0 0
      %3488 = vmatpush1.bf16.msra.mxu0 %v2515
      %3489 = vmatprep.subr.bf16.mxu0 0
      %3490 = vmatpush1.bf16.msra.mxu0 %v2516
      %3491 = vmatprep.subr.bf16.mxu0 0
      %3492 = vmatpush1.bf16.msra.mxu0 %v2517
      %3493 = vmatprep.subr.bf16.mxu0 0
      %3494 = vmatpush1.bf16.msra.mxu0 %v2518
      %3495 = vmatprep.subr.bf16.mxu0 0
      %3496 = vmatpush1.bf16.msra.mxu0 %v2519
      %3497 = vmatprep.subr.bf16.mxu0 0
      %3498 = vmatpush1.bf16.msra.mxu0 %v2520
      %3499 = vmatprep.subr.bf16.mxu0 0
      %3500 = vmatpush1.bf16.msra.mxu0 %v2521
      %3501 = vmatprep.mubr.bf16.mxu0 %v1601
      %3502 = vmatmul.mubr.bf16.gmra.mrb[0].mxu0 %v1600
      %v3503 = vpop.f32.mrb[0].mxu0
      %v3504 = vadd.f32 %v3215, %v3503
      %v3505 = vpop.f32.mrb[0].mxu0
      %v3506 = vpop.f32.mrb[0].mxu0
      %v3507 = vadd.f32 %v3218, %v3506
      %v3508 = vpop.f32.mrb[0].mxu0
      %3509 = vmatprep.mubr.bf16.mxu0 %v1610
      %3510 = vmatmul.mubr.bf16.gmra.mrb[0].mxu0 %v1609
      %v3511 = vpop.f32.mrb[0].mxu0
      %v3512 = vadd.f32 %v3223, %v3511
      %v3513 = vpop.f32.mrb[0].mxu0
      %v3514 = vpop.f32.mrb[0].mxu0
      %v3515 = vadd.f32 %v3226, %v3514
      %v3516 = vpop.f32.mrb[0].mxu0
      %3517 = vmatprep.mubr.bf16.mxu0 %v1619
      %3518 = vmatmul.mubr.bf16.gmra.mrb[0].mxu0 %v1618
      %v3519 = vpop.f32.mrb[0].mxu0
      %v3520 = vadd.f32 %v3231, %v3519
      %v3521 = vpop.f32.mrb[0].mxu0
      %v3522 = vpop.f32.mrb[0].mxu0
      %v3523 = vadd.f32 %v3234, %v3522
      %v3524 = vpop.f32.mrb[0].mxu0
      %3525 = vmatprep.mubr.bf16.mxu0 %v1628
      %3526 = vmatmul.mubr.bf16.gmra.mrb[0].mxu0 %v1627
      %v3527 = vpop.f32.mrb[0].mxu0
      %v3528 = vadd.f32 %v3239, %v3527
      %v3529 = vpop.f32.mrb[0].mxu0
      %v3530 = vpop.f32.mrb[0].mxu0
      %v3531 = vadd.f32 %v3242, %v3530
      %v3532 = vpop.f32.mrb[0].mxu0
      %3533 = vmatprep.mubr.bf16.mxu0 %v1637
      %3534 = vmatmul.mubr.bf16.gmra.mrb[0].mxu0 %v1636
      %v3535 = vpop.f32.mrb[0].mxu0
      %v3536 = vadd.f32 %v3247, %v3535
      %v3537 = vpop.f32.mrb[0].mxu0
      %v3538 = vpop.f32.mrb[0].mxu0
      %v3539 = vadd.f32 %v3250, %v3538
      %v3540 = vpop.f32.mrb[0].mxu0
      %3541 = vmatprep.mubr.bf16.mxu0 %v1646
      %3542 = vmatmul.mubr.bf16.gmra.mrb[0].mxu0 %v1645
      %v3543 = vpop.f32.mrb[0].mxu0
      %v3544 = vadd.f32 %v3255, %v3543
      %v3545 = vpop.f32.mrb[0].mxu0
      %v3546 = vpop.f32.mrb[0].mxu0
      %v3547 = vadd.f32 %v3258, %v3546
      %v3548 = vpop.f32.mrb[0].mxu0
      %3549 = vmatprep.mubr.bf16.mxu0 %v1655
      %3550 = vmatmul.mubr.bf16.gmra.mrb[0].mxu0 %v1654
      %v3551 = vpop.f32.mrb[0].mxu0
      %v3552 = vadd.f32 %v3263, %v3551
      %v3553 = vpop.f32.mrb[0].mxu0
      %v3554 = vpop.f32.mrb[0].mxu0
      %v3555 = vadd.f32 %v3266, %v3554
      %v3556 = vpop.f32.mrb[0].mxu0
      %3557 = vmatprep.mubr.bf16.mxu0 %v1664
      %3558 = vmatmul.mubr.bf16.gmra.mrb[0].mxu0 %v1663
      %v3559 = vpop.f32.mrb[0].mxu0
      %v3560 = vadd.f32 %v3271, %v3559
      %v3561 = vpop.f32.mrb[0].mxu0
      %v3562 = vpop.f32.mrb[0].mxu0
      %v3563 = vadd.f32 %v3274, %v3562
      %v3564 = vpop.f32.mrb[0].mxu0
      %3565 = vmatprep.mubr.bf16.mxu0 %v1673
      %3566 = vmatmul.mubr.bf16.gmra.mrb[0].mxu0 %v1672
      %v3567 = vpop.f32.mrb[0].mxu0
      %v3568 = vadd.f32 %v3279, %v3567
      %v3569 = vpop.f32.mrb[0].mxu0
      %v3570 = vpop.f32.mrb[0].mxu0
      %v3571 = vadd.f32 %v3282, %v3570
      %v3572 = vpop.f32.mrb[0].mxu0
      %3573 = vmatprep.mubr.bf16.mxu0 %v1682
      %3574 = vmatmul.mubr.bf16.gmra.mrb[0].mxu0 %v1681
      %v3575 = vpop.f32.mrb[0].mxu0
      %v3576 = vadd.f32 %v3287, %v3575
      %v3577 = vpop.f32.mrb[0].mxu0
      %v3578 = vpop.f32.mrb[0].mxu0
      %v3579 = vadd.f32 %v3290, %v3578
      %v3580 = vpop.f32.mrb[0].mxu0
      %3581 = vmatprep.mubr.bf16.mxu0 %v1691
      %3582 = vmatmul.mubr.bf16.gmra.mrb[0].mxu0 %v1690
      %v3583 = vpop.f32.mrb[0].mxu0
      %v3584 = vadd.f32 %v3295, %v3583
      %v3585 = vpop.f32.mrb[0].mxu0
      %v3586 = vpop.f32.mrb[0].mxu0
      %v3587 = vadd.f32 %v3298, %v3586
      %v3588 = vpop.f32.mrb[0].mxu0
      %3589 = vmatprep.mubr.bf16.mxu0 %v1700
      %3590 = vmatmul.mubr.bf16.gmra.mrb[0].mxu0 %v1699
      %v3591 = vpop.f32.mrb[0].mxu0
      %v3592 = vadd.f32 %v3303, %v3591
      %v3593 = vpop.f32.mrb[0].mxu0
      %v3594 = vpop.f32.mrb[0].mxu0
      %v3595 = vadd.f32 %v3306, %v3594
      %v3596 = vpop.f32.mrb[0].mxu0
      %3597 = vmatprep.mubr.bf16.mxu0 %v1709
      %3598 = vmatmul.mubr.bf16.gmra.mrb[0].mxu0 %v1708
      %v3599 = vpop.f32.mrb[0].mxu0
      %v3600 = vadd.f32 %v3311, %v3599
      %v3601 = vpop.f32.mrb[0].mxu0
      %v3602 = vpop.f32.mrb[0].mxu0
      %v3603 = vadd.f32 %v3314, %v3602
      %v3604 = vpop.f32.mrb[0].mxu0
      %3605 = vmatprep.mubr.bf16.mxu0 %v1718
      %3606 = vmatmul.mubr.bf16.gmra.mrb[0].mxu0 %v1717
      %v3607 = vpop.f32.mrb[0].mxu0
      %v3608 = vadd.f32 %v3319, %v3607
      %v3609 = vpop.f32.mrb[0].mxu0
      %v3610 = vpop.f32.mrb[0].mxu0
      %v3611 = vadd.f32 %v3322, %v3610
      %v3612 = vpop.f32.mrb[0].mxu0
      %3613 = vmatprep.mubr.bf16.mxu0 %v1727
      %3614 = vmatmul.mubr.bf16.gmra.mrb[0].mxu0 %v1726
      %v3615 = vpop.f32.mrb[0].mxu0
      %v3616 = vadd.f32 %v3327, %v3615
      %v3617 = vpop.f32.mrb[0].mxu0
      %v3618 = vpop.f32.mrb[0].mxu0
      %v3619 = vadd.f32 %v3330, %v3618
      %v3620 = vpop.f32.mrb[0].mxu0
      %3621 = vmatprep.mubr.bf16.mxu0 %v1736
      %3622 = vmatmul.mubr.bf16.gmra.mrb[0].mxu0 %v1735
      %v3623 = vpop.f32.mrb[0].mxu0
      %v3624 = vadd.f32 %v3335, %v3623
      %v3625 = vpop.f32.mrb[0].mxu0
      %v3626 = vpop.f32.mrb[0].mxu0
      %v3627 = vadd.f32 %v3338, %v3626
      %v3628 = vpop.f32.mrb[0].mxu0
      %3629 = vmatprep.mubr.bf16.mxu0 %v1745
      %3630 = vmatmul.mubr.bf16.gmra.mrb[0].mxu0 %v1744
      %v3631 = vpop.f32.mrb[0].mxu0
      %v3632 = vadd.f32 %v3343, %v3631
      %v3633 = vpop.f32.mrb[0].mxu0
      %v3634 = vpop.f32.mrb[0].mxu0
      %v3635 = vadd.f32 %v3346, %v3634
      %v3636 = vpop.f32.mrb[0].mxu0
      %3637 = vmatprep.mubr.bf16.mxu0 %v1754
      %3638 = vmatmul.mubr.bf16.gmra.mrb[0].mxu0 %v1753
      %v3639 = vpop.f32.mrb[0].mxu0
      %v3640 = vadd.f32 %v3351, %v3639
      %v3641 = vpop.f32.mrb[0].mxu0
      %v3642 = vpop.f32.mrb[0].mxu0
      %v3643 = vadd.f32 %v3354, %v3642
      %v3644 = vpop.f32.mrb[0].mxu0
      %3645 = vmatprep.mubr.bf16.mxu0 %v1763
      %3646 = vmatmul.mubr.bf16.gmra.mrb[0].mxu0 %v1762
      %v3647 = vpop.f32.mrb[0].mxu0
      %v3648 = vadd.f32 %v3359, %v3647
      %v3649 = vpop.f32.mrb[0].mxu0
      %v3650 = vpop.f32.mrb[0].mxu0
      %v3651 = vadd.f32 %v3362, %v3650
      %v3652 = vpop.f32.mrb[0].mxu0
      %3653 = vmatprep.mubr.bf16.mxu0 %v1772
      %3654 = vmatmul.mubr.bf16.gmra.mrb[0].mxu0 %v1771
      %v3655 = vpop.f32.mrb[0].mxu0
      %v3656 = vadd.f32 %v3367, %v3655
      %v3657 = vpop.f32.mrb[0].mxu0
      %v3658 = vpop.f32.mrb[0].mxu0
      %v3659 = vadd.f32 %v3370, %v3658
      %v3660 = vpop.f32.mrb[0].mxu0
      %3661 = vmatprep.mubr.bf16.mxu0 %v1781
      %3662 = vmatmul.mubr.bf16.gmra.mrb[0].mxu0 %v1780
      %v3663 = vpop.f32.mrb[0].mxu0
      %v3664 = vadd.f32 %v3375, %v3663
      %v3665 = vpop.f32.mrb[0].mxu0
      %v3666 = vpop.f32.mrb[0].mxu0
      %v3667 = vadd.f32 %v3378, %v3666
      %v3668 = vpop.f32.mrb[0].mxu0
      %3669 = vmatprep.mubr.bf16.mxu0 %v1790
      %3670 = vmatmul.mubr.bf16.gmra.mrb[0].mxu0 %v1789
      %v3671 = vpop.f32.mrb[0].mxu0
      %v3672 = vadd.f32 %v3383, %v3671
      %v3673 = vpop.f32.mrb[0].mxu0
      %v3674 = vpop.f32.mrb[0].mxu0
      %v3675 = vadd.f32 %v3386, %v3674
      %v3676 = vpop.f32.mrb[0].mxu0
      %3677 = vmatprep.mubr.bf16.mxu0 %v1799
      %3678 = vmatmul.mubr.bf16.gmra.mrb[0].mxu0 %v1798
      %v3679 = vpop.f32.mrb[0].mxu0
      %v3680 = vadd.f32 %v3391, %v3679
      %v3681 = vpop.f32.mrb[0].mxu0
      %v3682 = vpop.f32.mrb[0].mxu0
      %v3683 = vadd.f32 %v3394, %v3682
      %v3684 = vpop.f32.mrb[0].mxu0
      %3685 = vmatprep.mubr.bf16.mxu0 %v1808
      %3686 = vmatmul.mubr.bf16.gmra.mrb[0].mxu0 %v1807
      %v3687 = vpop.f32.mrb[0].mxu0
      %v3688 = vadd.f32 %v3399, %v3687
      %v3689 = vpop.f32.mrb[0].mxu0
      %v3690 = vpop.f32.mrb[0].mxu0
      %v3691 = vadd.f32 %v3402, %v3690
      %v3692 = vpop.f32.mrb[0].mxu0
      %3693 = vmatprep.mubr.bf16.mxu0 %v1817
      %3694 = vmatmul.mubr.bf16.gmra.mrb[0].mxu0 %v1816
      %v3695 = vpop.f32.mrb[0].mxu0
      %v3696 = vadd.f32 %v3407, %v3695
      %v3697 = vpop.f32.mrb[0].mxu0
      %v3698 = vpop.f32.mrb[0].mxu0
      %v3699 = vadd.f32 %v3410, %v3698
      %v3700 = vpop.f32.mrb[0].mxu0
      %3701 = vmatprep.mubr.bf16.mxu0 %v1826
      %3702 = vmatmul.mubr.bf16.gmra.mrb[0].mxu0 %v1825
      %v3703 = vpop.f32.mrb[0].mxu0
      %v3704 = vadd.f32 %v3415, %v3703
      %v3705 = vpop.f32.mrb[0].mxu0
      %v3706 = vpop.f32.mrb[0].mxu0
      %v3707 = vadd.f32 %v3418, %v3706
      %v3708 = vpop.f32.mrb[0].mxu0
      %3709 = vmatprep.mubr.bf16.mxu0 %v1835
      %3710 = vmatmul.mubr.bf16.gmra.mrb[0].mxu0 %v1834
      %v3711 = vpop.f32.mrb[0].mxu0
      %v3712 = vadd.f32 %v3423, %v3711
      %v3713 = vpop.f32.mrb[0].mxu0
      %v3714 = vpop.f32.mrb[0].mxu0
      %v3715 = vadd.f32 %v3426, %v3714
      %v3716 = vpop.f32.mrb[0].mxu0
      %3717 = vmatprep.mubr.bf16.mxu0 %v1844
      %3718 = vmatmul.mubr.bf16.gmra.mrb[0].mxu0 %v1843
      %v3719 = vpop.f32.mrb[0].mxu0
      %v3720 = vadd.f32 %v3431, %v3719
      %v3721 = vpop.f32.mrb[0].mxu0
      %v3722 = vpop.f32.mrb[0].mxu0
      %v3723 = vadd.f32 %v3434, %v3722
      %v3724 = vpop.f32.mrb[0].mxu0
      %3725 = vmatprep.mubr.bf16.mxu0 %v1853
      %3726 = vmatmul.mubr.bf16.gmra.mrb[0].mxu0 %v1852
      %v3727 = vpop.f32.mrb[0].mxu0
      %v3728 = vadd.f32 %v3439, %v3727
      %v3729 = vpop.f32.mrb[0].mxu0
      %v3730 = vpop.f32.mrb[0].mxu0
      %v3731 = vadd.f32 %v3442, %v3730
      %v3732 = vpop.f32.mrb[0].mxu0
      %3733 = vmatprep.mubr.bf16.mxu0 %v1862
      %3734 = vmatmul.mubr.bf16.gmra.mrb[0].mxu0 %v1861
      %v3735 = vpop.f32.mrb[0].mxu0
      %v3736 = vadd.f32 %v3447, %v3735
      %v3737 = vpop.f32.mrb[0].mxu0
      %v3738 = vpop.f32.mrb[0].mxu0
      %v3739 = vadd.f32 %v3450, %v3738
      %v3740 = vpop.f32.mrb[0].mxu0
      %3741 = vmatprep.mubr.bf16.mxu0 %v1871
      %3742 = vmatmul.mubr.bf16.gmra.mrb[0].mxu0 %v1870
      %v3743 = vpop.f32.mrb[0].mxu0
      %v3744 = vadd.f32 %v3455, %v3743
      %v3745 = vpop.f32.mrb[0].mxu0
      %v3746 = vpop.f32.mrb[0].mxu0
      %v3747 = vadd.f32 %v3458, %v3746
      %v3748 = vpop.f32.mrb[0].mxu0
      %3749 = vmatprep.mubr.bf16.mxu0 %v1880
      %3750 = vmatmul.mubr.bf16.gmra.mrb[0].mxu0 %v1879
      %v3751 = vpop.f32.mrb[0].mxu0
      %v3752 = vadd.f32 %v3463, %v3751
      %v3753 = vpop.f32.mrb[0].mxu0
      %v3754 = vpop.f32.mrb[0].mxu0
      %v3755 = vadd.f32 %v3466, %v3754
      %v3756 = vpop.f32.mrb[0].mxu0
      %3757 = vdwg.mxu0
      %3758 = vmatprep.subr.bf16.mxu0 0
      %3759 = vmatpush1.bf16.msra.mxu0 %v2522
      %3760 = vmatprep.subr.bf16.mxu0 0
      %3761 = vmatpush1.bf16.msra.mxu0 %v2523
      %3762 = vmatprep.subr.bf16.mxu0 0
      %3763 = vmatpush1.bf16.msra.mxu0 %v2524
      %3764 = vmatprep.subr.bf16.mxu0 0
      %3765 = vmatpush1.bf16.msra.mxu0 %v2525
      %3766 = vmatprep.subr.bf16.mxu0 0
      %3767 = vmatpush1.bf16.msra.mxu0 %v2526
      %3768 = vmatprep.subr.bf16.mxu0 0
      %3769 = vmatpush1.bf16.msra.mxu0 %v2527
      %3770 = vmatprep.subr.bf16.mxu0 0
      %3771 = vmatpush1.bf16.msra.mxu0 %v2528
      %3772 = vmatprep.subr.bf16.mxu0 0
      %3773 = vmatpush1.bf16.msra.mxu0 %v2529
      %3774 = vmatprep.subr.bf16.mxu0 0
      %3775 = vmatpush1.bf16.msra.mxu0 0
      %3776 = vmatprep.subr.bf16.mxu0 0
      %3777 = vmatpush1.bf16.msra.mxu0 0
      %3778 = vmatprep.subr.bf16.mxu0 0
      %3779 = vmatpush1.bf16.msra.mxu0 0
      %3780 = vmatprep.subr.bf16.mxu0 0
      %3781 = vmatpush1.bf16.msra.mxu0 0
      %3782 = vmatprep.subr.bf16.mxu0 0
      %3783 = vmatpush1.bf16.msra.mxu0 0
      %3784 = vmatprep.subr.bf16.mxu0 0
      %3785 = vmatpush1.bf16.msra.mxu0 0
      %3786 = vmatprep.subr.bf16.mxu0 0
      %3787 = vmatpush1.bf16.msra.mxu0 0
      %3788 = vmatprep.subr.bf16.mxu0 0
      %3789 = vmatpush1.bf16.msra.mxu0 0
      %3790 = vmatprep.mubr.bf16.mxu0 0
      %3791 = vmatmul.mubr.bf16.gmra.mrb[0].mxu0 %v1602
      %v3792 = vpop.f32.mrb[0].mxu0
      %v3793 = vadd.f32 %v3504, %v3792
      %v3794 = vpop.f32.mrb[0].mxu0
      %v3795 = vpop.f32.mrb[0].mxu0
      %v3796 = vadd.f32 %v3507, %v3795
      %v3797 = vpop.f32.mrb[0].mxu0
      %3798 = vmatprep.mubr.bf16.mxu0 0
      %3799 = vmatmul.mubr.bf16.gmra.mrb[0].mxu0 %v1611
      %v3800 = vpop.f32.mrb[0].mxu0
      %v3801 = vadd.f32 %v3512, %v3800
      %v3802 = vpop.f32.mrb[0].mxu0
      %v3803 = vpop.f32.mrb[0].mxu0
      %v3804 = vadd.f32 %v3515, %v3803
      %v3805 = vpop.f32.mrb[0].mxu0
      %3806 = vmatprep.mubr.bf16.mxu0 0
      %3807 = vmatmul.mubr.bf16.gmra.mrb[0].mxu0 %v1620
      %v3808 = vpop.f32.mrb[0].mxu0
      %v3809 = vadd.f32 %v3520, %v3808
      %v3810 = vpop.f32.mrb[0].mxu0
      %v3811 = vpop.f32.mrb[0].mxu0
      %v3812 = vadd.f32 %v3523, %v3811
      %v3813 = vpop.f32.mrb[0].mxu0
      %3814 = vmatprep.mubr.bf16.mxu0 0
      %3815 = vmatmul.mubr.bf16.gmra.mrb[0].mxu0 %v1629
      %v3816 = vpop.f32.mrb[0].mxu0
      %v3817 = vadd.f32 %v3528, %v3816
      %v3818 = vpop.f32.mrb[0].mxu0
      %v3819 = vpop.f32.mrb[0].mxu0
      %v3820 = vadd.f32 %v3531, %v3819
      %v3821 = vpop.f32.mrb[0].mxu0
      %3822 = vmatprep.mubr.bf16.mxu0 0
      %3823 = vmatmul.mubr.bf16.gmra.mrb[0].mxu0 %v1638
      %v3824 = vpop.f32.mrb[0].mxu0
      %v3825 = vadd.f32 %v3536, %v3824
      %v3826 = vpop.f32.mrb[0].mxu0
      %v3827 = vpop.f32.mrb[0].mxu0
      %v3828 = vadd.f32 %v3539, %v3827
      %v3829 = vpop.f32.mrb[0].mxu0
      %3830 = vmatprep.mubr.bf16.mxu0 0
      %3831 = vmatmul.mubr.bf16.gmra.mrb[0].mxu0 %v1647
      %v3832 = vpop.f32.mrb[0].mxu0
      %v3833 = vadd.f32 %v3544, %v3832
      %v3834 = vpop.f32.mrb[0].mxu0
      %v3835 = vpop.f32.mrb[0].mxu0
      %v3836 = vadd.f32 %v3547, %v3835
      %v3837 = vpop.f32.mrb[0].mxu0
      %3838 = vmatprep.mubr.bf16.mxu0 0
      %3839 = vmatmul.mubr.bf16.gmra.mrb[0].mxu0 %v1656
      %v3840 = vpop.f32.mrb[0].mxu0
      %v3841 = vadd.f32 %v3552, %v3840
      %v3842 = vpop.f32.mrb[0].mxu0
      %v3843 = vpop.f32.mrb[0].mxu0
      %v3844 = vadd.f32 %v3555, %v3843
      %v3845 = vpop.f32.mrb[0].mxu0
      %3846 = vmatprep.mubr.bf16.mxu0 0
      %3847 = vmatmul.mubr.bf16.gmra.mrb[0].mxu0 %v1665
      %v3848 = vpop.f32.mrb[0].mxu0
      %v3849 = vadd.f32 %v3560, %v3848
      %v3850 = vpop.f32.mrb[0].mxu0
      %v3851 = vpop.f32.mrb[0].mxu0
      %v3852 = vadd.f32 %v3563, %v3851
      %v3853 = vpop.f32.mrb[0].mxu0
      %3854 = vmatprep.mubr.bf16.mxu0 0
      %3855 = vmatmul.mubr.bf16.gmra.mrb[0].mxu0 %v1674
      %v3856 = vpop.f32.mrb[0].mxu0
      %v3857 = vadd.f32 %v3568, %v3856
      %v3858 = vpop.f32.mrb[0].mxu0
      %v3859 = vpop.f32.mrb[0].mxu0
      %v3860 = vadd.f32 %v3571, %v3859
      %v3861 = vpop.f32.mrb[0].mxu0
      %3862 = vmatprep.mubr.bf16.mxu0 0
      %3863 = vmatmul.mubr.bf16.gmra.mrb[0].mxu0 %v1683
      %v3864 = vpop.f32.mrb[0].mxu0
      %v3865 = vadd.f32 %v3576, %v3864
      %v3866 = vpop.f32.mrb[0].mxu0
      %v3867 = vpop.f32.mrb[0].mxu0
      %v3868 = vadd.f32 %v3579, %v3867
      %v3869 = vpop.f32.mrb[0].mxu0
      %3870 = vmatprep.mubr.bf16.mxu0 0
      %3871 = vmatmul.mubr.bf16.gmra.mrb[0].mxu0 %v1692
      %v3872 = vpop.f32.mrb[0].mxu0
      %v3873 = vadd.f32 %v3584, %v3872
      %v3874 = vpop.f32.mrb[0].mxu0
      %v3875 = vpop.f32.mrb[0].mxu0
      %v3876 = vadd.f32 %v3587, %v3875
      %v3877 = vpop.f32.mrb[0].mxu0
      %3878 = vmatprep.mubr.bf16.mxu0 0
      %3879 = vmatmul.mubr.bf16.gmra.mrb[0].mxu0 %v1701
      %v3880 = vpop.f32.mrb[0].mxu0
      %v3881 = vadd.f32 %v3592, %v3880
      %v3882 = vpop.f32.mrb[0].mxu0
      %v3883 = vpop.f32.mrb[0].mxu0
      %v3884 = vadd.f32 %v3595, %v3883
      %v3885 = vpop.f32.mrb[0].mxu0
      %3886 = vmatprep.mubr.bf16.mxu0 0
      %3887 = vmatmul.mubr.bf16.gmra.mrb[0].mxu0 %v1710
      %v3888 = vpop.f32.mrb[0].mxu0
      %v3889 = vadd.f32 %v3600, %v3888
      %v3890 = vpop.f32.mrb[0].mxu0
      %v3891 = vpop.f32.mrb[0].mxu0
      %v3892 = vadd.f32 %v3603, %v3891
      %v3893 = vpop.f32.mrb[0].mxu0
      %3894 = vmatprep.mubr.bf16.mxu0 0
      %3895 = vmatmul.mubr.bf16.gmra.mrb[0].mxu0 %v1719
      %v3896 = vpop.f32.mrb[0].mxu0
      %v3897 = vadd.f32 %v3608, %v3896
      %v3898 = vpop.f32.mrb[0].mxu0
      %v3899 = vpop.f32.mrb[0].mxu0
      %v3900 = vadd.f32 %v3611, %v3899
      %v3901 = vpop.f32.mrb[0].mxu0
      %3902 = vmatprep.mubr.bf16.mxu0 0
      %3903 = vmatmul.mubr.bf16.gmra.mrb[0].mxu0 %v1728
      %v3904 = vpop.f32.mrb[0].mxu0
      %v3905 = vadd.f32 %v3616, %v3904
      %v3906 = vpop.f32.mrb[0].mxu0
      %v3907 = vpop.f32.mrb[0].mxu0
      %v3908 = vadd.f32 %v3619, %v3907
      %v3909 = vpop.f32.mrb[0].mxu0
      %3910 = vmatprep.mubr.bf16.mxu0 0
      %3911 = vmatmul.mubr.bf16.gmra.mrb[0].mxu0 %v1737
      %v3912 = vpop.f32.mrb[0].mxu0
      %v3913 = vadd.f32 %v3624, %v3912
      %v3914 = vpop.f32.mrb[0].mxu0
      %v3915 = vpop.f32.mrb[0].mxu0
      %v3916 = vadd.f32 %v3627, %v3915
      %v3917 = vpop.f32.mrb[0].mxu0
      %3918 = vmatprep.mubr.bf16.mxu0 0
      %3919 = vmatmul.mubr.bf16.gmra.mrb[0].mxu0 %v1746
      %v3920 = vpop.f32.mrb[0].mxu0
      %v3921 = vadd.f32 %v3632, %v3920
      %v3922 = vpop.f32.mrb[0].mxu0
      %v3923 = vpop.f32.mrb[0].mxu0
      %v3924 = vadd.f32 %v3635, %v3923
      %v3925 = vpop.f32.mrb[0].mxu0
      %3926 = vmatprep.mubr.bf16.mxu0 0
      %3927 = vmatmul.mubr.bf16.gmra.mrb[0].mxu0 %v1755
      %v3928 = vpop.f32.mrb[0].mxu0
      %v3929 = vadd.f32 %v3640, %v3928
      %v3930 = vpop.f32.mrb[0].mxu0
      %v3931 = vpop.f32.mrb[0].mxu0
      %v3932 = vadd.f32 %v3643, %v3931
      %v3933 = vpop.f32.mrb[0].mxu0
      %3934 = vmatprep.mubr.bf16.mxu0 0
      %3935 = vmatmul.mubr.bf16.gmra.mrb[0].mxu0 %v1764
      %v3936 = vpop.f32.mrb[0].mxu0
      %v3937 = vadd.f32 %v3648, %v3936
      %v3938 = vpop.f32.mrb[0].mxu0
      %v3939 = vpop.f32.mrb[0].mxu0
      %v3940 = vadd.f32 %v3651, %v3939
      %v3941 = vpop.f32.mrb[0].mxu0
      %3942 = vmatprep.mubr.bf16.mxu0 0
      %3943 = vmatmul.mubr.bf16.gmra.mrb[0].mxu0 %v1773
      %v3944 = vpop.f32.mrb[0].mxu0
      %v3945 = vadd.f32 %v3656, %v3944
      %v3946 = vpop.f32.mrb[0].mxu0
      %v3947 = vpop.f32.mrb[0].mxu0
      %v3948 = vadd.f32 %v3659, %v3947
      %v3949 = vpop.f32.mrb[0].mxu0
      %3950 = vmatprep.mubr.bf16.mxu0 0
      %3951 = vmatmul.mubr.bf16.gmra.mrb[0].mxu0 %v1782
      %v3952 = vpop.f32.mrb[0].mxu0
      %v3953 = vadd.f32 %v3664, %v3952
      %v3954 = vpop.f32.mrb[0].mxu0
      %v3955 = vpop.f32.mrb[0].mxu0
      %v3956 = vadd.f32 %v3667, %v3955
      %v3957 = vpop.f32.mrb[0].mxu0
      %3958 = vmatprep.mubr.bf16.mxu0 0
      %3959 = vmatmul.mubr.bf16.gmra.mrb[0].mxu0 %v1791
      %v3960 = vpop.f32.mrb[0].mxu0
      %v3961 = vadd.f32 %v3672, %v3960
      %v3962 = vpop.f32.mrb[0].mxu0
      %v3963 = vpop.f32.mrb[0].mxu0
      %v3964 = vadd.f32 %v3675, %v3963
      %v3965 = vpop.f32.mrb[0].mxu0
      %3966 = vmatprep.mubr.bf16.mxu0 0
      %3967 = vmatmul.mubr.bf16.gmra.mrb[0].mxu0 %v1800
      %v3968 = vpop.f32.mrb[0].mxu0
      %v3969 = vadd.f32 %v3680, %v3968
      %v3970 = vpop.f32.mrb[0].mxu0
      %v3971 = vpop.f32.mrb[0].mxu0
      %v3972 = vadd.f32 %v3683, %v3971
      %v3973 = vpop.f32.mrb[0].mxu0
      %3974 = vmatprep.mubr.bf16.mxu0 0
      %3975 = vmatmul.mubr.bf16.gmra.mrb[0].mxu0 %v1809
      %v3976 = vpop.f32.mrb[0].mxu0
      %v3977 = vadd.f32 %v3688, %v3976
      %v3978 = vpop.f32.mrb[0].mxu0
      %v3979 = vpop.f32.mrb[0].mxu0
      %v3980 = vadd.f32 %v3691, %v3979
      %v3981 = vpop.f32.mrb[0].mxu0
      %3982 = vmatprep.mubr.bf16.mxu0 0
      %3983 = vmatmul.mubr.bf16.gmra.mrb[0].mxu0 %v1818
      %v3984 = vpop.f32.mrb[0].mxu0
      %v3985 = vadd.f32 %v3696, %v3984
      %v3986 = vpop.f32.mrb[0].mxu0
      %v3987 = vpop.f32.mrb[0].mxu0
      %v3988 = vadd.f32 %v3699, %v3987
      %v3989 = vpop.f32.mrb[0].mxu0
      %3990 = vmatprep.mubr.bf16.mxu0 0
      %3991 = vmatmul.mubr.bf16.gmra.mrb[0].mxu0 %v1827
      %v3992 = vpop.f32.mrb[0].mxu0
      %v3993 = vadd.f32 %v3704, %v3992
      %v3994 = vpop.f32.mrb[0].mxu0
      %v3995 = vpop.f32.mrb[0].mxu0
      %v3996 = vadd.f32 %v3707, %v3995
      %v3997 = vpop.f32.mrb[0].mxu0
      %3998 = vmatprep.mubr.bf16.mxu0 0
      %3999 = vmatmul.mubr.bf16.gmra.mrb[0].mxu0 %v1836
      %v4000 = vpop.f32.mrb[0].mxu0
      %v4001 = vadd.f32 %v3712, %v4000
      %v4002 = vpop.f32.mrb[0].mxu0
      %v4003 = vpop.f32.mrb[0].mxu0
      %v4004 = vadd.f32 %v3715, %v4003
      %v4005 = vpop.f32.mrb[0].mxu0
      %4006 = vmatprep.mubr.bf16.mxu0 0
      %4007 = vmatmul.mubr.bf16.gmra.mrb[0].mxu0 %v1845
      %v4008 = vpop.f32.mrb[0].mxu0
      %v4009 = vadd.f32 %v3720, %v4008
      %v4010 = vpop.f32.mrb[0].mxu0
      %v4011 = vpop.f32.mrb[0].mxu0
      %v4012 = vadd.f32 %v3723, %v4011
      %v4013 = vpop.f32.mrb[0].mxu0
      %4014 = vmatprep.mubr.bf16.mxu0 0
      %4015 = vmatmul.mubr.bf16.gmra.mrb[0].mxu0 %v1854
      %v4016 = vpop.f32.mrb[0].mxu0
      %v4017 = vadd.f32 %v3728, %v4016
      %v4018 = vpop.f32.mrb[0].mxu0
      %v4019 = vpop.f32.mrb[0].mxu0
      %v4020 = vadd.f32 %v3731, %v4019
      %v4021 = vpop.f32.mrb[0].mxu0
      %4022 = vmatprep.mubr.bf16.mxu0 0
      %4023 = vmatmul.mubr.bf16.gmra.mrb[0].mxu0 %v1863
      %v4024 = vpop.f32.mrb[0].mxu0
      %v4025 = vadd.f32 %v3736, %v4024
      %v4026 = vpop.f32.mrb[0].mxu0
      %v4027 = vpop.f32.mrb[0].mxu0
      %v4028 = vadd.f32 %v3739, %v4027
      %v4029 = vpop.f32.mrb[0].mxu0
      %4030 = vmatprep.mubr.bf16.mxu0 0
      %4031 = vmatmul.mubr.bf16.gmra.mrb[0].mxu0 %v1872
      %v4032 = vpop.f32.mrb[0].mxu0
      %v4033 = vadd.f32 %v3744, %v4032
      %v4034 = vpop.f32.mrb[0].mxu0
      %v4035 = vpop.f32.mrb[0].mxu0
      %v4036 = vadd.f32 %v3747, %v4035
      %v4037 = vpop.f32.mrb[0].mxu0
      %4038 = vmatprep.mubr.bf16.mxu0 0
      %4039 = vmatmul.mubr.bf16.gmra.mrb[0].mxu0 %v1881
      %v4040 = vpop.f32.mrb[0].mxu0
      %v4041 = vadd.f32 %v3752, %v4040
      %v4042 = vpop.f32.mrb[0].mxu0
      %v4043 = vpop.f32.mrb[0].mxu0
      %v4044 = vadd.f32 %v3755, %v4043
      %v4045 = vpop.f32.mrb[0].mxu0
      %4046 = vdwg.mxu0
      %v4047 = vld [vmem:[%s218] sm:$0xff]
      %v4048 = vld [vmem:[%s218 + $0x8] sm:$0xff]
      %v4049 = vld [vmem:[%s218 + $0x10] sm:$0xff]
      %v4050 = vld [vmem:[%s218 + $0x18] sm:$0xff]
      %v4051 = vld [vmem:[%s218 + $0x20] sm:$0xff]
      %v4052 = vld [vmem:[%s218 + $0x28] sm:$0xff]
      %v4053 = vld [vmem:[%s218 + $0x30] sm:$0xff]
      %v4054 = vld [vmem:[%s218 + $0x38] sm:$0xff]
      %v4055 = vld [vmem:[%s218 + $0x40] sm:$0xff]
      %v4056 = vld [vmem:[%s218 + $0x48] sm:$0xff]
      %v4057 = vld [vmem:[%s218 + $0x50] sm:$0xff]
      %v4058 = vld [vmem:[%s218 + $0x58] sm:$0xff]
      %v4059 = vld [vmem:[%s218 + $0x60] sm:$0xff]
      %v4060 = vld [vmem:[%s218 + $0x68] sm:$0xff]
      %v4061 = vld [vmem:[%s218 + $0x70] sm:$0xff]
      %v4062 = vld [vmem:[%s218 + $0x78] sm:$0xff]
      %v4063 = vld [vmem:[%s218 + $0x80] sm:$0xff]
      %v4064 = vld [vmem:[%s218 + $0x88] sm:$0xff]
      %v4065 = vld [vmem:[%s218 + $0x90] sm:$0xff]
      %v4066 = vld [vmem:[%s218 + $0x98] sm:$0xff]
      %v4067 = vld [vmem:[%s218 + $0xa0] sm:$0xff]
      %v4068 = vld [vmem:[%s218 + $0xa8] sm:$0xff]
      %v4069 = vld [vmem:[%s218 + $0xb0] sm:$0xff]
      %v4070 = vld [vmem:[%s218 + $0xb8] sm:$0xff]
      %v4071 = vld [vmem:[%s218 + $0xc0] sm:$0xff]
      %v4072 = vld [vmem:[%s218 + $0xc8] sm:$0xff]
      %v4073 = vld [vmem:[%s218 + $0xd0] sm:$0xff]
      %v4074 = vld [vmem:[%s218 + $0xd8] sm:$0xff]
      %v4075 = vld [vmem:[%s218 + $0xe0] sm:$0xff]
      %v4076 = vld [vmem:[%s218 + $0xe8] sm:$0xff]
      %v4077 = vld [vmem:[%s218 + $0xf0] sm:$0xff]
      %v4078 = vld [vmem:[%s218 + $0xf8] sm:$0xff]
      %v4079 = vld [vmem:[%s218 + $0x100] sm:$0xff]
      %v4080 = vld [vmem:[%s218 + $0x108] sm:$0xff]
      %v4081 = vld [vmem:[%s218 + $0x110] sm:$0xff]
      %v4082 = vld [vmem:[%s218 + $0x118] sm:$0xff]
      %v4083 = vld [vmem:[%s218 + $0x120] sm:$0xff]
      %v4084 = vld [vmem:[%s218 + $0x128] sm:$0xff]
      %v4085 = vld [vmem:[%s218 + $0x130] sm:$0xff]
      %v4086 = vld [vmem:[%s218 + $0x138] sm:$0xff]
      %v4087 = vld [vmem:[%s218 + $0x140] sm:$0xff]
      %v4088 = vld [vmem:[%s218 + $0x148] sm:$0xff]
      %v4089 = vld [vmem:[%s218 + $0x150] sm:$0xff]
      %v4090 = vld [vmem:[%s218 + $0x158] sm:$0xff]
      %v4091 = vld [vmem:[%s218 + $0x160] sm:$0xff]
      %v4092 = vld [vmem:[%s218 + $0x168] sm:$0xff]
      %v4093 = vld [vmem:[%s218 + $0x170] sm:$0xff]
      %v4094 = vld [vmem:[%s218 + $0x178] sm:$0xff]
      %v4095 = vld [vmem:[%s218 + $0x180] sm:$0xff]
      %v4096 = vld [vmem:[%s218 + $0x188] sm:$0xff]
      %v4097 = vld [vmem:[%s218 + $0x190] sm:$0xff]
      %v4098 = vld [vmem:[%s218 + $0x198] sm:$0xff]
      %v4099 = vld [vmem:[%s218 + $0x1a0] sm:$0xff]
      %v4100 = vld [vmem:[%s218 + $0x1a8] sm:$0xff]
      %v4101 = vld [vmem:[%s218 + $0x1b0] sm:$0xff]
      %v4102 = vld [vmem:[%s218 + $0x1b8] sm:$0xff]
      %v4103 = vld [vmem:[%s218 + $0x1c0] sm:$0xff]
      %v4104 = vld [vmem:[%s218 + $0x1c8] sm:$0xff]
      %v4105 = vld [vmem:[%s218 + $0x1d0] sm:$0xff]
      %v4106 = vld [vmem:[%s218 + $0x1d8] sm:$0xff]
      %v4107 = vld [vmem:[%s218 + $0x1e0] sm:$0xff]
      %v4108 = vld [vmem:[%s218 + $0x1e8] sm:$0xff]
      %v4109 = vld [vmem:[%s218 + $0x1f0] sm:$0xff]
      %v4110 = vld [vmem:[%s218 + $0x1f8] sm:$0xff]
      %v4111 = vadd.f32 %v3793, %v4047
      %v4112 = vadd.f32 %v3796, %v4048
      %v4113 = vadd.f32 %v3801, %v4049
      %v4114 = vadd.f32 %v3804, %v4050
      %v4115 = vadd.f32 %v3809, %v4051
      %v4116 = vadd.f32 %v3812, %v4052
      %v4117 = vadd.f32 %v3817, %v4053
      %v4118 = vadd.f32 %v3820, %v4054
      %v4119 = vadd.f32 %v3825, %v4055
      %v4120 = vadd.f32 %v3828, %v4056
      %v4121 = vadd.f32 %v3833, %v4057
      %v4122 = vadd.f32 %v3836, %v4058
      %v4123 = vadd.f32 %v3841, %v4059
      %v4124 = vadd.f32 %v3844, %v4060
      %v4125 = vadd.f32 %v3849, %v4061
      %v4126 = vadd.f32 %v3852, %v4062
      %v4127 = vadd.f32 %v3857, %v4063
      %v4128 = vadd.f32 %v3860, %v4064
      %v4129 = vadd.f32 %v3865, %v4065
      %v4130 = vadd.f32 %v3868, %v4066
      %v4131 = vadd.f32 %v3873, %v4067
      %v4132 = vadd.f32 %v3876, %v4068
      %v4133 = vadd.f32 %v3881, %v4069
      %v4134 = vadd.f32 %v3884, %v4070
      %v4135 = vadd.f32 %v3889, %v4071
      %v4136 = vadd.f32 %v3892, %v4072
      %v4137 = vadd.f32 %v3897, %v4073
      %v4138 = vadd.f32 %v3900, %v4074
      %v4139 = vadd.f32 %v3905, %v4075
      %v4140 = vadd.f32 %v3908, %v4076
      %v4141 = vadd.f32 %v3913, %v4077
      %v4142 = vadd.f32 %v3916, %v4078
      %v4143 = vadd.f32 %v3921, %v4079
      %v4144 = vadd.f32 %v3924, %v4080
      %v4145 = vadd.f32 %v3929, %v4081
      %v4146 = vadd.f32 %v3932, %v4082
      %v4147 = vadd.f32 %v3937, %v4083
      %v4148 = vadd.f32 %v3940, %v4084
      %v4149 = vadd.f32 %v3945, %v4085
      %v4150 = vadd.f32 %v3948, %v4086
      %v4151 = vadd.f32 %v3953, %v4087
      %v4152 = vadd.f32 %v3956, %v4088
      %v4153 = vadd.f32 %v3961, %v4089
      %v4154 = vadd.f32 %v3964, %v4090
      %v4155 = vadd.f32 %v3969, %v4091
      %v4156 = vadd.f32 %v3972, %v4092
      %v4157 = vadd.f32 %v3977, %v4093
      %v4158 = vadd.f32 %v3980, %v4094
      %v4159 = vadd.f32 %v3985, %v4095
      %v4160 = vadd.f32 %v3988, %v4096
      %v4161 = vadd.f32 %v3993, %v4097
      %v4162 = vadd.f32 %v3996, %v4098
      %v4163 = vadd.f32 %v4001, %v4099
      %v4164 = vadd.f32 %v4004, %v4100
      %v4165 = vadd.f32 %v4009, %v4101
      %v4166 = vadd.f32 %v4012, %v4102
      %v4167 = vadd.f32 %v4017, %v4103
      %v4168 = vadd.f32 %v4020, %v4104
      %v4169 = vadd.f32 %v4025, %v4105
      %v4170 = vadd.f32 %v4028, %v4106
      %v4171 = vadd.f32 %v4033, %v4107
      %v4172 = vadd.f32 %v4036, %v4108
      %v4173 = vadd.f32 %v4041, %v4109
      %v4174 = vadd.f32 %v4044, %v4110
      %4175 = vst [vmem:[%s224] sm:$0xff] %v4111
      %4176 = vst [vmem:[%s224 + $0x8] sm:$0xff] %v4112
      %4177 = vst [vmem:[%s224 + $0x10] sm:$0xff] %v4113
      %4178 = vst [vmem:[%s224 + $0x18] sm:$0xff] %v4114
      %4179 = vst [vmem:[%s224 + $0x20] sm:$0xff] %v4115
      %4180 = vst [vmem:[%s224 + $0x28] sm:$0xff] %v4116
      %4181 = vst [vmem:[%s224 + $0x30] sm:$0xff] %v4117
      %4182 = vst [vmem:[%s224 + $0x38] sm:$0xff] %v4118
      %4183 = vst [vmem:[%s224 + $0x40] sm:$0xff] %v4119
      %4184 = vst [vmem:[%s224 + $0x48] sm:$0xff] %v4120
      %4185 = vst [vmem:[%s224 + $0x50] sm:$0xff] %v4121
      %4186 = vst [vmem:[%s224 + $0x58] sm:$0xff] %v4122
      %4187 = vst [vmem:[%s224 + $0x60] sm:$0xff] %v4123
      %4188 = vst [vmem:[%s224 + $0x68] sm:$0xff] %v4124
      %4189 = vst [vmem:[%s224 + $0x70] sm:$0xff] %v4125
      %4190 = vst [vmem:[%s224 + $0x78] sm:$0xff] %v4126
      %4191 = vst [vmem:[%s224 + $0x80] sm:$0xff] %v4127
      %4192 = vst [vmem:[%s224 + $0x88] sm:$0xff] %v4128
      %4193 = vst [vmem:[%s224 + $0x90] sm:$0xff] %v4129
      %4194 = vst [vmem:[%s224 + $0x98] sm:$0xff] %v4130
      %4195 = vst [vmem:[%s224 + $0xa0] sm:$0xff] %v4131
      %4196 = vst [vmem:[%s224 + $0xa8] sm:$0xff] %v4132
      %4197 = vst [vmem:[%s224 + $0xb0] sm:$0xff] %v4133
      %4198 = vst [vmem:[%s224 + $0xb8] sm:$0xff] %v4134
      %4199 = vst [vmem:[%s224 + $0xc0] sm:$0xff] %v4135
      %4200 = vst [vmem:[%s224 + $0xc8] sm:$0xff] %v4136
      %4201 = vst [vmem:[%s224 + $0xd0] sm:$0xff] %v4137
      %4202 = vst [vmem:[%s224 + $0xd8] sm:$0xff] %v4138
      %4203 = vst [vmem:[%s224 + $0xe0] sm:$0xff] %v4139
      %4204 = vst [vmem:[%s224 + $0xe8] sm:$0xff] %v4140
      %4205 = vst [vmem:[%s224 + $0xf0] sm:$0xff] %v4141
      %4206 = vst [vmem:[%s224 + $0xf8] sm:$0xff] %v4142
      %4207 = vst [vmem:[%s224 + $0x100] sm:$0xff] %v4143
      %4208 = vst [vmem:[%s224 + $0x108] sm:$0xff] %v4144
      %4209 = vst [vmem:[%s224 + $0x110] sm:$0xff] %v4145
      %4210 = vst [vmem:[%s224 + $0x118] sm:$0xff] %v4146
      %4211 = vst [vmem:[%s224 + $0x120] sm:$0xff] %v4147
      %4212 = vst [vmem:[%s224 + $0x128] sm:$0xff] %v4148
      %4213 = vst [vmem:[%s224 + $0x130] sm:$0xff] %v4149
      %4214 = vst [vmem:[%s224 + $0x138] sm:$0xff] %v4150
      %4215 = vst [vmem:[%s224 + $0x140] sm:$0xff] %v4151
      %4216 = vst [vmem:[%s224 + $0x148] sm:$0xff] %v4152
      %4217 = vst [vmem:[%s224 + $0x150] sm:$0xff] %v4153
      %4218 = vst [vmem:[%s224 + $0x158] sm:$0xff] %v4154
      %4219 = vst [vmem:[%s224 + $0x160] sm:$0xff] %v4155
      %4220 = vst [vmem:[%s224 + $0x168] sm:$0xff] %v4156
      %4221 = vst [vmem:[%s224 + $0x170] sm:$0xff] %v4157
      %4222 = vst [vmem:[%s224 + $0x178] sm:$0xff] %v4158
      %4223 = vst [vmem:[%s224 + $0x180] sm:$0xff] %v4159
      %4224 = vst [vmem:[%s224 + $0x188] sm:$0xff] %v4160
      %4225 = vst [vmem:[%s224 + $0x190] sm:$0xff] %v4161
      %4226 = vst [vmem:[%s224 + $0x198] sm:$0xff] %v4162
      %4227 = vst [vmem:[%s224 + $0x1a0] sm:$0xff] %v4163
      %4228 = vst [vmem:[%s224 + $0x1a8] sm:$0xff] %v4164
      %4229 = vst [vmem:[%s224 + $0x1b0] sm:$0xff] %v4165
      %4230 = vst [vmem:[%s224 + $0x1b8] sm:$0xff] %v4166
      %4231 = vst [vmem:[%s224 + $0x1c0] sm:$0xff] %v4167
      %4232 = vst [vmem:[%s224 + $0x1c8] sm:$0xff] %v4168
      %4233 = vst [vmem:[%s224 + $0x1d0] sm:$0xff] %v4169
      %4234 = vst [vmem:[%s224 + $0x1d8] sm:$0xff] %v4170
      %4235 = vst [vmem:[%s224 + $0x1e0] sm:$0xff] %v4171
      %4236 = vst [vmem:[%s224 + $0x1e8] sm:$0xff] %v4172
      %4237 = vst [vmem:[%s224 + $0x1f0] sm:$0xff] %v4173
      %4238 = vst [vmem:[%s224 + $0x1f8] sm:$0xff] %v4174
      %s4239 = smul.u32 64, %s15
      %p4240 = scmp.lt.s32.totalorder %s4239, 127
      %s4241 = scalar_select %p4240, %s4239, 127
      %s4242 = smul.addr %s4241, 8
      %s4243 = scalar_lea.vmem %s4, %s4242
      // Predicated region
      $region37: #{middle_block.5} parent=35 // pred_check
        %p4244 = pneg %p127
      $region38: #{middle_block.5} parent=35 // pred_check_branch
        %4246 = sbr.rel (%p4244) target = $region40
      $region39: #{middle_block.5} parent=35 // pred_region
        %s4247 = smul.u32 64, %s15
      $region40: #{middle_block.5} parent=35 // pred_fallthru
        _
    $region36: #{middle_block.5} parent=5 // pred_fallthru
      _
    %p4248 = scmp.le.s32.totalorder 2, %s10
    // Predicated region
    $region41: #{middle_block.5} parent=5 // pred_check
      %p4249 = pneg %p4248
    $region42: #{middle_block.5} parent=5 // pred_check_branch
      %4251 = sbr.rel (%p4249) target = $region44
    $region43: #{middle_block.5} parent=5 // pred_region
      %s4252 = ssub.s32 %s10, 2
      // Predicated region
      $region45: #{middle_block.5} parent=43 // pred_check
        %p4253 = pneg %p133
      $region46: #{middle_block.5} parent=43 // pred_check_branch
        %4255 = sbr.rel (%p4253) target = $region48
      $region47: #{middle_block.5} parent=43 // pred_region
        %s4256 = smul.u32 64, %s16
        %p4257 = scmp.lt.s32.totalorder %s4256, 127
        %s4258 = scalar_select %p4257, %s4256, 127
        %s4259 = smul.addr %s4258, 8
        %s4260 = scalar_lea.vmem %s4, %s4259
      $region48: #{middle_block.5} parent=43 // pred_fallthru
        _
    $region44: #{middle_block.5} parent=5 // pred_fallthru
      _
  $region6: #{middle_block.5} parent=0 // loop_footer
    %s14 = sadd.s32 1, %s10
  $region7: #{middle_block.5} parent=0 // loop_footer_branch
    %9 = sbr.rel target = $region3
  $region8: #{middle_block.5} parent=0 // loop_exit
    _

// kernel: middle_block.7
$region0: #{middle_block.7}
  #allocation0 [shape = 'u32[]', space=smem, size = 0x4, offset = 0x4, fixed_abs, tag = 'smem constant byte address 0x4 - core index']
  #allocation1 [shape = 'u32[144,128]{1,0:T(1,128)}', space=vmem, size = 0x12000, scoped, tag = 'internal scratch']
  %s0 = inlined_call_operand.vmem [shape: bf16[1024,1152], index: 0, kind: input, shape index: {}]
  %s1 = inlined_call_operand.vmem [shape: bf16[1152,128], index: 1, kind: input, shape index: {}]
  %s2 = inlined_call_operand.vmem [shape: f32[1,128], index: 2, kind: input, shape index: {}]
  %s3 = inlined_call_operand.vmem [shape: f32[1024,128], index: 3, kind: input, shape index: {}]
  %s4 = inlined_call_operand.hbm [shape: f32[1024,128], index: 4, kind: output, shape index: {}]
  %s5 = sld [smem:[#allocation0]]
  $region49: #{middle_block.7} parent=0
    _
  %s7 = ssub.s32 1, %s5
  %s8 = scalar_select 0, %s7, %s5
  $region1: #{middle_block.7} parent=0
    #allocation2 [shape = 'u8[524288]{0}', space=vmem, size = 0x80000, scoped, tag = 'output window, operand 0']
    #allocation3 [shape = 's32[2]{0}', space=sflag, size = 0x8, scoped, tag = 'scoped memory for middle_block.7']
    %9 = vsyncpa [#allocation3], 0
    %s10 = scalar_lea.sflag [#allocation3], 1
    %11 = vsyncpa %s10, 0
    loop: start=0, step=1, limit=4
    $region2: #{middle_block.7} parent=1 // loop_pre_header
      _
    $region3: #{middle_block.7} parent=1 // loop_header
      %s13 = sphi 0, %s17
      %p14 = scmp.ge.s32.totalorder %s13, 4
      %s23 = sphi 0, %s25
      %s26 = sphi 0, %s23
      %s27 = sphi 0, %s26
      %s43 = sphi 0, %s27
      %s47 = sphi 0, %s47
      %s49 = sphi 0, %s47
      %s50 = sphi 0, %s49
      %s64 = sphi 0, %s50
      %s68 = sphi 0, %s68
      %s70 = sphi 0, %s68
      %s71 = sphi 0, %s70
      %s85 = sphi 0, %s71
      %s91 = sphi 0, %s93
      %s94 = sphi 0, %s91
      %s95 = sphi 0, %s94
      %s111 = sphi 0, %s95
      %s117 = sphi 0, %s119
      %s120 = sphi 0, %s117
      %s121 = sphi 0, %s120
      %s137 = sphi 0, %s121
    $region4: #{middle_block.7} parent=1 // loop_header_branch
      %16 = sbr.rel (%p14) target = $region8
    $region5: #{middle_block.7} parent=1 // loop_body
      %s18 = ssub.s32 %s13, 1
      %s19 = ssub.s32 %s13, 2
      %s20 = sadd.s32 %s13, 1
      %s21 = ssub.s32 %s13, %s20
      %p22 = scmp.eq.s32.totalorder %s21, 0
      %s24 = sadd.s32 %s23, 1
      %s25 = scalar_select %p22, %s23, %s24
      %p28 = pneg %p22
      %p29 = scmp.eq.s32.totalorder %s13, 1
      %p30 = por %p28, %p29
      %p31 = scmp.ne.s32.totalorder %s23, %s26
      %p32 = scmp.eq.s32.totalorder %s13, 0
      %p33 = por %p31, %p32
      %p34 = scmp.ne.s32.totalorder %s23, %s26
      %p35 = scmp.eq.s32.totalorder %s18, 1
      %p36 = por %p34, %p35
      %p37 = scmp.ne.s32.totalorder %s26, %s27
      %p38 = scmp.eq.s32.totalorder %s18, 0
      %p39 = por %p37, %p38
      %p40 = scmp.ne.s32.totalorder %s26, %s27
      %p41 = scmp.eq.s32.totalorder %s19, 1
      %p42 = por %p40, %p41
      %p44 = scmp.ne.s32.totalorder %s27, %s43
      %p45 = scmp.eq.s32.totalorder %s19, 0
      %p46 = por %p44, %p45
      %s48 = sadd.s32 %s47, 1
      %p51 = scmp.eq.s32.totalorder %s13, 1
      %p52 = scmp.ne.s32.totalorder %s47, %s49
      %p53 = scmp.eq.s32.totalorder %s13, 0
      %p54 = por %p52, %p53
      %p55 = scmp.ne.s32.totalorder %s47, %s49
      %p56 = scmp.eq.s32.totalorder %s18, 1
      %p57 = por %p55, %p56
      %p58 = scmp.ne.s32.totalorder %s49, %s50
      %p59 = scmp.eq.s32.totalorder %s18, 0
      %p60 = por %p58, %p59
      %p61 = scmp.ne.s32.totalorder %s49, %s50
      %p62 = scmp.eq.s32.totalorder %s19, 1
      %p63 = por %p61, %p62
      %p65 = scmp.ne.s32.totalorder %s50, %s64
      %p66 = scmp.eq.s32.totalorder %s19, 0
      %p67 = por %p65, %p66
      %s69 = sadd.s32 %s68, 1
      %p72 = scmp.eq.s32.totalorder %s13, 1
      %p73 = scmp.ne.s32.totalorder %s68, %s70
      %p74 = scmp.eq.s32.totalorder %s13, 0
      %p75 = por %p73, %p74
      %p76 = scmp.ne.s32.totalorder %s68, %s70
      %p77 = scmp.eq.s32.totalorder %s18, 1
      %p78 = por %p76, %p77
      %p79 = scmp.ne.s32.totalorder %s70, %s71
      %p80 = scmp.eq.s32.totalorder %s18, 0
      %p81 = por %p79, %p80
      %p82 = scmp.ne.s32.totalorder %s70, %s71
      %p83 = scmp.eq.s32.totalorder %s19, 1
      %p84 = por %p82, %p83
      %p86 = scmp.ne.s32.totalorder %s71, %s85
      %p87 = scmp.eq.s32.totalorder %s19, 0
      %p88 = por %p86, %p87
      %s89 = ssub.s32 %s13, %s20
      %p90 = scmp.eq.s32.totalorder %s89, 0
      %s92 = sadd.s32 %s91, 1
      %s93 = scalar_select %p90, %s91, %s92
      %p96 = pneg %p90
      %p97 = scmp.eq.s32.totalorder %s13, 1
      %p98 = por %p96, %p97
      %p99 = scmp.ne.s32.totalorder %s91, %s94
      %p100 = scmp.eq.s32.totalorder %s13, 0
      %p101 = por %p99, %p100
      %p102 = scmp.ne.s32.totalorder %s91, %s94
      %p103 = scmp.eq.s32.totalorder %s18, 1
      %p104 = por %p102, %p103
      %p105 = scmp.ne.s32.totalorder %s94, %s95
      %p106 = scmp.eq.s32.totalorder %s18, 0
      %p107 = por %p105, %p106
      %p108 = scmp.ne.s32.totalorder %s94, %s95
      %p109 = scmp.eq.s32.totalorder %s19, 1
      %p110 = por %p108, %p109
      %p112 = scmp.ne.s32.totalorder %s95, %s111
      %p113 = scmp.eq.s32.totalorder %s19, 0
      %p114 = por %p112, %p113
      %s115 = ssub.s32 %s13, %s20
      %p116 = scmp.eq.s32.totalorder %s115, 0
      %s118 = sadd.s32 %s117, 1
      %s119 = scalar_select %p116, %s117, %s118
      %p122 = pneg %p116
      %p123 = scmp.eq.s32.totalorder %s13, 1
      %p124 = por %p122, %p123
      %p125 = scmp.ne.s32.totalorder %s117, %s120
      %p126 = scmp.eq.s32.totalorder %s13, 0
      %p127 = por %p125, %p126
      %p128 = scmp.ne.s32.totalorder %s117, %s120
      %p129 = scmp.eq.s32.totalorder %s18, 1
      %p130 = por %p128, %p129
      %p131 = scmp.ne.s32.totalorder %s120, %s121
      %p132 = scmp.eq.s32.totalorder %s18, 0
      %p133 = por %p131, %p132
      %p134 = scmp.ne.s32.totalorder %s120, %s121
      %p135 = scmp.eq.s32.totalorder %s19, 1
      %p136 = por %p134, %p135
      %p138 = scmp.ne.s32.totalorder %s121, %s137
      %p139 = scmp.eq.s32.totalorder %s19, 0
      %p140 = por %p138, %p139
      %p141 = scmp.le.s32.totalorder 1, %s13
      %p142 = scmp.lt.s32.totalorder %s13, 3
      %p143 = pnand %p141, %p142
      %p144 = pneg %p143
      // Predicated region
      $region9: #{middle_block.7} parent=5 // pred_check
        _
      $region10: #{middle_block.7} parent=5 // pred_check_branch
        %146 = sbr.rel (%p143) target = $region12
      $region11: #{middle_block.7} parent=5 // pred_region
        %s147 = ssub.s32 %s13, 1
        // Predicated region
        $region13: #{middle_block.7} parent=11 // pred_check
          %p148 = pneg %p60
        $region14: #{middle_block.7} parent=11 // pred_check_branch
          %150 = sbr.rel (%p148) target = $region16
        $region15: #{middle_block.7} parent=11 // pred_region
          _
        $region16: #{middle_block.7} parent=11 // pred_fallthru
          _
        // Predicated region
        $region17: #{middle_block.7} parent=11 // pred_check
          %p151 = pneg %p81
        $region18: #{middle_block.7} parent=11 // pred_check_branch
          %153 = sbr.rel (%p151) target = $region20
        $region19: #{middle_block.7} parent=11 // pred_region
          _
        $region20: #{middle_block.7} parent=11 // pred_fallthru
          _
      $region12: #{middle_block.7} parent=5 // pred_fallthru
        _
      %p154 = scmp.lt.s32.totalorder %s13, 2
      // Predicated region
      $region21: #{middle_block.7} parent=5 // pred_check
        %p155 = pneg %p154
      $region22: #{middle_block.7} parent=5 // pred_check_branch
        %157 = sbr.rel (%p155) target = $region24
      $region23: #{middle_block.7} parent=5 // pred_region
        // Predicated region
        $region25: #{middle_block.7} parent=23 // pred_check
          %p158 = pneg %p33
        $region26: #{middle_block.7} parent=23 // pred_check_branch
          %160 = sbr.rel (%p158) target = $region28
        $region27: #{middle_block.7} parent=23 // pred_region
          %s161 = smul.u32 64, %s13
          %p162 = scmp.lt.s32.totalorder %s161, 127
          %s163 = scalar_select %p162, %s161, 127
          %s164 = smul.addr %s163, 9
          %s165 = smul.addr %s164, 4
          %s166 = scalar_lea.vmem %s0, %s165
          %s167 = smul.u32 64, %s13
        $region28: #{middle_block.7} parent=23 // pred_fallthru
          _
        // Predicated region
        $region29: #{middle_block.7} parent=23 // pred_check
          %p168 = pneg %p101
        $region30: #{middle_block.7} parent=23 // pred_check_branch
          %170 = sbr.rel (%p168) target = $region32
        $region31: #{middle_block.7} parent=23 // pred_region
          %s171 = smul.u32 64, %s13
          %p172 = scmp.lt.s32.totalorder %s171, 127
          %s173 = scalar_select %p172, %s171, 127
          %s174 = smul.addr %s173, 8
          %s175 = scalar_lea.vmem %s3, %s174
          %s176 = smul.u32 64, %s13
        $region32: #{middle_block.7} parent=23 // pred_fallthru
          _
      $region24: #{middle_block.7} parent=5 // pred_fallthru
        _
      %p177 = scmp.le.s32.totalorder 1, %s13
      %p178 = scmp.lt.s32.totalorder %s13, 3
      %p179 = pnand %p177, %p178
      %p180 = pneg %p179
      // Predicated region
      $region33: #{middle_block.7} parent=5 // pred_check
        _
      $region34: #{middle_block.7} parent=5 // pred_check_branch
        %182 = sbr.rel (%p179) target = $region36
      $region35: #{middle_block.7} parent=5 // pred_region
        %s183 = ssub.s32 %s13, 1
        %s184 = smul.u32 64, %s18
        %p185 = scmp.lt.s32.totalorder %s184, 127
        %s186 = scalar_select %p185, %s184, 127
        %s187 = smul.addr %s186, 9
        %s188 = smul.addr %s187, 4
        %s189 = scalar_lea.vmem %s0, %s188
        %p190 = pneg %p39
        %p191 = pneg %p36
        %p192 = pneg %p60
        %p193 = pneg %p57
        %p194 = pneg %p81
        %p195 = pneg %p78
        %s196 = smul.u32 64, %s18
        %p197 = scmp.lt.s32.totalorder %s196, 127
        %s198 = scalar_select %p197, %s196, 127
        %s199 = smul.addr %s198, 8
        %s200 = scalar_lea.vmem %s3, %s199
        %p201 = pneg %p107
        %p202 = pneg %p104
        %p203 = pneg %p133
        %p204 = pneg %p130
        %s205 = sand.u32 %s120, 1
        %s206 = scalar_lea.sflag [#allocation3], %s205
        %s207 = sand.u32 %s120, 1
        %s208 = smul.addr %s207, 512
        %s209 = scalar_lea.vmem [#allocation2], %s208
        %s210 = smul.u32 64, %s18
        %p211 = scmp.lt.s32.totalorder %s210, 127
        %s212 = scalar_select %p211, %s210, 127
        %s213 = smul.addr %s212, 9
        %s214 = smul.addr %s213, 4
        %s215 = scalar_lea.vmem %s0, %s214
        %s216 = smul.u32 64, %s18
        %s217 = smul.u32 64, %s18
        %p218 = scmp.lt.s32.totalorder %s217, 127
        %s219 = scalar_select %p218, %s217, 127
        %s220 = smul.addr %s219, 8
        %s221 = scalar_lea.vmem %s3, %s220
        %s222 = smul.u32 64, %s18
        %s223 = smul.u32 64, %s18
        %v225 = vld [vmem:[%s215] sm:$0xff]
        %v226 = vld [vmem:[%s215 + $0x8] sm:$0xff]
        %v227 = vld [vmem:[%s215 + $0x10] sm:$0xff]
        %v228 = vld [vmem:[%s215 + $0x18] sm:$0xff]
        %v229 = vld [vmem:[%s215 + $0x20] sm:$0xf]
        %v230 = vld [vmem:[%s215 + $0x24] sm:$0xff]
        %v231 = vld [vmem:[%s215 + $0x2c] sm:$0xff]
        %v232 = vld [vmem:[%s215 + $0x34] sm:$0xff]
        %v233 = vld [vmem:[%s215 + $0x3c] sm:$0xff]
        %v234 = vld [vmem:[%s215 + $0x44] sm:$0xf]
        %v235 = vld [vmem:[%s215 + $0x48] sm:$0xff]
        %v236 = vld [vmem:[%s215 + $0x50] sm:$0xff]
        %v237 = vld [vmem:[%s215 + $0x58] sm:$0xff]
        %v238 = vld [vmem:[%s215 + $0x60] sm:$0xff]
        %v239 = vld [vmem:[%s215 + $0x68] sm:$0xf]
        %v240 = vld [vmem:[%s215 + $0x6c] sm:$0xff]
        %v241 = vld [vmem:[%s215 + $0x74] sm:$0xff]
        %v242 = vld [vmem:[%s215 + $0x7c] sm:$0xff]
        %v243 = vld [vmem:[%s215 + $0x84] sm:$0xff]
        %v244 = vld [vmem:[%s215 + $0x8c] sm:$0xf]
        %v245 = vld [vmem:[%s215 + $0x90] sm:$0xff]
        %v246 = vld [vmem:[%s215 + $0x98] sm:$0xff]
        %v247 = vld [vmem:[%s215 + $0xa0] sm:$0xff]
        %v248 = vld [vmem:[%s215 + $0xa8] sm:$0xff]
        %v249 = vld [vmem:[%s215 + $0xb0] sm:$0xf]
        %v250 = vld [vmem:[%s215 + $0xb4] sm:$0xff]
        %v251 = vld [vmem:[%s215 + $0xbc] sm:$0xff]
        %v252 = vld [vmem:[%s215 + $0xc4] sm:$0xff]
        %v253 = vld [vmem:[%s215 + $0xcc] sm:$0xff]
        %v254 = vld [vmem:[%s215 + $0xd4] sm:$0xf]
        %v255 = vld [vmem:[%s215 + $0xd8] sm:$0xff]
        %v256 = vld [vmem:[%s215 + $0xe0] sm:$0xff]
        %v257 = vld [vmem:[%s215 + $0xe8] sm:$0xff]
        %v258 = vld [vmem:[%s215 + $0xf0] sm:$0xff]
        %v259 = vld [vmem:[%s215 + $0xf8] sm:$0xf]
        %v260 = vld [vmem:[%s215 + $0xfc] sm:$0xff]
        %v261 = vld [vmem:[%s215 + $0x104] sm:$0xff]
        %v262 = vld [vmem:[%s215 + $0x10c] sm:$0xff]
        %v263 = vld [vmem:[%s215 + $0x114] sm:$0xff]
        %v264 = vld [vmem:[%s215 + $0x11c] sm:$0xf]
        %v265 = vld [vmem:[%s215 + $0x120] sm:$0xff]
        %v266 = vld [vmem:[%s215 + $0x128] sm:$0xff]
        %v267 = vld [vmem:[%s215 + $0x130] sm:$0xff]
        %v268 = vld [vmem:[%s215 + $0x138] sm:$0xff]
        %v269 = vld [vmem:[%s215 + $0x140] sm:$0xf]
        %v270 = vld [vmem:[%s215 + $0x144] sm:$0xff]
        %v271 = vld [vmem:[%s215 + $0x14c] sm:$0xff]
        %v272 = vld [vmem:[%s215 + $0x154] sm:$0xff]
        %v273 = vld [vmem:[%s215 + $0x15c] sm:$0xff]
        %v274 = vld [vmem:[%s215 + $0x164] sm:$0xf]
        %v275 = vld [vmem:[%s215 + $0x168] sm:$0xff]
        %v276 = vld [vmem:[%s215 + $0x170] sm:$0xff]
        %v277 = vld [vmem:[%s215 + $0x178] sm:$0xff]
        %v278 = vld [vmem:[%s215 + $0x180] sm:$0xff]
        %v279 = vld [vmem:[%s215 + $0x188] sm:$0xf]
        %v280 = vld [vmem:[%s215 + $0x18c] sm:$0xff]
        %v281 = vld [vmem:[%s215 + $0x194] sm:$0xff]
        %v282 = vld [vmem:[%s215 + $0x19c] sm:$0xff]
        %v283 = vld [vmem:[%s215 + $0x1a4] sm:$0xff]
        %v284 = vld [vmem:[%s215 + $0x1ac] sm:$0xf]
        %v285 = vld [vmem:[%s215 + $0x1b0] sm:$0xff]
        %v286 = vld [vmem:[%s215 + $0x1b8] sm:$0xff]
        %v287 = vld [vmem:[%s215 + $0x1c0] sm:$0xff]
        %v288 = vld [vmem:[%s215 + $0x1c8] sm:$0xff]
        %v289 = vld [vmem:[%s215 + $0x1d0] sm:$0xf]
        %v290 = vld [vmem:[%s215 + $0x1d4] sm:$0xff]
        %v291 = vld [vmem:[%s215 + $0x1dc] sm:$0xff]
        %v292 = vld [vmem:[%s215 + $0x1e4] sm:$0xff]
        %v293 = vld [vmem:[%s215 + $0x1ec] sm:$0xff]
        %v294 = vld [vmem:[%s215 + $0x1f4] sm:$0xf]
        %v295 = vld [vmem:[%s215 + $0x1f8] sm:$0xff]
        %v296 = vld [vmem:[%s215 + $0x200] sm:$0xff]
        %v297 = vld [vmem:[%s215 + $0x208] sm:$0xff]
        %v298 = vld [vmem:[%s215 + $0x210] sm:$0xff]
        %v299 = vld [vmem:[%s215 + $0x218] sm:$0xf]
        %v300 = vld [vmem:[%s215 + $0x21c] sm:$0xff]
        %v301 = vld [vmem:[%s215 + $0x224] sm:$0xff]
        %v302 = vld [vmem:[%s215 + $0x22c] sm:$0xff]
        %v303 = vld [vmem:[%s215 + $0x234] sm:$0xff]
        %v304 = vld [vmem:[%s215 + $0x23c] sm:$0xf]
        %v305 = vld [vmem:[%s215 + $0x240] sm:$0xff]
        %v306 = vld [vmem:[%s215 + $0x248] sm:$0xff]
        %v307 = vld [vmem:[%s215 + $0x250] sm:$0xff]
        %v308 = vld [vmem:[%s215 + $0x258] sm:$0xff]
        %v309 = vld [vmem:[%s215 + $0x260] sm:$0xf]
        %v310 = vld [vmem:[%s215 + $0x264] sm:$0xff]
        %v311 = vld [vmem:[%s215 + $0x26c] sm:$0xff]
        %v312 = vld [vmem:[%s215 + $0x274] sm:$0xff]
        %v313 = vld [vmem:[%s215 + $0x27c] sm:$0xff]
        %v314 = vld [vmem:[%s215 + $0x284] sm:$0xf]
        %v315 = vld [vmem:[%s215 + $0x288] sm:$0xff]
        %v316 = vld [vmem:[%s215 + $0x290] sm:$0xff]
        %v317 = vld [vmem:[%s215 + $0x298] sm:$0xff]
        %v318 = vld [vmem:[%s215 + $0x2a0] sm:$0xff]
        %v319 = vld [vmem:[%s215 + $0x2a8] sm:$0xf]
        %v320 = vld [vmem:[%s215 + $0x2ac] sm:$0xff]
        %v321 = vld [vmem:[%s215 + $0x2b4] sm:$0xff]
        %v322 = vld [vmem:[%s215 + $0x2bc] sm:$0xff]
        %v323 = vld [vmem:[%s215 + $0x2c4] sm:$0xff]
        %v324 = vld [vmem:[%s215 + $0x2cc] sm:$0xf]
        %v325 = vld [vmem:[%s215 + $0x2d0] sm:$0xff]
        %v326 = vld [vmem:[%s215 + $0x2d8] sm:$0xff]
        %v327 = vld [vmem:[%s215 + $0x2e0] sm:$0xff]
        %v328 = vld [vmem:[%s215 + $0x2e8] sm:$0xff]
        %v329 = vld [vmem:[%s215 + $0x2f0] sm:$0xf]
        %v330 = vld [vmem:[%s215 + $0x2f4] sm:$0xff]
        %v331 = vld [vmem:[%s215 + $0x2fc] sm:$0xff]
        %v332 = vld [vmem:[%s215 + $0x304] sm:$0xff]
        %v333 = vld [vmem:[%s215 + $0x30c] sm:$0xff]
        %v334 = vld [vmem:[%s215 + $0x314] sm:$0xf]
        %v335 = vld [vmem:[%s215 + $0x318] sm:$0xff]
        %v336 = vld [vmem:[%s215 + $0x320] sm:$0xff]
        %v337 = vld [vmem:[%s215 + $0x328] sm:$0xff]
        %v338 = vld [vmem:[%s215 + $0x330] sm:$0xff]
        %v339 = vld [vmem:[%s215 + $0x338] sm:$0xf]
        %v340 = vld [vmem:[%s215 + $0x33c] sm:$0xff]
        %v341 = vld [vmem:[%s215 + $0x344] sm:$0xff]
        %v342 = vld [vmem:[%s215 + $0x34c] sm:$0xff]
        %v343 = vld [vmem:[%s215 + $0x354] sm:$0xff]
        %v344 = vld [vmem:[%s215 + $0x35c] sm:$0xf]
        %v345 = vld [vmem:[%s215 + $0x360] sm:$0xff]
        %v346 = vld [vmem:[%s215 + $0x368] sm:$0xff]
        %v347 = vld [vmem:[%s215 + $0x370] sm:$0xff]
        %v348 = vld [vmem:[%s215 + $0x378] sm:$0xff]
        %v349 = vld [vmem:[%s215 + $0x380] sm:$0xf]
        %v350 = vld [vmem:[%s215 + $0x384] sm:$0xff]
        %v351 = vld [vmem:[%s215 + $0x38c] sm:$0xff]
        %v352 = vld [vmem:[%s215 + $0x394] sm:$0xff]
        %v353 = vld [vmem:[%s215 + $0x39c] sm:$0xff]
        %v354 = vld [vmem:[%s215 + $0x3a4] sm:$0xf]
        %v355 = vld [vmem:[%s215 + $0x3a8] sm:$0xff]
        %v356 = vld [vmem:[%s215 + $0x3b0] sm:$0xff]
        %v357 = vld [vmem:[%s215 + $0x3b8] sm:$0xff]
        %v358 = vld [vmem:[%s215 + $0x3c0] sm:$0xff]
        %v359 = vld [vmem:[%s215 + $0x3c8] sm:$0xf]
        %v360 = vld [vmem:[%s215 + $0x3cc] sm:$0xff]
        %v361 = vld [vmem:[%s215 + $0x3d4] sm:$0xff]
        %v362 = vld [vmem:[%s215 + $0x3dc] sm:$0xff]
        %v363 = vld [vmem:[%s215 + $0x3e4] sm:$0xff]
        %v364 = vld [vmem:[%s215 + $0x3ec] sm:$0xf]
        %v365 = vld [vmem:[%s215 + $0x3f0] sm:$0xff]
        %v366 = vld [vmem:[%s215 + $0x3f8] sm:$0xff]
        %v367 = vld [vmem:[%s215 + $0x400] sm:$0xff]
        %v368 = vld [vmem:[%s215 + $0x408] sm:$0xff]
        %v369 = vld [vmem:[%s215 + $0x410] sm:$0xf]
        %v370 = vld [vmem:[%s215 + $0x414] sm:$0xff]
        %v371 = vld [vmem:[%s215 + $0x41c] sm:$0xff]
        %v372 = vld [vmem:[%s215 + $0x424] sm:$0xff]
        %v373 = vld [vmem:[%s215 + $0x42c] sm:$0xff]
        %v374 = vld [vmem:[%s215 + $0x434] sm:$0xf]
        %v375 = vld [vmem:[%s215 + $0x438] sm:$0xff]
        %v376 = vld [vmem:[%s215 + $0x440] sm:$0xff]
        %v377 = vld [vmem:[%s215 + $0x448] sm:$0xff]
        %v378 = vld [vmem:[%s215 + $0x450] sm:$0xff]
        %v379 = vld [vmem:[%s215 + $0x458] sm:$0xf]
        %v380 = vld [vmem:[%s215 + $0x45c] sm:$0xff]
        %v381 = vld [vmem:[%s215 + $0x464] sm:$0xff]
        %v382 = vld [vmem:[%s215 + $0x46c] sm:$0xff]
        %v383 = vld [vmem:[%s215 + $0x474] sm:$0xff]
        %v384 = vld [vmem:[%s215 + $0x47c] sm:$0xf]
        %v385 = vld [vmem:[%s215 + $0x480] sm:$0xff]
        %v386 = vld [vmem:[%s215 + $0x488] sm:$0xff]
        %v387 = vld [vmem:[%s215 + $0x490] sm:$0xff]
        %v388 = vld [vmem:[%s215 + $0x498] sm:$0xff]
        %v389 = vld [vmem:[%s215 + $0x4a0] sm:$0xf]
        %v390 = vld [vmem:[%s215 + $0x4a4] sm:$0xff]
        %v391 = vld [vmem:[%s215 + $0x4ac] sm:$0xff]
        %v392 = vld [vmem:[%s215 + $0x4b4] sm:$0xff]
        %v393 = vld [vmem:[%s215 + $0x4bc] sm:$0xff]
        %v394 = vld [vmem:[%s215 + $0x4c4] sm:$0xf]
        %v395 = vld [vmem:[%s215 + $0x4c8] sm:$0xff]
        %v396 = vld [vmem:[%s215 + $0x4d0] sm:$0xff]
        %v397 = vld [vmem:[%s215 + $0x4d8] sm:$0xff]
        %v398 = vld [vmem:[%s215 + $0x4e0] sm:$0xff]
        %v399 = vld [vmem:[%s215 + $0x4e8] sm:$0xf]
        %v400 = vld [vmem:[%s215 + $0x4ec] sm:$0xff]
        %v401 = vld [vmem:[%s215 + $0x4f4] sm:$0xff]
        %v402 = vld [vmem:[%s215 + $0x4fc] sm:$0xff]
        %v403 = vld [vmem:[%s215 + $0x504] sm:$0xff]
        %v404 = vld [vmem:[%s215 + $0x50c] sm:$0xf]
        %v405 = vld [vmem:[%s215 + $0x510] sm:$0xff]
        %v406 = vld [vmem:[%s215 + $0x518] sm:$0xff]
        %v407 = vld [vmem:[%s215 + $0x520] sm:$0xff]
        %v408 = vld [vmem:[%s215 + $0x528] sm:$0xff]
        %v409 = vld [vmem:[%s215 + $0x530] sm:$0xf]
        %v410 = vld [vmem:[%s215 + $0x534] sm:$0xff]
        %v411 = vld [vmem:[%s215 + $0x53c] sm:$0xff]
        %v412 = vld [vmem:[%s215 + $0x544] sm:$0xff]
        %v413 = vld [vmem:[%s215 + $0x54c] sm:$0xff]
        %v414 = vld [vmem:[%s215 + $0x554] sm:$0xf]
        %v415 = vld [vmem:[%s215 + $0x558] sm:$0xff]
        %v416 = vld [vmem:[%s215 + $0x560] sm:$0xff]
        %v417 = vld [vmem:[%s215 + $0x568] sm:$0xff]
        %v418 = vld [vmem:[%s215 + $0x570] sm:$0xff]
        %v419 = vld [vmem:[%s215 + $0x578] sm:$0xf]
        %v420 = vld [vmem:[%s215 + $0x57c] sm:$0xff]
        %v421 = vld [vmem:[%s215 + $0x584] sm:$0xff]
        %v422 = vld [vmem:[%s215 + $0x58c] sm:$0xff]
        %v423 = vld [vmem:[%s215 + $0x594] sm:$0xff]
        %v424 = vld [vmem:[%s215 + $0x59c] sm:$0xf]
        %v425 = vld [vmem:[%s215 + $0x5a0] sm:$0xff]
        %v426 = vld [vmem:[%s215 + $0x5a8] sm:$0xff]
        %v427 = vld [vmem:[%s215 + $0x5b0] sm:$0xff]
        %v428 = vld [vmem:[%s215 + $0x5b8] sm:$0xff]
        %v429 = vld [vmem:[%s215 + $0x5c0] sm:$0xf]
        %v430 = vld [vmem:[%s215 + $0x5c4] sm:$0xff]
        %v431 = vld [vmem:[%s215 + $0x5cc] sm:$0xff]
        %v432 = vld [vmem:[%s215 + $0x5d4] sm:$0xff]
        %v433 = vld [vmem:[%s215 + $0x5dc] sm:$0xff]
        %v434 = vld [vmem:[%s215 + $0x5e4] sm:$0xf]
        %v435 = vld [vmem:[%s215 + $0x5e8] sm:$0xff]
        %v436 = vld [vmem:[%s215 + $0x5f0] sm:$0xff]
        %v437 = vld [vmem:[%s215 + $0x5f8] sm:$0xff]
        %v438 = vld [vmem:[%s215 + $0x600] sm:$0xff]
        %v439 = vld [vmem:[%s215 + $0x608] sm:$0xf]
        %v440 = vld [vmem:[%s215 + $0x60c] sm:$0xff]
        %v441 = vld [vmem:[%s215 + $0x614] sm:$0xff]
        %v442 = vld [vmem:[%s215 + $0x61c] sm:$0xff]
        %v443 = vld [vmem:[%s215 + $0x624] sm:$0xff]
        %v444 = vld [vmem:[%s215 + $0x62c] sm:$0xf]
        %v445 = vld [vmem:[%s215 + $0x630] sm:$0xff]
        %v446 = vld [vmem:[%s215 + $0x638] sm:$0xff]
        %v447 = vld [vmem:[%s215 + $0x640] sm:$0xff]
        %v448 = vld [vmem:[%s215 + $0x648] sm:$0xff]
        %v449 = vld [vmem:[%s215 + $0x650] sm:$0xf]
        %v450 = vld [vmem:[%s215 + $0x654] sm:$0xff]
        %v451 = vld [vmem:[%s215 + $0x65c] sm:$0xff]
        %v452 = vld [vmem:[%s215 + $0x664] sm:$0xff]
        %v453 = vld [vmem:[%s215 + $0x66c] sm:$0xff]
        %v454 = vld [vmem:[%s215 + $0x674] sm:$0xf]
        %v455 = vld [vmem:[%s215 + $0x678] sm:$0xff]
        %v456 = vld [vmem:[%s215 + $0x680] sm:$0xff]
        %v457 = vld [vmem:[%s215 + $0x688] sm:$0xff]
        %v458 = vld [vmem:[%s215 + $0x690] sm:$0xff]
        %v459 = vld [vmem:[%s215 + $0x698] sm:$0xf]
        %v460 = vld [vmem:[%s215 + $0x69c] sm:$0xff]
        %v461 = vld [vmem:[%s215 + $0x6a4] sm:$0xff]
        %v462 = vld [vmem:[%s215 + $0x6ac] sm:$0xff]
        %v463 = vld [vmem:[%s215 + $0x6b4] sm:$0xff]
        %v464 = vld [vmem:[%s215 + $0x6bc] sm:$0xf]
        %v465 = vld [vmem:[%s215 + $0x6c0] sm:$0xff]
        %v466 = vld [vmem:[%s215 + $0x6c8] sm:$0xff]
        %v467 = vld [vmem:[%s215 + $0x6d0] sm:$0xff]
        %v468 = vld [vmem:[%s215 + $0x6d8] sm:$0xff]
        %v469 = vld [vmem:[%s215 + $0x6e0] sm:$0xf]
        %v470 = vld [vmem:[%s215 + $0x6e4] sm:$0xff]
        %v471 = vld [vmem:[%s215 + $0x6ec] sm:$0xff]
        %v472 = vld [vmem:[%s215 + $0x6f4] sm:$0xff]
        %v473 = vld [vmem:[%s215 + $0x6fc] sm:$0xff]
        %v474 = vld [vmem:[%s215 + $0x704] sm:$0xf]
        %v475 = vld [vmem:[%s215 + $0x708] sm:$0xff]
        %v476 = vld [vmem:[%s215 + $0x710] sm:$0xff]
        %v477 = vld [vmem:[%s215 + $0x718] sm:$0xff]
        %v478 = vld [vmem:[%s215 + $0x720] sm:$0xff]
        %v479 = vld [vmem:[%s215 + $0x728] sm:$0xf]
        %v480 = vld [vmem:[%s215 + $0x72c] sm:$0xff]
        %v481 = vld [vmem:[%s215 + $0x734] sm:$0xff]
        %v482 = vld [vmem:[%s215 + $0x73c] sm:$0xff]
        %v483 = vld [vmem:[%s215 + $0x744] sm:$0xff]
        %v484 = vld [vmem:[%s215 + $0x74c] sm:$0xf]
        %v485 = vld [vmem:[%s215 + $0x750] sm:$0xff]
        %v486 = vld [vmem:[%s215 + $0x758] sm:$0xff]
        %v487 = vld [vmem:[%s215 + $0x760] sm:$0xff]
        %v488 = vld [vmem:[%s215 + $0x768] sm:$0xff]
        %v489 = vld [vmem:[%s215 + $0x770] sm:$0xf]
        %v490 = vld [vmem:[%s215 + $0x774] sm:$0xff]
        %v491 = vld [vmem:[%s215 + $0x77c] sm:$0xff]
        %v492 = vld [vmem:[%s215 + $0x784] sm:$0xff]
        %v493 = vld [vmem:[%s215 + $0x78c] sm:$0xff]
        %v494 = vld [vmem:[%s215 + $0x794] sm:$0xf]
        %v495 = vld [vmem:[%s215 + $0x798] sm:$0xff]
        %v496 = vld [vmem:[%s215 + $0x7a0] sm:$0xff]
        %v497 = vld [vmem:[%s215 + $0x7a8] sm:$0xff]
        %v498 = vld [vmem:[%s215 + $0x7b0] sm:$0xff]
        %v499 = vld [vmem:[%s215 + $0x7b8] sm:$0xf]
        %v500 = vld [vmem:[%s215 + $0x7bc] sm:$0xff]
        %v501 = vld [vmem:[%s215 + $0x7c4] sm:$0xff]
        %v502 = vld [vmem:[%s215 + $0x7cc] sm:$0xff]
        %v503 = vld [vmem:[%s215 + $0x7d4] sm:$0xff]
        %v504 = vld [vmem:[%s215 + $0x7dc] sm:$0xf]
        %v505 = vld [vmem:[%s215 + $0x7e0] sm:$0xff]
        %v506 = vld [vmem:[%s215 + $0x7e8] sm:$0xff]
        %v507 = vld [vmem:[%s215 + $0x7f0] sm:$0xff]
        %v508 = vld [vmem:[%s215 + $0x7f8] sm:$0xff]
        %v509 = vld [vmem:[%s215 + $0x800] sm:$0xf]
        %v510 = vld [vmem:[%s215 + $0x804] sm:$0xff]
        %v511 = vld [vmem:[%s215 + $0x80c] sm:$0xff]
        %v512 = vld [vmem:[%s215 + $0x814] sm:$0xff]
        %v513 = vld [vmem:[%s215 + $0x81c] sm:$0xff]
        %v514 = vld [vmem:[%s215 + $0x824] sm:$0xf]
        %v515 = vld [vmem:[%s215 + $0x828] sm:$0xff]
        %v516 = vld [vmem:[%s215 + $0x830] sm:$0xff]
        %v517 = vld [vmem:[%s215 + $0x838] sm:$0xff]
        %v518 = vld [vmem:[%s215 + $0x840] sm:$0xff]
        %v519 = vld [vmem:[%s215 + $0x848] sm:$0xf]
        %v520 = vld [vmem:[%s215 + $0x84c] sm:$0xff]
        %v521 = vld [vmem:[%s215 + $0x854] sm:$0xff]
        %v522 = vld [vmem:[%s215 + $0x85c] sm:$0xff]
        %v523 = vld [vmem:[%s215 + $0x864] sm:$0xff]
        %v524 = vld [vmem:[%s215 + $0x86c] sm:$0xf]
        %v525 = vld [vmem:[%s215 + $0x870] sm:$0xff]
        %v526 = vld [vmem:[%s215 + $0x878] sm:$0xff]
        %v527 = vld [vmem:[%s215 + $0x880] sm:$0xff]
        %v528 = vld [vmem:[%s215 + $0x888] sm:$0xff]
        %v529 = vld [vmem:[%s215 + $0x890] sm:$0xf]
        %v530 = vld [vmem:[%s215 + $0x894] sm:$0xff]
        %v531 = vld [vmem:[%s215 + $0x89c] sm:$0xff]
        %v532 = vld [vmem:[%s215 + $0x8a4] sm:$0xff]
        %v533 = vld [vmem:[%s215 + $0x8ac] sm:$0xff]
        %v534 = vld [vmem:[%s215 + $0x8b4] sm:$0xf]
        %v535 = vld [vmem:[%s215 + $0x8b8] sm:$0xff]
        %v536 = vld [vmem:[%s215 + $0x8c0] sm:$0xff]
        %v537 = vld [vmem:[%s215 + $0x8c8] sm:$0xff]
        %v538 = vld [vmem:[%s215 + $0x8d0] sm:$0xff]
        %v539 = vld [vmem:[%s215 + $0x8d8] sm:$0xf]
        %v540 = vld [vmem:[%s215 + $0x8dc] sm:$0xff]
        %v541 = vld [vmem:[%s215 + $0x8e4] sm:$0xff]
        %v542 = vld [vmem:[%s215 + $0x8ec] sm:$0xff]
        %v543 = vld [vmem:[%s215 + $0x8f4] sm:$0xff]
        %v544 = vld [vmem:[%s215 + $0x8fc] sm:$0xf]
        %v545 = vld [vmem:[%s1] sm:$0xf]
        %v546 = vld [vmem:[%s1 + $0x4] sm:$0xf]
        %v547 = vld [vmem:[%s1 + $0x8] sm:$0xf]
        %v548 = vld [vmem:[%s1 + $0xc] sm:$0xf]
        %v549 = vld [vmem:[%s1 + $0x10] sm:$0xf]
        %v550 = vld [vmem:[%s1 + $0x14] sm:$0xf]
        %v551 = vld [vmem:[%s1 + $0x18] sm:$0xf]
        %v552 = vld [vmem:[%s1 + $0x1c] sm:$0xf]
        %v553 = vld [vmem:[%s1 + $0x20] sm:$0xf]
        %v554 = vld [vmem:[%s1 + $0x24] sm:$0xf]
        %v555 = vld [vmem:[%s1 + $0x28] sm:$0xf]
        %v556 = vld [vmem:[%s1 + $0x2c] sm:$0xf]
        %v557 = vld [vmem:[%s1 + $0x30] sm:$0xf]
        %v558 = vld [vmem:[%s1 + $0x34] sm:$0xf]
        %v559 = vld [vmem:[%s1 + $0x38] sm:$0xf]
        %v560 = vld [vmem:[%s1 + $0x3c] sm:$0xf]
        %v561 = vld [vmem:[%s1 + $0x40] sm:$0xf]
        %v562 = vld [vmem:[%s1 + $0x44] sm:$0xf]
        %v563 = vld [vmem:[%s1 + $0x48] sm:$0xf]
        %v564 = vld [vmem:[%s1 + $0x4c] sm:$0xf]
        %v565 = vld [vmem:[%s1 + $0x50] sm:$0xf]
        %v566 = vld [vmem:[%s1 + $0x54] sm:$0xf]
        %v567 = vld [vmem:[%s1 + $0x58] sm:$0xf]
        %v568 = vld [vmem:[%s1 + $0x5c] sm:$0xf]
        %v569 = vld [vmem:[%s1 + $0x60] sm:$0xf]
        %v570 = vld [vmem:[%s1 + $0x64] sm:$0xf]
        %v571 = vld [vmem:[%s1 + $0x68] sm:$0xf]
        %v572 = vld [vmem:[%s1 + $0x6c] sm:$0xf]
        %v573 = vld [vmem:[%s1 + $0x70] sm:$0xf]
        %v574 = vld [vmem:[%s1 + $0x74] sm:$0xf]
        %v575 = vld [vmem:[%s1 + $0x78] sm:$0xf]
        %v576 = vld [vmem:[%s1 + $0x7c] sm:$0xf]
        %v577 = vld [vmem:[%s1 + $0x80] sm:$0xf]
        %v578 = vld [vmem:[%s1 + $0x84] sm:$0xf]
        %v579 = vld [vmem:[%s1 + $0x88] sm:$0xf]
        %v580 = vld [vmem:[%s1 + $0x8c] sm:$0xf]
        %v581 = vld [vmem:[%s1 + $0x90] sm:$0xf]
        %v582 = vld [vmem:[%s1 + $0x94] sm:$0xf]
        %v583 = vld [vmem:[%s1 + $0x98] sm:$0xf]
        %v584 = vld [vmem:[%s1 + $0x9c] sm:$0xf]
        %v585 = vld [vmem:[%s1 + $0xa0] sm:$0xf]
        %v586 = vld [vmem:[%s1 + $0xa4] sm:$0xf]
        %v587 = vld [vmem:[%s1 + $0xa8] sm:$0xf]
        %v588 = vld [vmem:[%s1 + $0xac] sm:$0xf]
        %v589 = vld [vmem:[%s1 + $0xb0] sm:$0xf]
        %v590 = vld [vmem:[%s1 + $0xb4] sm:$0xf]
        %v591 = vld [vmem:[%s1 + $0xb8] sm:$0xf]
        %v592 = vld [vmem:[%s1 + $0xbc] sm:$0xf]
        %v593 = vld [vmem:[%s1 + $0xc0] sm:$0xf]
        %v594 = vld [vmem:[%s1 + $0xc4] sm:$0xf]
        %v595 = vld [vmem:[%s1 + $0xc8] sm:$0xf]
        %v596 = vld [vmem:[%s1 + $0xcc] sm:$0xf]
        %v597 = vld [vmem:[%s1 + $0xd0] sm:$0xf]
        %v598 = vld [vmem:[%s1 + $0xd4] sm:$0xf]
        %v599 = vld [vmem:[%s1 + $0xd8] sm:$0xf]
        %v600 = vld [vmem:[%s1 + $0xdc] sm:$0xf]
        %v601 = vld [vmem:[%s1 + $0xe0] sm:$0xf]
        %v602 = vld [vmem:[%s1 + $0xe4] sm:$0xf]
        %v603 = vld [vmem:[%s1 + $0xe8] sm:$0xf]
        %v604 = vld [vmem:[%s1 + $0xec] sm:$0xf]
        %v605 = vld [vmem:[%s1 + $0xf0] sm:$0xf]
        %v606 = vld [vmem:[%s1 + $0xf4] sm:$0xf]
        %v607 = vld [vmem:[%s1 + $0xf8] sm:$0xf]
        %v608 = vld [vmem:[%s1 + $0xfc] sm:$0xf]
        %v609 = vld [vmem:[%s1 + $0x100] sm:$0xf]
        %v610 = vld [vmem:[%s1 + $0x104] sm:$0xf]
        %v611 = vld [vmem:[%s1 + $0x108] sm:$0xf]
        %v612 = vld [vmem:[%s1 + $0x10c] sm:$0xf]
        %v613 = vld [vmem:[%s1 + $0x110] sm:$0xf]
        %v614 = vld [vmem:[%s1 + $0x114] sm:$0xf]
        %v615 = vld [vmem:[%s1 + $0x118] sm:$0xf]
        %v616 = vld [vmem:[%s1 + $0x11c] sm:$0xf]
        %v617 = vld [vmem:[%s1 + $0x120] sm:$0xf]
        %v618 = vld [vmem:[%s1 + $0x124] sm:$0xf]
        %v619 = vld [vmem:[%s1 + $0x128] sm:$0xf]
        %v620 = vld [vmem:[%s1 + $0x12c] sm:$0xf]
        %v621 = vld [vmem:[%s1 + $0x130] sm:$0xf]
        %v622 = vld [vmem:[%s1 + $0x134] sm:$0xf]
        %v623 = vld [vmem:[%s1 + $0x138] sm:$0xf]
        %v624 = vld [vmem:[%s1 + $0x13c] sm:$0xf]
        %v625 = vld [vmem:[%s1 + $0x140] sm:$0xf]
        %v626 = vld [vmem:[%s1 + $0x144] sm:$0xf]
        %v627 = vld [vmem:[%s1 + $0x148] sm:$0xf]
        %v628 = vld [vmem:[%s1 + $0x14c] sm:$0xf]
        %v629 = vld [vmem:[%s1 + $0x150] sm:$0xf]
        %v630 = vld [vmem:[%s1 + $0x154] sm:$0xf]
        %v631 = vld [vmem:[%s1 + $0x158] sm:$0xf]
        %v632 = vld [vmem:[%s1 + $0x15c] sm:$0xf]
        %v633 = vld [vmem:[%s1 + $0x160] sm:$0xf]
        %v634 = vld [vmem:[%s1 + $0x164] sm:$0xf]
        %v635 = vld [vmem:[%s1 + $0x168] sm:$0xf]
        %v636 = vld [vmem:[%s1 + $0x16c] sm:$0xf]
        %v637 = vld [vmem:[%s1 + $0x170] sm:$0xf]
        %v638 = vld [vmem:[%s1 + $0x174] sm:$0xf]
        %v639 = vld [vmem:[%s1 + $0x178] sm:$0xf]
        %v640 = vld [vmem:[%s1 + $0x17c] sm:$0xf]
        %v641 = vld [vmem:[%s1 + $0x180] sm:$0xf]
        %v642 = vld [vmem:[%s1 + $0x184] sm:$0xf]
        %v643 = vld [vmem:[%s1 + $0x188] sm:$0xf]
        %v644 = vld [vmem:[%s1 + $0x18c] sm:$0xf]
        %v645 = vld [vmem:[%s1 + $0x190] sm:$0xf]
        %v646 = vld [vmem:[%s1 + $0x194] sm:$0xf]
        %v647 = vld [vmem:[%s1 + $0x198] sm:$0xf]
        %v648 = vld [vmem:[%s1 + $0x19c] sm:$0xf]
        %v649 = vld [vmem:[%s1 + $0x1a0] sm:$0xf]
        %v650 = vld [vmem:[%s1 + $0x1a4] sm:$0xf]
        %v651 = vld [vmem:[%s1 + $0x1a8] sm:$0xf]
        %v652 = vld [vmem:[%s1 + $0x1ac] sm:$0xf]
        %v653 = vld [vmem:[%s1 + $0x1b0] sm:$0xf]
        %v654 = vld [vmem:[%s1 + $0x1b4] sm:$0xf]
        %v655 = vld [vmem:[%s1 + $0x1b8] sm:$0xf]
        %v656 = vld [vmem:[%s1 + $0x1bc] sm:$0xf]
        %v657 = vld [vmem:[%s1 + $0x1c0] sm:$0xf]
        %v658 = vld [vmem:[%s1 + $0x1c4] sm:$0xf]
        %v659 = vld [vmem:[%s1 + $0x1c8] sm:$0xf]
        %v660 = vld [vmem:[%s1 + $0x1cc] sm:$0xf]
        %v661 = vld [vmem:[%s1 + $0x1d0] sm:$0xf]
        %v662 = vld [vmem:[%s1 + $0x1d4] sm:$0xf]
        %v663 = vld [vmem:[%s1 + $0x1d8] sm:$0xf]
        %v664 = vld [vmem:[%s1 + $0x1dc] sm:$0xf]
        %v665 = vld [vmem:[%s1 + $0x1e0] sm:$0xf]
        %v666 = vld [vmem:[%s1 + $0x1e4] sm:$0xf]
        %v667 = vld [vmem:[%s1 + $0x1e8] sm:$0xf]
        %v668 = vld [vmem:[%s1 + $0x1ec] sm:$0xf]
        %v669 = vld [vmem:[%s1 + $0x1f0] sm:$0xf]
        %v670 = vld [vmem:[%s1 + $0x1f4] sm:$0xf]
        %v671 = vld [vmem:[%s1 + $0x1f8] sm:$0xf]
        %v672 = vld [vmem:[%s1 + $0x1fc] sm:$0xf]
        %v673 = vld [vmem:[%s1 + $0x200] sm:$0xf]
        %v674 = vld [vmem:[%s1 + $0x204] sm:$0xf]
        %v675 = vld [vmem:[%s1 + $0x208] sm:$0xf]
        %v676 = vld [vmem:[%s1 + $0x20c] sm:$0xf]
        %v677 = vld [vmem:[%s1 + $0x210] sm:$0xf]
        %v678 = vld [vmem:[%s1 + $0x214] sm:$0xf]
        %v679 = vld [vmem:[%s1 + $0x218] sm:$0xf]
        %v680 = vld [vmem:[%s1 + $0x21c] sm:$0xf]
        %v681 = vld [vmem:[%s1 + $0x220] sm:$0xf]
        %v682 = vld [vmem:[%s1 + $0x224] sm:$0xf]
        %v683 = vld [vmem:[%s1 + $0x228] sm:$0xf]
        %v684 = vld [vmem:[%s1 + $0x22c] sm:$0xf]
        %v685 = vld [vmem:[%s1 + $0x230] sm:$0xf]
        %v686 = vld [vmem:[%s1 + $0x234] sm:$0xf]
        %v687 = vld [vmem:[%s1 + $0x238] sm:$0xf]
        %v688 = vld [vmem:[%s1 + $0x23c] sm:$0xf]
        %v689 = vld [vmem:[%s2] sm:$0x1]
        %v691 = vlaneseq
        %v692 = vshrl.u32 %v691, 7
        %v693 = vsub.s32 0, %v692
        %v694 = vrot.slane %v689, %v693
        %v1016 = vunpack.c.l.b16 %v225
        %v1017 = vunpack.c.h.b16 %v225
        %v1018 = vunpack.c.l.b16 %v226
        %v1019 = vunpack.c.h.b16 %v226
        %v1020 = vunpack.c.l.b16 %v227
        %v1021 = vunpack.c.h.b16 %v227
        %v1022 = vunpack.c.l.b16 %v228
        %v1023 = vunpack.c.h.b16 %v228
        %v1024 = vunpack.c.l.b16 %v229
        %v1025 = vunpack.c.l.b16 %v230
        %v1026 = vunpack.c.h.b16 %v230
        %v1027 = vunpack.c.l.b16 %v231
        %v1028 = vunpack.c.h.b16 %v231
        %v1029 = vunpack.c.l.b16 %v232
        %v1030 = vunpack.c.h.b16 %v232
        %v1031 = vunpack.c.l.b16 %v233
        %v1032 = vunpack.c.h.b16 %v233
        %v1033 = vunpack.c.l.b16 %v234
        %v1034 = vunpack.c.l.b16 %v235
        %v1035 = vunpack.c.h.b16 %v235
        %v1036 = vunpack.c.l.b16 %v236
        %v1037 = vunpack.c.h.b16 %v236
        %v1038 = vunpack.c.l.b16 %v237
        %v1039 = vunpack.c.h.b16 %v237
        %v1040 = vunpack.c.l.b16 %v238
        %v1041 = vunpack.c.h.b16 %v238
        %v1042 = vunpack.c.l.b16 %v239
        %v1043 = vunpack.c.l.b16 %v240
        %v1044 = vunpack.c.h.b16 %v240
        %v1045 = vunpack.c.l.b16 %v241
        %v1046 = vunpack.c.h.b16 %v241
        %v1047 = vunpack.c.l.b16 %v242
        %v1048 = vunpack.c.h.b16 %v242
        %v1049 = vunpack.c.l.b16 %v243
        %v1050 = vunpack.c.h.b16 %v243
        %v1051 = vunpack.c.l.b16 %v244
        %v1052 = vunpack.c.l.b16 %v245
        %v1053 = vunpack.c.h.b16 %v245
        %v1054 = vunpack.c.l.b16 %v246
        %v1055 = vunpack.c.h.b16 %v246
        %v1056 = vunpack.c.l.b16 %v247
        %v1057 = vunpack.c.h.b16 %v247
        %v1058 = vunpack.c.l.b16 %v248
        %v1059 = vunpack.c.h.b16 %v248
        %v1060 = vunpack.c.l.b16 %v249
        %v1061 = vunpack.c.l.b16 %v250
        %v1062 = vunpack.c.h.b16 %v250
        %v1063 = vunpack.c.l.b16 %v251
        %v1064 = vunpack.c.h.b16 %v251
        %v1065 = vunpack.c.l.b16 %v252
        %v1066 = vunpack.c.h.b16 %v252
        %v1067 = vunpack.c.l.b16 %v253
        %v1068 = vunpack.c.h.b16 %v253
        %v1069 = vunpack.c.l.b16 %v254
        %v1070 = vunpack.c.l.b16 %v255
        %v1071 = vunpack.c.h.b16 %v255
        %v1072 = vunpack.c.l.b16 %v256
        %v1073 = vunpack.c.h.b16 %v256
        %v1074 = vunpack.c.l.b16 %v257
        %v1075 = vunpack.c.h.b16 %v257
        %v1076 = vunpack.c.l.b16 %v258
        %v1077 = vunpack.c.h.b16 %v258
        %v1078 = vunpack.c.l.b16 %v259
        %v1079 = vunpack.c.l.b16 %v260
        %v1080 = vunpack.c.h.b16 %v260
        %v1081 = vunpack.c.l.b16 %v261
        %v1082 = vunpack.c.h.b16 %v261
        %v1083 = vunpack.c.l.b16 %v262
        %v1084 = vunpack.c.h.b16 %v262
        %v1085 = vunpack.c.l.b16 %v263
        %v1086 = vunpack.c.h.b16 %v263
        %v1087 = vunpack.c.l.b16 %v264
        %v1088 = vunpack.c.l.b16 %v265
        %v1089 = vunpack.c.h.b16 %v265
        %v1090 = vunpack.c.l.b16 %v266
        %v1091 = vunpack.c.h.b16 %v266
        %v1092 = vunpack.c.l.b16 %v267
        %v1093 = vunpack.c.h.b16 %v267
        %v1094 = vunpack.c.l.b16 %v268
        %v1095 = vunpack.c.h.b16 %v268
        %v1096 = vunpack.c.l.b16 %v269
        %v1097 = vunpack.c.l.b16 %v270
        %v1098 = vunpack.c.h.b16 %v270
        %v1099 = vunpack.c.l.b16 %v271
        %v1100 = vunpack.c.h.b16 %v271
        %v1101 = vunpack.c.l.b16 %v272
        %v1102 = vunpack.c.h.b16 %v272
        %v1103 = vunpack.c.l.b16 %v273
        %v1104 = vunpack.c.h.b16 %v273
        %v1105 = vunpack.c.l.b16 %v274
        %v1106 = vunpack.c.l.b16 %v275
        %v1107 = vunpack.c.h.b16 %v275
        %v1108 = vunpack.c.l.b16 %v276
        %v1109 = vunpack.c.h.b16 %v276
        %v1110 = vunpack.c.l.b16 %v277
        %v1111 = vunpack.c.h.b16 %v277
        %v1112 = vunpack.c.l.b16 %v278
        %v1113 = vunpack.c.h.b16 %v278
        %v1114 = vunpack.c.l.b16 %v279
        %v1115 = vunpack.c.l.b16 %v280
        %v1116 = vunpack.c.h.b16 %v280
        %v1117 = vunpack.c.l.b16 %v281
        %v1118 = vunpack.c.h.b16 %v281
        %v1119 = vunpack.c.l.b16 %v282
        %v1120 = vunpack.c.h.b16 %v282
        %v1121 = vunpack.c.l.b16 %v283
        %v1122 = vunpack.c.h.b16 %v283
        %v1123 = vunpack.c.l.b16 %v284
        %v1124 = vunpack.c.l.b16 %v285
        %v1125 = vunpack.c.h.b16 %v285
        %v1126 = vunpack.c.l.b16 %v286
        %v1127 = vunpack.c.h.b16 %v286
        %v1128 = vunpack.c.l.b16 %v287
        %v1129 = vunpack.c.h.b16 %v287
        %v1130 = vunpack.c.l.b16 %v288
        %v1131 = vunpack.c.h.b16 %v288
        %v1132 = vunpack.c.l.b16 %v289
        %v1133 = vunpack.c.l.b16 %v290
        %v1134 = vunpack.c.h.b16 %v290
        %v1135 = vunpack.c.l.b16 %v291
        %v1136 = vunpack.c.h.b16 %v291
        %v1137 = vunpack.c.l.b16 %v292
        %v1138 = vunpack.c.h.b16 %v292
        %v1139 = vunpack.c.l.b16 %v293
        %v1140 = vunpack.c.h.b16 %v293
        %v1141 = vunpack.c.l.b16 %v294
        %v1142 = vunpack.c.l.b16 %v295
        %v1143 = vunpack.c.h.b16 %v295
        %v1144 = vunpack.c.l.b16 %v296
        %v1145 = vunpack.c.h.b16 %v296
        %v1146 = vunpack.c.l.b16 %v297
        %v1147 = vunpack.c.h.b16 %v297
        %v1148 = vunpack.c.l.b16 %v298
        %v1149 = vunpack.c.h.b16 %v298
        %v1150 = vunpack.c.l.b16 %v299
        %v1151 = vunpack.c.l.b16 %v300
        %v1152 = vunpack.c.h.b16 %v300
        %v1153 = vunpack.c.l.b16 %v301
        %v1154 = vunpack.c.h.b16 %v301
        %v1155 = vunpack.c.l.b16 %v302
        %v1156 = vunpack.c.h.b16 %v302
        %v1157 = vunpack.c.l.b16 %v303
        %v1158 = vunpack.c.h.b16 %v303
        %v1159 = vunpack.c.l.b16 %v304
        %v1160 = vunpack.c.l.b16 %v305
        %v1161 = vunpack.c.h.b16 %v305
        %v1162 = vunpack.c.l.b16 %v306
        %v1163 = vunpack.c.h.b16 %v306
        %v1164 = vunpack.c.l.b16 %v307
        %v1165 = vunpack.c.h.b16 %v307
        %v1166 = vunpack.c.l.b16 %v308
        %v1167 = vunpack.c.h.b16 %v308
        %v1168 = vunpack.c.l.b16 %v309
        %v1169 = vunpack.c.l.b16 %v310
        %v1170 = vunpack.c.h.b16 %v310
        %v1171 = vunpack.c.l.b16 %v311
        %v1172 = vunpack.c.h.b16 %v311
        %v1173 = vunpack.c.l.b16 %v312
        %v1174 = vunpack.c.h.b16 %v312
        %v1175 = vunpack.c.l.b16 %v313
        %v1176 = vunpack.c.h.b16 %v313
        %v1177 = vunpack.c.l.b16 %v314
        %v1178 = vunpack.c.l.b16 %v315
        %v1179 = vunpack.c.h.b16 %v315
        %v1180 = vunpack.c.l.b16 %v316
        %v1181 = vunpack.c.h.b16 %v316
        %v1182 = vunpack.c.l.b16 %v317
        %v1183 = vunpack.c.h.b16 %v317
        %v1184 = vunpack.c.l.b16 %v318
        %v1185 = vunpack.c.h.b16 %v318
        %v1186 = vunpack.c.l.b16 %v319
        %v1187 = vunpack.c.l.b16 %v320
        %v1188 = vunpack.c.h.b16 %v320
        %v1189 = vunpack.c.l.b16 %v321
        %v1190 = vunpack.c.h.b16 %v321
        %v1191 = vunpack.c.l.b16 %v322
        %v1192 = vunpack.c.h.b16 %v322
        %v1193 = vunpack.c.l.b16 %v323
        %v1194 = vunpack.c.h.b16 %v323
        %v1195 = vunpack.c.l.b16 %v324
        %v1196 = vunpack.c.l.b16 %v325
        %v1197 = vunpack.c.h.b16 %v325
        %v1198 = vunpack.c.l.b16 %v326
        %v1199 = vunpack.c.h.b16 %v326
        %v1200 = vunpack.c.l.b16 %v327
        %v1201 = vunpack.c.h.b16 %v327
        %v1202 = vunpack.c.l.b16 %v328
        %v1203 = vunpack.c.h.b16 %v328
        %v1204 = vunpack.c.l.b16 %v329
        %v1205 = vunpack.c.l.b16 %v330
        %v1206 = vunpack.c.h.b16 %v330
        %v1207 = vunpack.c.l.b16 %v331
        %v1208 = vunpack.c.h.b16 %v331
        %v1209 = vunpack.c.l.b16 %v332
        %v1210 = vunpack.c.h.b16 %v332
        %v1211 = vunpack.c.l.b16 %v333
        %v1212 = vunpack.c.h.b16 %v333
        %v1213 = vunpack.c.l.b16 %v334
        %v1214 = vunpack.c.l.b16 %v335
        %v1215 = vunpack.c.h.b16 %v335
        %v1216 = vunpack.c.l.b16 %v336
        %v1217 = vunpack.c.h.b16 %v336
        %v1218 = vunpack.c.l.b16 %v337
        %v1219 = vunpack.c.h.b16 %v337
        %v1220 = vunpack.c.l.b16 %v338
        %v1221 = vunpack.c.h.b16 %v338
        %v1222 = vunpack.c.l.b16 %v339
        %v1223 = vunpack.c.l.b16 %v340
        %v1224 = vunpack.c.h.b16 %v340
        %v1225 = vunpack.c.l.b16 %v341
        %v1226 = vunpack.c.h.b16 %v341
        %v1227 = vunpack.c.l.b16 %v342
        %v1228 = vunpack.c.h.b16 %v342
        %v1229 = vunpack.c.l.b16 %v343
        %v1230 = vunpack.c.h.b16 %v343
        %v1231 = vunpack.c.l.b16 %v344
        %v1232 = vunpack.c.l.b16 %v345
        %v1233 = vunpack.c.h.b16 %v345
        %v1234 = vunpack.c.l.b16 %v346
        %v1235 = vunpack.c.h.b16 %v346
        %v1236 = vunpack.c.l.b16 %v347
        %v1237 = vunpack.c.h.b16 %v347
        %v1238 = vunpack.c.l.b16 %v348
        %v1239 = vunpack.c.h.b16 %v348
        %v1240 = vunpack.c.l.b16 %v349
        %v1241 = vunpack.c.l.b16 %v350
        %v1242 = vunpack.c.h.b16 %v350
        %v1243 = vunpack.c.l.b16 %v351
        %v1244 = vunpack.c.h.b16 %v351
        %v1245 = vunpack.c.l.b16 %v352
        %v1246 = vunpack.c.h.b16 %v352
        %v1247 = vunpack.c.l.b16 %v353
        %v1248 = vunpack.c.h.b16 %v353
        %v1249 = vunpack.c.l.b16 %v354
        %v1250 = vunpack.c.l.b16 %v355
        %v1251 = vunpack.c.h.b16 %v355
        %v1252 = vunpack.c.l.b16 %v356
        %v1253 = vunpack.c.h.b16 %v356
        %v1254 = vunpack.c.l.b16 %v357
        %v1255 = vunpack.c.h.b16 %v357
        %v1256 = vunpack.c.l.b16 %v358
        %v1257 = vunpack.c.h.b16 %v358
        %v1258 = vunpack.c.l.b16 %v359
        %v1259 = vunpack.c.l.b16 %v360
        %v1260 = vunpack.c.h.b16 %v360
        %v1261 = vunpack.c.l.b16 %v361
        %v1262 = vunpack.c.h.b16 %v361
        %v1263 = vunpack.c.l.b16 %v362
        %v1264 = vunpack.c.h.b16 %v362
        %v1265 = vunpack.c.l.b16 %v363
        %v1266 = vunpack.c.h.b16 %v363
        %v1267 = vunpack.c.l.b16 %v364
        %v1268 = vunpack.c.l.b16 %v365
        %v1269 = vunpack.c.h.b16 %v365
        %v1270 = vunpack.c.l.b16 %v366
        %v1271 = vunpack.c.h.b16 %v366
        %v1272 = vunpack.c.l.b16 %v367
        %v1273 = vunpack.c.h.b16 %v367
        %v1274 = vunpack.c.l.b16 %v368
        %v1275 = vunpack.c.h.b16 %v368
        %v1276 = vunpack.c.l.b16 %v369
        %v1277 = vunpack.c.l.b16 %v370
        %v1278 = vunpack.c.h.b16 %v370
        %v1279 = vunpack.c.l.b16 %v371
        %v1280 = vunpack.c.h.b16 %v371
        %v1281 = vunpack.c.l.b16 %v372
        %v1282 = vunpack.c.h.b16 %v372
        %v1283 = vunpack.c.l.b16 %v373
        %v1284 = vunpack.c.h.b16 %v373
        %v1285 = vunpack.c.l.b16 %v374
        %v1286 = vunpack.c.l.b16 %v375
        %v1287 = vunpack.c.h.b16 %v375
        %v1288 = vunpack.c.l.b16 %v376
        %v1289 = vunpack.c.h.b16 %v376
        %v1290 = vunpack.c.l.b16 %v377
        %v1291 = vunpack.c.h.b16 %v377
        %v1292 = vunpack.c.l.b16 %v378
        %v1293 = vunpack.c.h.b16 %v378
        %v1294 = vunpack.c.l.b16 %v379
        %v1295 = vunpack.c.l.b16 %v380
        %v1296 = vunpack.c.h.b16 %v380
        %v1297 = vunpack.c.l.b16 %v381
        %v1298 = vunpack.c.h.b16 %v381
        %v1299 = vunpack.c.l.b16 %v382
        %v1300 = vunpack.c.h.b16 %v382
        %v1301 = vunpack.c.l.b16 %v383
        %v1302 = vunpack.c.h.b16 %v383
        %v1303 = vunpack.c.l.b16 %v384
        %v1304 = vunpack.c.l.b16 %v385
        %v1305 = vunpack.c.h.b16 %v385
        %v1306 = vunpack.c.l.b16 %v386
        %v1307 = vunpack.c.h.b16 %v386
        %v1308 = vunpack.c.l.b16 %v387
        %v1309 = vunpack.c.h.b16 %v387
        %v1310 = vunpack.c.l.b16 %v388
        %v1311 = vunpack.c.h.b16 %v388
        %v1312 = vunpack.c.l.b16 %v389
        %v1313 = vunpack.c.l.b16 %v390
        %v1314 = vunpack.c.h.b16 %v390
        %v1315 = vunpack.c.l.b16 %v391
        %v1316 = vunpack.c.h.b16 %v391
        %v1317 = vunpack.c.l.b16 %v392
        %v1318 = vunpack.c.h.b16 %v392
        %v1319 = vunpack.c.l.b16 %v393
        %v1320 = vunpack.c.h.b16 %v393
        %v1321 = vunpack.c.l.b16 %v394
        %v1322 = vunpack.c.l.b16 %v395
        %v1323 = vunpack.c.h.b16 %v395
        %v1324 = vunpack.c.l.b16 %v396
        %v1325 = vunpack.c.h.b16 %v396
        %v1326 = vunpack.c.l.b16 %v397
        %v1327 = vunpack.c.h.b16 %v397
        %v1328 = vunpack.c.l.b16 %v398
        %v1329 = vunpack.c.h.b16 %v398
        %v1330 = vunpack.c.l.b16 %v399
        %v1331 = vunpack.c.l.b16 %v400
        %v1332 = vunpack.c.h.b16 %v400
        %v1333 = vunpack.c.l.b16 %v401
        %v1334 = vunpack.c.h.b16 %v401
        %v1335 = vunpack.c.l.b16 %v402
        %v1336 = vunpack.c.h.b16 %v402
        %v1337 = vunpack.c.l.b16 %v403
        %v1338 = vunpack.c.h.b16 %v403
        %v1339 = vunpack.c.l.b16 %v404
        %v1340 = vunpack.c.l.b16 %v405
        %v1341 = vunpack.c.h.b16 %v405
        %v1342 = vunpack.c.l.b16 %v406
        %v1343 = vunpack.c.h.b16 %v406
        %v1344 = vunpack.c.l.b16 %v407
        %v1345 = vunpack.c.h.b16 %v407
        %v1346 = vunpack.c.l.b16 %v408
        %v1347 = vunpack.c.h.b16 %v408
        %v1348 = vunpack.c.l.b16 %v409
        %v1349 = vunpack.c.l.b16 %v410
        %v1350 = vunpack.c.h.b16 %v410
        %v1351 = vunpack.c.l.b16 %v411
        %v1352 = vunpack.c.h.b16 %v411
        %v1353 = vunpack.c.l.b16 %v412
        %v1354 = vunpack.c.h.b16 %v412
        %v1355 = vunpack.c.l.b16 %v413
        %v1356 = vunpack.c.h.b16 %v413
        %v1357 = vunpack.c.l.b16 %v414
        %v1358 = vunpack.c.l.b16 %v415
        %v1359 = vunpack.c.h.b16 %v415
        %v1360 = vunpack.c.l.b16 %v416
        %v1361 = vunpack.c.h.b16 %v416
        %v1362 = vunpack.c.l.b16 %v417
        %v1363 = vunpack.c.h.b16 %v417
        %v1364 = vunpack.c.l.b16 %v418
        %v1365 = vunpack.c.h.b16 %v418
        %v1366 = vunpack.c.l.b16 %v419
        %v1367 = vunpack.c.l.b16 %v420
        %v1368 = vunpack.c.h.b16 %v420
        %v1369 = vunpack.c.l.b16 %v421
        %v1370 = vunpack.c.h.b16 %v421
        %v1371 = vunpack.c.l.b16 %v422
        %v1372 = vunpack.c.h.b16 %v422
        %v1373 = vunpack.c.l.b16 %v423
        %v1374 = vunpack.c.h.b16 %v423
        %v1375 = vunpack.c.l.b16 %v424
        %v1376 = vunpack.c.l.b16 %v425
        %v1377 = vunpack.c.h.b16 %v425
        %v1378 = vunpack.c.l.b16 %v426
        %v1379 = vunpack.c.h.b16 %v426
        %v1380 = vunpack.c.l.b16 %v427
        %v1381 = vunpack.c.h.b16 %v427
        %v1382 = vunpack.c.l.b16 %v428
        %v1383 = vunpack.c.h.b16 %v428
        %v1384 = vunpack.c.l.b16 %v429
        %v1385 = vunpack.c.l.b16 %v430
        %v1386 = vunpack.c.h.b16 %v430
        %v1387 = vunpack.c.l.b16 %v431
        %v1388 = vunpack.c.h.b16 %v431
        %v1389 = vunpack.c.l.b16 %v432
        %v1390 = vunpack.c.h.b16 %v432
        %v1391 = vunpack.c.l.b16 %v433
        %v1392 = vunpack.c.h.b16 %v433
        %v1393 = vunpack.c.l.b16 %v434
        %v1394 = vunpack.c.l.b16 %v435
        %v1395 = vunpack.c.h.b16 %v435
        %v1396 = vunpack.c.l.b16 %v436
        %v1397 = vunpack.c.h.b16 %v436
        %v1398 = vunpack.c.l.b16 %v437
        %v1399 = vunpack.c.h.b16 %v437
        %v1400 = vunpack.c.l.b16 %v438
        %v1401 = vunpack.c.h.b16 %v438
        %v1402 = vunpack.c.l.b16 %v439
        %v1403 = vunpack.c.l.b16 %v440
        %v1404 = vunpack.c.h.b16 %v440
        %v1405 = vunpack.c.l.b16 %v441
        %v1406 = vunpack.c.h.b16 %v441
        %v1407 = vunpack.c.l.b16 %v442
        %v1408 = vunpack.c.h.b16 %v442
        %v1409 = vunpack.c.l.b16 %v443
        %v1410 = vunpack.c.h.b16 %v443
        %v1411 = vunpack.c.l.b16 %v444
        %v1412 = vunpack.c.l.b16 %v445
        %v1413 = vunpack.c.h.b16 %v445
        %v1414 = vunpack.c.l.b16 %v446
        %v1415 = vunpack.c.h.b16 %v446
        %v1416 = vunpack.c.l.b16 %v447
        %v1417 = vunpack.c.h.b16 %v447
        %v1418 = vunpack.c.l.b16 %v448
        %v1419 = vunpack.c.h.b16 %v448
        %v1420 = vunpack.c.l.b16 %v449
        %v1421 = vunpack.c.l.b16 %v450
        %v1422 = vunpack.c.h.b16 %v450
        %v1423 = vunpack.c.l.b16 %v451
        %v1424 = vunpack.c.h.b16 %v451
        %v1425 = vunpack.c.l.b16 %v452
        %v1426 = vunpack.c.h.b16 %v452
        %v1427 = vunpack.c.l.b16 %v453
        %v1428 = vunpack.c.h.b16 %v453
        %v1429 = vunpack.c.l.b16 %v454
        %v1430 = vunpack.c.l.b16 %v455
        %v1431 = vunpack.c.h.b16 %v455
        %v1432 = vunpack.c.l.b16 %v456
        %v1433 = vunpack.c.h.b16 %v456
        %v1434 = vunpack.c.l.b16 %v457
        %v1435 = vunpack.c.h.b16 %v457
        %v1436 = vunpack.c.l.b16 %v458
        %v1437 = vunpack.c.h.b16 %v458
        %v1438 = vunpack.c.l.b16 %v459
        %v1439 = vunpack.c.l.b16 %v460
        %v1440 = vunpack.c.h.b16 %v460
        %v1441 = vunpack.c.l.b16 %v461
        %v1442 = vunpack.c.h.b16 %v461
        %v1443 = vunpack.c.l.b16 %v462
        %v1444 = vunpack.c.h.b16 %v462
        %v1445 = vunpack.c.l.b16 %v463
        %v1446 = vunpack.c.h.b16 %v463
        %v1447 = vunpack.c.l.b16 %v464
        %v1448 = vunpack.c.l.b16 %v465
        %v1449 = vunpack.c.h.b16 %v465
        %v1450 = vunpack.c.l.b16 %v466
        %v1451 = vunpack.c.h.b16 %v466
        %v1452 = vunpack.c.l.b16 %v467
        %v1453 = vunpack.c.h.b16 %v467
        %v1454 = vunpack.c.l.b16 %v468
        %v1455 = vunpack.c.h.b16 %v468
        %v1456 = vunpack.c.l.b16 %v469
        %v1457 = vunpack.c.l.b16 %v470
        %v1458 = vunpack.c.h.b16 %v470
        %v1459 = vunpack.c.l.b16 %v471
        %v1460 = vunpack.c.h.b16 %v471
        %v1461 = vunpack.c.l.b16 %v472
        %v1462 = vunpack.c.h.b16 %v472
        %v1463 = vunpack.c.l.b16 %v473
        %v1464 = vunpack.c.h.b16 %v473
        %v1465 = vunpack.c.l.b16 %v474
        %v1466 = vunpack.c.l.b16 %v475
        %v1467 = vunpack.c.h.b16 %v475
        %v1468 = vunpack.c.l.b16 %v476
        %v1469 = vunpack.c.h.b16 %v476
        %v1470 = vunpack.c.l.b16 %v477
        %v1471 = vunpack.c.h.b16 %v477
        %v1472 = vunpack.c.l.b16 %v478
        %v1473 = vunpack.c.h.b16 %v478
        %v1474 = vunpack.c.l.b16 %v479
        %v1475 = vunpack.c.l.b16 %v480
        %v1476 = vunpack.c.h.b16 %v480
        %v1477 = vunpack.c.l.b16 %v481
        %v1478 = vunpack.c.h.b16 %v481
        %v1479 = vunpack.c.l.b16 %v482
        %v1480 = vunpack.c.h.b16 %v482
        %v1481 = vunpack.c.l.b16 %v483
        %v1482 = vunpack.c.h.b16 %v483
        %v1483 = vunpack.c.l.b16 %v484
        %v1484 = vunpack.c.l.b16 %v485
        %v1485 = vunpack.c.h.b16 %v485
        %v1486 = vunpack.c.l.b16 %v486
        %v1487 = vunpack.c.h.b16 %v486
        %v1488 = vunpack.c.l.b16 %v487
        %v1489 = vunpack.c.h.b16 %v487
        %v1490 = vunpack.c.l.b16 %v488
        %v1491 = vunpack.c.h.b16 %v488
        %v1492 = vunpack.c.l.b16 %v489
        %v1493 = vunpack.c.l.b16 %v490
        %v1494 = vunpack.c.h.b16 %v490
        %v1495 = vunpack.c.l.b16 %v491
        %v1496 = vunpack.c.h.b16 %v491
        %v1497 = vunpack.c.l.b16 %v492
        %v1498 = vunpack.c.h.b16 %v492
        %v1499 = vunpack.c.l.b16 %v493
        %v1500 = vunpack.c.h.b16 %v493
        %v1501 = vunpack.c.l.b16 %v494
        %v1502 = vunpack.c.l.b16 %v495
        %v1503 = vunpack.c.h.b16 %v495
        %v1504 = vunpack.c.l.b16 %v496
        %v1505 = vunpack.c.h.b16 %v496
        %v1506 = vunpack.c.l.b16 %v497
        %v1507 = vunpack.c.h.b16 %v497
        %v1508 = vunpack.c.l.b16 %v498
        %v1509 = vunpack.c.h.b16 %v498
        %v1510 = vunpack.c.l.b16 %v499
        %v1511 = vunpack.c.l.b16 %v500
        %v1512 = vunpack.c.h.b16 %v500
        %v1513 = vunpack.c.l.b16 %v501
        %v1514 = vunpack.c.h.b16 %v501
        %v1515 = vunpack.c.l.b16 %v502
        %v1516 = vunpack.c.h.b16 %v502
        %v1517 = vunpack.c.l.b16 %v503
        %v1518 = vunpack.c.h.b16 %v503
        %v1519 = vunpack.c.l.b16 %v504
        %v1520 = vunpack.c.l.b16 %v505
        %v1521 = vunpack.c.h.b16 %v505
        %v1522 = vunpack.c.l.b16 %v506
        %v1523 = vunpack.c.h.b16 %v506
        %v1524 = vunpack.c.l.b16 %v507
        %v1525 = vunpack.c.h.b16 %v507
        %v1526 = vunpack.c.l.b16 %v508
        %v1527 = vunpack.c.h.b16 %v508
        %v1528 = vunpack.c.l.b16 %v509
        %v1529 = vunpack.c.l.b16 %v510
        %v1530 = vunpack.c.h.b16 %v510
        %v1531 = vunpack.c.l.b16 %v511
        %v1532 = vunpack.c.h.b16 %v511
        %v1533 = vunpack.c.l.b16 %v512
        %v1534 = vunpack.c.h.b16 %v512
        %v1535 = vunpack.c.l.b16 %v513
        %v1536 = vunpack.c.h.b16 %v513
        %v1537 = vunpack.c.l.b16 %v514
        %v1538 = vunpack.c.l.b16 %v515
        %v1539 = vunpack.c.h.b16 %v515
        %v1540 = vunpack.c.l.b16 %v516
        %v1541 = vunpack.c.h.b16 %v516
        %v1542 = vunpack.c.l.b16 %v517
        %v1543 = vunpack.c.h.b16 %v517
        %v1544 = vunpack.c.l.b16 %v518
        %v1545 = vunpack.c.h.b16 %v518
        %v1546 = vunpack.c.l.b16 %v519
        %v1547 = vunpack.c.l.b16 %v520
        %v1548 = vunpack.c.h.b16 %v520
        %v1549 = vunpack.c.l.b16 %v521
        %v1550 = vunpack.c.h.b16 %v521
        %v1551 = vunpack.c.l.b16 %v522
        %v1552 = vunpack.c.h.b16 %v522
        %v1553 = vunpack.c.l.b16 %v523
        %v1554 = vunpack.c.h.b16 %v523
        %v1555 = vunpack.c.l.b16 %v524
        %v1556 = vunpack.c.l.b16 %v525
        %v1557 = vunpack.c.h.b16 %v525
        %v1558 = vunpack.c.l.b16 %v526
        %v1559 = vunpack.c.h.b16 %v526
        %v1560 = vunpack.c.l.b16 %v527
        %v1561 = vunpack.c.h.b16 %v527
        %v1562 = vunpack.c.l.b16 %v528
        %v1563 = vunpack.c.h.b16 %v528
        %v1564 = vunpack.c.l.b16 %v529
        %v1565 = vunpack.c.l.b16 %v530
        %v1566 = vunpack.c.h.b16 %v530
        %v1567 = vunpack.c.l.b16 %v531
        %v1568 = vunpack.c.h.b16 %v531
        %v1569 = vunpack.c.l.b16 %v532
        %v1570 = vunpack.c.h.b16 %v532
        %v1571 = vunpack.c.l.b16 %v533
        %v1572 = vunpack.c.h.b16 %v533
        %v1573 = vunpack.c.l.b16 %v534
        %v1574 = vunpack.c.l.b16 %v535
        %v1575 = vunpack.c.h.b16 %v535
        %v1576 = vunpack.c.l.b16 %v536
        %v1577 = vunpack.c.h.b16 %v536
        %v1578 = vunpack.c.l.b16 %v537
        %v1579 = vunpack.c.h.b16 %v537
        %v1580 = vunpack.c.l.b16 %v538
        %v1581 = vunpack.c.h.b16 %v538
        %v1582 = vunpack.c.l.b16 %v539
        %v1583 = vunpack.c.l.b16 %v540
        %v1584 = vunpack.c.h.b16 %v540
        %v1585 = vunpack.c.l.b16 %v541
        %v1586 = vunpack.c.h.b16 %v541
        %v1587 = vunpack.c.l.b16 %v542
        %v1588 = vunpack.c.h.b16 %v542
        %v1589 = vunpack.c.l.b16 %v543
        %v1590 = vunpack.c.h.b16 %v543
        %v1591 = vunpack.c.l.b16 %v544
        %v1592 = vpack.c.b16 %v1025, %v1016
        %v1593 = vpack.c.b16 %v1026, %v1017
        %v1594 = vpack.c.b16 %v1027, %v1018
        %v1595 = vpack.c.b16 %v1028, %v1019
        %v1596 = vpack.c.b16 %v1029, %v1020
        %v1597 = vpack.c.b16 %v1030, %v1021
        %v1598 = vpack.c.b16 %v1031, %v1022
        %v1599 = vpack.c.b16 %v1032, %v1023
        %v1600 = vpack.c.b16 %v1033, %v1024
        %v1601 = vpack.c.b16 %v1043, %v1034
        %v1602 = vpack.c.b16 %v1044, %v1035
        %v1603 = vpack.c.b16 %v1045, %v1036
        %v1604 = vpack.c.b16 %v1046, %v1037
        %v1605 = vpack.c.b16 %v1047, %v1038
        %v1606 = vpack.c.b16 %v1048, %v1039
        %v1607 = vpack.c.b16 %v1049, %v1040
        %v1608 = vpack.c.b16 %v1050, %v1041
        %v1609 = vpack.c.b16 %v1051, %v1042
        %v1610 = vpack.c.b16 %v1061, %v1052
        %v1611 = vpack.c.b16 %v1062, %v1053
        %v1612 = vpack.c.b16 %v1063, %v1054
        %v1613 = vpack.c.b16 %v1064, %v1055
        %v1614 = vpack.c.b16 %v1065, %v1056
        %v1615 = vpack.c.b16 %v1066, %v1057
        %v1616 = vpack.c.b16 %v1067, %v1058
        %v1617 = vpack.c.b16 %v1068, %v1059
        %v1618 = vpack.c.b16 %v1069, %v1060
        %v1619 = vpack.c.b16 %v1079, %v1070
        %v1620 = vpack.c.b16 %v1080, %v1071
        %v1621 = vpack.c.b16 %v1081, %v1072
        %v1622 = vpack.c.b16 %v1082, %v1073
        %v1623 = vpack.c.b16 %v1083, %v1074
        %v1624 = vpack.c.b16 %v1084, %v1075
        %v1625 = vpack.c.b16 %v1085, %v1076
        %v1626 = vpack.c.b16 %v1086, %v1077
        %v1627 = vpack.c.b16 %v1087, %v1078
        %v1628 = vpack.c.b16 %v1097, %v1088
        %v1629 = vpack.c.b16 %v1098, %v1089
        %v1630 = vpack.c.b16 %v1099, %v1090
        %v1631 = vpack.c.b16 %v1100, %v1091
        %v1632 = vpack.c.b16 %v1101, %v1092
        %v1633 = vpack.c.b16 %v1102, %v1093
        %v1634 = vpack.c.b16 %v1103, %v1094
        %v1635 = vpack.c.b16 %v1104, %v1095
        %v1636 = vpack.c.b16 %v1105, %v1096
        %v1637 = vpack.c.b16 %v1115, %v1106
        %v1638 = vpack.c.b16 %v1116, %v1107
        %v1639 = vpack.c.b16 %v1117, %v1108
        %v1640 = vpack.c.b16 %v1118, %v1109
        %v1641 = vpack.c.b16 %v1119, %v1110
        %v1642 = vpack.c.b16 %v1120, %v1111
        %v1643 = vpack.c.b16 %v1121, %v1112
        %v1644 = vpack.c.b16 %v1122, %v1113
        %v1645 = vpack.c.b16 %v1123, %v1114
        %v1646 = vpack.c.b16 %v1133, %v1124
        %v1647 = vpack.c.b16 %v1134, %v1125
        %v1648 = vpack.c.b16 %v1135, %v1126
        %v1649 = vpack.c.b16 %v1136, %v1127
        %v1650 = vpack.c.b16 %v1137, %v1128
        %v1651 = vpack.c.b16 %v1138, %v1129
        %v1652 = vpack.c.b16 %v1139, %v1130
        %v1653 = vpack.c.b16 %v1140, %v1131
        %v1654 = vpack.c.b16 %v1141, %v1132
        %v1655 = vpack.c.b16 %v1151, %v1142
        %v1656 = vpack.c.b16 %v1152, %v1143
        %v1657 = vpack.c.b16 %v1153, %v1144
        %v1658 = vpack.c.b16 %v1154, %v1145
        %v1659 = vpack.c.b16 %v1155, %v1146
        %v1660 = vpack.c.b16 %v1156, %v1147
        %v1661 = vpack.c.b16 %v1157, %v1148
        %v1662 = vpack.c.b16 %v1158, %v1149
        %v1663 = vpack.c.b16 %v1159, %v1150
        %v1664 = vpack.c.b16 %v1169, %v1160
        %v1665 = vpack.c.b16 %v1170, %v1161
        %v1666 = vpack.c.b16 %v1171, %v1162
        %v1667 = vpack.c.b16 %v1172, %v1163
        %v1668 = vpack.c.b16 %v1173, %v1164
        %v1669 = vpack.c.b16 %v1174, %v1165
        %v1670 = vpack.c.b16 %v1175, %v1166
        %v1671 = vpack.c.b16 %v1176, %v1167
        %v1672 = vpack.c.b16 %v1177, %v1168
        %v1673 = vpack.c.b16 %v1187, %v1178
        %v1674 = vpack.c.b16 %v1188, %v1179
        %v1675 = vpack.c.b16 %v1189, %v1180
        %v1676 = vpack.c.b16 %v1190, %v1181
        %v1677 = vpack.c.b16 %v1191, %v1182
        %v1678 = vpack.c.b16 %v1192, %v1183
        %v1679 = vpack.c.b16 %v1193, %v1184
        %v1680 = vpack.c.b16 %v1194, %v1185
        %v1681 = vpack.c.b16 %v1195, %v1186
        %v1682 = vpack.c.b16 %v1205, %v1196
        %v1683 = vpack.c.b16 %v1206, %v1197
        %v1684 = vpack.c.b16 %v1207, %v1198
        %v1685 = vpack.c.b16 %v1208, %v1199
        %v1686 = vpack.c.b16 %v1209, %v1200
        %v1687 = vpack.c.b16 %v1210, %v1201
        %v1688 = vpack.c.b16 %v1211, %v1202
        %v1689 = vpack.c.b16 %v1212, %v1203
        %v1690 = vpack.c.b16 %v1213, %v1204
        %v1691 = vpack.c.b16 %v1223, %v1214
        %v1692 = vpack.c.b16 %v1224, %v1215
        %v1693 = vpack.c.b16 %v1225, %v1216
        %v1694 = vpack.c.b16 %v1226, %v1217
        %v1695 = vpack.c.b16 %v1227, %v1218
        %v1696 = vpack.c.b16 %v1228, %v1219
        %v1697 = vpack.c.b16 %v1229, %v1220
        %v1698 = vpack.c.b16 %v1230, %v1221
        %v1699 = vpack.c.b16 %v1231, %v1222
        %v1700 = vpack.c.b16 %v1241, %v1232
        %v1701 = vpack.c.b16 %v1242, %v1233
        %v1702 = vpack.c.b16 %v1243, %v1234
        %v1703 = vpack.c.b16 %v1244, %v1235
        %v1704 = vpack.c.b16 %v1245, %v1236
        %v1705 = vpack.c.b16 %v1246, %v1237
        %v1706 = vpack.c.b16 %v1247, %v1238
        %v1707 = vpack.c.b16 %v1248, %v1239
        %v1708 = vpack.c.b16 %v1249, %v1240
        %v1709 = vpack.c.b16 %v1259, %v1250
        %v1710 = vpack.c.b16 %v1260, %v1251
        %v1711 = vpack.c.b16 %v1261, %v1252
        %v1712 = vpack.c.b16 %v1262, %v1253
        %v1713 = vpack.c.b16 %v1263, %v1254
        %v1714 = vpack.c.b16 %v1264, %v1255
        %v1715 = vpack.c.b16 %v1265, %v1256
        %v1716 = vpack.c.b16 %v1266, %v1257
        %v1717 = vpack.c.b16 %v1267, %v1258
        %v1718 = vpack.c.b16 %v1277, %v1268
        %v1719 = vpack.c.b16 %v1278, %v1269
        %v1720 = vpack.c.b16 %v1279, %v1270
        %v1721 = vpack.c.b16 %v1280, %v1271
        %v1722 = vpack.c.b16 %v1281, %v1272
        %v1723 = vpack.c.b16 %v1282, %v1273
        %v1724 = vpack.c.b16 %v1283, %v1274
        %v1725 = vpack.c.b16 %v1284, %v1275
        %v1726 = vpack.c.b16 %v1285, %v1276
        %v1727 = vpack.c.b16 %v1295, %v1286
        %v1728 = vpack.c.b16 %v1296, %v1287
        %v1729 = vpack.c.b16 %v1297, %v1288
        %v1730 = vpack.c.b16 %v1298, %v1289
        %v1731 = vpack.c.b16 %v1299, %v1290
        %v1732 = vpack.c.b16 %v1300, %v1291
        %v1733 = vpack.c.b16 %v1301, %v1292
        %v1734 = vpack.c.b16 %v1302, %v1293
        %v1735 = vpack.c.b16 %v1303, %v1294
        %v1736 = vpack.c.b16 %v1313, %v1304
        %v1737 = vpack.c.b16 %v1314, %v1305
        %v1738 = vpack.c.b16 %v1315, %v1306
        %v1739 = vpack.c.b16 %v1316, %v1307
        %v1740 = vpack.c.b16 %v1317, %v1308
        %v1741 = vpack.c.b16 %v1318, %v1309
        %v1742 = vpack.c.b16 %v1319, %v1310
        %v1743 = vpack.c.b16 %v1320, %v1311
        %v1744 = vpack.c.b16 %v1321, %v1312
        %v1745 = vpack.c.b16 %v1331, %v1322
        %v1746 = vpack.c.b16 %v1332, %v1323
        %v1747 = vpack.c.b16 %v1333, %v1324
        %v1748 = vpack.c.b16 %v1334, %v1325
        %v1749 = vpack.c.b16 %v1335, %v1326
        %v1750 = vpack.c.b16 %v1336, %v1327
        %v1751 = vpack.c.b16 %v1337, %v1328
        %v1752 = vpack.c.b16 %v1338, %v1329
        %v1753 = vpack.c.b16 %v1339, %v1330
        %v1754 = vpack.c.b16 %v1349, %v1340
        %v1755 = vpack.c.b16 %v1350, %v1341
        %v1756 = vpack.c.b16 %v1351, %v1342
        %v1757 = vpack.c.b16 %v1352, %v1343
        %v1758 = vpack.c.b16 %v1353, %v1344
        %v1759 = vpack.c.b16 %v1354, %v1345
        %v1760 = vpack.c.b16 %v1355, %v1346
        %v1761 = vpack.c.b16 %v1356, %v1347
        %v1762 = vpack.c.b16 %v1357, %v1348
        %v1763 = vpack.c.b16 %v1367, %v1358
        %v1764 = vpack.c.b16 %v1368, %v1359
        %v1765 = vpack.c.b16 %v1369, %v1360
        %v1766 = vpack.c.b16 %v1370, %v1361
        %v1767 = vpack.c.b16 %v1371, %v1362
        %v1768 = vpack.c.b16 %v1372, %v1363
        %v1769 = vpack.c.b16 %v1373, %v1364
        %v1770 = vpack.c.b16 %v1374, %v1365
        %v1771 = vpack.c.b16 %v1375, %v1366
        %v1772 = vpack.c.b16 %v1385, %v1376
        %v1773 = vpack.c.b16 %v1386, %v1377
        %v1774 = vpack.c.b16 %v1387, %v1378
        %v1775 = vpack.c.b16 %v1388, %v1379
        %v1776 = vpack.c.b16 %v1389, %v1380
        %v1777 = vpack.c.b16 %v1390, %v1381
        %v1778 = vpack.c.b16 %v1391, %v1382
        %v1779 = vpack.c.b16 %v1392, %v1383
        %v1780 = vpack.c.b16 %v1393, %v1384
        %v1781 = vpack.c.b16 %v1403, %v1394
        %v1782 = vpack.c.b16 %v1404, %v1395
        %v1783 = vpack.c.b16 %v1405, %v1396
        %v1784 = vpack.c.b16 %v1406, %v1397
        %v1785 = vpack.c.b16 %v1407, %v1398
        %v1786 = vpack.c.b16 %v1408, %v1399
        %v1787 = vpack.c.b16 %v1409, %v1400
        %v1788 = vpack.c.b16 %v1410, %v1401
        %v1789 = vpack.c.b16 %v1411, %v1402
        %v1790 = vpack.c.b16 %v1421, %v1412
        %v1791 = vpack.c.b16 %v1422, %v1413
        %v1792 = vpack.c.b16 %v1423, %v1414
        %v1793 = vpack.c.b16 %v1424, %v1415
        %v1794 = vpack.c.b16 %v1425, %v1416
        %v1795 = vpack.c.b16 %v1426, %v1417
        %v1796 = vpack.c.b16 %v1427, %v1418
        %v1797 = vpack.c.b16 %v1428, %v1419
        %v1798 = vpack.c.b16 %v1429, %v1420
        %v1799 = vpack.c.b16 %v1439, %v1430
        %v1800 = vpack.c.b16 %v1440, %v1431
        %v1801 = vpack.c.b16 %v1441, %v1432
        %v1802 = vpack.c.b16 %v1442, %v1433
        %v1803 = vpack.c.b16 %v1443, %v1434
        %v1804 = vpack.c.b16 %v1444, %v1435
        %v1805 = vpack.c.b16 %v1445, %v1436
        %v1806 = vpack.c.b16 %v1446, %v1437
        %v1807 = vpack.c.b16 %v1447, %v1438
        %v1808 = vpack.c.b16 %v1457, %v1448
        %v1809 = vpack.c.b16 %v1458, %v1449
        %v1810 = vpack.c.b16 %v1459, %v1450
        %v1811 = vpack.c.b16 %v1460, %v1451
        %v1812 = vpack.c.b16 %v1461, %v1452
        %v1813 = vpack.c.b16 %v1462, %v1453
        %v1814 = vpack.c.b16 %v1463, %v1454
        %v1815 = vpack.c.b16 %v1464, %v1455
        %v1816 = vpack.c.b16 %v1465, %v1456
        %v1817 = vpack.c.b16 %v1475, %v1466
        %v1818 = vpack.c.b16 %v1476, %v1467
        %v1819 = vpack.c.b16 %v1477, %v1468
        %v1820 = vpack.c.b16 %v1478, %v1469
        %v1821 = vpack.c.b16 %v1479, %v1470
        %v1822 = vpack.c.b16 %v1480, %v1471
        %v1823 = vpack.c.b16 %v1481, %v1472
        %v1824 = vpack.c.b16 %v1482, %v1473
        %v1825 = vpack.c.b16 %v1483, %v1474
        %v1826 = vpack.c.b16 %v1493, %v1484
        %v1827 = vpack.c.b16 %v1494, %v1485
        %v1828 = vpack.c.b16 %v1495, %v1486
        %v1829 = vpack.c.b16 %v1496, %v1487
        %v1830 = vpack.c.b16 %v1497, %v1488
        %v1831 = vpack.c.b16 %v1498, %v1489
        %v1832 = vpack.c.b16 %v1499, %v1490
        %v1833 = vpack.c.b16 %v1500, %v1491
        %v1834 = vpack.c.b16 %v1501, %v1492
        %v1835 = vpack.c.b16 %v1511, %v1502
        %v1836 = vpack.c.b16 %v1512, %v1503
        %v1837 = vpack.c.b16 %v1513, %v1504
        %v1838 = vpack.c.b16 %v1514, %v1505
        %v1839 = vpack.c.b16 %v1515, %v1506
        %v1840 = vpack.c.b16 %v1516, %v1507
        %v1841 = vpack.c.b16 %v1517, %v1508
        %v1842 = vpack.c.b16 %v1518, %v1509
        %v1843 = vpack.c.b16 %v1519, %v1510
        %v1844 = vpack.c.b16 %v1529, %v1520
        %v1845 = vpack.c.b16 %v1530, %v1521
        %v1846 = vpack.c.b16 %v1531, %v1522
        %v1847 = vpack.c.b16 %v1532, %v1523
        %v1848 = vpack.c.b16 %v1533, %v1524
        %v1849 = vpack.c.b16 %v1534, %v1525
        %v1850 = vpack.c.b16 %v1535, %v1526
        %v1851 = vpack.c.b16 %v1536, %v1527
        %v1852 = vpack.c.b16 %v1537, %v1528
        %v1853 = vpack.c.b16 %v1547, %v1538
        %v1854 = vpack.c.b16 %v1548, %v1539
        %v1855 = vpack.c.b16 %v1549, %v1540
        %v1856 = vpack.c.b16 %v1550, %v1541
        %v1857 = vpack.c.b16 %v1551, %v1542
        %v1858 = vpack.c.b16 %v1552, %v1543
        %v1859 = vpack.c.b16 %v1553, %v1544
        %v1860 = vpack.c.b16 %v1554, %v1545
        %v1861 = vpack.c.b16 %v1555, %v1546
        %v1862 = vpack.c.b16 %v1565, %v1556
        %v1863 = vpack.c.b16 %v1566, %v1557
        %v1864 = vpack.c.b16 %v1567, %v1558
        %v1865 = vpack.c.b16 %v1568, %v1559
        %v1866 = vpack.c.b16 %v1569, %v1560
        %v1867 = vpack.c.b16 %v1570, %v1561
        %v1868 = vpack.c.b16 %v1571, %v1562
        %v1869 = vpack.c.b16 %v1572, %v1563
        %v1870 = vpack.c.b16 %v1573, %v1564
        %v1871 = vpack.c.b16 %v1583, %v1574
        %v1872 = vpack.c.b16 %v1584, %v1575
        %v1873 = vpack.c.b16 %v1585, %v1576
        %v1874 = vpack.c.b16 %v1586, %v1577
        %v1875 = vpack.c.b16 %v1587, %v1578
        %v1876 = vpack.c.b16 %v1588, %v1579
        %v1877 = vpack.c.b16 %v1589, %v1580
        %v1878 = vpack.c.b16 %v1590, %v1581
        %v1879 = vpack.c.b16 %v1591, %v1582
        %v2312 = vunpack.c.l.b16 %v545
        %v2313 = vunpack.c.l.b16 %v546
        %v2314 = vunpack.c.l.b16 %v547
        %v2315 = vunpack.c.l.b16 %v548
        %v2316 = vunpack.c.l.b16 %v549
        %v2317 = vunpack.c.l.b16 %v550
        %v2318 = vunpack.c.l.b16 %v551
        %v2319 = vunpack.c.l.b16 %v552
        %v2320 = vunpack.c.l.b16 %v553
        %v2321 = vunpack.c.l.b16 %v554
        %v2322 = vunpack.c.l.b16 %v555
        %v2323 = vunpack.c.l.b16 %v556
        %v2324 = vunpack.c.l.b16 %v557
        %v2325 = vunpack.c.l.b16 %v558
        %v2326 = vunpack.c.l.b16 %v559
        %v2327 = vunpack.c.l.b16 %v560
        %v2328 = vunpack.c.l.b16 %v561
        %v2329 = vunpack.c.l.b16 %v562
        %v2330 = vunpack.c.l.b16 %v563
        %v2331 = vunpack.c.l.b16 %v564
        %v2332 = vunpack.c.l.b16 %v565
        %v2333 = vunpack.c.l.b16 %v566
        %v2334 = vunpack.c.l.b16 %v567
        %v2335 = vunpack.c.l.b16 %v568
        %v2336 = vunpack.c.l.b16 %v569
        %v2337 = vunpack.c.l.b16 %v570
        %v2338 = vunpack.c.l.b16 %v571
        %v2339 = vunpack.c.l.b16 %v572
        %v2340 = vunpack.c.l.b16 %v573
        %v2341 = vunpack.c.l.b16 %v574
        %v2342 = vunpack.c.l.b16 %v575
        %v2343 = vunpack.c.l.b16 %v576
        %v2344 = vunpack.c.l.b16 %v577
        %v2345 = vunpack.c.l.b16 %v578
        %v2346 = vunpack.c.l.b16 %v579
        %v2347 = vunpack.c.l.b16 %v580
        %v2348 = vunpack.c.l.b16 %v581
        %v2349 = vunpack.c.l.b16 %v582
        %v2350 = vunpack.c.l.b16 %v583
        %v2351 = vunpack.c.l.b16 %v584
        %v2352 = vunpack.c.l.b16 %v585
        %v2353 = vunpack.c.l.b16 %v586
        %v2354 = vunpack.c.l.b16 %v587
        %v2355 = vunpack.c.l.b16 %v588
        %v2356 = vunpack.c.l.b16 %v589
        %v2357 = vunpack.c.l.b16 %v590
        %v2358 = vunpack.c.l.b16 %v591
        %v2359 = vunpack.c.l.b16 %v592
        %v2360 = vunpack.c.l.b16 %v593
        %v2361 = vunpack.c.l.b16 %v594
        %v2362 = vunpack.c.l.b16 %v595
        %v2363 = vunpack.c.l.b16 %v596
        %v2364 = vunpack.c.l.b16 %v597
        %v2365 = vunpack.c.l.b16 %v598
        %v2366 = vunpack.c.l.b16 %v599
        %v2367 = vunpack.c.l.b16 %v600
        %v2368 = vunpack.c.l.b16 %v601
        %v2369 = vunpack.c.l.b16 %v602
        %v2370 = vunpack.c.l.b16 %v603
        %v2371 = vunpack.c.l.b16 %v604
        %v2372 = vunpack.c.l.b16 %v605
        %v2373 = vunpack.c.l.b16 %v606
        %v2374 = vunpack.c.l.b16 %v607
        %v2375 = vunpack.c.l.b16 %v608
        %v2376 = vunpack.c.l.b16 %v609
        %v2377 = vunpack.c.l.b16 %v610
        %v2378 = vunpack.c.l.b16 %v611
        %v2379 = vunpack.c.l.b16 %v612
        %v2380 = vunpack.c.l.b16 %v613
        %v2381 = vunpack.c.l.b16 %v614
        %v2382 = vunpack.c.l.b16 %v615
        %v2383 = vunpack.c.l.b16 %v616
        %v2384 = vunpack.c.l.b16 %v617
        %v2385 = vunpack.c.l.b16 %v618
        %v2386 = vunpack.c.l.b16 %v619
        %v2387 = vunpack.c.l.b16 %v620
        %v2388 = vunpack.c.l.b16 %v621
        %v2389 = vunpack.c.l.b16 %v622
        %v2390 = vunpack.c.l.b16 %v623
        %v2391 = vunpack.c.l.b16 %v624
        %v2392 = vunpack.c.l.b16 %v625
        %v2393 = vunpack.c.l.b16 %v626
        %v2394 = vunpack.c.l.b16 %v627
        %v2395 = vunpack.c.l.b16 %v628
        %v2396 = vunpack.c.l.b16 %v629
        %v2397 = vunpack.c.l.b16 %v630
        %v2398 = vunpack.c.l.b16 %v631
        %v2399 = vunpack.c.l.b16 %v632
        %v2400 = vunpack.c.l.b16 %v633
        %v2401 = vunpack.c.l.b16 %v634
        %v2402 = vunpack.c.l.b16 %v635
        %v2403 = vunpack.c.l.b16 %v636
        %v2404 = vunpack.c.l.b16 %v637
        %v2405 = vunpack.c.l.b16 %v638
        %v2406 = vunpack.c.l.b16 %v639
        %v2407 = vunpack.c.l.b16 %v640
        %v2408 = vunpack.c.l.b16 %v641
        %v2409 = vunpack.c.l.b16 %v642
        %v2410 = vunpack.c.l.b16 %v643
        %v2411 = vunpack.c.l.b16 %v644
        %v2412 = vunpack.c.l.b16 %v645
        %v2413 = vunpack.c.l.b16 %v646
        %v2414 = vunpack.c.l.b16 %v647
        %v2415 = vunpack.c.l.b16 %v648
        %v2416 = vunpack.c.l.b16 %v649
        %v2417 = vunpack.c.l.b16 %v650
        %v2418 = vunpack.c.l.b16 %v651
        %v2419 = vunpack.c.l.b16 %v652
        %v2420 = vunpack.c.l.b16 %v653
        %v2421 = vunpack.c.l.b16 %v654
        %v2422 = vunpack.c.l.b16 %v655
        %v2423 = vunpack.c.l.b16 %v656
        %v2424 = vunpack.c.l.b16 %v657
        %v2425 = vunpack.c.l.b16 %v658
        %v2426 = vunpack.c.l.b16 %v659
        %v2427 = vunpack.c.l.b16 %v660
        %v2428 = vunpack.c.l.b16 %v661
        %v2429 = vunpack.c.l.b16 %v662
        %v2430 = vunpack.c.l.b16 %v663
        %v2431 = vunpack.c.l.b16 %v664
        %v2432 = vunpack.c.l.b16 %v665
        %v2433 = vunpack.c.l.b16 %v666
        %v2434 = vunpack.c.l.b16 %v667
        %v2435 = vunpack.c.l.b16 %v668
        %v2436 = vunpack.c.l.b16 %v669
        %v2437 = vunpack.c.l.b16 %v670
        %v2438 = vunpack.c.l.b16 %v671
        %v2439 = vunpack.c.l.b16 %v672
        %v2440 = vunpack.c.l.b16 %v673
        %v2441 = vunpack.c.l.b16 %v674
        %v2442 = vunpack.c.l.b16 %v675
        %v2443 = vunpack.c.l.b16 %v676
        %v2444 = vunpack.c.l.b16 %v677
        %v2445 = vunpack.c.l.b16 %v678
        %v2446 = vunpack.c.l.b16 %v679
        %v2447 = vunpack.c.l.b16 %v680
        %v2448 = vunpack.c.l.b16 %v681
        %v2449 = vunpack.c.l.b16 %v682
        %v2450 = vunpack.c.l.b16 %v683
        %v2451 = vunpack.c.l.b16 %v684
        %v2452 = vunpack.c.l.b16 %v685
        %v2453 = vunpack.c.l.b16 %v686
        %v2454 = vunpack.c.l.b16 %v687
        %v2455 = vunpack.c.l.b16 %v688
        %v2456 = vpack.c.b16 %v2313, %v2312
        %v2457 = vpack.c.b16 %v2315, %v2314
        %v2458 = vpack.c.b16 %v2317, %v2316
        %v2459 = vpack.c.b16 %v2319, %v2318
        %v2460 = vpack.c.b16 %v2321, %v2320
        %v2461 = vpack.c.b16 %v2323, %v2322
        %v2462 = vpack.c.b16 %v2325, %v2324
        %v2463 = vpack.c.b16 %v2327, %v2326
        %v2464 = vpack.c.b16 %v2329, %v2328
        %v2465 = vpack.c.b16 %v2331, %v2330
        %v2466 = vpack.c.b16 %v2333, %v2332
        %v2467 = vpack.c.b16 %v2335, %v2334
        %v2468 = vpack.c.b16 %v2337, %v2336
        %v2469 = vpack.c.b16 %v2339, %v2338
        %v2470 = vpack.c.b16 %v2341, %v2340
        %v2471 = vpack.c.b16 %v2343, %v2342
        %v2472 = vpack.c.b16 %v2345, %v2344
        %v2473 = vpack.c.b16 %v2347, %v2346
        %v2474 = vpack.c.b16 %v2349, %v2348
        %v2475 = vpack.c.b16 %v2351, %v2350
        %v2476 = vpack.c.b16 %v2353, %v2352
        %v2477 = vpack.c.b16 %v2355, %v2354
        %v2478 = vpack.c.b16 %v2357, %v2356
        %v2479 = vpack.c.b16 %v2359, %v2358
        %v2480 = vpack.c.b16 %v2361, %v2360
        %v2481 = vpack.c.b16 %v2363, %v2362
        %v2482 = vpack.c.b16 %v2365, %v2364
        %v2483 = vpack.c.b16 %v2367, %v2366
        %v2484 = vpack.c.b16 %v2369, %v2368
        %v2485 = vpack.c.b16 %v2371, %v2370
        %v2486 = vpack.c.b16 %v2373, %v2372
        %v2487 = vpack.c.b16 %v2375, %v2374
        %v2488 = vpack.c.b16 %v2377, %v2376
        %v2489 = vpack.c.b16 %v2379, %v2378
        %v2490 = vpack.c.b16 %v2381, %v2380
        %v2491 = vpack.c.b16 %v2383, %v2382
        %v2492 = vpack.c.b16 %v2385, %v2384
        %v2493 = vpack.c.b16 %v2387, %v2386
        %v2494 = vpack.c.b16 %v2389, %v2388
        %v2495 = vpack.c.b16 %v2391, %v2390
        %v2496 = vpack.c.b16 %v2393, %v2392
        %v2497 = vpack.c.b16 %v2395, %v2394
        %v2498 = vpack.c.b16 %v2397, %v2396
        %v2499 = vpack.c.b16 %v2399, %v2398
        %v2500 = vpack.c.b16 %v2401, %v2400
        %v2501 = vpack.c.b16 %v2403, %v2402
        %v2502 = vpack.c.b16 %v2405, %v2404
        %v2503 = vpack.c.b16 %v2407, %v2406
        %v2504 = vpack.c.b16 %v2409, %v2408
        %v2505 = vpack.c.b16 %v2411, %v2410
        %v2506 = vpack.c.b16 %v2413, %v2412
        %v2507 = vpack.c.b16 %v2415, %v2414
        %v2508 = vpack.c.b16 %v2417, %v2416
        %v2509 = vpack.c.b16 %v2419, %v2418
        %v2510 = vpack.c.b16 %v2421, %v2420
        %v2511 = vpack.c.b16 %v2423, %v2422
        %v2512 = vpack.c.b16 %v2425, %v2424
        %v2513 = vpack.c.b16 %v2427, %v2426
        %v2514 = vpack.c.b16 %v2429, %v2428
        %v2515 = vpack.c.b16 %v2431, %v2430
        %v2516 = vpack.c.b16 %v2433, %v2432
        %v2517 = vpack.c.b16 %v2435, %v2434
        %v2518 = vpack.c.b16 %v2437, %v2436
        %v2519 = vpack.c.b16 %v2439, %v2438
        %v2520 = vpack.c.b16 %v2441, %v2440
        %v2521 = vpack.c.b16 %v2443, %v2442
        %v2522 = vpack.c.b16 %v2445, %v2444
        %v2523 = vpack.c.b16 %v2447, %v2446
        %v2524 = vpack.c.b16 %v2449, %v2448
        %v2525 = vpack.c.b16 %v2451, %v2450
        %v2526 = vpack.c.b16 %v2453, %v2452
        %v2527 = vpack.c.b16 %v2455, %v2454
        %2600 = vmatprep.subr.bf16.mxu0 0
        %2601 = vmatpush1.bf16.msra.mxu0 %v2456
        %2602 = vmatprep.subr.bf16.mxu0 0
        %2603 = vmatpush1.bf16.msra.mxu0 %v2457
        %2604 = vmatprep.subr.bf16.mxu0 0
        %2605 = vmatpush1.bf16.msra.mxu0 %v2458
        %2606 = vmatprep.subr.bf16.mxu0 0
        %2607 = vmatpush1.bf16.msra.mxu0 %v2459
        %2608 = vmatprep.subr.bf16.mxu0 0
        %2609 = vmatpush1.bf16.msra.mxu0 %v2460
        %2610 = vmatprep.subr.bf16.mxu0 0
        %2611 = vmatpush1.bf16.msra.mxu0 %v2461
        %2612 = vmatprep.subr.bf16.mxu0 0
        %2613 = vmatpush1.bf16.msra.mxu0 %v2462
        %2614 = vmatprep.subr.bf16.mxu0 0
        %2615 = vmatpush1.bf16.msra.mxu0 %v2463
        %2616 = vmatprep.subr.bf16.mxu0 0
        %2617 = vmatpush1.bf16.msra.mxu0 %v2464
        %2618 = vmatprep.subr.bf16.mxu0 0
        %2619 = vmatpush1.bf16.msra.mxu0 %v2465
        %2620 = vmatprep.subr.bf16.mxu0 0
        %2621 = vmatpush1.bf16.msra.mxu0 %v2466
        %2622 = vmatprep.subr.bf16.mxu0 0
        %2623 = vmatpush1.bf16.msra.mxu0 %v2467
        %2624 = vmatprep.subr.bf16.mxu0 0
        %2625 = vmatpush1.bf16.msra.mxu0 %v2468
        %2626 = vmatprep.subr.bf16.mxu0 0
        %2627 = vmatpush1.bf16.msra.mxu0 %v2469
        %2628 = vmatprep.subr.bf16.mxu0 0
        %2629 = vmatpush1.bf16.msra.mxu0 %v2470
        %2630 = vmatprep.subr.bf16.mxu0 0
        %2631 = vmatpush1.bf16.msra.mxu0 %v2471
        %2632 = vmatprep.mubr.bf16.mxu0 %v1593
        %2633 = vmatmul.mubr.bf16.gmra.mrb[0].mxu0 %v1592
        %v2634 = vpop.f32.mrb[0].mxu0
        %v2635 = vadd.f32 %v694, %v2634
        %v2636 = vpop.f32.mrb[0].mxu0
        %v2637 = vpop.f32.mrb[0].mxu0
        %v2638 = vadd.f32 %v694, %v2637
        %v2639 = vpop.f32.mrb[0].mxu0
        %2640 = vmatprep.mubr.bf16.mxu0 %v1602
        %2641 = vmatmul.mubr.bf16.gmra.mrb[0].mxu0 %v1601
        %v2642 = vpop.f32.mrb[0].mxu0
        %v2643 = vadd.f32 %v694, %v2642
        %v2644 = vpop.f32.mrb[0].mxu0
        %v2645 = vpop.f32.mrb[0].mxu0
        %v2646 = vadd.f32 %v694, %v2645
        %v2647 = vpop.f32.mrb[0].mxu0
        %2648 = vmatprep.mubr.bf16.mxu0 %v1611
        %2649 = vmatmul.mubr.bf16.gmra.mrb[0].mxu0 %v1610
        %v2650 = vpop.f32.mrb[0].mxu0
        %v2651 = vadd.f32 %v694, %v2650
        %v2652 = vpop.f32.mrb[0].mxu0
        %v2653 = vpop.f32.mrb[0].mxu0
        %v2654 = vadd.f32 %v694, %v2653
        %v2655 = vpop.f32.mrb[0].mxu0
        %2656 = vmatprep.mubr.bf16.mxu0 %v1620
        %2657 = vmatmul.mubr.bf16.gmra.mrb[0].mxu0 %v1619
        %v2658 = vpop.f32.mrb[0].mxu0
        %v2659 = vadd.f32 %v694, %v2658
        %v2660 = vpop.f32.mrb[0].mxu0
        %v2661 = vpop.f32.mrb[0].mxu0
        %v2662 = vadd.f32 %v694, %v2661
        %v2663 = vpop.f32.mrb[0].mxu0
        %2664 = vmatprep.mubr.bf16.mxu0 %v1629
        %2665 = vmatmul.mubr.bf16.gmra.mrb[0].mxu0 %v1628
        %v2666 = vpop.f32.mrb[0].mxu0
        %v2667 = vadd.f32 %v694, %v2666
        %v2668 = vpop.f32.mrb[0].mxu0
        %v2669 = vpop.f32.mrb[0].mxu0
        %v2670 = vadd.f32 %v694, %v2669
        %v2671 = vpop.f32.mrb[0].mxu0
        %2672 = vmatprep.mubr.bf16.mxu0 %v1638
        %2673 = vmatmul.mubr.bf16.gmra.mrb[0].mxu0 %v1637
        %v2674 = vpop.f32.mrb[0].mxu0
        %v2675 = vadd.f32 %v694, %v2674
        %v2676 = vpop.f32.mrb[0].mxu0
        %v2677 = vpop.f32.mrb[0].mxu0
        %v2678 = vadd.f32 %v694, %v2677
        %v2679 = vpop.f32.mrb[0].mxu0
        %2680 = vmatprep.mubr.bf16.mxu0 %v1647
        %2681 = vmatmul.mubr.bf16.gmra.mrb[0].mxu0 %v1646
        %v2682 = vpop.f32.mrb[0].mxu0
        %v2683 = vadd.f32 %v694, %v2682
        %v2684 = vpop.f32.mrb[0].mxu0
        %v2685 = vpop.f32.mrb[0].mxu0
        %v2686 = vadd.f32 %v694, %v2685
        %v2687 = vpop.f32.mrb[0].mxu0
        %2688 = vmatprep.mubr.bf16.mxu0 %v1656
        %2689 = vmatmul.mubr.bf16.gmra.mrb[0].mxu0 %v1655
        %v2690 = vpop.f32.mrb[0].mxu0
        %v2691 = vadd.f32 %v694, %v2690
        %v2692 = vpop.f32.mrb[0].mxu0
        %v2693 = vpop.f32.mrb[0].mxu0
        %v2694 = vadd.f32 %v694, %v2693
        %v2695 = vpop.f32.mrb[0].mxu0
        %2696 = vmatprep.mubr.bf16.mxu0 %v1665
        %2697 = vmatmul.mubr.bf16.gmra.mrb[0].mxu0 %v1664
        %v2698 = vpop.f32.mrb[0].mxu0
        %v2699 = vadd.f32 %v694, %v2698
        %v2700 = vpop.f32.mrb[0].mxu0
        %v2701 = vpop.f32.mrb[0].mxu0
        %v2702 = vadd.f32 %v694, %v2701
        %v2703 = vpop.f32.mrb[0].mxu0
        %2704 = vmatprep.mubr.bf16.mxu0 %v1674
        %2705 = vmatmul.mubr.bf16.gmra.mrb[0].mxu0 %v1673
        %v2706 = vpop.f32.mrb[0].mxu0
        %v2707 = vadd.f32 %v694, %v2706
        %v2708 = vpop.f32.mrb[0].mxu0
        %v2709 = vpop.f32.mrb[0].mxu0
        %v2710 = vadd.f32 %v694, %v2709
        %v2711 = vpop.f32.mrb[0].mxu0
        %2712 = vmatprep.mubr.bf16.mxu0 %v1683
        %2713 = vmatmul.mubr.bf16.gmra.mrb[0].mxu0 %v1682
        %v2714 = vpop.f32.mrb[0].mxu0
        %v2715 = vadd.f32 %v694, %v2714
        %v2716 = vpop.f32.mrb[0].mxu0
        %v2717 = vpop.f32.mrb[0].mxu0
        %v2718 = vadd.f32 %v694, %v2717
        %v2719 = vpop.f32.mrb[0].mxu0
        %2720 = vmatprep.mubr.bf16.mxu0 %v1692
        %2721 = vmatmul.mubr.bf16.gmra.mrb[0].mxu0 %v1691
        %v2722 = vpop.f32.mrb[0].mxu0
        %v2723 = vadd.f32 %v694, %v2722
        %v2724 = vpop.f32.mrb[0].mxu0
        %v2725 = vpop.f32.mrb[0].mxu0
        %v2726 = vadd.f32 %v694, %v2725
        %v2727 = vpop.f32.mrb[0].mxu0
        %2728 = vmatprep.mubr.bf16.mxu0 %v1701
        %2729 = vmatmul.mubr.bf16.gmra.mrb[0].mxu0 %v1700
        %v2730 = vpop.f32.mrb[0].mxu0
        %v2731 = vadd.f32 %v694, %v2730
        %v2732 = vpop.f32.mrb[0].mxu0
        %v2733 = vpop.f32.mrb[0].mxu0
        %v2734 = vadd.f32 %v694, %v2733
        %v2735 = vpop.f32.mrb[0].mxu0
        %2736 = vmatprep.mubr.bf16.mxu0 %v1710
        %2737 = vmatmul.mubr.bf16.gmra.mrb[0].mxu0 %v1709
        %v2738 = vpop.f32.mrb[0].mxu0
        %v2739 = vadd.f32 %v694, %v2738
        %v2740 = vpop.f32.mrb[0].mxu0
        %v2741 = vpop.f32.mrb[0].mxu0
        %v2742 = vadd.f32 %v694, %v2741
        %v2743 = vpop.f32.mrb[0].mxu0
        %2744 = vmatprep.mubr.bf16.mxu0 %v1719
        %2745 = vmatmul.mubr.bf16.gmra.mrb[0].mxu0 %v1718
        %v2746 = vpop.f32.mrb[0].mxu0
        %v2747 = vadd.f32 %v694, %v2746
        %v2748 = vpop.f32.mrb[0].mxu0
        %v2749 = vpop.f32.mrb[0].mxu0
        %v2750 = vadd.f32 %v694, %v2749
        %v2751 = vpop.f32.mrb[0].mxu0
        %2752 = vmatprep.mubr.bf16.mxu0 %v1728
        %2753 = vmatmul.mubr.bf16.gmra.mrb[0].mxu0 %v1727
        %v2754 = vpop.f32.mrb[0].mxu0
        %v2755 = vadd.f32 %v694, %v2754
        %v2756 = vpop.f32.mrb[0].mxu0
        %v2757 = vpop.f32.mrb[0].mxu0
        %v2758 = vadd.f32 %v694, %v2757
        %v2759 = vpop.f32.mrb[0].mxu0
        %2760 = vmatprep.mubr.bf16.mxu0 %v1737
        %2761 = vmatmul.mubr.bf16.gmra.mrb[0].mxu0 %v1736
        %v2762 = vpop.f32.mrb[0].mxu0
        %v2763 = vadd.f32 %v694, %v2762
        %v2764 = vpop.f32.mrb[0].mxu0
        %v2765 = vpop.f32.mrb[0].mxu0
        %v2766 = vadd.f32 %v694, %v2765
        %v2767 = vpop.f32.mrb[0].mxu0
        %2768 = vmatprep.mubr.bf16.mxu0 %v1746
        %2769 = vmatmul.mubr.bf16.gmra.mrb[0].mxu0 %v1745
        %v2770 = vpop.f32.mrb[0].mxu0
        %v2771 = vadd.f32 %v694, %v2770
        %v2772 = vpop.f32.mrb[0].mxu0
        %v2773 = vpop.f32.mrb[0].mxu0
        %v2774 = vadd.f32 %v694, %v2773
        %v2775 = vpop.f32.mrb[0].mxu0
        %2776 = vmatprep.mubr.bf16.mxu0 %v1755
        %2777 = vmatmul.mubr.bf16.gmra.mrb[0].mxu0 %v1754
        %v2778 = vpop.f32.mrb[0].mxu0
        %v2779 = vadd.f32 %v694, %v2778
        %v2780 = vpop.f32.mrb[0].mxu0
        %v2781 = vpop.f32.mrb[0].mxu0
        %v2782 = vadd.f32 %v694, %v2781
        %v2783 = vpop.f32.mrb[0].mxu0
        %2784 = vmatprep.mubr.bf16.mxu0 %v1764
        %2785 = vmatmul.mubr.bf16.gmra.mrb[0].mxu0 %v1763
        %v2786 = vpop.f32.mrb[0].mxu0
        %v2787 = vadd.f32 %v694, %v2786
        %v2788 = vpop.f32.mrb[0].mxu0
        %v2789 = vpop.f32.mrb[0].mxu0
        %v2790 = vadd.f32 %v694, %v2789
        %v2791 = vpop.f32.mrb[0].mxu0
        %2792 = vmatprep.mubr.bf16.mxu0 %v1773
        %2793 = vmatmul.mubr.bf16.gmra.mrb[0].mxu0 %v1772
        %v2794 = vpop.f32.mrb[0].mxu0
        %v2795 = vadd.f32 %v694, %v2794
        %v2796 = vpop.f32.mrb[0].mxu0
        %v2797 = vpop.f32.mrb[0].mxu0
        %v2798 = vadd.f32 %v694, %v2797
        %v2799 = vpop.f32.mrb[0].mxu0
        %2800 = vmatprep.mubr.bf16.mxu0 %v1782
        %2801 = vmatmul.mubr.bf16.gmra.mrb[0].mxu0 %v1781
        %v2802 = vpop.f32.mrb[0].mxu0
        %v2803 = vadd.f32 %v694, %v2802
        %v2804 = vpop.f32.mrb[0].mxu0
        %v2805 = vpop.f32.mrb[0].mxu0
        %v2806 = vadd.f32 %v694, %v2805
        %v2807 = vpop.f32.mrb[0].mxu0
        %2808 = vmatprep.mubr.bf16.mxu0 %v1791
        %2809 = vmatmul.mubr.bf16.gmra.mrb[0].mxu0 %v1790
        %v2810 = vpop.f32.mrb[0].mxu0
        %v2811 = vadd.f32 %v694, %v2810
        %v2812 = vpop.f32.mrb[0].mxu0
        %v2813 = vpop.f32.mrb[0].mxu0
        %v2814 = vadd.f32 %v694, %v2813
        %v2815 = vpop.f32.mrb[0].mxu0
        %2816 = vmatprep.mubr.bf16.mxu0 %v1800
        %2817 = vmatmul.mubr.bf16.gmra.mrb[0].mxu0 %v1799
        %v2818 = vpop.f32.mrb[0].mxu0
        %v2819 = vadd.f32 %v694, %v2818
        %v2820 = vpop.f32.mrb[0].mxu0
        %v2821 = vpop.f32.mrb[0].mxu0
        %v2822 = vadd.f32 %v694, %v2821
        %v2823 = vpop.f32.mrb[0].mxu0
        %2824 = vmatprep.mubr.bf16.mxu0 %v1809
        %2825 = vmatmul.mubr.bf16.gmra.mrb[0].mxu0 %v1808
        %v2826 = vpop.f32.mrb[0].mxu0
        %v2827 = vadd.f32 %v694, %v2826
        %v2828 = vpop.f32.mrb[0].mxu0
        %v2829 = vpop.f32.mrb[0].mxu0
        %v2830 = vadd.f32 %v694, %v2829
        %v2831 = vpop.f32.mrb[0].mxu0
        %2832 = vmatprep.mubr.bf16.mxu0 %v1818
        %2833 = vmatmul.mubr.bf16.gmra.mrb[0].mxu0 %v1817
        %v2834 = vpop.f32.mrb[0].mxu0
        %v2835 = vadd.f32 %v694, %v2834
        %v2836 = vpop.f32.mrb[0].mxu0
        %v2837 = vpop.f32.mrb[0].mxu0
        %v2838 = vadd.f32 %v694, %v2837
        %v2839 = vpop.f32.mrb[0].mxu0
        %2840 = vmatprep.mubr.bf16.mxu0 %v1827
        %2841 = vmatmul.mubr.bf16.gmra.mrb[0].mxu0 %v1826
        %v2842 = vpop.f32.mrb[0].mxu0
        %v2843 = vadd.f32 %v694, %v2842
        %v2844 = vpop.f32.mrb[0].mxu0
        %v2845 = vpop.f32.mrb[0].mxu0
        %v2846 = vadd.f32 %v694, %v2845
        %v2847 = vpop.f32.mrb[0].mxu0
        %2848 = vmatprep.mubr.bf16.mxu0 %v1836
        %2849 = vmatmul.mubr.bf16.gmra.mrb[0].mxu0 %v1835
        %v2850 = vpop.f32.mrb[0].mxu0
        %v2851 = vadd.f32 %v694, %v2850
        %v2852 = vpop.f32.mrb[0].mxu0
        %v2853 = vpop.f32.mrb[0].mxu0
        %v2854 = vadd.f32 %v694, %v2853
        %v2855 = vpop.f32.mrb[0].mxu0
        %2856 = vmatprep.mubr.bf16.mxu0 %v1845
        %2857 = vmatmul.mubr.bf16.gmra.mrb[0].mxu0 %v1844
        %v2858 = vpop.f32.mrb[0].mxu0
        %v2859 = vadd.f32 %v694, %v2858
        %v2860 = vpop.f32.mrb[0].mxu0
        %v2861 = vpop.f32.mrb[0].mxu0
        %v2862 = vadd.f32 %v694, %v2861
        %v2863 = vpop.f32.mrb[0].mxu0
        %2864 = vmatprep.mubr.bf16.mxu0 %v1854
        %2865 = vmatmul.mubr.bf16.gmra.mrb[0].mxu0 %v1853
        %v2866 = vpop.f32.mrb[0].mxu0
        %v2867 = vadd.f32 %v694, %v2866
        %v2868 = vpop.f32.mrb[0].mxu0
        %v2869 = vpop.f32.mrb[0].mxu0
        %v2870 = vadd.f32 %v694, %v2869
        %v2871 = vpop.f32.mrb[0].mxu0
        %2872 = vmatprep.mubr.bf16.mxu0 %v1863
        %2873 = vmatmul.mubr.bf16.gmra.mrb[0].mxu0 %v1862
        %v2874 = vpop.f32.mrb[0].mxu0
        %v2875 = vadd.f32 %v694, %v2874
        %v2876 = vpop.f32.mrb[0].mxu0
        %v2877 = vpop.f32.mrb[0].mxu0
        %v2878 = vadd.f32 %v694, %v2877
        %v2879 = vpop.f32.mrb[0].mxu0
        %2880 = vmatprep.mubr.bf16.mxu0 %v1872
        %2881 = vmatmul.mubr.bf16.gmra.mrb[0].mxu0 %v1871
        %v2882 = vpop.f32.mrb[0].mxu0
        %v2883 = vadd.f32 %v694, %v2882
        %v2884 = vpop.f32.mrb[0].mxu0
        %v2885 = vpop.f32.mrb[0].mxu0
        %v2886 = vadd.f32 %v694, %v2885
        %v2887 = vpop.f32.mrb[0].mxu0
        %2888 = vdwg.mxu0
        %2889 = vmatprep.subr.bf16.mxu0 0
        %2890 = vmatpush1.bf16.msra.mxu0 %v2472
        %2891 = vmatprep.subr.bf16.mxu0 0
        %2892 = vmatpush1.bf16.msra.mxu0 %v2473
        %2893 = vmatprep.subr.bf16.mxu0 0
        %2894 = vmatpush1.bf16.msra.mxu0 %v2474
        %2895 = vmatprep.subr.bf16.mxu0 0
        %2896 = vmatpush1.bf16.msra.mxu0 %v2475
        %2897 = vmatprep.subr.bf16.mxu0 0
        %2898 = vmatpush1.bf16.msra.mxu0 %v2476
        %2899 = vmatprep.subr.bf16.mxu0 0
        %2900 = vmatpush1.bf16.msra.mxu0 %v2477
        %2901 = vmatprep.subr.bf16.mxu0 0
        %2902 = vmatpush1.bf16.msra.mxu0 %v2478
        %2903 = vmatprep.subr.bf16.mxu0 0
        %2904 = vmatpush1.bf16.msra.mxu0 %v2479
        %2905 = vmatprep.subr.bf16.mxu0 0
        %2906 = vmatpush1.bf16.msra.mxu0 %v2480
        %2907 = vmatprep.subr.bf16.mxu0 0
        %2908 = vmatpush1.bf16.msra.mxu0 %v2481
        %2909 = vmatprep.subr.bf16.mxu0 0
        %2910 = vmatpush1.bf16.msra.mxu0 %v2482
        %2911 = vmatprep.subr.bf16.mxu0 0
        %2912 = vmatpush1.bf16.msra.mxu0 %v2483
        %2913 = vmatprep.subr.bf16.mxu0 0
        %2914 = vmatpush1.bf16.msra.mxu0 %v2484
        %2915 = vmatprep.subr.bf16.mxu0 0
        %2916 = vmatpush1.bf16.msra.mxu0 %v2485
        %2917 = vmatprep.subr.bf16.mxu0 0
        %2918 = vmatpush1.bf16.msra.mxu0 %v2486
        %2919 = vmatprep.subr.bf16.mxu0 0
        %2920 = vmatpush1.bf16.msra.mxu0 %v2487
        %2921 = vmatprep.mubr.bf16.mxu0 %v1595
        %2922 = vmatmul.mubr.bf16.gmra.mrb[0].mxu0 %v1594
        %v2923 = vpop.f32.mrb[0].mxu0
        %v2924 = vadd.f32 %v2635, %v2923
        %v2925 = vpop.f32.mrb[0].mxu0
        %v2926 = vpop.f32.mrb[0].mxu0
        %v2927 = vadd.f32 %v2638, %v2926
        %v2928 = vpop.f32.mrb[0].mxu0
        %2929 = vmatprep.mubr.bf16.mxu0 %v1604
        %2930 = vmatmul.mubr.bf16.gmra.mrb[0].mxu0 %v1603
        %v2931 = vpop.f32.mrb[0].mxu0
        %v2932 = vadd.f32 %v2643, %v2931
        %v2933 = vpop.f32.mrb[0].mxu0
        %v2934 = vpop.f32.mrb[0].mxu0
        %v2935 = vadd.f32 %v2646, %v2934
        %v2936 = vpop.f32.mrb[0].mxu0
        %2937 = vmatprep.mubr.bf16.mxu0 %v1613
        %2938 = vmatmul.mubr.bf16.gmra.mrb[0].mxu0 %v1612
        %v2939 = vpop.f32.mrb[0].mxu0
        %v2940 = vadd.f32 %v2651, %v2939
        %v2941 = vpop.f32.mrb[0].mxu0
        %v2942 = vpop.f32.mrb[0].mxu0
        %v2943 = vadd.f32 %v2654, %v2942
        %v2944 = vpop.f32.mrb[0].mxu0
        %2945 = vmatprep.mubr.bf16.mxu0 %v1622
        %2946 = vmatmul.mubr.bf16.gmra.mrb[0].mxu0 %v1621
        %v2947 = vpop.f32.mrb[0].mxu0
        %v2948 = vadd.f32 %v2659, %v2947
        %v2949 = vpop.f32.mrb[0].mxu0
        %v2950 = vpop.f32.mrb[0].mxu0
        %v2951 = vadd.f32 %v2662, %v2950
        %v2952 = vpop.f32.mrb[0].mxu0
        %2953 = vmatprep.mubr.bf16.mxu0 %v1631
        %2954 = vmatmul.mubr.bf16.gmra.mrb[0].mxu0 %v1630
        %v2955 = vpop.f32.mrb[0].mxu0
        %v2956 = vadd.f32 %v2667, %v2955
        %v2957 = vpop.f32.mrb[0].mxu0
        %v2958 = vpop.f32.mrb[0].mxu0
        %v2959 = vadd.f32 %v2670, %v2958
        %v2960 = vpop.f32.mrb[0].mxu0
        %2961 = vmatprep.mubr.bf16.mxu0 %v1640
        %2962 = vmatmul.mubr.bf16.gmra.mrb[0].mxu0 %v1639
        %v2963 = vpop.f32.mrb[0].mxu0
        %v2964 = vadd.f32 %v2675, %v2963
        %v2965 = vpop.f32.mrb[0].mxu0
        %v2966 = vpop.f32.mrb[0].mxu0
        %v2967 = vadd.f32 %v2678, %v2966
        %v2968 = vpop.f32.mrb[0].mxu0
        %2969 = vmatprep.mubr.bf16.mxu0 %v1649
        %2970 = vmatmul.mubr.bf16.gmra.mrb[0].mxu0 %v1648
        %v2971 = vpop.f32.mrb[0].mxu0
        %v2972 = vadd.f32 %v2683, %v2971
        %v2973 = vpop.f32.mrb[0].mxu0
        %v2974 = vpop.f32.mrb[0].mxu0
        %v2975 = vadd.f32 %v2686, %v2974
        %v2976 = vpop.f32.mrb[0].mxu0
        %2977 = vmatprep.mubr.bf16.mxu0 %v1658
        %2978 = vmatmul.mubr.bf16.gmra.mrb[0].mxu0 %v1657
        %v2979 = vpop.f32.mrb[0].mxu0
        %v2980 = vadd.f32 %v2691, %v2979
        %v2981 = vpop.f32.mrb[0].mxu0
        %v2982 = vpop.f32.mrb[0].mxu0
        %v2983 = vadd.f32 %v2694, %v2982
        %v2984 = vpop.f32.mrb[0].mxu0
        %2985 = vmatprep.mubr.bf16.mxu0 %v1667
        %2986 = vmatmul.mubr.bf16.gmra.mrb[0].mxu0 %v1666
        %v2987 = vpop.f32.mrb[0].mxu0
        %v2988 = vadd.f32 %v2699, %v2987
        %v2989 = vpop.f32.mrb[0].mxu0
        %v2990 = vpop.f32.mrb[0].mxu0
        %v2991 = vadd.f32 %v2702, %v2990
        %v2992 = vpop.f32.mrb[0].mxu0
        %2993 = vmatprep.mubr.bf16.mxu0 %v1676
        %2994 = vmatmul.mubr.bf16.gmra.mrb[0].mxu0 %v1675
        %v2995 = vpop.f32.mrb[0].mxu0
        %v2996 = vadd.f32 %v2707, %v2995
        %v2997 = vpop.f32.mrb[0].mxu0
        %v2998 = vpop.f32.mrb[0].mxu0
        %v2999 = vadd.f32 %v2710, %v2998
        %v3000 = vpop.f32.mrb[0].mxu0
        %3001 = vmatprep.mubr.bf16.mxu0 %v1685
        %3002 = vmatmul.mubr.bf16.gmra.mrb[0].mxu0 %v1684
        %v3003 = vpop.f32.mrb[0].mxu0
        %v3004 = vadd.f32 %v2715, %v3003
        %v3005 = vpop.f32.mrb[0].mxu0
        %v3006 = vpop.f32.mrb[0].mxu0
        %v3007 = vadd.f32 %v2718, %v3006
        %v3008 = vpop.f32.mrb[0].mxu0
        %3009 = vmatprep.mubr.bf16.mxu0 %v1694
        %3010 = vmatmul.mubr.bf16.gmra.mrb[0].mxu0 %v1693
        %v3011 = vpop.f32.mrb[0].mxu0
        %v3012 = vadd.f32 %v2723, %v3011
        %v3013 = vpop.f32.mrb[0].mxu0
        %v3014 = vpop.f32.mrb[0].mxu0
        %v3015 = vadd.f32 %v2726, %v3014
        %v3016 = vpop.f32.mrb[0].mxu0
        %3017 = vmatprep.mubr.bf16.mxu0 %v1703
        %3018 = vmatmul.mubr.bf16.gmra.mrb[0].mxu0 %v1702
        %v3019 = vpop.f32.mrb[0].mxu0
        %v3020 = vadd.f32 %v2731, %v3019
        %v3021 = vpop.f32.mrb[0].mxu0
        %v3022 = vpop.f32.mrb[0].mxu0
        %v3023 = vadd.f32 %v2734, %v3022
        %v3024 = vpop.f32.mrb[0].mxu0
        %3025 = vmatprep.mubr.bf16.mxu0 %v1712
        %3026 = vmatmul.mubr.bf16.gmra.mrb[0].mxu0 %v1711
        %v3027 = vpop.f32.mrb[0].mxu0
        %v3028 = vadd.f32 %v2739, %v3027
        %v3029 = vpop.f32.mrb[0].mxu0
        %v3030 = vpop.f32.mrb[0].mxu0
        %v3031 = vadd.f32 %v2742, %v3030
        %v3032 = vpop.f32.mrb[0].mxu0
        %3033 = vmatprep.mubr.bf16.mxu0 %v1721
        %3034 = vmatmul.mubr.bf16.gmra.mrb[0].mxu0 %v1720
        %v3035 = vpop.f32.mrb[0].mxu0
        %v3036 = vadd.f32 %v2747, %v3035
        %v3037 = vpop.f32.mrb[0].mxu0
        %v3038 = vpop.f32.mrb[0].mxu0
        %v3039 = vadd.f32 %v2750, %v3038
        %v3040 = vpop.f32.mrb[0].mxu0
        %3041 = vmatprep.mubr.bf16.mxu0 %v1730
        %3042 = vmatmul.mubr.bf16.gmra.mrb[0].mxu0 %v1729
        %v3043 = vpop.f32.mrb[0].mxu0
        %v3044 = vadd.f32 %v2755, %v3043
        %v3045 = vpop.f32.mrb[0].mxu0
        %v3046 = vpop.f32.mrb[0].mxu0
        %v3047 = vadd.f32 %v2758, %v3046
        %v3048 = vpop.f32.mrb[0].mxu0
        %3049 = vmatprep.mubr.bf16.mxu0 %v1739
        %3050 = vmatmul.mubr.bf16.gmra.mrb[0].mxu0 %v1738
        %v3051 = vpop.f32.mrb[0].mxu0
        %v3052 = vadd.f32 %v2763, %v3051
        %v3053 = vpop.f32.mrb[0].mxu0
        %v3054 = vpop.f32.mrb[0].mxu0
        %v3055 = vadd.f32 %v2766, %v3054
        %v3056 = vpop.f32.mrb[0].mxu0
        %3057 = vmatprep.mubr.bf16.mxu0 %v1748
        %3058 = vmatmul.mubr.bf16.gmra.mrb[0].mxu0 %v1747
        %v3059 = vpop.f32.mrb[0].mxu0
        %v3060 = vadd.f32 %v2771, %v3059
        %v3061 = vpop.f32.mrb[0].mxu0
        %v3062 = vpop.f32.mrb[0].mxu0
        %v3063 = vadd.f32 %v2774, %v3062
        %v3064 = vpop.f32.mrb[0].mxu0
        %3065 = vmatprep.mubr.bf16.mxu0 %v1757
        %3066 = vmatmul.mubr.bf16.gmra.mrb[0].mxu0 %v1756
        %v3067 = vpop.f32.mrb[0].mxu0
        %v3068 = vadd.f32 %v2779, %v3067
        %v3069 = vpop.f32.mrb[0].mxu0
        %v3070 = vpop.f32.mrb[0].mxu0
        %v3071 = vadd.f32 %v2782, %v3070
        %v3072 = vpop.f32.mrb[0].mxu0
        %3073 = vmatprep.mubr.bf16.mxu0 %v1766
        %3074 = vmatmul.mubr.bf16.gmra.mrb[0].mxu0 %v1765
        %v3075 = vpop.f32.mrb[0].mxu0
        %v3076 = vadd.f32 %v2787, %v3075
        %v3077 = vpop.f32.mrb[0].mxu0
        %v3078 = vpop.f32.mrb[0].mxu0
        %v3079 = vadd.f32 %v2790, %v3078
        %v3080 = vpop.f32.mrb[0].mxu0
        %3081 = vmatprep.mubr.bf16.mxu0 %v1775
        %3082 = vmatmul.mubr.bf16.gmra.mrb[0].mxu0 %v1774
        %v3083 = vpop.f32.mrb[0].mxu0
        %v3084 = vadd.f32 %v2795, %v3083
        %v3085 = vpop.f32.mrb[0].mxu0
        %v3086 = vpop.f32.mrb[0].mxu0
        %v3087 = vadd.f32 %v2798, %v3086
        %v3088 = vpop.f32.mrb[0].mxu0
        %3089 = vmatprep.mubr.bf16.mxu0 %v1784
        %3090 = vmatmul.mubr.bf16.gmra.mrb[0].mxu0 %v1783
        %v3091 = vpop.f32.mrb[0].mxu0
        %v3092 = vadd.f32 %v2803, %v3091
        %v3093 = vpop.f32.mrb[0].mxu0
        %v3094 = vpop.f32.mrb[0].mxu0
        %v3095 = vadd.f32 %v2806, %v3094
        %v3096 = vpop.f32.mrb[0].mxu0
        %3097 = vmatprep.mubr.bf16.mxu0 %v1793
        %3098 = vmatmul.mubr.bf16.gmra.mrb[0].mxu0 %v1792
        %v3099 = vpop.f32.mrb[0].mxu0
        %v3100 = vadd.f32 %v2811, %v3099
        %v3101 = vpop.f32.mrb[0].mxu0
        %v3102 = vpop.f32.mrb[0].mxu0
        %v3103 = vadd.f32 %v2814, %v3102
        %v3104 = vpop.f32.mrb[0].mxu0
        %3105 = vmatprep.mubr.bf16.mxu0 %v1802
        %3106 = vmatmul.mubr.bf16.gmra.mrb[0].mxu0 %v1801
        %v3107 = vpop.f32.mrb[0].mxu0
        %v3108 = vadd.f32 %v2819, %v3107
        %v3109 = vpop.f32.mrb[0].mxu0
        %v3110 = vpop.f32.mrb[0].mxu0
        %v3111 = vadd.f32 %v2822, %v3110
        %v3112 = vpop.f32.mrb[0].mxu0
        %3113 = vmatprep.mubr.bf16.mxu0 %v1811
        %3114 = vmatmul.mubr.bf16.gmra.mrb[0].mxu0 %v1810
        %v3115 = vpop.f32.mrb[0].mxu0
        %v3116 = vadd.f32 %v2827, %v3115
        %v3117 = vpop.f32.mrb[0].mxu0
        %v3118 = vpop.f32.mrb[0].mxu0
        %v3119 = vadd.f32 %v2830, %v3118
        %v3120 = vpop.f32.mrb[0].mxu0
        %3121 = vmatprep.mubr.bf16.mxu0 %v1820
        %3122 = vmatmul.mubr.bf16.gmra.mrb[0].mxu0 %v1819
        %v3123 = vpop.f32.mrb[0].mxu0
        %v3124 = vadd.f32 %v2835, %v3123
        %v3125 = vpop.f32.mrb[0].mxu0
        %v3126 = vpop.f32.mrb[0].mxu0
        %v3127 = vadd.f32 %v2838, %v3126
        %v3128 = vpop.f32.mrb[0].mxu0
        %3129 = vmatprep.mubr.bf16.mxu0 %v1829
        %3130 = vmatmul.mubr.bf16.gmra.mrb[0].mxu0 %v1828
        %v3131 = vpop.f32.mrb[0].mxu0
        %v3132 = vadd.f32 %v2843, %v3131
        %v3133 = vpop.f32.mrb[0].mxu0
        %v3134 = vpop.f32.mrb[0].mxu0
        %v3135 = vadd.f32 %v2846, %v3134
        %v3136 = vpop.f32.mrb[0].mxu0
        %3137 = vmatprep.mubr.bf16.mxu0 %v1838
        %3138 = vmatmul.mubr.bf16.gmra.mrb[0].mxu0 %v1837
        %v3139 = vpop.f32.mrb[0].mxu0
        %v3140 = vadd.f32 %v2851, %v3139
        %v3141 = vpop.f32.mrb[0].mxu0
        %v3142 = vpop.f32.mrb[0].mxu0
        %v3143 = vadd.f32 %v2854, %v3142
        %v3144 = vpop.f32.mrb[0].mxu0
        %3145 = vmatprep.mubr.bf16.mxu0 %v1847
        %3146 = vmatmul.mubr.bf16.gmra.mrb[0].mxu0 %v1846
        %v3147 = vpop.f32.mrb[0].mxu0
        %v3148 = vadd.f32 %v2859, %v3147
        %v3149 = vpop.f32.mrb[0].mxu0
        %v3150 = vpop.f32.mrb[0].mxu0
        %v3151 = vadd.f32 %v2862, %v3150
        %v3152 = vpop.f32.mrb[0].mxu0
        %3153 = vmatprep.mubr.bf16.mxu0 %v1856
        %3154 = vmatmul.mubr.bf16.gmra.mrb[0].mxu0 %v1855
        %v3155 = vpop.f32.mrb[0].mxu0
        %v3156 = vadd.f32 %v2867, %v3155
        %v3157 = vpop.f32.mrb[0].mxu0
        %v3158 = vpop.f32.mrb[0].mxu0
        %v3159 = vadd.f32 %v2870, %v3158
        %v3160 = vpop.f32.mrb[0].mxu0
        %3161 = vmatprep.mubr.bf16.mxu0 %v1865
        %3162 = vmatmul.mubr.bf16.gmra.mrb[0].mxu0 %v1864
        %v3163 = vpop.f32.mrb[0].mxu0
        %v3164 = vadd.f32 %v2875, %v3163
        %v3165 = vpop.f32.mrb[0].mxu0
        %v3166 = vpop.f32.mrb[0].mxu0
        %v3167 = vadd.f32 %v2878, %v3166
        %v3168 = vpop.f32.mrb[0].mxu0
        %3169 = vmatprep.mubr.bf16.mxu0 %v1874
        %3170 = vmatmul.mubr.bf16.gmra.mrb[0].mxu0 %v1873
        %v3171 = vpop.f32.mrb[0].mxu0
        %v3172 = vadd.f32 %v2883, %v3171
        %v3173 = vpop.f32.mrb[0].mxu0
        %v3174 = vpop.f32.mrb[0].mxu0
        %v3175 = vadd.f32 %v2886, %v3174
        %v3176 = vpop.f32.mrb[0].mxu0
        %3177 = vdwg.mxu0
        %3178 = vmatprep.subr.bf16.mxu0 0
        %3179 = vmatpush1.bf16.msra.mxu0 %v2488
        %3180 = vmatprep.subr.bf16.mxu0 0
        %3181 = vmatpush1.bf16.msra.mxu0 %v2489
        %3182 = vmatprep.subr.bf16.mxu0 0
        %3183 = vmatpush1.bf16.msra.mxu0 %v2490
        %3184 = vmatprep.subr.bf16.mxu0 0
        %3185 = vmatpush1.bf16.msra.mxu0 %v2491
        %3186 = vmatprep.subr.bf16.mxu0 0
        %3187 = vmatpush1.bf16.msra.mxu0 %v2492
        %3188 = vmatprep.subr.bf16.mxu0 0
        %3189 = vmatpush1.bf16.msra.mxu0 %v2493
        %3190 = vmatprep.subr.bf16.mxu0 0
        %3191 = vmatpush1.bf16.msra.mxu0 %v2494
        %3192 = vmatprep.subr.bf16.mxu0 0
        %3193 = vmatpush1.bf16.msra.mxu0 %v2495
        %3194 = vmatprep.subr.bf16.mxu0 0
        %3195 = vmatpush1.bf16.msra.mxu0 %v2496
        %3196 = vmatprep.subr.bf16.mxu0 0
        %3197 = vmatpush1.bf16.msra.mxu0 %v2497
        %3198 = vmatprep.subr.bf16.mxu0 0
        %3199 = vmatpush1.bf16.msra.mxu0 %v2498
        %3200 = vmatprep.subr.bf16.mxu0 0
        %3201 = vmatpush1.bf16.msra.mxu0 %v2499
        %3202 = vmatprep.subr.bf16.mxu0 0
        %3203 = vmatpush1.bf16.msra.mxu0 %v2500
        %3204 = vmatprep.subr.bf16.mxu0 0
        %3205 = vmatpush1.bf16.msra.mxu0 %v2501
        %3206 = vmatprep.subr.bf16.mxu0 0
        %3207 = vmatpush1.bf16.msra.mxu0 %v2502
        %3208 = vmatprep.subr.bf16.mxu0 0
        %3209 = vmatpush1.bf16.msra.mxu0 %v2503
        %3210 = vmatprep.mubr.bf16.mxu0 %v1597
        %3211 = vmatmul.mubr.bf16.gmra.mrb[0].mxu0 %v1596
        %v3212 = vpop.f32.mrb[0].mxu0
        %v3213 = vadd.f32 %v2924, %v3212
        %v3214 = vpop.f32.mrb[0].mxu0
        %v3215 = vpop.f32.mrb[0].mxu0
        %v3216 = vadd.f32 %v2927, %v3215
        %v3217 = vpop.f32.mrb[0].mxu0
        %3218 = vmatprep.mubr.bf16.mxu0 %v1606
        %3219 = vmatmul.mubr.bf16.gmra.mrb[0].mxu0 %v1605
        %v3220 = vpop.f32.mrb[0].mxu0
        %v3221 = vadd.f32 %v2932, %v3220
        %v3222 = vpop.f32.mrb[0].mxu0
        %v3223 = vpop.f32.mrb[0].mxu0
        %v3224 = vadd.f32 %v2935, %v3223
        %v3225 = vpop.f32.mrb[0].mxu0
        %3226 = vmatprep.mubr.bf16.mxu0 %v1615
        %3227 = vmatmul.mubr.bf16.gmra.mrb[0].mxu0 %v1614
        %v3228 = vpop.f32.mrb[0].mxu0
        %v3229 = vadd.f32 %v2940, %v3228
        %v3230 = vpop.f32.mrb[0].mxu0
        %v3231 = vpop.f32.mrb[0].mxu0
        %v3232 = vadd.f32 %v2943, %v3231
        %v3233 = vpop.f32.mrb[0].mxu0
        %3234 = vmatprep.mubr.bf16.mxu0 %v1624
        %3235 = vmatmul.mubr.bf16.gmra.mrb[0].mxu0 %v1623
        %v3236 = vpop.f32.mrb[0].mxu0
        %v3237 = vadd.f32 %v2948, %v3236
        %v3238 = vpop.f32.mrb[0].mxu0
        %v3239 = vpop.f32.mrb[0].mxu0
        %v3240 = vadd.f32 %v2951, %v3239
        %v3241 = vpop.f32.mrb[0].mxu0
        %3242 = vmatprep.mubr.bf16.mxu0 %v1633
        %3243 = vmatmul.mubr.bf16.gmra.mrb[0].mxu0 %v1632
        %v3244 = vpop.f32.mrb[0].mxu0
        %v3245 = vadd.f32 %v2956, %v3244
        %v3246 = vpop.f32.mrb[0].mxu0
        %v3247 = vpop.f32.mrb[0].mxu0
        %v3248 = vadd.f32 %v2959, %v3247
        %v3249 = vpop.f32.mrb[0].mxu0
        %3250 = vmatprep.mubr.bf16.mxu0 %v1642
        %3251 = vmatmul.mubr.bf16.gmra.mrb[0].mxu0 %v1641
        %v3252 = vpop.f32.mrb[0].mxu0
        %v3253 = vadd.f32 %v2964, %v3252
        %v3254 = vpop.f32.mrb[0].mxu0
        %v3255 = vpop.f32.mrb[0].mxu0
        %v3256 = vadd.f32 %v2967, %v3255
        %v3257 = vpop.f32.mrb[0].mxu0
        %3258 = vmatprep.mubr.bf16.mxu0 %v1651
        %3259 = vmatmul.mubr.bf16.gmra.mrb[0].mxu0 %v1650
        %v3260 = vpop.f32.mrb[0].mxu0
        %v3261 = vadd.f32 %v2972, %v3260
        %v3262 = vpop.f32.mrb[0].mxu0
        %v3263 = vpop.f32.mrb[0].mxu0
        %v3264 = vadd.f32 %v2975, %v3263
        %v3265 = vpop.f32.mrb[0].mxu0
        %3266 = vmatprep.mubr.bf16.mxu0 %v1660
        %3267 = vmatmul.mubr.bf16.gmra.mrb[0].mxu0 %v1659
        %v3268 = vpop.f32.mrb[0].mxu0
        %v3269 = vadd.f32 %v2980, %v3268
        %v3270 = vpop.f32.mrb[0].mxu0
        %v3271 = vpop.f32.mrb[0].mxu0
        %v3272 = vadd.f32 %v2983, %v3271
        %v3273 = vpop.f32.mrb[0].mxu0
        %3274 = vmatprep.mubr.bf16.mxu0 %v1669
        %3275 = vmatmul.mubr.bf16.gmra.mrb[0].mxu0 %v1668
        %v3276 = vpop.f32.mrb[0].mxu0
        %v3277 = vadd.f32 %v2988, %v3276
        %v3278 = vpop.f32.mrb[0].mxu0
        %v3279 = vpop.f32.mrb[0].mxu0
        %v3280 = vadd.f32 %v2991, %v3279
        %v3281 = vpop.f32.mrb[0].mxu0
        %3282 = vmatprep.mubr.bf16.mxu0 %v1678
        %3283 = vmatmul.mubr.bf16.gmra.mrb[0].mxu0 %v1677
        %v3284 = vpop.f32.mrb[0].mxu0
        %v3285 = vadd.f32 %v2996, %v3284
        %v3286 = vpop.f32.mrb[0].mxu0
        %v3287 = vpop.f32.mrb[0].mxu0
        %v3288 = vadd.f32 %v2999, %v3287
        %v3289 = vpop.f32.mrb[0].mxu0
        %3290 = vmatprep.mubr.bf16.mxu0 %v1687
        %3291 = vmatmul.mubr.bf16.gmra.mrb[0].mxu0 %v1686
        %v3292 = vpop.f32.mrb[0].mxu0
        %v3293 = vadd.f32 %v3004, %v3292
        %v3294 = vpop.f32.mrb[0].mxu0
        %v3295 = vpop.f32.mrb[0].mxu0
        %v3296 = vadd.f32 %v3007, %v3295
        %v3297 = vpop.f32.mrb[0].mxu0
        %3298 = vmatprep.mubr.bf16.mxu0 %v1696
        %3299 = vmatmul.mubr.bf16.gmra.mrb[0].mxu0 %v1695
        %v3300 = vpop.f32.mrb[0].mxu0
        %v3301 = vadd.f32 %v3012, %v3300
        %v3302 = vpop.f32.mrb[0].mxu0
        %v3303 = vpop.f32.mrb[0].mxu0
        %v3304 = vadd.f32 %v3015, %v3303
        %v3305 = vpop.f32.mrb[0].mxu0
        %3306 = vmatprep.mubr.bf16.mxu0 %v1705
        %3307 = vmatmul.mubr.bf16.gmra.mrb[0].mxu0 %v1704
        %v3308 = vpop.f32.mrb[0].mxu0
        %v3309 = vadd.f32 %v3020, %v3308
        %v3310 = vpop.f32.mrb[0].mxu0
        %v3311 = vpop.f32.mrb[0].mxu0
        %v3312 = vadd.f32 %v3023, %v3311
        %v3313 = vpop.f32.mrb[0].mxu0
        %3314 = vmatprep.mubr.bf16.mxu0 %v1714
        %3315 = vmatmul.mubr.bf16.gmra.mrb[0].mxu0 %v1713
        %v3316 = vpop.f32.mrb[0].mxu0
        %v3317 = vadd.f32 %v3028, %v3316
        %v3318 = vpop.f32.mrb[0].mxu0
        %v3319 = vpop.f32.mrb[0].mxu0
        %v3320 = vadd.f32 %v3031, %v3319
        %v3321 = vpop.f32.mrb[0].mxu0
        %3322 = vmatprep.mubr.bf16.mxu0 %v1723
        %3323 = vmatmul.mubr.bf16.gmra.mrb[0].mxu0 %v1722
        %v3324 = vpop.f32.mrb[0].mxu0
        %v3325 = vadd.f32 %v3036, %v3324
        %v3326 = vpop.f32.mrb[0].mxu0
        %v3327 = vpop.f32.mrb[0].mxu0
        %v3328 = vadd.f32 %v3039, %v3327
        %v3329 = vpop.f32.mrb[0].mxu0
        %3330 = vmatprep.mubr.bf16.mxu0 %v1732
        %3331 = vmatmul.mubr.bf16.gmra.mrb[0].mxu0 %v1731
        %v3332 = vpop.f32.mrb[0].mxu0
        %v3333 = vadd.f32 %v3044, %v3332
        %v3334 = vpop.f32.mrb[0].mxu0
        %v3335 = vpop.f32.mrb[0].mxu0
        %v3336 = vadd.f32 %v3047, %v3335
        %v3337 = vpop.f32.mrb[0].mxu0
        %3338 = vmatprep.mubr.bf16.mxu0 %v1741
        %3339 = vmatmul.mubr.bf16.gmra.mrb[0].mxu0 %v1740
        %v3340 = vpop.f32.mrb[0].mxu0
        %v3341 = vadd.f32 %v3052, %v3340
        %v3342 = vpop.f32.mrb[0].mxu0
        %v3343 = vpop.f32.mrb[0].mxu0
        %v3344 = vadd.f32 %v3055, %v3343
        %v3345 = vpop.f32.mrb[0].mxu0
        %3346 = vmatprep.mubr.bf16.mxu0 %v1750
        %3347 = vmatmul.mubr.bf16.gmra.mrb[0].mxu0 %v1749
        %v3348 = vpop.f32.mrb[0].mxu0
        %v3349 = vadd.f32 %v3060, %v3348
        %v3350 = vpop.f32.mrb[0].mxu0
        %v3351 = vpop.f32.mrb[0].mxu0
        %v3352 = vadd.f32 %v3063, %v3351
        %v3353 = vpop.f32.mrb[0].mxu0
        %3354 = vmatprep.mubr.bf16.mxu0 %v1759
        %3355 = vmatmul.mubr.bf16.gmra.mrb[0].mxu0 %v1758
        %v3356 = vpop.f32.mrb[0].mxu0
        %v3357 = vadd.f32 %v3068, %v3356
        %v3358 = vpop.f32.mrb[0].mxu0
        %v3359 = vpop.f32.mrb[0].mxu0
        %v3360 = vadd.f32 %v3071, %v3359
        %v3361 = vpop.f32.mrb[0].mxu0
        %3362 = vmatprep.mubr.bf16.mxu0 %v1768
        %3363 = vmatmul.mubr.bf16.gmra.mrb[0].mxu0 %v1767
        %v3364 = vpop.f32.mrb[0].mxu0
        %v3365 = vadd.f32 %v3076, %v3364
        %v3366 = vpop.f32.mrb[0].mxu0
        %v3367 = vpop.f32.mrb[0].mxu0
        %v3368 = vadd.f32 %v3079, %v3367
        %v3369 = vpop.f32.mrb[0].mxu0
        %3370 = vmatprep.mubr.bf16.mxu0 %v1777
        %3371 = vmatmul.mubr.bf16.gmra.mrb[0].mxu0 %v1776
        %v3372 = vpop.f32.mrb[0].mxu0
        %v3373 = vadd.f32 %v3084, %v3372
        %v3374 = vpop.f32.mrb[0].mxu0
        %v3375 = vpop.f32.mrb[0].mxu0
        %v3376 = vadd.f32 %v3087, %v3375
        %v3377 = vpop.f32.mrb[0].mxu0
        %3378 = vmatprep.mubr.bf16.mxu0 %v1786
        %3379 = vmatmul.mubr.bf16.gmra.mrb[0].mxu0 %v1785
        %v3380 = vpop.f32.mrb[0].mxu0
        %v3381 = vadd.f32 %v3092, %v3380
        %v3382 = vpop.f32.mrb[0].mxu0
        %v3383 = vpop.f32.mrb[0].mxu0
        %v3384 = vadd.f32 %v3095, %v3383
        %v3385 = vpop.f32.mrb[0].mxu0
        %3386 = vmatprep.mubr.bf16.mxu0 %v1795
        %3387 = vmatmul.mubr.bf16.gmra.mrb[0].mxu0 %v1794
        %v3388 = vpop.f32.mrb[0].mxu0
        %v3389 = vadd.f32 %v3100, %v3388
        %v3390 = vpop.f32.mrb[0].mxu0
        %v3391 = vpop.f32.mrb[0].mxu0
        %v3392 = vadd.f32 %v3103, %v3391
        %v3393 = vpop.f32.mrb[0].mxu0
        %3394 = vmatprep.mubr.bf16.mxu0 %v1804
        %3395 = vmatmul.mubr.bf16.gmra.mrb[0].mxu0 %v1803
        %v3396 = vpop.f32.mrb[0].mxu0
        %v3397 = vadd.f32 %v3108, %v3396
        %v3398 = vpop.f32.mrb[0].mxu0
        %v3399 = vpop.f32.mrb[0].mxu0
        %v3400 = vadd.f32 %v3111, %v3399
        %v3401 = vpop.f32.mrb[0].mxu0
        %3402 = vmatprep.mubr.bf16.mxu0 %v1813
        %3403 = vmatmul.mubr.bf16.gmra.mrb[0].mxu0 %v1812
        %v3404 = vpop.f32.mrb[0].mxu0
        %v3405 = vadd.f32 %v3116, %v3404
        %v3406 = vpop.f32.mrb[0].mxu0
        %v3407 = vpop.f32.mrb[0].mxu0
        %v3408 = vadd.f32 %v3119, %v3407
        %v3409 = vpop.f32.mrb[0].mxu0
        %3410 = vmatprep.mubr.bf16.mxu0 %v1822
        %3411 = vmatmul.mubr.bf16.gmra.mrb[0].mxu0 %v1821
        %v3412 = vpop.f32.mrb[0].mxu0
        %v3413 = vadd.f32 %v3124, %v3412
        %v3414 = vpop.f32.mrb[0].mxu0
        %v3415 = vpop.f32.mrb[0].mxu0
        %v3416 = vadd.f32 %v3127, %v3415
        %v3417 = vpop.f32.mrb[0].mxu0
        %3418 = vmatprep.mubr.bf16.mxu0 %v1831
        %3419 = vmatmul.mubr.bf16.gmra.mrb[0].mxu0 %v1830
        %v3420 = vpop.f32.mrb[0].mxu0
        %v3421 = vadd.f32 %v3132, %v3420
        %v3422 = vpop.f32.mrb[0].mxu0
        %v3423 = vpop.f32.mrb[0].mxu0
        %v3424 = vadd.f32 %v3135, %v3423
        %v3425 = vpop.f32.mrb[0].mxu0
        %3426 = vmatprep.mubr.bf16.mxu0 %v1840
        %3427 = vmatmul.mubr.bf16.gmra.mrb[0].mxu0 %v1839
        %v3428 = vpop.f32.mrb[0].mxu0
        %v3429 = vadd.f32 %v3140, %v3428
        %v3430 = vpop.f32.mrb[0].mxu0
        %v3431 = vpop.f32.mrb[0].mxu0
        %v3432 = vadd.f32 %v3143, %v3431
        %v3433 = vpop.f32.mrb[0].mxu0
        %3434 = vmatprep.mubr.bf16.mxu0 %v1849
        %3435 = vmatmul.mubr.bf16.gmra.mrb[0].mxu0 %v1848
        %v3436 = vpop.f32.mrb[0].mxu0
        %v3437 = vadd.f32 %v3148, %v3436
        %v3438 = vpop.f32.mrb[0].mxu0
        %v3439 = vpop.f32.mrb[0].mxu0
        %v3440 = vadd.f32 %v3151, %v3439
        %v3441 = vpop.f32.mrb[0].mxu0
        %3442 = vmatprep.mubr.bf16.mxu0 %v1858
        %3443 = vmatmul.mubr.bf16.gmra.mrb[0].mxu0 %v1857
        %v3444 = vpop.f32.mrb[0].mxu0
        %v3445 = vadd.f32 %v3156, %v3444
        %v3446 = vpop.f32.mrb[0].mxu0
        %v3447 = vpop.f32.mrb[0].mxu0
        %v3448 = vadd.f32 %v3159, %v3447
        %v3449 = vpop.f32.mrb[0].mxu0
        %3450 = vmatprep.mubr.bf16.mxu0 %v1867
        %3451 = vmatmul.mubr.bf16.gmra.mrb[0].mxu0 %v1866
        %v3452 = vpop.f32.mrb[0].mxu0
        %v3453 = vadd.f32 %v3164, %v3452
        %v3454 = vpop.f32.mrb[0].mxu0
        %v3455 = vpop.f32.mrb[0].mxu0
        %v3456 = vadd.f32 %v3167, %v3455
        %v3457 = vpop.f32.mrb[0].mxu0
        %3458 = vmatprep.mubr.bf16.mxu0 %v1876
        %3459 = vmatmul.mubr.bf16.gmra.mrb[0].mxu0 %v1875
        %v3460 = vpop.f32.mrb[0].mxu0
        %v3461 = vadd.f32 %v3172, %v3460
        %v3462 = vpop.f32.mrb[0].mxu0
        %v3463 = vpop.f32.mrb[0].mxu0
        %v3464 = vadd.f32 %v3175, %v3463
        %v3465 = vpop.f32.mrb[0].mxu0
        %3466 = vdwg.mxu0
        %3467 = vmatprep.subr.bf16.mxu0 0
        %3468 = vmatpush1.bf16.msra.mxu0 %v2504
        %3469 = vmatprep.subr.bf16.mxu0 0
        %3470 = vmatpush1.bf16.msra.mxu0 %v2505
        %3471 = vmatprep.subr.bf16.mxu0 0
        %3472 = vmatpush1.bf16.msra.mxu0 %v2506
        %3473 = vmatprep.subr.bf16.mxu0 0
        %3474 = vmatpush1.bf16.msra.mxu0 %v2507
        %3475 = vmatprep.subr.bf16.mxu0 0
        %3476 = vmatpush1.bf16.msra.mxu0 %v2508
        %3477 = vmatprep.subr.bf16.mxu0 0
        %3478 = vmatpush1.bf16.msra.mxu0 %v2509
        %3479 = vmatprep.subr.bf16.mxu0 0
        %3480 = vmatpush1.bf16.msra.mxu0 %v2510
        %3481 = vmatprep.subr.bf16.mxu0 0
        %3482 = vmatpush1.bf16.msra.mxu0 %v2511
        %3483 = vmatprep.subr.bf16.mxu0 0
        %3484 = vmatpush1.bf16.msra.mxu0 %v2512
        %3485 = vmatprep.subr.bf16.mxu0 0
        %3486 = vmatpush1.bf16.msra.mxu0 %v2513
        %3487 = vmatprep.subr.bf16.mxu0 0
        %3488 = vmatpush1.bf16.msra.mxu0 %v2514
        %3489 = vmatprep.subr.bf16.mxu0 0
        %3490 = vmatpush1.bf16.msra.mxu0 %v2515
        %3491 = vmatprep.subr.bf16.mxu0 0
        %3492 = vmatpush1.bf16.msra.mxu0 %v2516
        %3493 = vmatprep.subr.bf16.mxu0 0
        %3494 = vmatpush1.bf16.msra.mxu0 %v2517
        %3495 = vmatprep.subr.bf16.mxu0 0
        %3496 = vmatpush1.bf16.msra.mxu0 %v2518
        %3497 = vmatprep.subr.bf16.mxu0 0
        %3498 = vmatpush1.bf16.msra.mxu0 %v2519
        %3499 = vmatprep.mubr.bf16.mxu0 %v1599
        %3500 = vmatmul.mubr.bf16.gmra.mrb[0].mxu0 %v1598
        %v3501 = vpop.f32.mrb[0].mxu0
        %v3502 = vadd.f32 %v3213, %v3501
        %v3503 = vpop.f32.mrb[0].mxu0
        %v3504 = vpop.f32.mrb[0].mxu0
        %v3505 = vadd.f32 %v3216, %v3504
        %v3506 = vpop.f32.mrb[0].mxu0
        %3507 = vmatprep.mubr.bf16.mxu0 %v1608
        %3508 = vmatmul.mubr.bf16.gmra.mrb[0].mxu0 %v1607
        %v3509 = vpop.f32.mrb[0].mxu0
        %v3510 = vadd.f32 %v3221, %v3509
        %v3511 = vpop.f32.mrb[0].mxu0
        %v3512 = vpop.f32.mrb[0].mxu0
        %v3513 = vadd.f32 %v3224, %v3512
        %v3514 = vpop.f32.mrb[0].mxu0
        %3515 = vmatprep.mubr.bf16.mxu0 %v1617
        %3516 = vmatmul.mubr.bf16.gmra.mrb[0].mxu0 %v1616
        %v3517 = vpop.f32.mrb[0].mxu0
        %v3518 = vadd.f32 %v3229, %v3517
        %v3519 = vpop.f32.mrb[0].mxu0
        %v3520 = vpop.f32.mrb[0].mxu0
        %v3521 = vadd.f32 %v3232, %v3520
        %v3522 = vpop.f32.mrb[0].mxu0
        %3523 = vmatprep.mubr.bf16.mxu0 %v1626
        %3524 = vmatmul.mubr.bf16.gmra.mrb[0].mxu0 %v1625
        %v3525 = vpop.f32.mrb[0].mxu0
        %v3526 = vadd.f32 %v3237, %v3525
        %v3527 = vpop.f32.mrb[0].mxu0
        %v3528 = vpop.f32.mrb[0].mxu0
        %v3529 = vadd.f32 %v3240, %v3528
        %v3530 = vpop.f32.mrb[0].mxu0
        %3531 = vmatprep.mubr.bf16.mxu0 %v1635
        %3532 = vmatmul.mubr.bf16.gmra.mrb[0].mxu0 %v1634
        %v3533 = vpop.f32.mrb[0].mxu0
        %v3534 = vadd.f32 %v3245, %v3533
        %v3535 = vpop.f32.mrb[0].mxu0
        %v3536 = vpop.f32.mrb[0].mxu0
        %v3537 = vadd.f32 %v3248, %v3536
        %v3538 = vpop.f32.mrb[0].mxu0
        %3539 = vmatprep.mubr.bf16.mxu0 %v1644
        %3540 = vmatmul.mubr.bf16.gmra.mrb[0].mxu0 %v1643
        %v3541 = vpop.f32.mrb[0].mxu0
        %v3542 = vadd.f32 %v3253, %v3541
        %v3543 = vpop.f32.mrb[0].mxu0
        %v3544 = vpop.f32.mrb[0].mxu0
        %v3545 = vadd.f32 %v3256, %v3544
        %v3546 = vpop.f32.mrb[0].mxu0
        %3547 = vmatprep.mubr.bf16.mxu0 %v1653
        %3548 = vmatmul.mubr.bf16.gmra.mrb[0].mxu0 %v1652
        %v3549 = vpop.f32.mrb[0].mxu0
        %v3550 = vadd.f32 %v3261, %v3549
        %v3551 = vpop.f32.mrb[0].mxu0
        %v3552 = vpop.f32.mrb[0].mxu0
        %v3553 = vadd.f32 %v3264, %v3552
        %v3554 = vpop.f32.mrb[0].mxu0
        %3555 = vmatprep.mubr.bf16.mxu0 %v1662
        %3556 = vmatmul.mubr.bf16.gmra.mrb[0].mxu0 %v1661
        %v3557 = vpop.f32.mrb[0].mxu0
        %v3558 = vadd.f32 %v3269, %v3557
        %v3559 = vpop.f32.mrb[0].mxu0
        %v3560 = vpop.f32.mrb[0].mxu0
        %v3561 = vadd.f32 %v3272, %v3560
        %v3562 = vpop.f32.mrb[0].mxu0
        %3563 = vmatprep.mubr.bf16.mxu0 %v1671
        %3564 = vmatmul.mubr.bf16.gmra.mrb[0].mxu0 %v1670
        %v3565 = vpop.f32.mrb[0].mxu0
        %v3566 = vadd.f32 %v3277, %v3565
        %v3567 = vpop.f32.mrb[0].mxu0
        %v3568 = vpop.f32.mrb[0].mxu0
        %v3569 = vadd.f32 %v3280, %v3568
        %v3570 = vpop.f32.mrb[0].mxu0
        %3571 = vmatprep.mubr.bf16.mxu0 %v1680
        %3572 = vmatmul.mubr.bf16.gmra.mrb[0].mxu0 %v1679
        %v3573 = vpop.f32.mrb[0].mxu0
        %v3574 = vadd.f32 %v3285, %v3573
        %v3575 = vpop.f32.mrb[0].mxu0
        %v3576 = vpop.f32.mrb[0].mxu0
        %v3577 = vadd.f32 %v3288, %v3576
        %v3578 = vpop.f32.mrb[0].mxu0
        %3579 = vmatprep.mubr.bf16.mxu0 %v1689
        %3580 = vmatmul.mubr.bf16.gmra.mrb[0].mxu0 %v1688
        %v3581 = vpop.f32.mrb[0].mxu0
        %v3582 = vadd.f32 %v3293, %v3581
        %v3583 = vpop.f32.mrb[0].mxu0
        %v3584 = vpop.f32.mrb[0].mxu0
        %v3585 = vadd.f32 %v3296, %v3584
        %v3586 = vpop.f32.mrb[0].mxu0
        %3587 = vmatprep.mubr.bf16.mxu0 %v1698
        %3588 = vmatmul.mubr.bf16.gmra.mrb[0].mxu0 %v1697
        %v3589 = vpop.f32.mrb[0].mxu0
        %v3590 = vadd.f32 %v3301, %v3589
        %v3591 = vpop.f32.mrb[0].mxu0
        %v3592 = vpop.f32.mrb[0].mxu0
        %v3593 = vadd.f32 %v3304, %v3592
        %v3594 = vpop.f32.mrb[0].mxu0
        %3595 = vmatprep.mubr.bf16.mxu0 %v1707
        %3596 = vmatmul.mubr.bf16.gmra.mrb[0].mxu0 %v1706
        %v3597 = vpop.f32.mrb[0].mxu0
        %v3598 = vadd.f32 %v3309, %v3597
        %v3599 = vpop.f32.mrb[0].mxu0
        %v3600 = vpop.f32.mrb[0].mxu0
        %v3601 = vadd.f32 %v3312, %v3600
        %v3602 = vpop.f32.mrb[0].mxu0
        %3603 = vmatprep.mubr.bf16.mxu0 %v1716
        %3604 = vmatmul.mubr.bf16.gmra.mrb[0].mxu0 %v1715
        %v3605 = vpop.f32.mrb[0].mxu0
        %v3606 = vadd.f32 %v3317, %v3605
        %v3607 = vpop.f32.mrb[0].mxu0
        %v3608 = vpop.f32.mrb[0].mxu0
        %v3609 = vadd.f32 %v3320, %v3608
        %v3610 = vpop.f32.mrb[0].mxu0
        %3611 = vmatprep.mubr.bf16.mxu0 %v1725
        %3612 = vmatmul.mubr.bf16.gmra.mrb[0].mxu0 %v1724
        %v3613 = vpop.f32.mrb[0].mxu0
        %v3614 = vadd.f32 %v3325, %v3613
        %v3615 = vpop.f32.mrb[0].mxu0
        %v3616 = vpop.f32.mrb[0].mxu0
        %v3617 = vadd.f32 %v3328, %v3616
        %v3618 = vpop.f32.mrb[0].mxu0
        %3619 = vmatprep.mubr.bf16.mxu0 %v1734
        %3620 = vmatmul.mubr.bf16.gmra.mrb[0].mxu0 %v1733
        %v3621 = vpop.f32.mrb[0].mxu0
        %v3622 = vadd.f32 %v3333, %v3621
        %v3623 = vpop.f32.mrb[0].mxu0
        %v3624 = vpop.f32.mrb[0].mxu0
        %v3625 = vadd.f32 %v3336, %v3624
        %v3626 = vpop.f32.mrb[0].mxu0
        %3627 = vmatprep.mubr.bf16.mxu0 %v1743
        %3628 = vmatmul.mubr.bf16.gmra.mrb[0].mxu0 %v1742
        %v3629 = vpop.f32.mrb[0].mxu0
        %v3630 = vadd.f32 %v3341, %v3629
        %v3631 = vpop.f32.mrb[0].mxu0
        %v3632 = vpop.f32.mrb[0].mxu0
        %v3633 = vadd.f32 %v3344, %v3632
        %v3634 = vpop.f32.mrb[0].mxu0
        %3635 = vmatprep.mubr.bf16.mxu0 %v1752
        %3636 = vmatmul.mubr.bf16.gmra.mrb[0].mxu0 %v1751
        %v3637 = vpop.f32.mrb[0].mxu0
        %v3638 = vadd.f32 %v3349, %v3637
        %v3639 = vpop.f32.mrb[0].mxu0
        %v3640 = vpop.f32.mrb[0].mxu0
        %v3641 = vadd.f32 %v3352, %v3640
        %v3642 = vpop.f32.mrb[0].mxu0
        %3643 = vmatprep.mubr.bf16.mxu0 %v1761
        %3644 = vmatmul.mubr.bf16.gmra.mrb[0].mxu0 %v1760
        %v3645 = vpop.f32.mrb[0].mxu0
        %v3646 = vadd.f32 %v3357, %v3645
        %v3647 = vpop.f32.mrb[0].mxu0
        %v3648 = vpop.f32.mrb[0].mxu0
        %v3649 = vadd.f32 %v3360, %v3648
        %v3650 = vpop.f32.mrb[0].mxu0
        %3651 = vmatprep.mubr.bf16.mxu0 %v1770
        %3652 = vmatmul.mubr.bf16.gmra.mrb[0].mxu0 %v1769
        %v3653 = vpop.f32.mrb[0].mxu0
        %v3654 = vadd.f32 %v3365, %v3653
        %v3655 = vpop.f32.mrb[0].mxu0
        %v3656 = vpop.f32.mrb[0].mxu0
        %v3657 = vadd.f32 %v3368, %v3656
        %v3658 = vpop.f32.mrb[0].mxu0
        %3659 = vmatprep.mubr.bf16.mxu0 %v1779
        %3660 = vmatmul.mubr.bf16.gmra.mrb[0].mxu0 %v1778
        %v3661 = vpop.f32.mrb[0].mxu0
        %v3662 = vadd.f32 %v3373, %v3661
        %v3663 = vpop.f32.mrb[0].mxu0
        %v3664 = vpop.f32.mrb[0].mxu0
        %v3665 = vadd.f32 %v3376, %v3664
        %v3666 = vpop.f32.mrb[0].mxu0
        %3667 = vmatprep.mubr.bf16.mxu0 %v1788
        %3668 = vmatmul.mubr.bf16.gmra.mrb[0].mxu0 %v1787
        %v3669 = vpop.f32.mrb[0].mxu0
        %v3670 = vadd.f32 %v3381, %v3669
        %v3671 = vpop.f32.mrb[0].mxu0
        %v3672 = vpop.f32.mrb[0].mxu0
        %v3673 = vadd.f32 %v3384, %v3672
        %v3674 = vpop.f32.mrb[0].mxu0
        %3675 = vmatprep.mubr.bf16.mxu0 %v1797
        %3676 = vmatmul.mubr.bf16.gmra.mrb[0].mxu0 %v1796
        %v3677 = vpop.f32.mrb[0].mxu0
        %v3678 = vadd.f32 %v3389, %v3677
        %v3679 = vpop.f32.mrb[0].mxu0
        %v3680 = vpop.f32.mrb[0].mxu0
        %v3681 = vadd.f32 %v3392, %v3680
        %v3682 = vpop.f32.mrb[0].mxu0
        %3683 = vmatprep.mubr.bf16.mxu0 %v1806
        %3684 = vmatmul.mubr.bf16.gmra.mrb[0].mxu0 %v1805
        %v3685 = vpop.f32.mrb[0].mxu0
        %v3686 = vadd.f32 %v3397, %v3685
        %v3687 = vpop.f32.mrb[0].mxu0
        %v3688 = vpop.f32.mrb[0].mxu0
        %v3689 = vadd.f32 %v3400, %v3688
        %v3690 = vpop.f32.mrb[0].mxu0
        %3691 = vmatprep.mubr.bf16.mxu0 %v1815
        %3692 = vmatmul.mubr.bf16.gmra.mrb[0].mxu0 %v1814
        %v3693 = vpop.f32.mrb[0].mxu0
        %v3694 = vadd.f32 %v3405, %v3693
        %v3695 = vpop.f32.mrb[0].mxu0
        %v3696 = vpop.f32.mrb[0].mxu0
        %v3697 = vadd.f32 %v3408, %v3696
        %v3698 = vpop.f32.mrb[0].mxu0
        %3699 = vmatprep.mubr.bf16.mxu0 %v1824
        %3700 = vmatmul.mubr.bf16.gmra.mrb[0].mxu0 %v1823
        %v3701 = vpop.f32.mrb[0].mxu0
        %v3702 = vadd.f32 %v3413, %v3701
        %v3703 = vpop.f32.mrb[0].mxu0
        %v3704 = vpop.f32.mrb[0].mxu0
        %v3705 = vadd.f32 %v3416, %v3704
        %v3706 = vpop.f32.mrb[0].mxu0
        %3707 = vmatprep.mubr.bf16.mxu0 %v1833
        %3708 = vmatmul.mubr.bf16.gmra.mrb[0].mxu0 %v1832
        %v3709 = vpop.f32.mrb[0].mxu0
        %v3710 = vadd.f32 %v3421, %v3709
        %v3711 = vpop.f32.mrb[0].mxu0
        %v3712 = vpop.f32.mrb[0].mxu0
        %v3713 = vadd.f32 %v3424, %v3712
        %v3714 = vpop.f32.mrb[0].mxu0
        %3715 = vmatprep.mubr.bf16.mxu0 %v1842
        %3716 = vmatmul.mubr.bf16.gmra.mrb[0].mxu0 %v1841
        %v3717 = vpop.f32.mrb[0].mxu0
        %v3718 = vadd.f32 %v3429, %v3717
        %v3719 = vpop.f32.mrb[0].mxu0
        %v3720 = vpop.f32.mrb[0].mxu0
        %v3721 = vadd.f32 %v3432, %v3720
        %v3722 = vpop.f32.mrb[0].mxu0
        %3723 = vmatprep.mubr.bf16.mxu0 %v1851
        %3724 = vmatmul.mubr.bf16.gmra.mrb[0].mxu0 %v1850
        %v3725 = vpop.f32.mrb[0].mxu0
        %v3726 = vadd.f32 %v3437, %v3725
        %v3727 = vpop.f32.mrb[0].mxu0
        %v3728 = vpop.f32.mrb[0].mxu0
        %v3729 = vadd.f32 %v3440, %v3728
        %v3730 = vpop.f32.mrb[0].mxu0
        %3731 = vmatprep.mubr.bf16.mxu0 %v1860
        %3732 = vmatmul.mubr.bf16.gmra.mrb[0].mxu0 %v1859
        %v3733 = vpop.f32.mrb[0].mxu0
        %v3734 = vadd.f32 %v3445, %v3733
        %v3735 = vpop.f32.mrb[0].mxu0
        %v3736 = vpop.f32.mrb[0].mxu0
        %v3737 = vadd.f32 %v3448, %v3736
        %v3738 = vpop.f32.mrb[0].mxu0
        %3739 = vmatprep.mubr.bf16.mxu0 %v1869
        %3740 = vmatmul.mubr.bf16.gmra.mrb[0].mxu0 %v1868
        %v3741 = vpop.f32.mrb[0].mxu0
        %v3742 = vadd.f32 %v3453, %v3741
        %v3743 = vpop.f32.mrb[0].mxu0
        %v3744 = vpop.f32.mrb[0].mxu0
        %v3745 = vadd.f32 %v3456, %v3744
        %v3746 = vpop.f32.mrb[0].mxu0
        %3747 = vmatprep.mubr.bf16.mxu0 %v1878
        %3748 = vmatmul.mubr.bf16.gmra.mrb[0].mxu0 %v1877
        %v3749 = vpop.f32.mrb[0].mxu0
        %v3750 = vadd.f32 %v3461, %v3749
        %v3751 = vpop.f32.mrb[0].mxu0
        %v3752 = vpop.f32.mrb[0].mxu0
        %v3753 = vadd.f32 %v3464, %v3752
        %v3754 = vpop.f32.mrb[0].mxu0
        %3755 = vdwg.mxu0
        %3756 = vmatprep.subr.bf16.mxu0 0
        %3757 = vmatpush1.bf16.msra.mxu0 %v2520
        %3758 = vmatprep.subr.bf16.mxu0 0
        %3759 = vmatpush1.bf16.msra.mxu0 %v2521
        %3760 = vmatprep.subr.bf16.mxu0 0
        %3761 = vmatpush1.bf16.msra.mxu0 %v2522
        %3762 = vmatprep.subr.bf16.mxu0 0
        %3763 = vmatpush1.bf16.msra.mxu0 %v2523
        %3764 = vmatprep.subr.bf16.mxu0 0
        %3765 = vmatpush1.bf16.msra.mxu0 %v2524
        %3766 = vmatprep.subr.bf16.mxu0 0
        %3767 = vmatpush1.bf16.msra.mxu0 %v2525
        %3768 = vmatprep.subr.bf16.mxu0 0
        %3769 = vmatpush1.bf16.msra.mxu0 %v2526
        %3770 = vmatprep.subr.bf16.mxu0 0
        %3771 = vmatpush1.bf16.msra.mxu0 %v2527
        %3772 = vmatprep.subr.bf16.mxu0 0
        %3773 = vmatpush1.bf16.msra.mxu0 0
        %3774 = vmatprep.subr.bf16.mxu0 0
        %3775 = vmatpush1.bf16.msra.mxu0 0
        %3776 = vmatprep.subr.bf16.mxu0 0
        %3777 = vmatpush1.bf16.msra.mxu0 0
        %3778 = vmatprep.subr.bf16.mxu0 0
        %3779 = vmatpush1.bf16.msra.mxu0 0
        %3780 = vmatprep.subr.bf16.mxu0 0
        %3781 = vmatpush1.bf16.msra.mxu0 0
        %3782 = vmatprep.subr.bf16.mxu0 0
        %3783 = vmatpush1.bf16.msra.mxu0 0
        %3784 = vmatprep.subr.bf16.mxu0 0
        %3785 = vmatpush1.bf16.msra.mxu0 0
        %3786 = vmatprep.subr.bf16.mxu0 0
        %3787 = vmatpush1.bf16.msra.mxu0 0
        %3788 = vmatprep.mubr.bf16.mxu0 0
        %3789 = vmatmul.mubr.bf16.gmra.mrb[0].mxu0 %v1600
        %v3790 = vpop.f32.mrb[0].mxu0
        %v3791 = vadd.f32 %v3502, %v3790
        %v3792 = vpop.f32.mrb[0].mxu0
        %v3793 = vpop.f32.mrb[0].mxu0
        %v3794 = vadd.f32 %v3505, %v3793
        %v3795 = vpop.f32.mrb[0].mxu0
        %3796 = vmatprep.mubr.bf16.mxu0 0
        %3797 = vmatmul.mubr.bf16.gmra.mrb[0].mxu0 %v1609
        %v3798 = vpop.f32.mrb[0].mxu0
        %v3799 = vadd.f32 %v3510, %v3798
        %v3800 = vpop.f32.mrb[0].mxu0
        %v3801 = vpop.f32.mrb[0].mxu0
        %v3802 = vadd.f32 %v3513, %v3801
        %v3803 = vpop.f32.mrb[0].mxu0
        %3804 = vmatprep.mubr.bf16.mxu0 0
        %3805 = vmatmul.mubr.bf16.gmra.mrb[0].mxu0 %v1618
        %v3806 = vpop.f32.mrb[0].mxu0
        %v3807 = vadd.f32 %v3518, %v3806
        %v3808 = vpop.f32.mrb[0].mxu0
        %v3809 = vpop.f32.mrb[0].mxu0
        %v3810 = vadd.f32 %v3521, %v3809
        %v3811 = vpop.f32.mrb[0].mxu0
        %3812 = vmatprep.mubr.bf16.mxu0 0
        %3813 = vmatmul.mubr.bf16.gmra.mrb[0].mxu0 %v1627
        %v3814 = vpop.f32.mrb[0].mxu0
        %v3815 = vadd.f32 %v3526, %v3814
        %v3816 = vpop.f32.mrb[0].mxu0
        %v3817 = vpop.f32.mrb[0].mxu0
        %v3818 = vadd.f32 %v3529, %v3817
        %v3819 = vpop.f32.mrb[0].mxu0
        %3820 = vmatprep.mubr.bf16.mxu0 0
        %3821 = vmatmul.mubr.bf16.gmra.mrb[0].mxu0 %v1636
        %v3822 = vpop.f32.mrb[0].mxu0
        %v3823 = vadd.f32 %v3534, %v3822
        %v3824 = vpop.f32.mrb[0].mxu0
        %v3825 = vpop.f32.mrb[0].mxu0
        %v3826 = vadd.f32 %v3537, %v3825
        %v3827 = vpop.f32.mrb[0].mxu0
        %3828 = vmatprep.mubr.bf16.mxu0 0
        %3829 = vmatmul.mubr.bf16.gmra.mrb[0].mxu0 %v1645
        %v3830 = vpop.f32.mrb[0].mxu0
        %v3831 = vadd.f32 %v3542, %v3830
        %v3832 = vpop.f32.mrb[0].mxu0
        %v3833 = vpop.f32.mrb[0].mxu0
        %v3834 = vadd.f32 %v3545, %v3833
        %v3835 = vpop.f32.mrb[0].mxu0
        %3836 = vmatprep.mubr.bf16.mxu0 0
        %3837 = vmatmul.mubr.bf16.gmra.mrb[0].mxu0 %v1654
        %v3838 = vpop.f32.mrb[0].mxu0
        %v3839 = vadd.f32 %v3550, %v3838
        %v3840 = vpop.f32.mrb[0].mxu0
        %v3841 = vpop.f32.mrb[0].mxu0
        %v3842 = vadd.f32 %v3553, %v3841
        %v3843 = vpop.f32.mrb[0].mxu0
        %3844 = vmatprep.mubr.bf16.mxu0 0
        %3845 = vmatmul.mubr.bf16.gmra.mrb[0].mxu0 %v1663
        %v3846 = vpop.f32.mrb[0].mxu0
        %v3847 = vadd.f32 %v3558, %v3846
        %v3848 = vpop.f32.mrb[0].mxu0
        %v3849 = vpop.f32.mrb[0].mxu0
        %v3850 = vadd.f32 %v3561, %v3849
        %v3851 = vpop.f32.mrb[0].mxu0
        %3852 = vmatprep.mubr.bf16.mxu0 0
        %3853 = vmatmul.mubr.bf16.gmra.mrb[0].mxu0 %v1672
        %v3854 = vpop.f32.mrb[0].mxu0
        %v3855 = vadd.f32 %v3566, %v3854
        %v3856 = vpop.f32.mrb[0].mxu0
        %v3857 = vpop.f32.mrb[0].mxu0
        %v3858 = vadd.f32 %v3569, %v3857
        %v3859 = vpop.f32.mrb[0].mxu0
        %3860 = vmatprep.mubr.bf16.mxu0 0
        %3861 = vmatmul.mubr.bf16.gmra.mrb[0].mxu0 %v1681
        %v3862 = vpop.f32.mrb[0].mxu0
        %v3863 = vadd.f32 %v3574, %v3862
        %v3864 = vpop.f32.mrb[0].mxu0
        %v3865 = vpop.f32.mrb[0].mxu0
        %v3866 = vadd.f32 %v3577, %v3865
        %v3867 = vpop.f32.mrb[0].mxu0
        %3868 = vmatprep.mubr.bf16.mxu0 0
        %3869 = vmatmul.mubr.bf16.gmra.mrb[0].mxu0 %v1690
        %v3870 = vpop.f32.mrb[0].mxu0
        %v3871 = vadd.f32 %v3582, %v3870
        %v3872 = vpop.f32.mrb[0].mxu0
        %v3873 = vpop.f32.mrb[0].mxu0
        %v3874 = vadd.f32 %v3585, %v3873
        %v3875 = vpop.f32.mrb[0].mxu0
        %3876 = vmatprep.mubr.bf16.mxu0 0
        %3877 = vmatmul.mubr.bf16.gmra.mrb[0].mxu0 %v1699
        %v3878 = vpop.f32.mrb[0].mxu0
        %v3879 = vadd.f32 %v3590, %v3878
        %v3880 = vpop.f32.mrb[0].mxu0
        %v3881 = vpop.f32.mrb[0].mxu0
        %v3882 = vadd.f32 %v3593, %v3881
        %v3883 = vpop.f32.mrb[0].mxu0
        %3884 = vmatprep.mubr.bf16.mxu0 0
        %3885 = vmatmul.mubr.bf16.gmra.mrb[0].mxu0 %v1708
        %v3886 = vpop.f32.mrb[0].mxu0
        %v3887 = vadd.f32 %v3598, %v3886
        %v3888 = vpop.f32.mrb[0].mxu0
        %v3889 = vpop.f32.mrb[0].mxu0
        %v3890 = vadd.f32 %v3601, %v3889
        %v3891 = vpop.f32.mrb[0].mxu0
        %3892 = vmatprep.mubr.bf16.mxu0 0
        %3893 = vmatmul.mubr.bf16.gmra.mrb[0].mxu0 %v1717
        %v3894 = vpop.f32.mrb[0].mxu0
        %v3895 = vadd.f32 %v3606, %v3894
        %v3896 = vpop.f32.mrb[0].mxu0
        %v3897 = vpop.f32.mrb[0].mxu0
        %v3898 = vadd.f32 %v3609, %v3897
        %v3899 = vpop.f32.mrb[0].mxu0
        %3900 = vmatprep.mubr.bf16.mxu0 0
        %3901 = vmatmul.mubr.bf16.gmra.mrb[0].mxu0 %v1726
        %v3902 = vpop.f32.mrb[0].mxu0
        %v3903 = vadd.f32 %v3614, %v3902
        %v3904 = vpop.f32.mrb[0].mxu0
        %v3905 = vpop.f32.mrb[0].mxu0
        %v3906 = vadd.f32 %v3617, %v3905
        %v3907 = vpop.f32.mrb[0].mxu0
        %3908 = vmatprep.mubr.bf16.mxu0 0
        %3909 = vmatmul.mubr.bf16.gmra.mrb[0].mxu0 %v1735
        %v3910 = vpop.f32.mrb[0].mxu0
        %v3911 = vadd.f32 %v3622, %v3910
        %v3912 = vpop.f32.mrb[0].mxu0
        %v3913 = vpop.f32.mrb[0].mxu0
        %v3914 = vadd.f32 %v3625, %v3913
        %v3915 = vpop.f32.mrb[0].mxu0
        %3916 = vmatprep.mubr.bf16.mxu0 0
        %3917 = vmatmul.mubr.bf16.gmra.mrb[0].mxu0 %v1744
        %v3918 = vpop.f32.mrb[0].mxu0
        %v3919 = vadd.f32 %v3630, %v3918
        %v3920 = vpop.f32.mrb[0].mxu0
        %v3921 = vpop.f32.mrb[0].mxu0
        %v3922 = vadd.f32 %v3633, %v3921
        %v3923 = vpop.f32.mrb[0].mxu0
        %3924 = vmatprep.mubr.bf16.mxu0 0
        %3925 = vmatmul.mubr.bf16.gmra.mrb[0].mxu0 %v1753
        %v3926 = vpop.f32.mrb[0].mxu0
        %v3927 = vadd.f32 %v3638, %v3926
        %v3928 = vpop.f32.mrb[0].mxu0
        %v3929 = vpop.f32.mrb[0].mxu0
        %v3930 = vadd.f32 %v3641, %v3929
        %v3931 = vpop.f32.mrb[0].mxu0
        %3932 = vmatprep.mubr.bf16.mxu0 0
        %3933 = vmatmul.mubr.bf16.gmra.mrb[0].mxu0 %v1762
        %v3934 = vpop.f32.mrb[0].mxu0
        %v3935 = vadd.f32 %v3646, %v3934
        %v3936 = vpop.f32.mrb[0].mxu0
        %v3937 = vpop.f32.mrb[0].mxu0
        %v3938 = vadd.f32 %v3649, %v3937
        %v3939 = vpop.f32.mrb[0].mxu0
        %3940 = vmatprep.mubr.bf16.mxu0 0
        %3941 = vmatmul.mubr.bf16.gmra.mrb[0].mxu0 %v1771
        %v3942 = vpop.f32.mrb[0].mxu0
        %v3943 = vadd.f32 %v3654, %v3942
        %v3944 = vpop.f32.mrb[0].mxu0
        %v3945 = vpop.f32.mrb[0].mxu0
        %v3946 = vadd.f32 %v3657, %v3945
        %v3947 = vpop.f32.mrb[0].mxu0
        %3948 = vmatprep.mubr.bf16.mxu0 0
        %3949 = vmatmul.mubr.bf16.gmra.mrb[0].mxu0 %v1780
        %v3950 = vpop.f32.mrb[0].mxu0
        %v3951 = vadd.f32 %v3662, %v3950
        %v3952 = vpop.f32.mrb[0].mxu0
        %v3953 = vpop.f32.mrb[0].mxu0
        %v3954 = vadd.f32 %v3665, %v3953
        %v3955 = vpop.f32.mrb[0].mxu0
        %3956 = vmatprep.mubr.bf16.mxu0 0
        %3957 = vmatmul.mubr.bf16.gmra.mrb[0].mxu0 %v1789
        %v3958 = vpop.f32.mrb[0].mxu0
        %v3959 = vadd.f32 %v3670, %v3958
        %v3960 = vpop.f32.mrb[0].mxu0
        %v3961 = vpop.f32.mrb[0].mxu0
        %v3962 = vadd.f32 %v3673, %v3961
        %v3963 = vpop.f32.mrb[0].mxu0
        %3964 = vmatprep.mubr.bf16.mxu0 0
        %3965 = vmatmul.mubr.bf16.gmra.mrb[0].mxu0 %v1798
        %v3966 = vpop.f32.mrb[0].mxu0
        %v3967 = vadd.f32 %v3678, %v3966
        %v3968 = vpop.f32.mrb[0].mxu0
        %v3969 = vpop.f32.mrb[0].mxu0
        %v3970 = vadd.f32 %v3681, %v3969
        %v3971 = vpop.f32.mrb[0].mxu0
        %3972 = vmatprep.mubr.bf16.mxu0 0
        %3973 = vmatmul.mubr.bf16.gmra.mrb[0].mxu0 %v1807
        %v3974 = vpop.f32.mrb[0].mxu0
        %v3975 = vadd.f32 %v3686, %v3974
        %v3976 = vpop.f32.mrb[0].mxu0
        %v3977 = vpop.f32.mrb[0].mxu0
        %v3978 = vadd.f32 %v3689, %v3977
        %v3979 = vpop.f32.mrb[0].mxu0
        %3980 = vmatprep.mubr.bf16.mxu0 0
        %3981 = vmatmul.mubr.bf16.gmra.mrb[0].mxu0 %v1816
        %v3982 = vpop.f32.mrb[0].mxu0
        %v3983 = vadd.f32 %v3694, %v3982
        %v3984 = vpop.f32.mrb[0].mxu0
        %v3985 = vpop.f32.mrb[0].mxu0
        %v3986 = vadd.f32 %v3697, %v3985
        %v3987 = vpop.f32.mrb[0].mxu0
        %3988 = vmatprep.mubr.bf16.mxu0 0
        %3989 = vmatmul.mubr.bf16.gmra.mrb[0].mxu0 %v1825
        %v3990 = vpop.f32.mrb[0].mxu0
        %v3991 = vadd.f32 %v3702, %v3990
        %v3992 = vpop.f32.mrb[0].mxu0
        %v3993 = vpop.f32.mrb[0].mxu0
        %v3994 = vadd.f32 %v3705, %v3993
        %v3995 = vpop.f32.mrb[0].mxu0
        %3996 = vmatprep.mubr.bf16.mxu0 0
        %3997 = vmatmul.mubr.bf16.gmra.mrb[0].mxu0 %v1834
        %v3998 = vpop.f32.mrb[0].mxu0
        %v3999 = vadd.f32 %v3710, %v3998
        %v4000 = vpop.f32.mrb[0].mxu0
        %v4001 = vpop.f32.mrb[0].mxu0
        %v4002 = vadd.f32 %v3713, %v4001
        %v4003 = vpop.f32.mrb[0].mxu0
        %4004 = vmatprep.mubr.bf16.mxu0 0
        %4005 = vmatmul.mubr.bf16.gmra.mrb[0].mxu0 %v1843
        %v4006 = vpop.f32.mrb[0].mxu0
        %v4007 = vadd.f32 %v3718, %v4006
        %v4008 = vpop.f32.mrb[0].mxu0
        %v4009 = vpop.f32.mrb[0].mxu0
        %v4010 = vadd.f32 %v3721, %v4009
        %v4011 = vpop.f32.mrb[0].mxu0
        %4012 = vmatprep.mubr.bf16.mxu0 0
        %4013 = vmatmul.mubr.bf16.gmra.mrb[0].mxu0 %v1852
        %v4014 = vpop.f32.mrb[0].mxu0
        %v4015 = vadd.f32 %v3726, %v4014
        %v4016 = vpop.f32.mrb[0].mxu0
        %v4017 = vpop.f32.mrb[0].mxu0
        %v4018 = vadd.f32 %v3729, %v4017
        %v4019 = vpop.f32.mrb[0].mxu0
        %4020 = vmatprep.mubr.bf16.mxu0 0
        %4021 = vmatmul.mubr.bf16.gmra.mrb[0].mxu0 %v1861
        %v4022 = vpop.f32.mrb[0].mxu0
        %v4023 = vadd.f32 %v3734, %v4022
        %v4024 = vpop.f32.mrb[0].mxu0
        %v4025 = vpop.f32.mrb[0].mxu0
        %v4026 = vadd.f32 %v3737, %v4025
        %v4027 = vpop.f32.mrb[0].mxu0
        %4028 = vmatprep.mubr.bf16.mxu0 0
        %4029 = vmatmul.mubr.bf16.gmra.mrb[0].mxu0 %v1870
        %v4030 = vpop.f32.mrb[0].mxu0
        %v4031 = vadd.f32 %v3742, %v4030
        %v4032 = vpop.f32.mrb[0].mxu0
        %v4033 = vpop.f32.mrb[0].mxu0
        %v4034 = vadd.f32 %v3745, %v4033
        %v4035 = vpop.f32.mrb[0].mxu0
        %4036 = vmatprep.mubr.bf16.mxu0 0
        %4037 = vmatmul.mubr.bf16.gmra.mrb[0].mxu0 %v1879
        %v4038 = vpop.f32.mrb[0].mxu0
        %v4039 = vadd.f32 %v3750, %v4038
        %v4040 = vpop.f32.mrb[0].mxu0
        %v4041 = vpop.f32.mrb[0].mxu0
        %v4042 = vadd.f32 %v3753, %v4041
        %v4043 = vpop.f32.mrb[0].mxu0
        %4044 = vdwg.mxu0
        %v4045 = vld [vmem:[%s221] sm:$0xff]
        %v4046 = vld [vmem:[%s221 + $0x8] sm:$0xff]
        %v4047 = vld [vmem:[%s221 + $0x10] sm:$0xff]
        %v4048 = vld [vmem:[%s221 + $0x18] sm:$0xff]
        %v4049 = vld [vmem:[%s221 + $0x20] sm:$0xff]
        %v4050 = vld [vmem:[%s221 + $0x28] sm:$0xff]
        %v4051 = vld [vmem:[%s221 + $0x30] sm:$0xff]
        %v4052 = vld [vmem:[%s221 + $0x38] sm:$0xff]
        %v4053 = vld [vmem:[%s221 + $0x40] sm:$0xff]
        %v4054 = vld [vmem:[%s221 + $0x48] sm:$0xff]
        %v4055 = vld [vmem:[%s221 + $0x50] sm:$0xff]
        %v4056 = vld [vmem:[%s221 + $0x58] sm:$0xff]
        %v4057 = vld [vmem:[%s221 + $0x60] sm:$0xff]
        %v4058 = vld [vmem:[%s221 + $0x68] sm:$0xff]
        %v4059 = vld [vmem:[%s221 + $0x70] sm:$0xff]
        %v4060 = vld [vmem:[%s221 + $0x78] sm:$0xff]
        %v4061 = vld [vmem:[%s221 + $0x80] sm:$0xff]
        %v4062 = vld [vmem:[%s221 + $0x88] sm:$0xff]
        %v4063 = vld [vmem:[%s221 + $0x90] sm:$0xff]
        %v4064 = vld [vmem:[%s221 + $0x98] sm:$0xff]
        %v4065 = vld [vmem:[%s221 + $0xa0] sm:$0xff]
        %v4066 = vld [vmem:[%s221 + $0xa8] sm:$0xff]
        %v4067 = vld [vmem:[%s221 + $0xb0] sm:$0xff]
        %v4068 = vld [vmem:[%s221 + $0xb8] sm:$0xff]
        %v4069 = vld [vmem:[%s221 + $0xc0] sm:$0xff]
        %v4070 = vld [vmem:[%s221 + $0xc8] sm:$0xff]
        %v4071 = vld [vmem:[%s221 + $0xd0] sm:$0xff]
        %v4072 = vld [vmem:[%s221 + $0xd8] sm:$0xff]
        %v4073 = vld [vmem:[%s221 + $0xe0] sm:$0xff]
        %v4074 = vld [vmem:[%s221 + $0xe8] sm:$0xff]
        %v4075 = vld [vmem:[%s221 + $0xf0] sm:$0xff]
        %v4076 = vld [vmem:[%s221 + $0xf8] sm:$0xff]
        %v4077 = vld [vmem:[%s221 + $0x100] sm:$0xff]
        %v4078 = vld [vmem:[%s221 + $0x108] sm:$0xff]
        %v4079 = vld [vmem:[%s221 + $0x110] sm:$0xff]
        %v4080 = vld [vmem:[%s221 + $0x118] sm:$0xff]
        %v4081 = vld [vmem:[%s221 + $0x120] sm:$0xff]
        %v4082 = vld [vmem:[%s221 + $0x128] sm:$0xff]
        %v4083 = vld [vmem:[%s221 + $0x130] sm:$0xff]
        %v4084 = vld [vmem:[%s221 + $0x138] sm:$0xff]
        %v4085 = vld [vmem:[%s221 + $0x140] sm:$0xff]
        %v4086 = vld [vmem:[%s221 + $0x148] sm:$0xff]
        %v4087 = vld [vmem:[%s221 + $0x150] sm:$0xff]
        %v4088 = vld [vmem:[%s221 + $0x158] sm:$0xff]
        %v4089 = vld [vmem:[%s221 + $0x160] sm:$0xff]
        %v4090 = vld [vmem:[%s221 + $0x168] sm:$0xff]
        %v4091 = vld [vmem:[%s221 + $0x170] sm:$0xff]
        %v4092 = vld [vmem:[%s221 + $0x178] sm:$0xff]
        %v4093 = vld [vmem:[%s221 + $0x180] sm:$0xff]
        %v4094 = vld [vmem:[%s221 + $0x188] sm:$0xff]
        %v4095 = vld [vmem:[%s221 + $0x190] sm:$0xff]
        %v4096 = vld [vmem:[%s221 + $0x198] sm:$0xff]
        %v4097 = vld [vmem:[%s221 + $0x1a0] sm:$0xff]
        %v4098 = vld [vmem:[%s221 + $0x1a8] sm:$0xff]
        %v4099 = vld [vmem:[%s221 + $0x1b0] sm:$0xff]
        %v4100 = vld [vmem:[%s221 + $0x1b8] sm:$0xff]
        %v4101 = vld [vmem:[%s221 + $0x1c0] sm:$0xff]
        %v4102 = vld [vmem:[%s221 + $0x1c8] sm:$0xff]
        %v4103 = vld [vmem:[%s221 + $0x1d0] sm:$0xff]
        %v4104 = vld [vmem:[%s221 + $0x1d8] sm:$0xff]
        %v4105 = vld [vmem:[%s221 + $0x1e0] sm:$0xff]
        %v4106 = vld [vmem:[%s221 + $0x1e8] sm:$0xff]
        %v4107 = vld [vmem:[%s221 + $0x1f0] sm:$0xff]
        %v4108 = vld [vmem:[%s221 + $0x1f8] sm:$0xff]
        %v4109 = vadd.f32 %v3791, %v4045
        %v4110 = vadd.f32 %v3794, %v4046
        %v4111 = vadd.f32 %v3799, %v4047
        %v4112 = vadd.f32 %v3802, %v4048
        %v4113 = vadd.f32 %v3807, %v4049
        %v4114 = vadd.f32 %v3810, %v4050
        %v4115 = vadd.f32 %v3815, %v4051
        %v4116 = vadd.f32 %v3818, %v4052
        %v4117 = vadd.f32 %v3823, %v4053
        %v4118 = vadd.f32 %v3826, %v4054
        %v4119 = vadd.f32 %v3831, %v4055
        %v4120 = vadd.f32 %v3834, %v4056
        %v4121 = vadd.f32 %v3839, %v4057
        %v4122 = vadd.f32 %v3842, %v4058
        %v4123 = vadd.f32 %v3847, %v4059
        %v4124 = vadd.f32 %v3850, %v4060
        %v4125 = vadd.f32 %v3855, %v4061
        %v4126 = vadd.f32 %v3858, %v4062
        %v4127 = vadd.f32 %v3863, %v4063
        %v4128 = vadd.f32 %v3866, %v4064
        %v4129 = vadd.f32 %v3871, %v4065
        %v4130 = vadd.f32 %v3874, %v4066
        %v4131 = vadd.f32 %v3879, %v4067
        %v4132 = vadd.f32 %v3882, %v4068
        %v4133 = vadd.f32 %v3887, %v4069
        %v4134 = vadd.f32 %v3890, %v4070
        %v4135 = vadd.f32 %v3895, %v4071
        %v4136 = vadd.f32 %v3898, %v4072
        %v4137 = vadd.f32 %v3903, %v4073
        %v4138 = vadd.f32 %v3906, %v4074
        %v4139 = vadd.f32 %v3911, %v4075
        %v4140 = vadd.f32 %v3914, %v4076
        %v4141 = vadd.f32 %v3919, %v4077
        %v4142 = vadd.f32 %v3922, %v4078
        %v4143 = vadd.f32 %v3927, %v4079
        %v4144 = vadd.f32 %v3930, %v4080
        %v4145 = vadd.f32 %v3935, %v4081
        %v4146 = vadd.f32 %v3938, %v4082
        %v4147 = vadd.f32 %v3943, %v4083
        %v4148 = vadd.f32 %v3946, %v4084
        %v4149 = vadd.f32 %v3951, %v4085
        %v4150 = vadd.f32 %v3954, %v4086
        %v4151 = vadd.f32 %v3959, %v4087
        %v4152 = vadd.f32 %v3962, %v4088
        %v4153 = vadd.f32 %v3967, %v4089
        %v4154 = vadd.f32 %v3970, %v4090
        %v4155 = vadd.f32 %v3975, %v4091
        %v4156 = vadd.f32 %v3978, %v4092
        %v4157 = vadd.f32 %v3983, %v4093
        %v4158 = vadd.f32 %v3986, %v4094
        %v4159 = vadd.f32 %v3991, %v4095
        %v4160 = vadd.f32 %v3994, %v4096
        %v4161 = vadd.f32 %v3999, %v4097
        %v4162 = vadd.f32 %v4002, %v4098
        %v4163 = vadd.f32 %v4007, %v4099
        %v4164 = vadd.f32 %v4010, %v4100
        %v4165 = vadd.f32 %v4015, %v4101
        %v4166 = vadd.f32 %v4018, %v4102
        %v4167 = vadd.f32 %v4023, %v4103
        %v4168 = vadd.f32 %v4026, %v4104
        %v4169 = vadd.f32 %v4031, %v4105
        %v4170 = vadd.f32 %v4034, %v4106
        %v4171 = vadd.f32 %v4039, %v4107
        %v4172 = vadd.f32 %v4042, %v4108
        %4173 = vst [vmem:[%s209] sm:$0xff] %v4109
        %4174 = vst [vmem:[%s209 + $0x8] sm:$0xff] %v4110
        %4175 = vst [vmem:[%s209 + $0x10] sm:$0xff] %v4111
        %4176 = vst [vmem:[%s209 + $0x18] sm:$0xff] %v4112
        %4177 = vst [vmem:[%s209 + $0x20] sm:$0xff] %v4113
        %4178 = vst [vmem:[%s209 + $0x28] sm:$0xff] %v4114
        %4179 = vst [vmem:[%s209 + $0x30] sm:$0xff] %v4115
        %4180 = vst [vmem:[%s209 + $0x38] sm:$0xff] %v4116
        %4181 = vst [vmem:[%s209 + $0x40] sm:$0xff] %v4117
        %4182 = vst [vmem:[%s209 + $0x48] sm:$0xff] %v4118
        %4183 = vst [vmem:[%s209 + $0x50] sm:$0xff] %v4119
        %4184 = vst [vmem:[%s209 + $0x58] sm:$0xff] %v4120
        %4185 = vst [vmem:[%s209 + $0x60] sm:$0xff] %v4121
        %4186 = vst [vmem:[%s209 + $0x68] sm:$0xff] %v4122
        %4187 = vst [vmem:[%s209 + $0x70] sm:$0xff] %v4123
        %4188 = vst [vmem:[%s209 + $0x78] sm:$0xff] %v4124
        %4189 = vst [vmem:[%s209 + $0x80] sm:$0xff] %v4125
        %4190 = vst [vmem:[%s209 + $0x88] sm:$0xff] %v4126
        %4191 = vst [vmem:[%s209 + $0x90] sm:$0xff] %v4127
        %4192 = vst [vmem:[%s209 + $0x98] sm:$0xff] %v4128
        %4193 = vst [vmem:[%s209 + $0xa0] sm:$0xff] %v4129
        %4194 = vst [vmem:[%s209 + $0xa8] sm:$0xff] %v4130
        %4195 = vst [vmem:[%s209 + $0xb0] sm:$0xff] %v4131
        %4196 = vst [vmem:[%s209 + $0xb8] sm:$0xff] %v4132
        %4197 = vst [vmem:[%s209 + $0xc0] sm:$0xff] %v4133
        %4198 = vst [vmem:[%s209 + $0xc8] sm:$0xff] %v4134
        %4199 = vst [vmem:[%s209 + $0xd0] sm:$0xff] %v4135
        %4200 = vst [vmem:[%s209 + $0xd8] sm:$0xff] %v4136
        %4201 = vst [vmem:[%s209 + $0xe0] sm:$0xff] %v4137
        %4202 = vst [vmem:[%s209 + $0xe8] sm:$0xff] %v4138
        %4203 = vst [vmem:[%s209 + $0xf0] sm:$0xff] %v4139
        %4204 = vst [vmem:[%s209 + $0xf8] sm:$0xff] %v4140
        %4205 = vst [vmem:[%s209 + $0x100] sm:$0xff] %v4141
        %4206 = vst [vmem:[%s209 + $0x108] sm:$0xff] %v4142
        %4207 = vst [vmem:[%s209 + $0x110] sm:$0xff] %v4143
        %4208 = vst [vmem:[%s209 + $0x118] sm:$0xff] %v4144
        %4209 = vst [vmem:[%s209 + $0x120] sm:$0xff] %v4145
        %4210 = vst [vmem:[%s209 + $0x128] sm:$0xff] %v4146
        %4211 = vst [vmem:[%s209 + $0x130] sm:$0xff] %v4147
        %4212 = vst [vmem:[%s209 + $0x138] sm:$0xff] %v4148
        %4213 = vst [vmem:[%s209 + $0x140] sm:$0xff] %v4149
        %4214 = vst [vmem:[%s209 + $0x148] sm:$0xff] %v4150
        %4215 = vst [vmem:[%s209 + $0x150] sm:$0xff] %v4151
        %4216 = vst [vmem:[%s209 + $0x158] sm:$0xff] %v4152
        %4217 = vst [vmem:[%s209 + $0x160] sm:$0xff] %v4153
        %4218 = vst [vmem:[%s209 + $0x168] sm:$0xff] %v4154
        %4219 = vst [vmem:[%s209 + $0x170] sm:$0xff] %v4155
        %4220 = vst [vmem:[%s209 + $0x178] sm:$0xff] %v4156
        %4221 = vst [vmem:[%s209 + $0x180] sm:$0xff] %v4157
        %4222 = vst [vmem:[%s209 + $0x188] sm:$0xff] %v4158
        %4223 = vst [vmem:[%s209 + $0x190] sm:$0xff] %v4159
        %4224 = vst [vmem:[%s209 + $0x198] sm:$0xff] %v4160
        %4225 = vst [vmem:[%s209 + $0x1a0] sm:$0xff] %v4161
        %4226 = vst [vmem:[%s209 + $0x1a8] sm:$0xff] %v4162
        %4227 = vst [vmem:[%s209 + $0x1b0] sm:$0xff] %v4163
        %4228 = vst [vmem:[%s209 + $0x1b8] sm:$0xff] %v4164
        %4229 = vst [vmem:[%s209 + $0x1c0] sm:$0xff] %v4165
        %4230 = vst [vmem:[%s209 + $0x1c8] sm:$0xff] %v4166
        %4231 = vst [vmem:[%s209 + $0x1d0] sm:$0xff] %v4167
        %4232 = vst [vmem:[%s209 + $0x1d8] sm:$0xff] %v4168
        %4233 = vst [vmem:[%s209 + $0x1e0] sm:$0xff] %v4169
        %4234 = vst [vmem:[%s209 + $0x1e8] sm:$0xff] %v4170
        %4235 = vst [vmem:[%s209 + $0x1f0] sm:$0xff] %v4171
        %4236 = vst [vmem:[%s209 + $0x1f8] sm:$0xff] %v4172
        %s4237 = sand.u32 %s120, 1
        %s4238 = scalar_lea.sflag [#allocation3], %s4237
        %s4239 = sand.u32 %s120, 1
        %s4240 = smul.addr %s4239, 512
        %s4241 = scalar_lea.vmem [#allocation2], %s4240
        // Predicated region
        $region37: #{middle_block.7} parent=35 // pred_check
          %p4242 = pneg %p130
        $region38: #{middle_block.7} parent=35 // pred_check_branch
          %4244 = sbr.rel (%p4242) target = $region40
        $region39: #{middle_block.7} parent=35 // pred_region
          %s4245 = smul.u32 64, %s18
          %s4247 = ssub.s32 8192, 8192
          %4248 = vsyncadd %s4238, %s4247
          %s4249 = smul.addr %s4245, 128
          %s4250 = scalar_lea.hbm %s4, %s4249
          %s4251 = sshll.u32 %s4241, 4
          %s4252 = int_to_ptr.vmem [resolvable:$true] %s4251
          %4257 = dma.vmem_to_hbm [thread:$0]  %s4252, 8192, %s4250, %s4238, 128, 128, 8
        $region40: #{middle_block.7} parent=35 // pred_fallthru
          _
      $region36: #{middle_block.7} parent=5 // pred_fallthru
        _
      %p4258 = scmp.le.s32.totalorder 2, %s13
      // Predicated region
      $region41: #{middle_block.7} parent=5 // pred_check
        %p4259 = pneg %p4258
      $region42: #{middle_block.7} parent=5 // pred_check_branch
        %4261 = sbr.rel (%p4259) target = $region44
      $region43: #{middle_block.7} parent=5 // pred_region
        %s4262 = ssub.s32 %s13, 2
        // Predicated region
        $region45: #{middle_block.7} parent=43 // pred_check
          %p4263 = pneg %p136
        $region46: #{middle_block.7} parent=43 // pred_check_branch
          %4265 = sbr.rel (%p4263) target = $region48
        $region47: #{middle_block.7} parent=43 // pred_region
          %s4266 = sand.u32 %s121, 1
          %s4267 = scalar_lea.sflag [#allocation3], %s4266
          %s4268 = sand.u32 %s121, 1
          %s4269 = smul.addr %s4268, 512
          %s4270 = scalar_lea.vmem [#allocation2], %s4269
          %4271 = dma.done %s4267, 8192
        $region48: #{middle_block.7} parent=43 // pred_fallthru
          _
      $region44: #{middle_block.7} parent=5 // pred_fallthru
        _
    $region6: #{middle_block.7} parent=1 // loop_footer
      %s17 = sadd.s32 1, %s13
    $region7: #{middle_block.7} parent=1 // loop_footer_branch
      %12 = sbr.rel target = $region3
    $region8: #{middle_block.7} parent=1 // loop_exit
      _
    %4272 = vsyncpa [#allocation3], 1
    %s4273 = scalar_lea.sflag [#allocation3], 1
    %4274 = vsyncpa %s4273, 1

</llo_original>
